<compile_context>
chip_gen: v7x
topology: tpu7x:2x2x1
jax: 0.10.0
libtpu: 0.0.40
codegen_flags: <defaults>
</compile_context>

<pallas_src>
import functools

import jax
import jax.numpy as jnp
import numpy as np
from jax.experimental import pallas as pl
from jax.experimental.pallas import tpu as pltpu

LANE = 128  # TPU lane width; all channel dims are zero-padded to this.


def _round_up(x, m):
    return (x + m - 1) // m * m


# ----------------------------------------------------------------------------
# Fused RDB kernel: one batch element per grid step.
#
# feat_ref is a flat, row-padded bf16 feature scratch of shape (R, 128):
#   image pixel (y, x) lives at flat row  BASE + y*W + x,
#   rows [0, BASE) and [BASE+HW, R) stay zero (top/bottom conv halo).
# A 3x3 tap (dy, dx) is then the constant-offset row slice starting at
# BASE + (dy-1)*W + (dx-1); left/right column wrap-around is masked.
# ----------------------------------------------------------------------------
def _rdb_fused_kernel(x_ref, wconv_ref, bconv_ref, wlff_ref, blff_ref,
                      w1_ref, w2_ref, o_ref, feat_ref, *, H, W, C, G0, BASE):
    HW = H * W

    # (1) Initialise the lane-padded bf16 feature scratch.
    # The +-1-row halo AND the interior lanes >= G0 must both be zero every
    # grid step (the input is only G0 lanes wide and each batch element
    # overwrites the conv lanes), so one full-scratch zero store followed by
    # a masked store of x into lanes [0, G0) is the minimal-pass init here.
    feat_ref[...] = jnp.zeros_like(feat_ref)
    feat_ref[pl.ds(BASE, HW), pl.ds(0, G0)] = x_ref[0].astype(jnp.bfloat16)

    # (2) Column-boundary masks, hoisted: built once, reused for all C layers
    # (pre-broadcast to (HW, LANE); no broadcast_in_dim inside the hot loop).
    col = jax.lax.broadcasted_iota(jnp.int32, (H, W, LANE), 1).reshape(HW, LANE)
    valid_l = col > 0            # taps with dx == 0 read pixel (., x-1)
    valid_r = col < (W - 1)      # taps with dx == 2 read pixel (., x+1)
    zero_slab = jnp.zeros((HW, LANE), jnp.bfloat16)

    def tap(t):
        """Masked bf16 tap t = 3*dy + dx, read straight from the scratch."""
        dy, dx = divmod(t, 3)
        off = BASE + (dy - 1) * W + (dx - 1)
        slab = feat_ref[pl.ds(off, HW), :]
        if dx == 0:
            slab = jnp.where(valid_l, slab, zero_slab)
        elif dx == 2:
            slab = jnp.where(valid_r, slab, zero_slab)
        return slab

    # (3) Dense conv stack: 3x3 conv + ReLU, "concat" via lane-disjoint add.
    # Weights/bias are zero outside layer c's output-lane slice and
    # ReLU(0) = 0, so the add preserves existing channels exactly while
    # writing the new ones.
    for c in range(C):
        acc = None
        for t0 in range(0, 9, 2):                 # K = 256 chunks (+128 tail)
            nt = min(2, 9 - t0)
            chunk = tap(t0) if nt == 1 else jnp.concatenate(
                [tap(t0), tap(t0 + 1)], axis=1)   # (HW, nt*128) bf16
            part = jnp.dot(chunk,
                           wconv_ref[c, pl.ds(t0 * LANE, nt * LANE), :],
                           preferred_element_type=jnp.float32)
            acc = part if acc is None else acc + part
        conv = jnp.maximum(acc + bconv_ref[c], 0.0)        # (HW, 128) f32
        feat_ref[pl.ds(BASE, HW), :] = (
            feat_ref[pl.ds(BASE, HW), :] + conv.astype(jnp.bfloat16))

    # (4) LFF (1x1 conv) + Squeeze-Excitation + residual, all in-register.
    feat = feat_ref[pl.ds(BASE, HW), :]                          # (HW,128) bf16
    y = jnp.dot(feat, wlff_ref[...],
                preferred_element_type=jnp.float32) + blff_ref[...]
    avg = jnp.sum(y, axis=0, keepdims=True) * (1.0 / HW)         # (1,128) f32
    h = jnp.maximum(jnp.dot(avg, w1_ref[...],
                            preferred_element_type=jnp.float32), 0.0)
    s = jax.nn.sigmoid(jnp.dot(h, w2_ref[...],
                               preferred_element_type=jnp.float32))
    # Only the first G0 lanes are real; emit the output lane-exact in x.dtype
    # (no padded HBM writeback, no post-kernel slice pass).
    o_ref[0] = ((y * s)[:, :G0] + x_ref[0]).astype(o_ref.dtype)


# ----------------------------------------------------------------------------
# One-time parameter packing (hoisted out of the forward pass).
# ----------------------------------------------------------------------------
def pack_rdb_params(params):
    convs = params["convs"]
    C = len(convs)
    G = convs[0][0].shape[-1]
    G0 = params["lff_w"].shape[1]
    Ct = G0 + C * G
    assert Ct <= LANE, "total feature channels must fit one 128-lane tile"

    # Conv weights -> (C, 9*128, 128) bf16; layer c's outputs land at lanes
    # [G0 + c*G, G0 + (c+1)*G) so the in-kernel add acts as channel concat.
    wstack, bstack = [], []
    for c, (w, b) in enumerate(convs):
        cin = w.shape[2]
        off = G0 + c * G
        wp = jnp.zeros((3, 3, LANE, LANE), jnp.float32)
        wp = wp.at[:, :, :cin, off:off + G].set(w)
        wstack.append(wp.reshape(9 * LANE, LANE))
        bstack.append(jnp.zeros((LANE,), jnp.float32).at[off:off + G].set(b))
    wconv = jnp.stack(wstack).astype(jnp.bfloat16)          # (C, 1152, 128)
    bconv = jnp.stack(bstack)[:, None, :]                   # (C, 1, 128) f32

    wlff = (jnp.zeros((LANE, LANE), jnp.float32)
            .at[:Ct, :G0].set(params["lff_w"]).astype(jnp.bfloat16))
    blff = jnp.zeros((1, LANE), jnp.float32).at[0, :G0].set(params["lff_b"])
    Gr = params["se_w1"].shape[-1]
    w1 = jnp.zeros((LANE, LANE), jnp.float32).at[:G0, :Gr].set(params["se_w1"])
    w2 = jnp.zeros((LANE, LANE), jnp.float32).at[:Gr, :G0].set(params["se_w2"])
    return {"wconv": wconv, "bconv": bconv, "wlff": wlff, "blff": blff,
            "w1": w1, "w2": w2}


# ----------------------------------------------------------------------------
# Forward wrapper: metadata-only reshapes around a single fused pallas_call.
# ----------------------------------------------------------------------------
@jax.jit
def rdb_forward(x, packed):
    N, H, W, G0 = x.shape
    HW = H * W
    assert HW % 8 == 0
    wconv = packed["wconv"]
    C = wconv.shape[0]

    # Flat-row scratch geometry: pixel (y,x) -> row BASE + y*W + x; 16-row
    # alignment keeps the packed bf16 sublane tiles aligned for the big
    # interior loads/stores.
    BASE = _round_up(W + 1, 16)
    R = _round_up(BASE + HW + W + 1, 16)

    xp = x.reshape(N, HW, G0)          # contiguous collapse -> metadata only

    kernel = functools.partial(_rdb_fused_kernel, H=H, W=W, C=C, G0=G0,
                               BASE=BASE)
    out = pl.pallas_call(
        kernel,
        out_shape=jax.ShapeDtypeStruct((N, HW, G0), x.dtype),
        grid_spec=pltpu.PrefetchScalarGridSpec(
            num_scalar_prefetch=0,
            grid=(N,),
            in_specs=[
                pl.BlockSpec((1, HW, G0), lambda n: (n, 0, 0)),
                pl.BlockSpec((C, 9 * LANE, LANE), lambda n: (0, 0, 0)),
                pl.BlockSpec((C, 1, LANE), lambda n: (0, 0, 0)),
                pl.BlockSpec((LANE, LANE), lambda n: (0, 0)),
                pl.BlockSpec((1, LANE), lambda n: (0, 0)),
                pl.BlockSpec((LANE, LANE), lambda n: (0, 0)),
                pl.BlockSpec((LANE, LANE), lambda n: (0, 0)),
            ],
            out_specs=pl.BlockSpec((1, HW, G0), lambda n: (n, 0, 0)),
            scratch_shapes=[pltpu.VMEM((R, LANE), jnp.bfloat16)],
        ),
        compiler_params=pltpu.CompilerParams(
            dimension_semantics=("parallel",)),
    )(xp, wconv, packed["bconv"], packed["wlff"], packed["blff"],
      packed["w1"], packed["w2"])

    return out.reshape(N, H, W, G0)


# ----------------------------------------------------------------------------
# Pure-JAX reference (f32) for correctness check only.
# ----------------------------------------------------------------------------
def rdb_reference(x, params):
    feat = x
    for (w, b) in params["convs"]:
        y = jax.lax.conv_general_dilated(
            feat, w, window_strides=(1, 1), padding="SAME",
            dimension_numbers=("NHWC", "HWIO", "NHWC"))
        feat = jnp.concatenate([feat, jax.nn.relu(y + b)], axis=-1)
    y = jnp.einsum("nhwc,cf->nhwf", feat, params["lff_w"]) + params["lff_b"]
    avg = jnp.mean(y, axis=(1, 2))                                   # (N, G0)
    h = jax.nn.relu(avg @ params["se_w1"])
    s = jax.nn.sigmoid(h @ params["se_w2"])                          # (N, G0)
    return y * s[:, None, None, :] + x


def make_params(key, grow_rate0, grow_rate, n_conv_layers, reduction=16):
    G0, G, C = grow_rate0, grow_rate, n_conv_layers
    Gr = G0 // reduction
    keys = jax.random.split(key, 2 * C + 4)
    convs = []
    for c in range(C):
        cin = G0 + c * G
        w = jax.random.normal(keys[2 * c], (3, 3, cin, G), jnp.float32) * 0.05
        b = jax.random.normal(keys[2 * c + 1], (G,), jnp.float32) * 0.05
        convs.append((w, b))
    ct = G0 + C * G
    lff_w = jax.random.normal(keys[2 * C], (ct, G0), jnp.float32) * 0.05
    lff_b = jax.random.normal(keys[2 * C + 1], (G0,), jnp.float32) * 0.05
    se_w1 = jax.random.normal(keys[2 * C + 2], (G0, Gr), jnp.float32) * 0.2
    se_w2 = jax.random.normal(keys[2 * C + 3], (Gr, G0), jnp.float32) * 0.2
    return {"convs": convs, "lff_w": lff_w, "lff_b": lff_b,
            "se_w1": se_w1, "se_w2": se_w2}


if __name__ == "__main__":
    # Small config consistent with the module: G0=32 (so G0//16 >= 1), G=16,
    # C=3.  NHWC here; the equivalent PyTorch input is NCHW (2, 32, 16, 16).
    N, H, W = 2, 16, 16
    G0, G, C = 32, 16, 3

    key = jax.random.PRNGKey(0)
    k_x, k_p = jax.random.split(key)
    x = jax.random.normal(k_x, (N, H, W, G0), jnp.float32)
    params = make_params(k_p, G0, G, C)

    packed = jax.tree_util.tree_map(jax.block_until_ready,
                                    pack_rdb_params(params))  # one-time prep

    out = jax.block_until_ready(rdb_forward(x, packed))
    ref = jax.block_until_ready(rdb_reference(x, params))

    # bf16 MXU operands with f32 accumulation -> loosened tolerance vs f32 ref.
    np.testing.assert_allclose(np.asarray(out), np.asarray(ref),
                               rtol=2e-2, atol=2e-2)
    print("KERNEL_OK")
</pallas_src>

<mosaic_0001>
module attributes {stable_mosaic.version = 11 : i64} {
  func.func @_rdb_fused_kernel(%arg0: i32, %arg1: memref<1x256x32xf32, #tpu.memory_space<vmem>>, %arg2: memref<3x1152x128xbf16, #tpu.memory_space<vmem>>, %arg3: memref<3x1x128xf32, #tpu.memory_space<vmem>>, %arg4: memref<128x128xbf16, #tpu.memory_space<vmem>>, %arg5: memref<1x128xf32, #tpu.memory_space<vmem>>, %arg6: memref<128x128xf32, #tpu.memory_space<vmem>>, %arg7: memref<128x128xf32, #tpu.memory_space<vmem>>, %arg8: memref<1x256x32xf32, #tpu.memory_space<vmem>>, %arg9: memref<320x128xbf16, #tpu.memory_space<vmem>>) attributes {dimension_semantics = [#tpu.dimension_semantics<parallel>], iteration_bounds = array<i64: 2>, scalar_prefetch = 0 : i64, scratch_operands = 1 : i64, tpu.core_type = #tpu.core_type<tc>, window_params = [{transform_indices = @transform_0, window_bounds = array<i64: 1, 256, 32>}, {pipeline_mode = #tpu.pipeline_mode<synchronous>, transform_indices = @transform_1, window_bounds = array<i64: 3, 1152, 128>}, {pipeline_mode = #tpu.pipeline_mode<synchronous>, transform_indices = @transform_2, window_bounds = array<i64: 3, 1, 128>}, {pipeline_mode = #tpu.pipeline_mode<synchronous>, transform_indices = @transform_3, window_bounds = array<i64: 128, 128>}, {pipeline_mode = #tpu.pipeline_mode<synchronous>, transform_indices = @transform_4, window_bounds = array<i64: 1, 128>}, {pipeline_mode = #tpu.pipeline_mode<synchronous>, transform_indices = @transform_5, window_bounds = array<i64: 128, 128>}, {pipeline_mode = #tpu.pipeline_mode<synchronous>, transform_indices = @transform_6, window_bounds = array<i64: 128, 128>}, {transform_indices = @transform_7, window_bounds = array<i64: 1, 256, 32>}]} {
    %cst = arith.constant 0.000000e+00 : bf16
    %0 = vector.broadcast %cst : bf16 to vector<320x128xbf16>
    %c0 = arith.constant 0 : index
    %c0_0 = arith.constant 0 : index
    %1 = vector.load %arg9[%c0, %c0_0] : memref<320x128xbf16, #tpu.memory_space<vmem>>, vector<320x128xbf16>
    tpu.vector_store %arg9[%c0, %c0_0], %0 {strides = array<i32>} : memref<320x128xbf16, #tpu.memory_space<vmem>>, vector<320x128xbf16>,
    %c0_1 = arith.constant 0 : index
    %c0_2 = arith.constant 0 : index
    %c0_3 = arith.constant 0 : index
    %2 = vector.load %arg1[%c0_1, %c0_2, %c0_3] : memref<1x256x32xf32, #tpu.memory_space<vmem>>, vector<1x256x32xf32>
    %3 = vector.shape_cast %2 : vector<1x256x32xf32> to vector<256x32xf32>
    %4 = arith.truncf %3 : vector<256x32xf32> to vector<256x32xbf16>
    %c32 = arith.constant 32 : index
    %c0_4 = arith.constant 0 : index
    %5 = vector.load %arg9[%c32, %c0_4] : memref<320x128xbf16, #tpu.memory_space<vmem>>, vector<256x32xbf16>
    tpu.vector_store %arg9[%c32, %c0_4], %4 {strides = array<i32>} : memref<320x128xbf16, #tpu.memory_space<vmem>>, vector<256x32xbf16>,
    %6 = tpu.iota {dimensions = array<i32: 1>} : vector<16x16x128xi32>
    %7 = vector.shape_cast %6 : vector<16x16x128xi32> to vector<256x128xi32>
    %c0_i32 = arith.constant 0 : i32
    %8 = vector.broadcast %c0_i32 : i32 to vector<256x128xi32>
    %9 = arith.cmpi sgt, %7, %8 : vector<256x128xi32>
    %c15_i32 = arith.constant 15 : i32
    %10 = vector.broadcast %c15_i32 : i32 to vector<256x128xi32>
    %11 = arith.cmpi slt, %7, %10 : vector<256x128xi32>
    %cst_5 = arith.constant 0.000000e+00 : bf16
    %12 = vector.broadcast %cst_5 : bf16 to vector<256x128xbf16>
    %c15 = arith.constant 15 : index
    %c0_6 = arith.constant 0 : index
    %13 = vector.load %arg9[%c15, %c0_6] : memref<320x128xbf16, #tpu.memory_space<vmem>>, vector<256x128xbf16>
    %14 = arith.select %9, %13, %12 : vector<256x128xi1>, vector<256x128xbf16>
    %c16 = arith.constant 16 : index
    %c0_7 = arith.constant 0 : index
    %15 = vector.load %arg9[%c16, %c0_7] : memref<320x128xbf16, #tpu.memory_space<vmem>>, vector<256x128xbf16>
    %16 = tpu.concatenate %14, %15 in 1 : vector<256x128xbf16>, vector<256x128xbf16> -> vector<256x256xbf16>
    %c0_8 = arith.constant 0 : index
    %c0_9 = arith.constant 0 : index
    %c0_10 = arith.constant 0 : index
    %17 = vector.load %arg2[%c0_8, %c0_9, %c0_10] : memref<3x1152x128xbf16, #tpu.memory_space<vmem>>, vector<1x256x128xbf16>
    %18 = vector.shape_cast %17 : vector<1x256x128xbf16> to vector<256x128xbf16>
    %cst_11 = arith.constant dense<0.000000e+00> : vector<256x128xf32>
    %19 = tpu.matmul %16, %18, %cst_11 {dimension_numbers = #tpu.dot_dimension_numbers<[1], [0], [0], [1], [0, 0, 1, 1], [], []>} : vector<256x256xbf16>, vector<256x128xbf16>, vector<256x128xf32> -> vector<256x128xf32>
    %c17 = arith.constant 17 : index
    %c0_12 = arith.constant 0 : index
    %20 = vector.load %arg9[%c17, %c0_12] : memref<320x128xbf16, #tpu.memory_space<vmem>>, vector<256x128xbf16>
    %21 = arith.select %11, %20, %12 : vector<256x128xi1>, vector<256x128xbf16>
    %c31 = arith.constant 31 : index
    %c0_13 = arith.constant 0 : index
    %22 = vector.load %arg9[%c31, %c0_13] : memref<320x128xbf16, #tpu.memory_space<vmem>>, vector<256x128xbf16>
    %23 = arith.select %9, %22, %12 : vector<256x128xi1>, vector<256x128xbf16>
    %24 = tpu.concatenate %21, %23 in 1 : vector<256x128xbf16>, vector<256x128xbf16> -> vector<256x256xbf16>
    %c0_14 = arith.constant 0 : index
    %c256 = arith.constant 256 : index
    %c0_15 = arith.constant 0 : index
    %25 = vector.load %arg2[%c0_14, %c256, %c0_15] : memref<3x1152x128xbf16, #tpu.memory_space<vmem>>, vector<1x256x128xbf16>
    %26 = vector.shape_cast %25 : vector<1x256x128xbf16> to vector<256x128xbf16>
    %cst_16 = arith.constant dense<0.000000e+00> : vector<256x128xf32>
    %27 = tpu.matmul %24, %26, %cst_16 {dimension_numbers = #tpu.dot_dimension_numbers<[1], [0], [0], [1], [0, 0, 1, 1], [], []>} : vector<256x256xbf16>, vector<256x128xbf16>, vector<256x128xf32> -> vector<256x128xf32>
    %28 = arith.addf %19, %27 : vector<256x128xf32>
    %c32_17 = arith.constant 32 : index
    %c0_18 = arith.constant 0 : index
    %29 = vector.load %arg9[%c32_17, %c0_18] : memref<320x128xbf16, #tpu.memory_space<vmem>>, vector<256x128xbf16>
    %c33 = arith.constant 33 : index
    %c0_19 = arith.constant 0 : index
    %30 = vector.load %arg9[%c33, %c0_19] : memref<320x128xbf16, #tpu.memory_space<vmem>>, vector<256x128xbf16>
    %31 = arith.select %11, %30, %12 : vector<256x128xi1>, vector<256x128xbf16>
    %32 = tpu.concatenate %29, %31 in 1 : vector<256x128xbf16>, vector<256x128xbf16> -> vector<256x256xbf16>
    %c0_20 = arith.constant 0 : index
    %c512 = arith.constant 512 : index
    %c0_21 = arith.constant 0 : index
    %33 = vector.load %arg2[%c0_20, %c512, %c0_21] : memref<3x1152x128xbf16, #tpu.memory_space<vmem>>, vector<1x256x128xbf16>
    %34 = vector.shape_cast %33 : vector<1x256x128xbf16> to vector<256x128xbf16>
    %cst_22 = arith.constant dense<0.000000e+00> : vector<256x128xf32>
    %35 = tpu.matmul %32, %34, %cst_22 {dimension_numbers = #tpu.dot_dimension_numbers<[1], [0], [0], [1], [0, 0, 1, 1], [], []>} : vector<256x256xbf16>, vector<256x128xbf16>, vector<256x128xf32> -> vector<256x128xf32>
    %36 = arith.addf %28, %35 : vector<256x128xf32>
    %c47 = arith.constant 47 : index
    %c0_23 = arith.constant 0 : index
    %37 = vector.load %arg9[%c47, %c0_23] : memref<320x128xbf16, #tpu.memory_space<vmem>>, vector<256x128xbf16>
    %38 = arith.select %9, %37, %12 : vector<256x128xi1>, vector<256x128xbf16>
    %c48 = arith.constant 48 : index
    %c0_24 = arith.constant 0 : index
    %39 = vector.load %arg9[%c48, %c0_24] : memref<320x128xbf16, #tpu.memory_space<vmem>>, vector<256x128xbf16>
    %40 = tpu.concatenate %38, %39 in 1 : vector<256x128xbf16>, vector<256x128xbf16> -> vector<256x256xbf16>
    %c0_25 = arith.constant 0 : index
    %c768 = arith.constant 768 : index
    %c0_26 = arith.constant 0 : index
    %41 = vector.load %arg2[%c0_25, %c768, %c0_26] : memref<3x1152x128xbf16, #tpu.memory_space<vmem>>, vector<1x256x128xbf16>
    %42 = vector.shape_cast %41 : vector<1x256x128xbf16> to vector<256x128xbf16>
    %cst_27 = arith.constant dense<0.000000e+00> : vector<256x128xf32>
    %43 = tpu.matmul %40, %42, %cst_27 {dimension_numbers = #tpu.dot_dimension_numbers<[1], [0], [0], [1], [0, 0, 1, 1], [], []>} : vector<256x256xbf16>, vector<256x128xbf16>, vector<256x128xf32> -> vector<256x128xf32>
    %44 = arith.addf %36, %43 : vector<256x128xf32>
    %c49 = arith.constant 49 : index
    %c0_28 = arith.constant 0 : index
    %45 = vector.load %arg9[%c49, %c0_28] : memref<320x128xbf16, #tpu.memory_space<vmem>>, vector<256x128xbf16>
    %46 = arith.select %11, %45, %12 : vector<256x128xi1>, vector<256x128xbf16>
    %c0_29 = arith.constant 0 : index
    %c1024 = arith.constant 1024 : index
    %c0_30 = arith.constant 0 : index
    %47 = vector.load %arg2[%c0_29, %c1024, %c0_30] : memref<3x1152x128xbf16, #tpu.memory_space<vmem>>, vector<1x128x128xbf16>
    %48 = vector.shape_cast %47 : vector<1x128x128xbf16> to vector<128x128xbf16>
    %cst_31 = arith.constant dense<0.000000e+00> : vector<256x128xf32>
    %49 = tpu.matmul %46, %48, %cst_31 {dimension_numbers = #tpu.dot_dimension_numbers<[1], [0], [0], [1], [0, 0, 1, 1], [], []>} : vector<256x128xbf16>, vector<128x128xbf16>, vector<256x128xf32> -> vector<256x128xf32>
    %50 = arith.addf %44, %49 : vector<256x128xf32>
    %c0_32 = arith.constant 0 : index
    %c0_33 = arith.constant 0 : index
    %c0_34 = arith.constant 0 : index
    %51 = vector.load %arg3[%c0_32, %c0_33, %c0_34] : memref<3x1x128xf32, #tpu.memory_space<vmem>>, vector<1x1x128xf32>
    %52 = vector.shape_cast %51 : vector<1x1x128xf32> to vector<1x128xf32>
    %53 = vector.broadcast %52 : vector<1x128xf32> to vector<256x128xf32>
    %54 = arith.addf %50, %53 : vector<256x128xf32>
    %cst_35 = arith.constant 0.000000e+00 : f32
    %55 = vector.broadcast %cst_35 : f32 to vector<256x128xf32>
    %56 = arith.maximumf %54, %55 : vector<256x128xf32>
    %c32_36 = arith.constant 32 : index
    %c0_37 = arith.constant 0 : index
    %57 = vector.load %arg9[%c32_36, %c0_37] : memref<320x128xbf16, #tpu.memory_space<vmem>>, vector<256x128xbf16>
    %58 = arith.truncf %56 : vector<256x128xf32> to vector<256x128xbf16>
    %59 = arith.addf %57, %58 : vector<256x128xbf16>
    %c32_38 = arith.constant 32 : index
    %c0_39 = arith.constant 0 : index
    %60 = vector.load %arg9[%c32_38, %c0_39] : memref<320x128xbf16, #tpu.memory_space<vmem>>, vector<256x128xbf16>
    tpu.vector_store %arg9[%c32_38, %c0_39], %59 {strides = array<i32>} : memref<320x128xbf16, #tpu.memory_space<vmem>>, vector<256x128xbf16>,
    %c15_40 = arith.constant 15 : index
    %c0_41 = arith.constant 0 : index
    %61 = vector.load %arg9[%c15_40, %c0_41] : memref<320x128xbf16, #tpu.memory_space<vmem>>, vector<256x128xbf16>
    %62 = arith.select %9, %61, %12 : vector<256x128xi1>, vector<256x128xbf16>
    %c16_42 = arith.constant 16 : index
    %c0_43 = arith.constant 0 : index
    %63 = vector.load %arg9[%c16_42, %c0_43] : memref<320x128xbf16, #tpu.memory_space<vmem>>, vector<256x128xbf16>
    %64 = tpu.concatenate %62, %63 in 1 : vector<256x128xbf16>, vector<256x128xbf16> -> vector<256x256xbf16>
    %c1 = arith.constant 1 : index
    %c0_44 = arith.constant 0 : index
    %c0_45 = arith.constant 0 : index
    %65 = vector.load %arg2[%c1, %c0_44, %c0_45] : memref<3x1152x128xbf16, #tpu.memory_space<vmem>>, vector<1x256x128xbf16>
    %66 = vector.shape_cast %65 : vector<1x256x128xbf16> to vector<256x128xbf16>
    %cst_46 = arith.constant dense<0.000000e+00> : vector<256x128xf32>
    %67 = tpu.matmul %64, %66, %cst_46 {dimension_numbers = #tpu.dot_dimension_numbers<[1], [0], [0], [1], [0, 0, 1, 1], [], []>} : vector<256x256xbf16>, vector<256x128xbf16>, vector<256x128xf32> -> vector<256x128xf32>
    %c17_47 = arith.constant 17 : index
    %c0_48 = arith.constant 0 : index
    %68 = vector.load %arg9[%c17_47, %c0_48] : memref<320x128xbf16, #tpu.memory_space<vmem>>, vector<256x128xbf16>
    %69 = arith.select %11, %68, %12 : vector<256x128xi1>, vector<256x128xbf16>
    %c31_49 = arith.constant 31 : index
    %c0_50 = arith.constant 0 : index
    %70 = vector.load %arg9[%c31_49, %c0_50] : memref<320x128xbf16, #tpu.memory_space<vmem>>, vector<256x128xbf16>
    %71 = arith.select %9, %70, %12 : vector<256x128xi1>, vector<256x128xbf16>
    %72 = tpu.concatenate %69, %71 in 1 : vector<256x128xbf16>, vector<256x128xbf16> -> vector<256x256xbf16>
    %c1_51 = arith.constant 1 : index
    %c256_52 = arith.constant 256 : index
    %c0_53 = arith.constant 0 : index
    %73 = vector.load %arg2[%c1_51, %c256_52, %c0_53] : memref<3x1152x128xbf16, #tpu.memory_space<vmem>>, vector<1x256x128xbf16>
    %74 = vector.shape_cast %73 : vector<1x256x128xbf16> to vector<256x128xbf16>
    %cst_54 = arith.constant dense<0.000000e+00> : vector<256x128xf32>
    %75 = tpu.matmul %72, %74, %cst_54 {dimension_numbers = #tpu.dot_dimension_numbers<[1], [0], [0], [1], [0, 0, 1, 1], [], []>} : vector<256x256xbf16>, vector<256x128xbf16>, vector<256x128xf32> -> vector<256x128xf32>
    %76 = arith.addf %67, %75 : vector<256x128xf32>
    %c32_55 = arith.constant 32 : index
    %c0_56 = arith.constant 0 : index
    %77 = vector.load %arg9[%c32_55, %c0_56] : memref<320x128xbf16, #tpu.memory_space<vmem>>, vector<256x128xbf16>
    %c33_57 = arith.constant 33 : index
    %c0_58 = arith.constant 0 : index
    %78 = vector.load %arg9[%c33_57, %c0_58] : memref<320x128xbf16, #tpu.memory_space<vmem>>, vector<256x128xbf16>
    %79 = arith.select %11, %78, %12 : vector<256x128xi1>, vector<256x128xbf16>
    %80 = tpu.concatenate %77, %79 in 1 : vector<256x128xbf16>, vector<256x128xbf16> -> vector<256x256xbf16>
    %c1_59 = arith.constant 1 : index
    %c512_60 = arith.constant 512 : index
    %c0_61 = arith.constant 0 : index
    %81 = vector.load %arg2[%c1_59, %c512_60, %c0_61] : memref<3x1152x128xbf16, #tpu.memory_space<vmem>>, vector<1x256x128xbf16>
    %82 = vector.shape_cast %81 : vector<1x256x128xbf16> to vector<256x128xbf16>
    %cst_62 = arith.constant dense<0.000000e+00> : vector<256x128xf32>
    %83 = tpu.matmul %80, %82, %cst_62 {dimension_numbers = #tpu.dot_dimension_numbers<[1], [0], [0], [1], [0, 0, 1, 1], [], []>} : vector<256x256xbf16>, vector<256x128xbf16>, vector<256x128xf32> -> vector<256x128xf32>
    %84 = arith.addf %76, %83 : vector<256x128xf32>
    %c47_63 = arith.constant 47 : index
    %c0_64 = arith.constant 0 : index
    %85 = vector.load %arg9[%c47_63, %c0_64] : memref<320x128xbf16, #tpu.memory_space<vmem>>, vector<256x128xbf16>
    %86 = arith.select %9, %85, %12 : vector<256x128xi1>, vector<256x128xbf16>
    %c48_65 = arith.constant 48 : index
    %c0_66 = arith.constant 0 : index
    %87 = vector.load %arg9[%c48_65, %c0_66] : memref<320x128xbf16, #tpu.memory_space<vmem>>, vector<256x128xbf16>
    %88 = tpu.concatenate %86, %87 in 1 : vector<256x128xbf16>, vector<256x128xbf16> -> vector<256x256xbf16>
    %c1_67 = arith.constant 1 : index
    %c768_68 = arith.constant 768 : index
    %c0_69 = arith.constant 0 : index
    %89 = vector.load %arg2[%c1_67, %c768_68, %c0_69] : memref<3x1152x128xbf16, #tpu.memory_space<vmem>>, vector<1x256x128xbf16>
    %90 = vector.shape_cast %89 : vector<1x256x128xbf16> to vector<256x128xbf16>
    %cst_70 = arith.constant dense<0.000000e+00> : vector<256x128xf32>
    %91 = tpu.matmul %88, %90, %cst_70 {dimension_numbers = #tpu.dot_dimension_numbers<[1], [0], [0], [1], [0, 0, 1, 1], [], []>} : vector<256x256xbf16>, vector<256x128xbf16>, vector<256x128xf32> -> vector<256x128xf32>
    %92 = arith.addf %84, %91 : vector<256x128xf32>
    %c49_71 = arith.constant 49 : index
    %c0_72 = arith.constant 0 : index
    %93 = vector.load %arg9[%c49_71, %c0_72] : memref<320x128xbf16, #tpu.memory_space<vmem>>, vector<256x128xbf16>
    %94 = arith.select %11, %93, %12 : vector<256x128xi1>, vector<256x128xbf16>
    %c1_73 = arith.constant 1 : index
    %c1024_74 = arith.constant 1024 : index
    %c0_75 = arith.constant 0 : index
    %95 = vector.load %arg2[%c1_73, %c1024_74, %c0_75] : memref<3x1152x128xbf16, #tpu.memory_space<vmem>>, vector<1x128x128xbf16>
    %96 = vector.shape_cast %95 : vector<1x128x128xbf16> to vector<128x128xbf16>
    %cst_76 = arith.constant dense<0.000000e+00> : vector<256x128xf32>
    %97 = tpu.matmul %94, %96, %cst_76 {dimension_numbers = #tpu.dot_dimension_numbers<[1], [0], [0], [1], [0, 0, 1, 1], [], []>} : vector<256x128xbf16>, vector<128x128xbf16>, vector<256x128xf32> -> vector<256x128xf32>
    %98 = arith.addf %92, %97 : vector<256x128xf32>
    %c1_77 = arith.constant 1 : index
    %c0_78 = arith.constant 0 : index
    %c0_79 = arith.constant 0 : index
    %99 = vector.load %arg3[%c1_77, %c0_78, %c0_79] : memref<3x1x128xf32, #tpu.memory_space<vmem>>, vector<1x1x128xf32>
    %100 = vector.shape_cast %99 : vector<1x1x128xf32> to vector<1x128xf32>
    %101 = vector.broadcast %100 : vector<1x128xf32> to vector<256x128xf32>
    %102 = arith.addf %98, %101 : vector<256x128xf32>
    %cst_80 = arith.constant 0.000000e+00 : f32
    %103 = vector.broadcast %cst_80 : f32 to vector<256x128xf32>
    %104 = arith.maximumf %102, %103 : vector<256x128xf32>
    %c32_81 = arith.constant 32 : index
    %c0_82 = arith.constant 0 : index
    %105 = vector.load %arg9[%c32_81, %c0_82] : memref<320x128xbf16, #tpu.memory_space<vmem>>, vector<256x128xbf16>
    %106 = arith.truncf %104 : vector<256x128xf32> to vector<256x128xbf16>
    %107 = arith.addf %105, %106 : vector<256x128xbf16>
    %c32_83 = arith.constant 32 : index
    %c0_84 = arith.constant 0 : index
    %108 = vector.load %arg9[%c32_83, %c0_84] : memref<320x128xbf16, #tpu.memory_space<vmem>>, vector<256x128xbf16>
    tpu.vector_store %arg9[%c32_83, %c0_84], %107 {strides = array<i32>} : memref<320x128xbf16, #tpu.memory_space<vmem>>, vector<256x128xbf16>,
    %c15_85 = arith.constant 15 : index
    %c0_86 = arith.constant 0 : index
    %109 = vector.load %arg9[%c15_85, %c0_86] : memref<320x128xbf16, #tpu.memory_space<vmem>>, vector<256x128xbf16>
    %110 = arith.select %9, %109, %12 : vector<256x128xi1>, vector<256x128xbf16>
    %c16_87 = arith.constant 16 : index
    %c0_88 = arith.constant 0 : index
    %111 = vector.load %arg9[%c16_87, %c0_88] : memref<320x128xbf16, #tpu.memory_space<vmem>>, vector<256x128xbf16>
    %112 = tpu.concatenate %110, %111 in 1 : vector<256x128xbf16>, vector<256x128xbf16> -> vector<256x256xbf16>
    %c2 = arith.constant 2 : index
    %c0_89 = arith.constant 0 : index
    %c0_90 = arith.constant 0 : index
    %113 = vector.load %arg2[%c2, %c0_89, %c0_90] : memref<3x1152x128xbf16, #tpu.memory_space<vmem>>, vector<1x256x128xbf16>
    %114 = vector.shape_cast %113 : vector<1x256x128xbf16> to vector<256x128xbf16>
    %cst_91 = arith.constant dense<0.000000e+00> : vector<256x128xf32>
    %115 = tpu.matmul %112, %114, %cst_91 {dimension_numbers = #tpu.dot_dimension_numbers<[1], [0], [0], [1], [0, 0, 1, 1], [], []>} : vector<256x256xbf16>, vector<256x128xbf16>, vector<256x128xf32> -> vector<256x128xf32>
    %c17_92 = arith.constant 17 : index
    %c0_93 = arith.constant 0 : index
    %116 = vector.load %arg9[%c17_92, %c0_93] : memref<320x128xbf16, #tpu.memory_space<vmem>>, vector<256x128xbf16>
    %117 = arith.select %11, %116, %12 : vector<256x128xi1>, vector<256x128xbf16>
    %c31_94 = arith.constant 31 : index
    %c0_95 = arith.constant 0 : index
    %118 = vector.load %arg9[%c31_94, %c0_95] : memref<320x128xbf16, #tpu.memory_space<vmem>>, vector<256x128xbf16>
    %119 = arith.select %9, %118, %12 : vector<256x128xi1>, vector<256x128xbf16>
    %120 = tpu.concatenate %117, %119 in 1 : vector<256x128xbf16>, vector<256x128xbf16> -> vector<256x256xbf16>
    %c2_96 = arith.constant 2 : index
    %c256_97 = arith.constant 256 : index
    %c0_98 = arith.constant 0 : index
    %121 = vector.load %arg2[%c2_96, %c256_97, %c0_98] : memref<3x1152x128xbf16, #tpu.memory_space<vmem>>, vector<1x256x128xbf16>
    %122 = vector.shape_cast %121 : vector<1x256x128xbf16> to vector<256x128xbf16>
    %cst_99 = arith.constant dense<0.000000e+00> : vector<256x128xf32>
    %123 = tpu.matmul %120, %122, %cst_99 {dimension_numbers = #tpu.dot_dimension_numbers<[1], [0], [0], [1], [0, 0, 1, 1], [], []>} : vector<256x256xbf16>, vector<256x128xbf16>, vector<256x128xf32> -> vector<256x128xf32>
    %124 = arith.addf %115, %123 : vector<256x128xf32>
    %c32_100 = arith.constant 32 : index
    %c0_101 = arith.constant 0 : index
    %125 = vector.load %arg9[%c32_100, %c0_101] : memref<320x128xbf16, #tpu.memory_space<vmem>>, vector<256x128xbf16>
    %c33_102 = arith.constant 33 : index
    %c0_103 = arith.constant 0 : index
    %126 = vector.load %arg9[%c33_102, %c0_103] : memref<320x128xbf16, #tpu.memory_space<vmem>>, vector<256x128xbf16>
    %127 = arith.select %11, %126, %12 : vector<256x128xi1>, vector<256x128xbf16>
    %128 = tpu.concatenate %125, %127 in 1 : vector<256x128xbf16>, vector<256x128xbf16> -> vector<256x256xbf16>
    %c2_104 = arith.constant 2 : index
    %c512_105 = arith.constant 512 : index
    %c0_106 = arith.constant 0 : index
    %129 = vector.load %arg2[%c2_104, %c512_105, %c0_106] : memref<3x1152x128xbf16, #tpu.memory_space<vmem>>, vector<1x256x128xbf16>
    %130 = vector.shape_cast %129 : vector<1x256x128xbf16> to vector<256x128xbf16>
    %cst_107 = arith.constant dense<0.000000e+00> : vector<256x128xf32>
    %131 = tpu.matmul %128, %130, %cst_107 {dimension_numbers = #tpu.dot_dimension_numbers<[1], [0], [0], [1], [0, 0, 1, 1], [], []>} : vector<256x256xbf16>, vector<256x128xbf16>, vector<256x128xf32> -> vector<256x128xf32>
    %132 = arith.addf %124, %131 : vector<256x128xf32>
    %c47_108 = arith.constant 47 : index
    %c0_109 = arith.constant 0 : index
    %133 = vector.load %arg9[%c47_108, %c0_109] : memref<320x128xbf16, #tpu.memory_space<vmem>>, vector<256x128xbf16>
    %134 = arith.select %9, %133, %12 : vector<256x128xi1>, vector<256x128xbf16>
    %c48_110 = arith.constant 48 : index
    %c0_111 = arith.constant 0 : index
    %135 = vector.load %arg9[%c48_110, %c0_111] : memref<320x128xbf16, #tpu.memory_space<vmem>>, vector<256x128xbf16>
    %136 = tpu.concatenate %134, %135 in 1 : vector<256x128xbf16>, vector<256x128xbf16> -> vector<256x256xbf16>
    %c2_112 = arith.constant 2 : index
    %c768_113 = arith.constant 768 : index
    %c0_114 = arith.constant 0 : index
    %137 = vector.load %arg2[%c2_112, %c768_113, %c0_114] : memref<3x1152x128xbf16, #tpu.memory_space<vmem>>, vector<1x256x128xbf16>
    %138 = vector.shape_cast %137 : vector<1x256x128xbf16> to vector<256x128xbf16>
    %cst_115 = arith.constant dense<0.000000e+00> : vector<256x128xf32>
    %139 = tpu.matmul %136, %138, %cst_115 {dimension_numbers = #tpu.dot_dimension_numbers<[1], [0], [0], [1], [0, 0, 1, 1], [], []>} : vector<256x256xbf16>, vector<256x128xbf16>, vector<256x128xf32> -> vector<256x128xf32>
    %140 = arith.addf %132, %139 : vector<256x128xf32>
    %c49_116 = arith.constant 49 : index
    %c0_117 = arith.constant 0 : index
    %141 = vector.load %arg9[%c49_116, %c0_117] : memref<320x128xbf16, #tpu.memory_space<vmem>>, vector<256x128xbf16>
    %142 = arith.select %11, %141, %12 : vector<256x128xi1>, vector<256x128xbf16>
    %c2_118 = arith.constant 2 : index
    %c1024_119 = arith.constant 1024 : index
    %c0_120 = arith.constant 0 : index
    %143 = vector.load %arg2[%c2_118, %c1024_119, %c0_120] : memref<3x1152x128xbf16, #tpu.memory_space<vmem>>, vector<1x128x128xbf16>
    %144 = vector.shape_cast %143 : vector<1x128x128xbf16> to vector<128x128xbf16>
    %cst_121 = arith.constant dense<0.000000e+00> : vector<256x128xf32>
    %145 = tpu.matmul %142, %144, %cst_121 {dimension_numbers = #tpu.dot_dimension_numbers<[1], [0], [0], [1], [0, 0, 1, 1], [], []>} : vector<256x128xbf16>, vector<128x128xbf16>, vector<256x128xf32> -> vector<256x128xf32>
    %146 = arith.addf %140, %145 : vector<256x128xf32>
    %c2_122 = arith.constant 2 : index
    %c0_123 = arith.constant 0 : index
    %c0_124 = arith.constant 0 : index
    %147 = vector.load %arg3[%c2_122, %c0_123, %c0_124] : memref<3x1x128xf32, #tpu.memory_space<vmem>>, vector<1x1x128xf32>
    %148 = vector.shape_cast %147 : vector<1x1x128xf32> to vector<1x128xf32>
    %149 = vector.broadcast %148 : vector<1x128xf32> to vector<256x128xf32>
    %150 = arith.addf %146, %149 : vector<256x128xf32>
    %cst_125 = arith.constant 0.000000e+00 : f32
    %151 = vector.broadcast %cst_125 : f32 to vector<256x128xf32>
    %152 = arith.maximumf %150, %151 : vector<256x128xf32>
    %c32_126 = arith.constant 32 : index
    %c0_127 = arith.constant 0 : index
    %153 = vector.load %arg9[%c32_126, %c0_127] : memref<320x128xbf16, #tpu.memory_space<vmem>>, vector<256x128xbf16>
    %154 = arith.truncf %152 : vector<256x128xf32> to vector<256x128xbf16>
    %155 = arith.addf %153, %154 : vector<256x128xbf16>
    %c32_128 = arith.constant 32 : index
    %c0_129 = arith.constant 0 : index
    %156 = vector.load %arg9[%c32_128, %c0_129] : memref<320x128xbf16, #tpu.memory_space<vmem>>, vector<256x128xbf16>
    tpu.vector_store %arg9[%c32_128, %c0_129], %155 {strides = array<i32>} : memref<320x128xbf16, #tpu.memory_space<vmem>>, vector<256x128xbf16>,
    %c32_130 = arith.constant 32 : index
    %c0_131 = arith.constant 0 : index
    %157 = vector.load %arg9[%c32_130, %c0_131] : memref<320x128xbf16, #tpu.memory_space<vmem>>, vector<256x128xbf16>
    %c0_132 = arith.constant 0 : index
    %c0_133 = arith.constant 0 : index
    %158 = vector.load %arg4[%c0_132, %c0_133] : memref<128x128xbf16, #tpu.memory_space<vmem>>, vector<128x128xbf16>
    %cst_134 = arith.constant dense<0.000000e+00> : vector<256x128xf32>
    %159 = tpu.matmul %157, %158, %cst_134 {dimension_numbers = #tpu.dot_dimension_numbers<[1], [0], [0], [1], [0, 0, 1, 1], [], []>} : vector<256x128xbf16>, vector<128x128xbf16>, vector<256x128xf32> -> vector<256x128xf32>
    %c0_135 = arith.constant 0 : index
    %c0_136 = arith.constant 0 : index
    %160 = vector.load %arg5[%c0_135, %c0_136] : memref<1x128xf32, #tpu.memory_space<vmem>>, vector<1x128xf32>
    %161 = vector.broadcast %160 : vector<1x128xf32> to vector<256x128xf32>
    %162 = arith.addf %159, %161 : vector<256x128xf32>
    %cst_137 = arith.constant dense<0.000000e+00> : vector<128xf32>
    %163 = vector.multi_reduction <add>, %162, %cst_137 [0] : vector<256x128xf32> to vector<128xf32>
    %164 = vector.shape_cast %163 : vector<128xf32> to vector<1x128xf32>
    %cst_138 = arith.constant 3.906250e-03 : f32
    %165 = vector.broadcast %cst_138 : f32 to vector<1x128xf32>
    %166 = arith.mulf %164, %165 : vector<1x128xf32>
    %c0_139 = arith.constant 0 : index
    %c0_140 = arith.constant 0 : index
    %167 = vector.load %arg6[%c0_139, %c0_140] : memref<128x128xf32, #tpu.memory_space<vmem>>, vector<128x128xf32>
    %cst_141 = arith.constant dense<0.000000e+00> : vector<1x128xf32>
    %168 = tpu.matmul %166, %167, %cst_141 {dimension_numbers = #tpu.dot_dimension_numbers<[1], [0], [0], [1], [0, 0, 1, 1], [], []>} : vector<1x128xf32>, vector<128x128xf32>, vector<1x128xf32> -> vector<1x128xf32>
    %cst_142 = arith.constant 0.000000e+00 : f32
    %169 = vector.broadcast %cst_142 : f32 to vector<1x128xf32>
    %170 = arith.maximumf %168, %169 : vector<1x128xf32>
    %c0_143 = arith.constant 0 : index
    %c0_144 = arith.constant 0 : index
    %171 = vector.load %arg7[%c0_143, %c0_144] : memref<128x128xf32, #tpu.memory_space<vmem>>, vector<128x128xf32>
    %cst_145 = arith.constant dense<0.000000e+00> : vector<1x128xf32>
    %172 = tpu.matmul %170, %171, %cst_145 {dimension_numbers = #tpu.dot_dimension_numbers<[1], [0], [0], [1], [0, 0, 1, 1], [], []>} : vector<1x128xf32>, vector<128x128xf32>, vector<1x128xf32> -> vector<1x128xf32>
    %173 = arith.negf %172 : vector<1x128xf32>
    %174 = math.exp %173 : vector<1x128xf32>
    %cst_146 = arith.constant 1.000000e+00 : f32
    %175 = vector.broadcast %cst_146 : f32 to vector<1x128xf32>
    %176 = arith.addf %175, %174 : vector<1x128xf32>
    %177 = arith.divf %175, %176 : vector<1x128xf32>
    %178 = vector.broadcast %177 : vector<1x128xf32> to vector<256x128xf32>
    %179 = arith.mulf %162, %178 : vector<256x128xf32>
    %180 = vector.extract_strided_slice %179 {offsets = [0, 0], sizes = [256, 32], strides = [1, 1]} : vector<256x128xf32> to vector<256x32xf32>
    %c0_147 = arith.constant 0 : index
    %c0_148 = arith.constant 0 : index
    %c0_149 = arith.constant 0 : index
    %181 = vector.load %arg1[%c0_147, %c0_148, %c0_149] : memref<1x256x32xf32, #tpu.memory_space<vmem>>, vector<1x256x32xf32>
    %182 = vector.shape_cast %181 : vector<1x256x32xf32> to vector<256x32xf32>
    %183 = arith.addf %180, %182 : vector<256x32xf32>
    %c0_150 = arith.constant 0 : index
    %c0_151 = arith.constant 0 : index
    %c0_152 = arith.constant 0 : index
    %184 = vector.load %arg8[%c0_150, %c0_151, %c0_152] : memref<1x256x32xf32, #tpu.memory_space<vmem>>, vector<1x256x32xf32>
    %185 = vector.shape_cast %184 : vector<1x256x32xf32> to vector<256x32xf32>
    %186 = vector.shape_cast %183 : vector<256x32xf32> to vector<1x256x32xf32>
    tpu.vector_store %arg8[%c0_150, %c0_151, %c0_152], %186 {strides = array<i32>} : memref<1x256x32xf32, #tpu.memory_space<vmem>>, vector<1x256x32xf32>,
    return
  }
  func.func @transform_0(%arg0: i32) -> (i32, i32, i32) {
    %c0_i32 = arith.constant 0 : i32
    %c0_i32_0 = arith.constant 0 : i32
    %c0_i32_1 = arith.constant 0 : i32
    return %arg0, %c0_i32, %c0_i32_0 : i32, i32, i32
  }
  func.func @transform_1(%arg0: i32) -> (i32, i32, i32) {
    %c0_i32 = arith.constant 0 : i32
    %c0_i32_0 = arith.constant 0 : i32
    %c0_i32_1 = arith.constant 0 : i32
    %c0_i32_2 = arith.constant 0 : i32
    return %c0_i32, %c0_i32_0, %c0_i32_1 : i32, i32, i32
  }
  func.func @transform_2(%arg0: i32) -> (i32, i32, i32) {
    %c0_i32 = arith.constant 0 : i32
    %c0_i32_0 = arith.constant 0 : i32
    %c0_i32_1 = arith.constant 0 : i32
    %c0_i32_2 = arith.constant 0 : i32
    return %c0_i32, %c0_i32_0, %c0_i32_1 : i32, i32, i32
  }
  func.func @transform_3(%arg0: i32) -> (i32, i32) {
    %c0_i32 = arith.constant 0 : i32
    %c0_i32_0 = arith.constant 0 : i32
    %c0_i32_1 = arith.constant 0 : i32
    return %c0_i32, %c0_i32_0 : i32, i32
  }
  func.func @transform_4(%arg0: i32) -> (i32, i32) {
    %c0_i32 = arith.constant 0 : i32
    %c0_i32_0 = arith.constant 0 : i32
    %c0_i32_1 = arith.constant 0 : i32
    return %c0_i32, %c0_i32_0 : i32, i32
  }
  func.func @transform_5(%arg0: i32) -> (i32, i32) {
    %c0_i32 = arith.constant 0 : i32
    %c0_i32_0 = arith.constant 0 : i32
    %c0_i32_1 = arith.constant 0 : i32
    return %c0_i32, %c0_i32_0 : i32, i32
  }
  func.func @transform_6(%arg0: i32) -> (i32, i32) {
    %c0_i32 = arith.constant 0 : i32
    %c0_i32_0 = arith.constant 0 : i32
    %c0_i32_1 = arith.constant 0 : i32
    return %c0_i32, %c0_i32_0 : i32, i32
  }
  func.func @transform_7(%arg0: i32) -> (i32, i32, i32) {
    %c0_i32 = arith.constant 0 : i32
    %c0_i32_0 = arith.constant 0 : i32
    %c0_i32_1 = arith.constant 0 : i32
    return %arg0, %c0_i32, %c0_i32_0 : i32, i32, i32
  }
}

</mosaic_0001>

<llo_original>
// kernel: rdb_forward.1
$region0: #{rdb_forward.1}
  #allocation0 [shape = 'u32[]', space=smem, size = 0x4, offset = 0x4, fixed_abs, tag = 'smem constant byte address 0x4 - core index']
  #allocation1 [shape = 'u32[144,128]{1,0:T(1,128)}', space=vmem, size = 0x12000, scoped, tag = 'internal scratch']
  #allocation2 [shape = 'bf16[320,128]{1,0:T(16,128)(2,1)}', space=vmem, size = 0x14000, scoped, tag = 'scratch operand']
  %s0 = inlined_call_operand.hbm [shape: f32[2,256,32], index: 0, kind: input, shape index: {}]
  %s1 = inlined_call_operand.hbm [shape: bf16[3,1152,128], index: 1, kind: input, shape index: {}]
  %s2 = inlined_call_operand.vmem [shape: f32[3,1,128], index: 2, kind: input, shape index: {}]
  %s3 = inlined_call_operand.hbm [shape: bf16[128,128], index: 3, kind: input, shape index: {}]
  %s4 = inlined_call_operand.vmem [shape: f32[1,128], index: 4, kind: input, shape index: {}]
  %s5 = inlined_call_operand.hbm [shape: f32[128,128], index: 5, kind: input, shape index: {}]
  %s6 = inlined_call_operand.hbm [shape: f32[128,128], index: 6, kind: input, shape index: {}]
  %s7 = inlined_call_operand.hbm [shape: f32[2,256,32], index: 7, kind: output, shape index: {}]
  %s8 = sld [smem:[#allocation0]]
  $region81: #{rdb_forward.1} parent=0
    _
  %s10 = ssub.s32 1, %s8
  %s11 = scalar_select 0, %s10, %s8
  $region1: #{rdb_forward.1} parent=0
    #allocation3 [shape = 'u8[262144]{0}', space=vmem, size = 0x40000, scoped, tag = 'input window, operand 0']
    #allocation4 [shape = 's32[2]{0}', space=sflag, size = 0x8, scoped, tag = 'scoped memory for rdb_forward.1']
    #allocation5 [shape = 's32[2]{0}', space=sflag, size = 0x8, scoped, tag = 'scoped memory for rdb_forward.1']
    #allocation6 [shape = 'u8[884736]{0}', space=vmem, size = 0xd8000, scoped, tag = 'input window, operand 1, single buffered']
    #allocation7 [shape = 's32[1]{0}', space=sflag, size = 0x4, scoped, tag = 'scoped memory for rdb_forward.1']
    #allocation8 [shape = 'u8[32768]{0}', space=vmem, size = 0x8000, scoped, tag = 'input window, operand 3, single buffered']
    #allocation9 [shape = 'u8[65536]{0}', space=vmem, size = 0x10000, scoped, tag = 'input window, operand 5, single buffered']
    #allocation10 [shape = 's32[1]{0}', space=sflag, size = 0x4, scoped, tag = 'scoped memory for rdb_forward.1']
    #allocation11 [shape = 'u8[65536]{0}', space=vmem, size = 0x10000, scoped, tag = 'input window, operand 6, single buffered']
    #allocation12 [shape = 'u8[262144]{0}', space=vmem, size = 0x40000, scoped, tag = 'output window, operand 0']
    %12 = vsyncpa [#allocation4], 0
    %s13 = scalar_lea.sflag [#allocation4], 1
    %14 = vsyncpa %s13, 0
    %15 = vsyncpa [#allocation7], 0
    %16 = vsyncpa [#allocation10], 0
    %17 = vsyncpa [#allocation5], 0
    %s18 = scalar_lea.sflag [#allocation5], 1
    %19 = vsyncpa %s18, 0
    loop: start=0, step=1, limit=4
    $region2: #{rdb_forward.1} parent=1 // loop_pre_header
      _
    $region3: #{rdb_forward.1} parent=1 // loop_header
      %s21 = sphi 0, %s25
      %p22 = scmp.ge.s32.totalorder %s21, 4
      %s31 = sphi 0, %s33
      %s34 = sphi 0, %s31
      %s35 = sphi 0, %s34
      %s51 = sphi 0, %s35
      %s55 = sphi 0, %s55
      %s57 = sphi 0, %s55
      %s58 = sphi 0, %s57
      %s72 = sphi 0, %s58
      %s76 = sphi 0, %s76
      %s78 = sphi 0, %s76
      %s79 = sphi 0, %s78
      %s93 = sphi 0, %s79
      %s97 = sphi 0, %s97
      %s99 = sphi 0, %s97
      %s100 = sphi 0, %s99
      %s114 = sphi 0, %s100
      %s118 = sphi 0, %s118
      %s120 = sphi 0, %s118
      %s121 = sphi 0, %s120
      %s135 = sphi 0, %s121
      %s139 = sphi 0, %s139
      %s141 = sphi 0, %s139
      %s142 = sphi 0, %s141
      %s156 = sphi 0, %s142
      %s160 = sphi 0, %s160
      %s162 = sphi 0, %s160
      %s163 = sphi 0, %s162
      %s177 = sphi 0, %s163
      %s183 = sphi 0, %s185
      %s186 = sphi 0, %s183
      %s187 = sphi 0, %s186
      %s203 = sphi 0, %s187
    $region4: #{rdb_forward.1} parent=1 // loop_header_branch
      %24 = sbr.rel (%p22) target = $region8
    $region5: #{rdb_forward.1} parent=1 // loop_body
      %s26 = ssub.s32 %s21, 1
      %s27 = ssub.s32 %s21, 2
      %s28 = sadd.s32 %s21, 1
      %s29 = ssub.s32 %s21, %s28
      %p30 = scmp.eq.s32.totalorder %s29, 0
      %s32 = sadd.s32 %s31, 1
      %s33 = scalar_select %p30, %s31, %s32
      %p36 = pneg %p30
      %p37 = scmp.eq.s32.totalorder %s21, 1
      %p38 = por %p36, %p37
      %p39 = scmp.ne.s32.totalorder %s31, %s34
      %p40 = scmp.eq.s32.totalorder %s21, 0
      %p41 = por %p39, %p40
      %p42 = scmp.ne.s32.totalorder %s31, %s34
      %p43 = scmp.eq.s32.totalorder %s26, 1
      %p44 = por %p42, %p43
      %p45 = scmp.ne.s32.totalorder %s34, %s35
      %p46 = scmp.eq.s32.totalorder %s26, 0
      %p47 = por %p45, %p46
      %p48 = scmp.ne.s32.totalorder %s34, %s35
      %p49 = scmp.eq.s32.totalorder %s27, 1
      %p50 = por %p48, %p49
      %p52 = scmp.ne.s32.totalorder %s35, %s51
      %p53 = scmp.eq.s32.totalorder %s27, 0
      %p54 = por %p52, %p53
      %s56 = sadd.s32 %s55, 1
      %p59 = scmp.eq.s32.totalorder %s21, 1
      %p60 = scmp.ne.s32.totalorder %s55, %s57
      %p61 = scmp.eq.s32.totalorder %s21, 0
      %p62 = por %p60, %p61
      %p63 = scmp.ne.s32.totalorder %s55, %s57
      %p64 = scmp.eq.s32.totalorder %s26, 1
      %p65 = por %p63, %p64
      %p66 = scmp.ne.s32.totalorder %s57, %s58
      %p67 = scmp.eq.s32.totalorder %s26, 0
      %p68 = por %p66, %p67
      %p69 = scmp.ne.s32.totalorder %s57, %s58
      %p70 = scmp.eq.s32.totalorder %s27, 1
      %p71 = por %p69, %p70
      %p73 = scmp.ne.s32.totalorder %s58, %s72
      %p74 = scmp.eq.s32.totalorder %s27, 0
      %p75 = por %p73, %p74
      %s77 = sadd.s32 %s76, 1
      %p80 = scmp.eq.s32.totalorder %s21, 1
      %p81 = scmp.ne.s32.totalorder %s76, %s78
      %p82 = scmp.eq.s32.totalorder %s21, 0
      %p83 = por %p81, %p82
      %p84 = scmp.ne.s32.totalorder %s76, %s78
      %p85 = scmp.eq.s32.totalorder %s26, 1
      %p86 = por %p84, %p85
      %p87 = scmp.ne.s32.totalorder %s78, %s79
      %p88 = scmp.eq.s32.totalorder %s26, 0
      %p89 = por %p87, %p88
      %p90 = scmp.ne.s32.totalorder %s78, %s79
      %p91 = scmp.eq.s32.totalorder %s27, 1
      %p92 = por %p90, %p91
      %p94 = scmp.ne.s32.totalorder %s79, %s93
      %p95 = scmp.eq.s32.totalorder %s27, 0
      %p96 = por %p94, %p95
      %s98 = sadd.s32 %s97, 1
      %p101 = scmp.eq.s32.totalorder %s21, 1
      %p102 = scmp.ne.s32.totalorder %s97, %s99
      %p103 = scmp.eq.s32.totalorder %s21, 0
      %p104 = por %p102, %p103
      %p105 = scmp.ne.s32.totalorder %s97, %s99
      %p106 = scmp.eq.s32.totalorder %s26, 1
      %p107 = por %p105, %p106
      %p108 = scmp.ne.s32.totalorder %s99, %s100
      %p109 = scmp.eq.s32.totalorder %s26, 0
      %p110 = por %p108, %p109
      %p111 = scmp.ne.s32.totalorder %s99, %s100
      %p112 = scmp.eq.s32.totalorder %s27, 1
      %p113 = por %p111, %p112
      %p115 = scmp.ne.s32.totalorder %s100, %s114
      %p116 = scmp.eq.s32.totalorder %s27, 0
      %p117 = por %p115, %p116
      %s119 = sadd.s32 %s118, 1
      %p122 = scmp.eq.s32.totalorder %s21, 1
      %p123 = scmp.ne.s32.totalorder %s118, %s120
      %p124 = scmp.eq.s32.totalorder %s21, 0
      %p125 = por %p123, %p124
      %p126 = scmp.ne.s32.totalorder %s118, %s120
      %p127 = scmp.eq.s32.totalorder %s26, 1
      %p128 = por %p126, %p127
      %p129 = scmp.ne.s32.totalorder %s120, %s121
      %p130 = scmp.eq.s32.totalorder %s26, 0
      %p131 = por %p129, %p130
      %p132 = scmp.ne.s32.totalorder %s120, %s121
      %p133 = scmp.eq.s32.totalorder %s27, 1
      %p134 = por %p132, %p133
      %p136 = scmp.ne.s32.totalorder %s121, %s135
      %p137 = scmp.eq.s32.totalorder %s27, 0
      %p138 = por %p136, %p137
      %s140 = sadd.s32 %s139, 1
      %p143 = scmp.eq.s32.totalorder %s21, 1
      %p144 = scmp.ne.s32.totalorder %s139, %s141
      %p145 = scmp.eq.s32.totalorder %s21, 0
      %p146 = por %p144, %p145
      %p147 = scmp.ne.s32.totalorder %s139, %s141
      %p148 = scmp.eq.s32.totalorder %s26, 1
      %p149 = por %p147, %p148
      %p150 = scmp.ne.s32.totalorder %s141, %s142
      %p151 = scmp.eq.s32.totalorder %s26, 0
      %p152 = por %p150, %p151
      %p153 = scmp.ne.s32.totalorder %s141, %s142
      %p154 = scmp.eq.s32.totalorder %s27, 1
      %p155 = por %p153, %p154
      %p157 = scmp.ne.s32.totalorder %s142, %s156
      %p158 = scmp.eq.s32.totalorder %s27, 0
      %p159 = por %p157, %p158
      %s161 = sadd.s32 %s160, 1
      %p164 = scmp.eq.s32.totalorder %s21, 1
      %p165 = scmp.ne.s32.totalorder %s160, %s162
      %p166 = scmp.eq.s32.totalorder %s21, 0
      %p167 = por %p165, %p166
      %p168 = scmp.ne.s32.totalorder %s160, %s162
      %p169 = scmp.eq.s32.totalorder %s26, 1
      %p170 = por %p168, %p169
      %p171 = scmp.ne.s32.totalorder %s162, %s163
      %p172 = scmp.eq.s32.totalorder %s26, 0
      %p173 = por %p171, %p172
      %p174 = scmp.ne.s32.totalorder %s162, %s163
      %p175 = scmp.eq.s32.totalorder %s27, 1
      %p176 = por %p174, %p175
      %p178 = scmp.ne.s32.totalorder %s163, %s177
      %p179 = scmp.eq.s32.totalorder %s27, 0
      %p180 = por %p178, %p179
      %s181 = ssub.s32 %s21, %s28
      %p182 = scmp.eq.s32.totalorder %s181, 0
      %s184 = sadd.s32 %s183, 1
      %s185 = scalar_select %p182, %s183, %s184
      %p188 = pneg %p182
      %p189 = scmp.eq.s32.totalorder %s21, 1
      %p190 = por %p188, %p189
      %p191 = scmp.ne.s32.totalorder %s183, %s186
      %p192 = scmp.eq.s32.totalorder %s21, 0
      %p193 = por %p191, %p192
      %p194 = scmp.ne.s32.totalorder %s183, %s186
      %p195 = scmp.eq.s32.totalorder %s26, 1
      %p196 = por %p194, %p195
      %p197 = scmp.ne.s32.totalorder %s186, %s187
      %p198 = scmp.eq.s32.totalorder %s26, 0
      %p199 = por %p197, %p198
      %p200 = scmp.ne.s32.totalorder %s186, %s187
      %p201 = scmp.eq.s32.totalorder %s27, 1
      %p202 = por %p200, %p201
      %p204 = scmp.ne.s32.totalorder %s187, %s203
      %p205 = scmp.eq.s32.totalorder %s27, 0
      %p206 = por %p204, %p205
      %p207 = scmp.le.s32.totalorder 1, %s21
      %p208 = scmp.lt.s32.totalorder %s21, 3
      %p209 = pnand %p207, %p208
      %p210 = pneg %p209
      // Predicated region
      $region9: #{rdb_forward.1} parent=5 // pred_check
        _
      $region10: #{rdb_forward.1} parent=5 // pred_check_branch
        %212 = sbr.rel (%p209) target = $region12
      $region11: #{rdb_forward.1} parent=5 // pred_region
        %s213 = ssub.s32 %s21, 1
        // Predicated region
        $region13: #{rdb_forward.1} parent=11 // pred_check
          %p214 = pneg %p68
        $region14: #{rdb_forward.1} parent=11 // pred_check_branch
          %216 = sbr.rel (%p214) target = $region16
        $region15: #{rdb_forward.1} parent=11 // pred_region
          %s218 = ssub.s32 27648, 27648
          %219 = vsyncadd [#allocation7], %s218
          %s220 = sshll.u32 [#allocation6], 4
          %s221 = int_to_ptr.vmem [resolvable:$true] %s220
          %226 = dma.hbm_to_vmem [thread:$0]  %s1, 27648, %s221, [#allocation7], 64, 64, 4
        $region16: #{rdb_forward.1} parent=11 // pred_fallthru
          _
        // Predicated region
        $region17: #{rdb_forward.1} parent=11 // pred_check
          %p227 = pneg %p89
        $region18: #{rdb_forward.1} parent=11 // pred_check_branch
          %229 = sbr.rel (%p227) target = $region20
        $region19: #{rdb_forward.1} parent=11 // pred_region
          _
        $region20: #{rdb_forward.1} parent=11 // pred_fallthru
          _
        // Predicated region
        $region21: #{rdb_forward.1} parent=11 // pred_check
          %p230 = pneg %p110
        $region22: #{rdb_forward.1} parent=11 // pred_check_branch
          %232 = sbr.rel (%p230) target = $region24
        $region23: #{rdb_forward.1} parent=11 // pred_region
          %s234 = ssub.s32 1024, 1024
          %235 = vsyncadd [#allocation7], %s234
          %s236 = sshll.u32 [#allocation8], 4
          %s237 = int_to_ptr.vmem [resolvable:$true] %s236
          %242 = dma.hbm_to_vmem [thread:$0]  %s3, 1024, %s237, [#allocation7], 64, 64, 4
        $region24: #{rdb_forward.1} parent=11 // pred_fallthru
          _
        // Predicated region
        $region25: #{rdb_forward.1} parent=11 // pred_check
          %p243 = pneg %p131
        $region26: #{rdb_forward.1} parent=11 // pred_check_branch
          %245 = sbr.rel (%p243) target = $region28
        $region27: #{rdb_forward.1} parent=11 // pred_region
          _
        $region28: #{rdb_forward.1} parent=11 // pred_fallthru
          _
        // Predicated region
        $region29: #{rdb_forward.1} parent=11 // pred_check
          %p246 = pneg %p152
        $region30: #{rdb_forward.1} parent=11 // pred_check_branch
          %248 = sbr.rel (%p246) target = $region32
        $region31: #{rdb_forward.1} parent=11 // pred_region
          %s250 = ssub.s32 2048, 2048
          %251 = vsyncadd [#allocation10], %s250
          %s252 = sshll.u32 [#allocation9], 4
          %s253 = int_to_ptr.vmem [resolvable:$true] %s252
          %258 = dma.hbm_to_vmem [thread:$0]  %s5, 2048, %s253, [#allocation10], 128, 128, 8
        $region32: #{rdb_forward.1} parent=11 // pred_fallthru
          _
        // Predicated region
        $region33: #{rdb_forward.1} parent=11 // pred_check
          %p259 = pneg %p173
        $region34: #{rdb_forward.1} parent=11 // pred_check_branch
          %261 = sbr.rel (%p259) target = $region36
        $region35: #{rdb_forward.1} parent=11 // pred_region
          %s263 = ssub.s32 2048, 2048
          %264 = vsyncadd [#allocation10], %s263
          %s265 = sshll.u32 [#allocation11], 4
          %s266 = int_to_ptr.vmem [resolvable:$true] %s265
          %271 = dma.hbm_to_vmem [thread:$0]  %s6, 2048, %s266, [#allocation10], 128, 128, 8
        $region36: #{rdb_forward.1} parent=11 // pred_fallthru
          _
      $region12: #{rdb_forward.1} parent=5 // pred_fallthru
        _
      %p272 = scmp.lt.s32.totalorder %s21, 2
      // Predicated region
      $region37: #{rdb_forward.1} parent=5 // pred_check
        %p273 = pneg %p272
      $region38: #{rdb_forward.1} parent=5 // pred_check_branch
        %275 = sbr.rel (%p273) target = $region40
      $region39: #{rdb_forward.1} parent=5 // pred_region
        // Predicated region
        $region41: #{rdb_forward.1} parent=39 // pred_check
          %p276 = pneg %p41
        $region42: #{rdb_forward.1} parent=39 // pred_check_branch
          %278 = sbr.rel (%p276) target = $region44
        $region43: #{rdb_forward.1} parent=39 // pred_region
          %s279 = sand.u32 %s31, 1
          %s280 = scalar_lea.sflag [#allocation4], %s279
          %s281 = sand.u32 %s31, 1
          %s282 = smul.addr %s281, 256
          %s283 = scalar_lea.vmem [#allocation3], %s282
          %s285 = ssub.s32 4096, 4096
          %286 = vsyncadd %s280, %s285
          %s287 = smul.addr %s21, 32
          %s288 = smul.addr %s287, 128
          %s289 = scalar_lea.hbm %s0, %s288
          %s290 = sshll.u32 %s283, 4
          %s291 = int_to_ptr.vmem [resolvable:$true] %s290
          %296 = dma.hbm_to_vmem [thread:$0]  %s289, 4096, %s291, %s280, 128, 128, 8
        $region44: #{rdb_forward.1} parent=39 // pred_fallthru
          _
      $region40: #{rdb_forward.1} parent=5 // pred_fallthru
        _
      %p297 = scmp.le.s32.totalorder 1, %s21
      %p298 = scmp.lt.s32.totalorder %s21, 3
      %p299 = pnand %p297, %p298
      %p300 = pneg %p299
      // Predicated region
      $region45: #{rdb_forward.1} parent=5 // pred_check
        _
      $region46: #{rdb_forward.1} parent=5 // pred_check_branch
        %302 = sbr.rel (%p299) target = $region48
      $region47: #{rdb_forward.1} parent=5 // pred_region
        %s303 = ssub.s32 %s21, 1
        %s304 = sand.u32 %s34, 1
        %s305 = scalar_lea.sflag [#allocation4], %s304
        %s306 = sand.u32 %s34, 1
        %s307 = smul.addr %s306, 256
        %s308 = scalar_lea.vmem [#allocation3], %s307
        // Predicated region
        $region49: #{rdb_forward.1} parent=47 // pred_check
          %p309 = pneg %p47
        $region50: #{rdb_forward.1} parent=47 // pred_check_branch
          %311 = sbr.rel (%p309) target = $region52
        $region51: #{rdb_forward.1} parent=47 // pred_region
          %312 = dma.done %s305, 4096
        $region52: #{rdb_forward.1} parent=47 // pred_fallthru
          _
        // Predicated region
        $region53: #{rdb_forward.1} parent=47 // pred_check
          %p313 = pneg %p68
        $region54: #{rdb_forward.1} parent=47 // pred_check_branch
          %315 = sbr.rel (%p313) target = $region56
        $region55: #{rdb_forward.1} parent=47 // pred_region
          %316 = dma.done [#allocation7], 27648
        $region56: #{rdb_forward.1} parent=47 // pred_fallthru
          _
        // Predicated region
        $region57: #{rdb_forward.1} parent=47 // pred_check
          %p317 = pneg %p110
        $region58: #{rdb_forward.1} parent=47 // pred_check_branch
          %319 = sbr.rel (%p317) target = $region60
        $region59: #{rdb_forward.1} parent=47 // pred_region
          %320 = dma.done [#allocation7], 1024
        $region60: #{rdb_forward.1} parent=47 // pred_fallthru
          _
        // Predicated region
        $region61: #{rdb_forward.1} parent=47 // pred_check
          %p321 = pneg %p152
        $region62: #{rdb_forward.1} parent=47 // pred_check_branch
          %323 = sbr.rel (%p321) target = $region64
        $region63: #{rdb_forward.1} parent=47 // pred_region
          %324 = dma.done [#allocation10], 2048
        $region64: #{rdb_forward.1} parent=47 // pred_fallthru
          _
        // Predicated region
        $region65: #{rdb_forward.1} parent=47 // pred_check
          %p325 = pneg %p173
        $region66: #{rdb_forward.1} parent=47 // pred_check_branch
          %327 = sbr.rel (%p325) target = $region68
        $region67: #{rdb_forward.1} parent=47 // pred_region
          %328 = dma.done [#allocation10], 2048
        $region68: #{rdb_forward.1} parent=47 // pred_fallthru
          _
        %s329 = sand.u32 %s34, 1
        %s330 = scalar_lea.sflag [#allocation4], %s329
        %s331 = sand.u32 %s34, 1
        %s332 = smul.addr %s331, 256
        %s333 = scalar_lea.vmem [#allocation3], %s332
        %p334 = pneg %p47
        %p335 = pneg %p44
        %p336 = pneg %p68
        %p337 = pneg %p65
        %p338 = pneg %p89
        %p339 = pneg %p86
        %p340 = pneg %p110
        %p341 = pneg %p107
        %p342 = pneg %p131
        %p343 = pneg %p128
        %p344 = pneg %p152
        %p345 = pneg %p149
        %p346 = pneg %p173
        %p347 = pneg %p170
        %p348 = pneg %p199
        %p349 = pneg %p196
        %s350 = sand.u32 %s186, 1
        %s351 = scalar_lea.sflag [#allocation5], %s350
        %s352 = sand.u32 %s186, 1
        %s353 = smul.addr %s352, 256
        %s354 = scalar_lea.vmem [#allocation12], %s353
        %358 = vst [vmem:[#allocation2] sm:$0xff] 0
        %359 = vst [vmem:[#allocation2 + $0x8] sm:$0xff] 0
        %360 = vst [vmem:[#allocation2 + $0x10] sm:$0xff] 0
        %361 = vst [vmem:[#allocation2 + $0x18] sm:$0xff] 0
        %362 = vst [vmem:[#allocation2 + $0x20] sm:$0xff] 0
        %363 = vst [vmem:[#allocation2 + $0x28] sm:$0xff] 0
        %364 = vst [vmem:[#allocation2 + $0x30] sm:$0xff] 0
        %365 = vst [vmem:[#allocation2 + $0x38] sm:$0xff] 0
        %366 = vst [vmem:[#allocation2 + $0x40] sm:$0xff] 0
        %367 = vst [vmem:[#allocation2 + $0x48] sm:$0xff] 0
        %368 = vst [vmem:[#allocation2 + $0x50] sm:$0xff] 0
        %369 = vst [vmem:[#allocation2 + $0x58] sm:$0xff] 0
        %370 = vst [vmem:[#allocation2 + $0x60] sm:$0xff] 0
        %371 = vst [vmem:[#allocation2 + $0x68] sm:$0xff] 0
        %372 = vst [vmem:[#allocation2 + $0x70] sm:$0xff] 0
        %373 = vst [vmem:[#allocation2 + $0x78] sm:$0xff] 0
        %374 = vst [vmem:[#allocation2 + $0x80] sm:$0xff] 0
        %375 = vst [vmem:[#allocation2 + $0x88] sm:$0xff] 0
        %376 = vst [vmem:[#allocation2 + $0x90] sm:$0xff] 0
        %377 = vst [vmem:[#allocation2 + $0x98] sm:$0xff] 0
        %v378 = vld [vmem:[%s308] sm:$0xff]
        %v379 = vld [vmem:[%s308 + $0x8] sm:$0xff]
        %v380 = vld [vmem:[%s308 + $0x10] sm:$0xff]
        %v381 = vld [vmem:[%s308 + $0x18] sm:$0xff]
        %v382 = vld [vmem:[%s308 + $0x20] sm:$0xff]
        %v383 = vld [vmem:[%s308 + $0x28] sm:$0xff]
        %v384 = vld [vmem:[%s308 + $0x30] sm:$0xff]
        %v385 = vld [vmem:[%s308 + $0x38] sm:$0xff]
        %v386 = vld [vmem:[%s308 + $0x40] sm:$0xff]
        %v387 = vld [vmem:[%s308 + $0x48] sm:$0xff]
        %v388 = vld [vmem:[%s308 + $0x50] sm:$0xff]
        %v389 = vld [vmem:[%s308 + $0x58] sm:$0xff]
        %v390 = vld [vmem:[%s308 + $0x60] sm:$0xff]
        %v391 = vld [vmem:[%s308 + $0x68] sm:$0xff]
        %v392 = vld [vmem:[%s308 + $0x70] sm:$0xff]
        %v393 = vld [vmem:[%s308 + $0x78] sm:$0xff]
        %v394 = vld [vmem:[%s308 + $0x80] sm:$0xff]
        %v395 = vld [vmem:[%s308 + $0x88] sm:$0xff]
        %v396 = vld [vmem:[%s308 + $0x90] sm:$0xff]
        %v397 = vld [vmem:[%s308 + $0x98] sm:$0xff]
        %v398 = vld [vmem:[%s308 + $0xa0] sm:$0xff]
        %v399 = vld [vmem:[%s308 + $0xa8] sm:$0xff]
        %v400 = vld [vmem:[%s308 + $0xb0] sm:$0xff]
        %v401 = vld [vmem:[%s308 + $0xb8] sm:$0xff]
        %v402 = vld [vmem:[%s308 + $0xc0] sm:$0xff]
        %v403 = vld [vmem:[%s308 + $0xc8] sm:$0xff]
        %v404 = vld [vmem:[%s308 + $0xd0] sm:$0xff]
        %v405 = vld [vmem:[%s308 + $0xd8] sm:$0xff]
        %v406 = vld [vmem:[%s308 + $0xe0] sm:$0xff]
        %v407 = vld [vmem:[%s308 + $0xe8] sm:$0xff]
        %v408 = vld [vmem:[%s308 + $0xf0] sm:$0xff]
        %v409 = vld [vmem:[%s308 + $0xf8] sm:$0xff]
        %v410 = vpack.c.bf16 %v379, %v378
        %v411 = vpack.c.bf16 %v381, %v380
        %v412 = vpack.c.bf16 %v383, %v382
        %v413 = vpack.c.bf16 %v385, %v384
        %v414 = vpack.c.bf16 %v387, %v386
        %v415 = vpack.c.bf16 %v389, %v388
        %v416 = vpack.c.bf16 %v391, %v390
        %v417 = vpack.c.bf16 %v393, %v392
        %v418 = vpack.c.bf16 %v395, %v394
        %v419 = vpack.c.bf16 %v397, %v396
        %v420 = vpack.c.bf16 %v399, %v398
        %v421 = vpack.c.bf16 %v401, %v400
        %v422 = vpack.c.bf16 %v403, %v402
        %v423 = vpack.c.bf16 %v405, %v404
        %v424 = vpack.c.bf16 %v407, %v406
        %v425 = vpack.c.bf16 %v409, %v408
        %vm426 = vcmask 261120
        %427 = vst.msk [vmem:[#allocation2 + $0x10] sm:$0xff] %vm426, %v410
        %428 = vst.msk [vmem:[#allocation2 + $0x18] sm:$0xff] %vm426, %v411
        %429 = vst.msk [vmem:[#allocation2 + $0x20] sm:$0xff] %vm426, %v412
        %430 = vst.msk [vmem:[#allocation2 + $0x28] sm:$0xff] %vm426, %v413
        %431 = vst.msk [vmem:[#allocation2 + $0x30] sm:$0xff] %vm426, %v414
        %432 = vst.msk [vmem:[#allocation2 + $0x38] sm:$0xff] %vm426, %v415
        %433 = vst.msk [vmem:[#allocation2 + $0x40] sm:$0xff] %vm426, %v416
        %434 = vst.msk [vmem:[#allocation2 + $0x48] sm:$0xff] %vm426, %v417
        %435 = vst.msk [vmem:[#allocation2 + $0x50] sm:$0xff] %vm426, %v418
        %436 = vst.msk [vmem:[#allocation2 + $0x58] sm:$0xff] %vm426, %v419
        %437 = vst.msk [vmem:[#allocation2 + $0x60] sm:$0xff] %vm426, %v420
        %438 = vst.msk [vmem:[#allocation2 + $0x68] sm:$0xff] %vm426, %v421
        %439 = vst.msk [vmem:[#allocation2 + $0x70] sm:$0xff] %vm426, %v422
        %440 = vst.msk [vmem:[#allocation2 + $0x78] sm:$0xff] %vm426, %v423
        %441 = vst.msk [vmem:[#allocation2 + $0x80] sm:$0xff] %vm426, %v424
        %442 = vst.msk [vmem:[#allocation2 + $0x88] sm:$0xff] %vm426, %v425
        %v443 = vlaneseq
        %v444 = vshrl.u32 %v443, 7
        %v445 = vadd.s32 %v444, 8
        %vm446 = vcmp.gt.s32.totalorder %v444, 0
        %vm447 = vcmp.gt.s32.totalorder %v445, 0
        %vm448 = vcmp.lt.s32.totalorder %v444, 15
        %vm449 = vcmp.lt.s32.totalorder %v445, 15
        %v450 = vld [vmem:[#allocation2] sm:$0x80]
        %v451 = vld [vmem:[#allocation2 + $0x8] sm:$0xff]
        %v452 = vld [vmem:[#allocation2 + $0x10] sm:$0xff]
        %v453 = vld [vmem:[#allocation2 + $0x18] sm:$0xff]
        %v454 = vld [vmem:[#allocation2 + $0x20] sm:$0xff]
        %v455 = vld [vmem:[#allocation2 + $0x28] sm:$0xff]
        %v456 = vld [vmem:[#allocation2 + $0x30] sm:$0xff]
        %v457 = vld [vmem:[#allocation2 + $0x38] sm:$0xff]
        %v458 = vld [vmem:[#allocation2 + $0x40] sm:$0xff]
        %v459 = vld [vmem:[#allocation2 + $0x48] sm:$0xff]
        %v460 = vld [vmem:[#allocation2 + $0x50] sm:$0xff]
        %v461 = vld [vmem:[#allocation2 + $0x58] sm:$0xff]
        %v462 = vld [vmem:[#allocation2 + $0x60] sm:$0xff]
        %v463 = vld [vmem:[#allocation2 + $0x68] sm:$0xff]
        %v464 = vld [vmem:[#allocation2 + $0x70] sm:$0xff]
        %v465 = vld [vmem:[#allocation2 + $0x78] sm:$0xff]
        %v466 = vld [vmem:[#allocation2 + $0x80] sm:$0xff]
        %vm467 = vmpackc.low %vm446, %vm446
        %vm468 = vmpackc.low %vm447, %vm447
        %v469 = vsel %vm467, 65537, 0
        %v470 = vsel %vm468, 65537, 0
        %v471 = vunpack.c.l.b16 %v469
        %v472 = vunpack.c.l.b16 %v470
        %v473 = vpack.c.b16 %v472, %v471
        %vm474 = vsmask.f32 7424
        %v476 = vshll.u32 %v473, 16
        %v478 = vrot.slane %v476, 1
        %v479 = vshrl.u32 %v473, 16
        %v481 = vor.u32 %v479, %v478
        %v482 = vsel %vm474, %v481, %v478
        %vm483 = vcmp.ne.s16.totalorder %v478, 0
        %vm484 = vcmp.ne.s16.totalorder %v482, 0
        %vm485 = vcmp.ne.s16.totalorder %v481, 0
        %v486 = vsel %vm483, %v450, 0
        %v487 = vsel %vm484, %v451, 0
        %v488 = vsel %vm484, %v452, 0
        %v489 = vsel %vm484, %v453, 0
        %v490 = vsel %vm484, %v454, 0
        %v491 = vsel %vm484, %v455, 0
        %v492 = vsel %vm484, %v456, 0
        %v493 = vsel %vm484, %v457, 0
        %v494 = vsel %vm484, %v458, 0
        %v495 = vsel %vm484, %v459, 0
        %v496 = vsel %vm484, %v460, 0
        %v497 = vsel %vm484, %v461, 0
        %v498 = vsel %vm484, %v462, 0
        %v499 = vsel %vm484, %v463, 0
        %v500 = vsel %vm484, %v464, 0
        %v501 = vsel %vm484, %v465, 0
        %v502 = vsel %vm485, %v466, 0
        %v504 = vshll.u32 %v451, 16
        %v506 = vrot.slane %v504, 1
        %v507 = vshrl.u32 %v451, 16
        %v509 = vor.u32 %v507, %v506
        %v511 = vshll.u32 %v452, 16
        %v513 = vrot.slane %v511, 1
        %v514 = vsel %vm474, %v509, %v513
        %v515 = vshrl.u32 %v452, 16
        %v517 = vor.u32 %v515, %v513
        %v519 = vshll.u32 %v453, 16
        %v521 = vrot.slane %v519, 1
        %v522 = vsel %vm474, %v517, %v521
        %v523 = vshrl.u32 %v453, 16
        %v525 = vor.u32 %v523, %v521
        %v527 = vshll.u32 %v454, 16
        %v529 = vrot.slane %v527, 1
        %v530 = vsel %vm474, %v525, %v529
        %v531 = vshrl.u32 %v454, 16
        %v533 = vor.u32 %v531, %v529
        %v535 = vshll.u32 %v455, 16
        %v537 = vrot.slane %v535, 1
        %v538 = vsel %vm474, %v533, %v537
        %v539 = vshrl.u32 %v455, 16
        %v541 = vor.u32 %v539, %v537
        %v543 = vshll.u32 %v456, 16
        %v545 = vrot.slane %v543, 1
        %v546 = vsel %vm474, %v541, %v545
        %v547 = vshrl.u32 %v456, 16
        %v549 = vor.u32 %v547, %v545
        %v551 = vshll.u32 %v457, 16
        %v553 = vrot.slane %v551, 1
        %v554 = vsel %vm474, %v549, %v553
        %v555 = vshrl.u32 %v457, 16
        %v557 = vor.u32 %v555, %v553
        %v559 = vshll.u32 %v458, 16
        %v561 = vrot.slane %v559, 1
        %v562 = vsel %vm474, %v557, %v561
        %v563 = vshrl.u32 %v458, 16
        %v565 = vor.u32 %v563, %v561
        %v567 = vshll.u32 %v459, 16
        %v569 = vrot.slane %v567, 1
        %v570 = vsel %vm474, %v565, %v569
        %v571 = vshrl.u32 %v459, 16
        %v573 = vor.u32 %v571, %v569
        %v575 = vshll.u32 %v460, 16
        %v577 = vrot.slane %v575, 1
        %v578 = vsel %vm474, %v573, %v577
        %v579 = vshrl.u32 %v460, 16
        %v581 = vor.u32 %v579, %v577
        %v583 = vshll.u32 %v461, 16
        %v585 = vrot.slane %v583, 1
        %v586 = vsel %vm474, %v581, %v585
        %v587 = vshrl.u32 %v461, 16
        %v589 = vor.u32 %v587, %v585
        %v591 = vshll.u32 %v462, 16
        %v593 = vrot.slane %v591, 1
        %v594 = vsel %vm474, %v589, %v593
        %v595 = vshrl.u32 %v462, 16
        %v597 = vor.u32 %v595, %v593
        %v599 = vshll.u32 %v463, 16
        %v601 = vrot.slane %v599, 1
        %v602 = vsel %vm474, %v597, %v601
        %v603 = vshrl.u32 %v463, 16
        %v605 = vor.u32 %v603, %v601
        %v607 = vshll.u32 %v464, 16
        %v609 = vrot.slane %v607, 1
        %v610 = vsel %vm474, %v605, %v609
        %v611 = vshrl.u32 %v464, 16
        %v613 = vor.u32 %v611, %v609
        %v615 = vshll.u32 %v465, 16
        %v617 = vrot.slane %v615, 1
        %v618 = vsel %vm474, %v613, %v617
        %v619 = vshrl.u32 %v465, 16
        %v621 = vor.u32 %v619, %v617
        %v623 = vshll.u32 %v466, 16
        %v625 = vrot.slane %v623, 1
        %v626 = vsel %vm474, %v621, %v625
        %v627 = vshrl.u32 %v466, 16
        %v629 = vor.u32 %v627, %v625
        %v630 = vld [vmem:[#allocation6] sm:$0xf]
        %v631 = vld [vmem:[#allocation6 + $0x4] sm:$0xf]
        %v632 = vld [vmem:[#allocation6 + $0x8] sm:$0xf]
        %v633 = vld [vmem:[#allocation6 + $0xc] sm:$0xf]
        %v634 = vld [vmem:[#allocation6 + $0x10] sm:$0xf]
        %v635 = vld [vmem:[#allocation6 + $0x14] sm:$0xf]
        %v636 = vld [vmem:[#allocation6 + $0x18] sm:$0xf]
        %v637 = vld [vmem:[#allocation6 + $0x1c] sm:$0xf]
        %v638 = vld [vmem:[#allocation6 + $0x20] sm:$0xf]
        %v639 = vld [vmem:[#allocation6 + $0x24] sm:$0xf]
        %v640 = vld [vmem:[#allocation6 + $0x28] sm:$0xf]
        %v641 = vld [vmem:[#allocation6 + $0x2c] sm:$0xf]
        %v642 = vld [vmem:[#allocation6 + $0x30] sm:$0xf]
        %v643 = vld [vmem:[#allocation6 + $0x34] sm:$0xf]
        %v644 = vld [vmem:[#allocation6 + $0x38] sm:$0xf]
        %v645 = vld [vmem:[#allocation6 + $0x3c] sm:$0xf]
        %v646 = vld [vmem:[#allocation6 + $0x40] sm:$0xf]
        %v647 = vld [vmem:[#allocation6 + $0x44] sm:$0xf]
        %v648 = vld [vmem:[#allocation6 + $0x48] sm:$0xf]
        %v649 = vld [vmem:[#allocation6 + $0x4c] sm:$0xf]
        %v650 = vld [vmem:[#allocation6 + $0x50] sm:$0xf]
        %v651 = vld [vmem:[#allocation6 + $0x54] sm:$0xf]
        %v652 = vld [vmem:[#allocation6 + $0x58] sm:$0xf]
        %v653 = vld [vmem:[#allocation6 + $0x5c] sm:$0xf]
        %v654 = vld [vmem:[#allocation6 + $0x60] sm:$0xf]
        %v655 = vld [vmem:[#allocation6 + $0x64] sm:$0xf]
        %v656 = vld [vmem:[#allocation6 + $0x68] sm:$0xf]
        %v657 = vld [vmem:[#allocation6 + $0x6c] sm:$0xf]
        %v658 = vld [vmem:[#allocation6 + $0x70] sm:$0xf]
        %v659 = vld [vmem:[#allocation6 + $0x74] sm:$0xf]
        %v660 = vld [vmem:[#allocation6 + $0x78] sm:$0xf]
        %v661 = vld [vmem:[#allocation6 + $0x7c] sm:$0xf]
        %v662 = vld [vmem:[#allocation2 + $0x88] sm:$0x1]
        %vm663 = vmpackc.low %vm448, %vm448
        %vm664 = vmpackc.low %vm449, %vm449
        %v665 = vsel %vm663, 65537, 0
        %v666 = vsel %vm664, 65537, 0
        %v667 = vunpack.c.l.b16 %v665
        %v668 = vunpack.c.l.b16 %v666
        %v669 = vpack.c.b16 %v668, %v667
        %vm670 = vsmask.f32 256
        %v672 = vshrl.u32 %v669, 16
        %v674 = vrot.slane %v672, 7
        %v675 = vshll.u32 %v669, 16
        %v677 = vor.u32 %v674, %v675
        %v678 = vsel %vm670, %v674, %v677
        %vm679 = vcmp.ne.s16.totalorder %v677, 0
        %vm680 = vcmp.ne.s16.totalorder %v678, 0
        %vm681 = vcmp.ne.s16.totalorder %v674, 0
        %v682 = vsel %vm679, %v451, 0
        %v683 = vsel %vm680, %v452, 0
        %v684 = vsel %vm680, %v453, 0
        %v685 = vsel %vm680, %v454, 0
        %v686 = vsel %vm680, %v455, 0
        %v687 = vsel %vm680, %v456, 0
        %v688 = vsel %vm680, %v457, 0
        %v689 = vsel %vm680, %v458, 0
        %v690 = vsel %vm680, %v459, 0
        %v691 = vsel %vm680, %v460, 0
        %v692 = vsel %vm680, %v461, 0
        %v693 = vsel %vm680, %v462, 0
        %v694 = vsel %vm680, %v463, 0
        %v695 = vsel %vm680, %v464, 0
        %v696 = vsel %vm680, %v465, 0
        %v697 = vsel %vm680, %v466, 0
        %v698 = vsel %vm681, %v662, 0
        %v699 = vld [vmem:[#allocation2 + $0x8] sm:$0x80]
        %v700 = vld [vmem:[#allocation2 + $0x88] sm:$0xff]
        %v701 = vsel %vm483, %v699, 0
        %v702 = vsel %vm484, %v466, 0
        %v703 = vsel %vm485, %v700, 0
        %vm721 = vcmask 1040384
        %v722 = vrot.slane %v701, 7
        %v723 = vrot.slane %v488, 7
        %v724 = vsel %vm721, %v722, %v723
        %v725 = vrot.slane %v489, 7
        %v726 = vsel %vm721, %v723, %v725
        %v727 = vrot.slane %v490, 7
        %v728 = vsel %vm721, %v725, %v727
        %v729 = vrot.slane %v491, 7
        %v730 = vsel %vm721, %v727, %v729
        %v731 = vrot.slane %v492, 7
        %v732 = vsel %vm721, %v729, %v731
        %v733 = vrot.slane %v493, 7
        %v734 = vsel %vm721, %v731, %v733
        %v735 = vrot.slane %v494, 7
        %v736 = vsel %vm721, %v733, %v735
        %v737 = vrot.slane %v495, 7
        %v738 = vsel %vm721, %v735, %v737
        %v739 = vrot.slane %v496, 7
        %v740 = vsel %vm721, %v737, %v739
        %v741 = vrot.slane %v497, 7
        %v742 = vsel %vm721, %v739, %v741
        %v743 = vrot.slane %v498, 7
        %v744 = vsel %vm721, %v741, %v743
        %v745 = vrot.slane %v499, 7
        %v746 = vsel %vm721, %v743, %v745
        %v747 = vrot.slane %v500, 7
        %v748 = vsel %vm721, %v745, %v747
        %v749 = vrot.slane %v501, 7
        %v750 = vsel %vm721, %v747, %v749
        %v751 = vrot.slane %v702, 7
        %v752 = vsel %vm721, %v749, %v751
        %v753 = vrot.slane %v703, 7
        %v754 = vsel %vm721, %v751, %v753
        %v755 = vld [vmem:[#allocation6 + $0x80] sm:$0xf]
        %v756 = vld [vmem:[#allocation6 + $0x84] sm:$0xf]
        %v757 = vld [vmem:[#allocation6 + $0x88] sm:$0xf]
        %v758 = vld [vmem:[#allocation6 + $0x8c] sm:$0xf]
        %v759 = vld [vmem:[#allocation6 + $0x90] sm:$0xf]
        %v760 = vld [vmem:[#allocation6 + $0x94] sm:$0xf]
        %v761 = vld [vmem:[#allocation6 + $0x98] sm:$0xf]
        %v762 = vld [vmem:[#allocation6 + $0x9c] sm:$0xf]
        %v763 = vld [vmem:[#allocation6 + $0xa0] sm:$0xf]
        %v764 = vld [vmem:[#allocation6 + $0xa4] sm:$0xf]
        %v765 = vld [vmem:[#allocation6 + $0xa8] sm:$0xf]
        %v766 = vld [vmem:[#allocation6 + $0xac] sm:$0xf]
        %v767 = vld [vmem:[#allocation6 + $0xb0] sm:$0xf]
        %v768 = vld [vmem:[#allocation6 + $0xb4] sm:$0xf]
        %v769 = vld [vmem:[#allocation6 + $0xb8] sm:$0xf]
        %v770 = vld [vmem:[#allocation6 + $0xbc] sm:$0xf]
        %v771 = vld [vmem:[#allocation6 + $0xc0] sm:$0xf]
        %v772 = vld [vmem:[#allocation6 + $0xc4] sm:$0xf]
        %v773 = vld [vmem:[#allocation6 + $0xc8] sm:$0xf]
        %v774 = vld [vmem:[#allocation6 + $0xcc] sm:$0xf]
        %v775 = vld [vmem:[#allocation6 + $0xd0] sm:$0xf]
        %v776 = vld [vmem:[#allocation6 + $0xd4] sm:$0xf]
        %v777 = vld [vmem:[#allocation6 + $0xd8] sm:$0xf]
        %v778 = vld [vmem:[#allocation6 + $0xdc] sm:$0xf]
        %v779 = vld [vmem:[#allocation6 + $0xe0] sm:$0xf]
        %v780 = vld [vmem:[#allocation6 + $0xe4] sm:$0xf]
        %v781 = vld [vmem:[#allocation6 + $0xe8] sm:$0xf]
        %v782 = vld [vmem:[#allocation6 + $0xec] sm:$0xf]
        %v783 = vld [vmem:[#allocation6 + $0xf0] sm:$0xf]
        %v784 = vld [vmem:[#allocation6 + $0xf4] sm:$0xf]
        %v785 = vld [vmem:[#allocation6 + $0xf8] sm:$0xf]
        %v786 = vld [vmem:[#allocation6 + $0xfc] sm:$0xf]
        %v788 = vshrl.u32 %v682, 16
        %v790 = vshll.u32 %v682, 16
        %v792 = vrot.slane %v790, 1
        %v793 = vor.u32 %v788, %v792
        %v795 = vshll.u32 %v683, 16
        %v797 = vrot.slane %v795, 1
        %v798 = vsel %vm474, %v793, %v797
        %v800 = vshrl.u32 %v724, 16
        %v802 = vshll.u32 %v724, 16
        %v804 = vrot.slane %v802, 1
        %v805 = vor.u32 %v800, %v804
        %v807 = vshll.u32 %v726, 16
        %v809 = vrot.slane %v807, 1
        %v810 = vsel %vm474, %v805, %v809
        %v811 = vshrl.u32 %v683, 16
        %v813 = vor.u32 %v811, %v797
        %v815 = vshll.u32 %v684, 16
        %v817 = vrot.slane %v815, 1
        %v818 = vsel %vm474, %v813, %v817
        %v819 = vshrl.u32 %v726, 16
        %v821 = vor.u32 %v819, %v809
        %v823 = vshll.u32 %v728, 16
        %v825 = vrot.slane %v823, 1
        %v826 = vsel %vm474, %v821, %v825
        %v827 = vshrl.u32 %v684, 16
        %v829 = vor.u32 %v827, %v817
        %v831 = vshll.u32 %v685, 16
        %v833 = vrot.slane %v831, 1
        %v834 = vsel %vm474, %v829, %v833
        %v835 = vshrl.u32 %v728, 16
        %v837 = vor.u32 %v835, %v825
        %v839 = vshll.u32 %v730, 16
        %v841 = vrot.slane %v839, 1
        %v842 = vsel %vm474, %v837, %v841
        %v843 = vshrl.u32 %v685, 16
        %v845 = vor.u32 %v843, %v833
        %v847 = vshll.u32 %v686, 16
        %v849 = vrot.slane %v847, 1
        %v850 = vsel %vm474, %v845, %v849
        %v851 = vshrl.u32 %v730, 16
        %v853 = vor.u32 %v851, %v841
        %v855 = vshll.u32 %v732, 16
        %v857 = vrot.slane %v855, 1
        %v858 = vsel %vm474, %v853, %v857
        %v859 = vshrl.u32 %v686, 16
        %v861 = vor.u32 %v859, %v849
        %v863 = vshll.u32 %v687, 16
        %v865 = vrot.slane %v863, 1
        %v866 = vsel %vm474, %v861, %v865
        %v867 = vshrl.u32 %v732, 16
        %v869 = vor.u32 %v867, %v857
        %v871 = vshll.u32 %v734, 16
        %v873 = vrot.slane %v871, 1
        %v874 = vsel %vm474, %v869, %v873
        %v875 = vshrl.u32 %v687, 16
        %v877 = vor.u32 %v875, %v865
        %v879 = vshll.u32 %v688, 16
        %v881 = vrot.slane %v879, 1
        %v882 = vsel %vm474, %v877, %v881
        %v883 = vshrl.u32 %v734, 16
        %v885 = vor.u32 %v883, %v873
        %v887 = vshll.u32 %v736, 16
        %v889 = vrot.slane %v887, 1
        %v890 = vsel %vm474, %v885, %v889
        %v891 = vshrl.u32 %v688, 16
        %v893 = vor.u32 %v891, %v881
        %v895 = vshll.u32 %v689, 16
        %v897 = vrot.slane %v895, 1
        %v898 = vsel %vm474, %v893, %v897
        %v899 = vshrl.u32 %v736, 16
        %v901 = vor.u32 %v899, %v889
        %v903 = vshll.u32 %v738, 16
        %v905 = vrot.slane %v903, 1
        %v906 = vsel %vm474, %v901, %v905
        %v907 = vshrl.u32 %v689, 16
        %v909 = vor.u32 %v907, %v897
        %v911 = vshll.u32 %v690, 16
        %v913 = vrot.slane %v911, 1
        %v914 = vsel %vm474, %v909, %v913
        %v915 = vshrl.u32 %v738, 16
        %v917 = vor.u32 %v915, %v905
        %v919 = vshll.u32 %v740, 16
        %v921 = vrot.slane %v919, 1
        %v922 = vsel %vm474, %v917, %v921
        %v923 = vshrl.u32 %v690, 16
        %v925 = vor.u32 %v923, %v913
        %v927 = vshll.u32 %v691, 16
        %v929 = vrot.slane %v927, 1
        %v930 = vsel %vm474, %v925, %v929
        %v931 = vshrl.u32 %v740, 16
        %v933 = vor.u32 %v931, %v921
        %v935 = vshll.u32 %v742, 16
        %v937 = vrot.slane %v935, 1
        %v938 = vsel %vm474, %v933, %v937
        %v939 = vshrl.u32 %v691, 16
        %v941 = vor.u32 %v939, %v929
        %v943 = vshll.u32 %v692, 16
        %v945 = vrot.slane %v943, 1
        %v946 = vsel %vm474, %v941, %v945
        %v947 = vshrl.u32 %v742, 16
        %v949 = vor.u32 %v947, %v937
        %v951 = vshll.u32 %v744, 16
        %v953 = vrot.slane %v951, 1
        %v954 = vsel %vm474, %v949, %v953
        %v955 = vshrl.u32 %v692, 16
        %v957 = vor.u32 %v955, %v945
        %v959 = vshll.u32 %v693, 16
        %v961 = vrot.slane %v959, 1
        %v962 = vsel %vm474, %v957, %v961
        %v963 = vshrl.u32 %v744, 16
        %v965 = vor.u32 %v963, %v953
        %v967 = vshll.u32 %v746, 16
        %v969 = vrot.slane %v967, 1
        %v970 = vsel %vm474, %v965, %v969
        %v971 = vshrl.u32 %v693, 16
        %v973 = vor.u32 %v971, %v961
        %v975 = vshll.u32 %v694, 16
        %v977 = vrot.slane %v975, 1
        %v978 = vsel %vm474, %v973, %v977
        %v979 = vshrl.u32 %v746, 16
        %v981 = vor.u32 %v979, %v969
        %v983 = vshll.u32 %v748, 16
        %v985 = vrot.slane %v983, 1
        %v986 = vsel %vm474, %v981, %v985
        %v987 = vshrl.u32 %v694, 16
        %v989 = vor.u32 %v987, %v977
        %v991 = vshll.u32 %v695, 16
        %v993 = vrot.slane %v991, 1
        %v994 = vsel %vm474, %v989, %v993
        %v995 = vshrl.u32 %v748, 16
        %v997 = vor.u32 %v995, %v985
        %v999 = vshll.u32 %v750, 16
        %v1001 = vrot.slane %v999, 1
        %v1002 = vsel %vm474, %v997, %v1001
        %v1003 = vshrl.u32 %v695, 16
        %v1005 = vor.u32 %v1003, %v993
        %v1007 = vshll.u32 %v696, 16
        %v1009 = vrot.slane %v1007, 1
        %v1010 = vsel %vm474, %v1005, %v1009
        %v1011 = vshrl.u32 %v750, 16
        %v1013 = vor.u32 %v1011, %v1001
        %v1015 = vshll.u32 %v752, 16
        %v1017 = vrot.slane %v1015, 1
        %v1018 = vsel %vm474, %v1013, %v1017
        %v1019 = vshrl.u32 %v696, 16
        %v1021 = vor.u32 %v1019, %v1009
        %v1023 = vshll.u32 %v697, 16
        %v1025 = vrot.slane %v1023, 1
        %v1026 = vsel %vm474, %v1021, %v1025
        %v1027 = vshrl.u32 %v752, 16
        %v1029 = vor.u32 %v1027, %v1017
        %v1031 = vshll.u32 %v754, 16
        %v1033 = vrot.slane %v1031, 1
        %v1034 = vsel %vm474, %v1029, %v1033
        %v1035 = vshrl.u32 %v697, 16
        %v1037 = vor.u32 %v1035, %v1025
        %v1039 = vshll.u32 %v698, 16
        %v1041 = vrot.slane %v1039, 1
        %v1042 = vsel %vm474, %v1037, %v1041
        %v1043 = vshrl.u32 %v754, 16
        %v1045 = vor.u32 %v1043, %v1033
        %v1047 = vshll.u32 %v753, 16
        %v1049 = vrot.slane %v1047, 1
        %v1050 = vsel %vm474, %v1045, %v1049
        %v1115 = vunpack.c.l.b16 %v755
        %v1116 = vunpack.c.l.b16 %v756
        %v1117 = vunpack.c.l.b16 %v757
        %v1118 = vunpack.c.l.b16 %v758
        %v1119 = vunpack.c.l.b16 %v759
        %v1120 = vunpack.c.l.b16 %v760
        %v1121 = vunpack.c.l.b16 %v761
        %v1122 = vunpack.c.l.b16 %v762
        %v1123 = vunpack.c.l.b16 %v763
        %v1124 = vunpack.c.l.b16 %v764
        %v1125 = vunpack.c.l.b16 %v765
        %v1126 = vunpack.c.l.b16 %v766
        %v1127 = vunpack.c.l.b16 %v767
        %v1128 = vunpack.c.l.b16 %v768
        %v1129 = vunpack.c.l.b16 %v769
        %v1130 = vunpack.c.l.b16 %v770
        %v1131 = vunpack.c.l.b16 %v771
        %v1132 = vunpack.c.l.b16 %v772
        %v1133 = vunpack.c.l.b16 %v773
        %v1134 = vunpack.c.l.b16 %v774
        %v1135 = vunpack.c.l.b16 %v775
        %v1136 = vunpack.c.l.b16 %v776
        %v1137 = vunpack.c.l.b16 %v777
        %v1138 = vunpack.c.l.b16 %v778
        %v1139 = vunpack.c.l.b16 %v779
        %v1140 = vunpack.c.l.b16 %v780
        %v1141 = vunpack.c.l.b16 %v781
        %v1142 = vunpack.c.l.b16 %v782
        %v1143 = vunpack.c.l.b16 %v783
        %v1144 = vunpack.c.l.b16 %v784
        %v1145 = vunpack.c.l.b16 %v785
        %v1146 = vunpack.c.l.b16 %v786
        %v1147 = vpack.c.b16 %v1116, %v1115
        %v1148 = vpack.c.b16 %v1118, %v1117
        %v1149 = vpack.c.b16 %v1120, %v1119
        %v1150 = vpack.c.b16 %v1122, %v1121
        %v1151 = vpack.c.b16 %v1124, %v1123
        %v1152 = vpack.c.b16 %v1126, %v1125
        %v1153 = vpack.c.b16 %v1128, %v1127
        %v1154 = vpack.c.b16 %v1130, %v1129
        %v1155 = vpack.c.b16 %v1132, %v1131
        %v1156 = vpack.c.b16 %v1134, %v1133
        %v1157 = vpack.c.b16 %v1136, %v1135
        %v1158 = vpack.c.b16 %v1138, %v1137
        %v1159 = vpack.c.b16 %v1140, %v1139
        %v1160 = vpack.c.b16 %v1142, %v1141
        %v1161 = vpack.c.b16 %v1144, %v1143
        %v1162 = vpack.c.b16 %v1146, %v1145
        %1179 = vmatprep.subr.bf16.mxu0 0
        %1180 = vmatpush1.bf16.msra.mxu0 %v1147
        %1181 = vmatprep.subr.bf16.mxu0 0
        %1182 = vmatpush1.bf16.msra.mxu0 %v1148
        %1183 = vmatprep.subr.bf16.mxu0 0
        %1184 = vmatpush1.bf16.msra.mxu0 %v1149
        %1185 = vmatprep.subr.bf16.mxu0 0
        %1186 = vmatpush1.bf16.msra.mxu0 %v1150
        %1187 = vmatprep.subr.bf16.mxu0 0
        %1188 = vmatpush1.bf16.msra.mxu0 %v1151
        %1189 = vmatprep.subr.bf16.mxu0 0
        %1190 = vmatpush1.bf16.msra.mxu0 %v1152
        %1191 = vmatprep.subr.bf16.mxu0 0
        %1192 = vmatpush1.bf16.msra.mxu0 %v1153
        %1193 = vmatprep.subr.bf16.mxu0 0
        %1194 = vmatpush1.bf16.msra.mxu0 %v1154
        %1195 = vmatprep.subr.bf16.mxu0 0
        %1196 = vmatpush1.bf16.msra.mxu0 %v1155
        %1197 = vmatprep.subr.bf16.mxu0 0
        %1198 = vmatpush1.bf16.msra.mxu0 %v1156
        %1199 = vmatprep.subr.bf16.mxu0 0
        %1200 = vmatpush1.bf16.msra.mxu0 %v1157
        %1201 = vmatprep.subr.bf16.mxu0 0
        %1202 = vmatpush1.bf16.msra.mxu0 %v1158
        %1203 = vmatprep.subr.bf16.mxu0 0
        %1204 = vmatpush1.bf16.msra.mxu0 %v1159
        %1205 = vmatprep.subr.bf16.mxu0 0
        %1206 = vmatpush1.bf16.msra.mxu0 %v1160
        %1207 = vmatprep.subr.bf16.mxu0 0
        %1208 = vmatpush1.bf16.msra.mxu0 %v1161
        %1209 = vmatprep.subr.bf16.mxu0 0
        %1210 = vmatpush1.bf16.msra.mxu0 %v1162
        %1211 = vmatprep.mubr.bf16.mxu0 %v810
        %1212 = vmatmul.mubr.bf16.gmra.mrb[0].mxu0 %v798
        %v1213 = vpop.f32.mrb[0].mxu0
        %v1214 = vadd.f32 0.0, %v1213
        %v1215 = vpop.f32.mrb[0].mxu0
        %v1216 = vpop.f32.mrb[0].mxu0
        %v1217 = vadd.f32 0.0, %v1216
        %v1218 = vpop.f32.mrb[0].mxu0
        %1219 = vmatprep.mubr.bf16.mxu0 %v826
        %1220 = vmatmul.mubr.bf16.gmra.mrb[0].mxu0 %v818
        %v1221 = vpop.f32.mrb[0].mxu0
        %v1222 = vadd.f32 0.0, %v1221
        %v1223 = vpop.f32.mrb[0].mxu0
        %v1224 = vpop.f32.mrb[0].mxu0
        %v1225 = vadd.f32 0.0, %v1224
        %v1226 = vpop.f32.mrb[0].mxu0
        %1227 = vmatprep.mubr.bf16.mxu0 %v842
        %1228 = vmatmul.mubr.bf16.gmra.mrb[0].mxu0 %v834
        %v1229 = vpop.f32.mrb[0].mxu0
        %v1230 = vadd.f32 0.0, %v1229
        %v1231 = vpop.f32.mrb[0].mxu0
        %v1232 = vpop.f32.mrb[0].mxu0
        %v1233 = vadd.f32 0.0, %v1232
        %v1234 = vpop.f32.mrb[0].mxu0
        %1235 = vmatprep.mubr.bf16.mxu0 %v858
        %1236 = vmatmul.mubr.bf16.gmra.mrb[0].mxu0 %v850
        %v1237 = vpop.f32.mrb[0].mxu0
        %v1238 = vadd.f32 0.0, %v1237
        %v1239 = vpop.f32.mrb[0].mxu0
        %v1240 = vpop.f32.mrb[0].mxu0
        %v1241 = vadd.f32 0.0, %v1240
        %v1242 = vpop.f32.mrb[0].mxu0
        %1243 = vmatprep.mubr.bf16.mxu0 %v874
        %1244 = vmatmul.mubr.bf16.gmra.mrb[0].mxu0 %v866
        %v1245 = vpop.f32.mrb[0].mxu0
        %v1246 = vadd.f32 0.0, %v1245
        %v1247 = vpop.f32.mrb[0].mxu0
        %v1248 = vpop.f32.mrb[0].mxu0
        %v1249 = vadd.f32 0.0, %v1248
        %v1250 = vpop.f32.mrb[0].mxu0
        %1251 = vmatprep.mubr.bf16.mxu0 %v890
        %1252 = vmatmul.mubr.bf16.gmra.mrb[0].mxu0 %v882
        %v1253 = vpop.f32.mrb[0].mxu0
        %v1254 = vadd.f32 0.0, %v1253
        %v1255 = vpop.f32.mrb[0].mxu0
        %v1256 = vpop.f32.mrb[0].mxu0
        %v1257 = vadd.f32 0.0, %v1256
        %v1258 = vpop.f32.mrb[0].mxu0
        %1259 = vmatprep.mubr.bf16.mxu0 %v906
        %1260 = vmatmul.mubr.bf16.gmra.mrb[0].mxu0 %v898
        %v1261 = vpop.f32.mrb[0].mxu0
        %v1262 = vadd.f32 0.0, %v1261
        %v1263 = vpop.f32.mrb[0].mxu0
        %v1264 = vpop.f32.mrb[0].mxu0
        %v1265 = vadd.f32 0.0, %v1264
        %v1266 = vpop.f32.mrb[0].mxu0
        %1267 = vmatprep.mubr.bf16.mxu0 %v922
        %1268 = vmatmul.mubr.bf16.gmra.mrb[0].mxu0 %v914
        %v1269 = vpop.f32.mrb[0].mxu0
        %v1270 = vadd.f32 0.0, %v1269
        %v1271 = vpop.f32.mrb[0].mxu0
        %v1272 = vpop.f32.mrb[0].mxu0
        %v1273 = vadd.f32 0.0, %v1272
        %v1274 = vpop.f32.mrb[0].mxu0
        %1275 = vmatprep.mubr.bf16.mxu0 %v938
        %1276 = vmatmul.mubr.bf16.gmra.mrb[0].mxu0 %v930
        %v1277 = vpop.f32.mrb[0].mxu0
        %v1278 = vadd.f32 0.0, %v1277
        %v1279 = vpop.f32.mrb[0].mxu0
        %v1280 = vpop.f32.mrb[0].mxu0
        %v1281 = vadd.f32 0.0, %v1280
        %v1282 = vpop.f32.mrb[0].mxu0
        %1283 = vmatprep.mubr.bf16.mxu0 %v954
        %1284 = vmatmul.mubr.bf16.gmra.mrb[0].mxu0 %v946
        %v1285 = vpop.f32.mrb[0].mxu0
        %v1286 = vadd.f32 0.0, %v1285
        %v1287 = vpop.f32.mrb[0].mxu0
        %v1288 = vpop.f32.mrb[0].mxu0
        %v1289 = vadd.f32 0.0, %v1288
        %v1290 = vpop.f32.mrb[0].mxu0
        %1291 = vmatprep.mubr.bf16.mxu0 %v970
        %1292 = vmatmul.mubr.bf16.gmra.mrb[0].mxu0 %v962
        %v1293 = vpop.f32.mrb[0].mxu0
        %v1294 = vadd.f32 0.0, %v1293
        %v1295 = vpop.f32.mrb[0].mxu0
        %v1296 = vpop.f32.mrb[0].mxu0
        %v1297 = vadd.f32 0.0, %v1296
        %v1298 = vpop.f32.mrb[0].mxu0
        %1299 = vmatprep.mubr.bf16.mxu0 %v986
        %1300 = vmatmul.mubr.bf16.gmra.mrb[0].mxu0 %v978
        %v1301 = vpop.f32.mrb[0].mxu0
        %v1302 = vadd.f32 0.0, %v1301
        %v1303 = vpop.f32.mrb[0].mxu0
        %v1304 = vpop.f32.mrb[0].mxu0
        %v1305 = vadd.f32 0.0, %v1304
        %v1306 = vpop.f32.mrb[0].mxu0
        %1307 = vmatprep.mubr.bf16.mxu0 %v1002
        %1308 = vmatmul.mubr.bf16.gmra.mrb[0].mxu0 %v994
        %v1309 = vpop.f32.mrb[0].mxu0
        %v1310 = vadd.f32 0.0, %v1309
        %v1311 = vpop.f32.mrb[0].mxu0
        %v1312 = vpop.f32.mrb[0].mxu0
        %v1313 = vadd.f32 0.0, %v1312
        %v1314 = vpop.f32.mrb[0].mxu0
        %1315 = vmatprep.mubr.bf16.mxu0 %v1018
        %1316 = vmatmul.mubr.bf16.gmra.mrb[0].mxu0 %v1010
        %v1317 = vpop.f32.mrb[0].mxu0
        %v1318 = vadd.f32 0.0, %v1317
        %v1319 = vpop.f32.mrb[0].mxu0
        %v1320 = vpop.f32.mrb[0].mxu0
        %v1321 = vadd.f32 0.0, %v1320
        %v1322 = vpop.f32.mrb[0].mxu0
        %1323 = vmatprep.mubr.bf16.mxu0 %v1034
        %1324 = vmatmul.mubr.bf16.gmra.mrb[0].mxu0 %v1026
        %v1325 = vpop.f32.mrb[0].mxu0
        %v1326 = vadd.f32 0.0, %v1325
        %v1327 = vpop.f32.mrb[0].mxu0
        %v1328 = vpop.f32.mrb[0].mxu0
        %v1329 = vadd.f32 0.0, %v1328
        %v1330 = vpop.f32.mrb[0].mxu0
        %1331 = vmatprep.mubr.bf16.mxu0 %v1050
        %1332 = vmatmul.mubr.bf16.gmra.mrb[0].mxu0 %v1042
        %v1333 = vpop.f32.mrb[0].mxu0
        %v1334 = vadd.f32 0.0, %v1333
        %v1335 = vpop.f32.mrb[0].mxu0
        %v1336 = vpop.f32.mrb[0].mxu0
        %v1337 = vadd.f32 0.0, %v1336
        %v1338 = vpop.f32.mrb[0].mxu0
        %1339 = vdwg.mxu0
        %v1341 = vshrl.u32 %v486, 16
        %v1343 = vrot.slane %v1341, 7
        %v1345 = vshrl.u32 %v487, 16
        %v1347 = vrot.slane %v1345, 7
        %v1348 = vshll.u32 %v487, 16
        %v1350 = vor.u32 %v1347, %v1348
        %v1351 = vsel %vm670, %v1343, %v1350
        %v1353 = vshrl.u32 %v506, 16
        %v1355 = vrot.slane %v1353, 7
        %v1357 = vshrl.u32 %v514, 16
        %v1359 = vrot.slane %v1357, 7
        %v1360 = vshll.u32 %v514, 16
        %v1362 = vor.u32 %v1359, %v1360
        %v1363 = vsel %vm670, %v1355, %v1362
        %v1365 = vshrl.u32 %v488, 16
        %v1367 = vrot.slane %v1365, 7
        %v1368 = vshll.u32 %v488, 16
        %v1370 = vor.u32 %v1367, %v1368
        %v1371 = vsel %vm670, %v1347, %v1370
        %v1373 = vshrl.u32 %v522, 16
        %v1375 = vrot.slane %v1373, 7
        %v1376 = vshll.u32 %v522, 16
        %v1378 = vor.u32 %v1375, %v1376
        %v1379 = vsel %vm670, %v1359, %v1378
        %v1381 = vshrl.u32 %v489, 16
        %v1383 = vrot.slane %v1381, 7
        %v1384 = vshll.u32 %v489, 16
        %v1386 = vor.u32 %v1383, %v1384
        %v1387 = vsel %vm670, %v1367, %v1386
        %v1389 = vshrl.u32 %v530, 16
        %v1391 = vrot.slane %v1389, 7
        %v1392 = vshll.u32 %v530, 16
        %v1394 = vor.u32 %v1391, %v1392
        %v1395 = vsel %vm670, %v1375, %v1394
        %v1397 = vshrl.u32 %v490, 16
        %v1399 = vrot.slane %v1397, 7
        %v1400 = vshll.u32 %v490, 16
        %v1402 = vor.u32 %v1399, %v1400
        %v1403 = vsel %vm670, %v1383, %v1402
        %v1405 = vshrl.u32 %v538, 16
        %v1407 = vrot.slane %v1405, 7
        %v1408 = vshll.u32 %v538, 16
        %v1410 = vor.u32 %v1407, %v1408
        %v1411 = vsel %vm670, %v1391, %v1410
        %v1413 = vshrl.u32 %v491, 16
        %v1415 = vrot.slane %v1413, 7
        %v1416 = vshll.u32 %v491, 16
        %v1418 = vor.u32 %v1415, %v1416
        %v1419 = vsel %vm670, %v1399, %v1418
        %v1421 = vshrl.u32 %v546, 16
        %v1423 = vrot.slane %v1421, 7
        %v1424 = vshll.u32 %v546, 16
        %v1426 = vor.u32 %v1423, %v1424
        %v1427 = vsel %vm670, %v1407, %v1426
        %v1429 = vshrl.u32 %v492, 16
        %v1431 = vrot.slane %v1429, 7
        %v1432 = vshll.u32 %v492, 16
        %v1434 = vor.u32 %v1431, %v1432
        %v1435 = vsel %vm670, %v1415, %v1434
        %v1437 = vshrl.u32 %v554, 16
        %v1439 = vrot.slane %v1437, 7
        %v1440 = vshll.u32 %v554, 16
        %v1442 = vor.u32 %v1439, %v1440
        %v1443 = vsel %vm670, %v1423, %v1442
        %v1445 = vshrl.u32 %v493, 16
        %v1447 = vrot.slane %v1445, 7
        %v1448 = vshll.u32 %v493, 16
        %v1450 = vor.u32 %v1447, %v1448
        %v1451 = vsel %vm670, %v1431, %v1450
        %v1453 = vshrl.u32 %v562, 16
        %v1455 = vrot.slane %v1453, 7
        %v1456 = vshll.u32 %v562, 16
        %v1458 = vor.u32 %v1455, %v1456
        %v1459 = vsel %vm670, %v1439, %v1458
        %v1461 = vshrl.u32 %v494, 16
        %v1463 = vrot.slane %v1461, 7
        %v1464 = vshll.u32 %v494, 16
        %v1466 = vor.u32 %v1463, %v1464
        %v1467 = vsel %vm670, %v1447, %v1466
        %v1469 = vshrl.u32 %v570, 16
        %v1471 = vrot.slane %v1469, 7
        %v1472 = vshll.u32 %v570, 16
        %v1474 = vor.u32 %v1471, %v1472
        %v1475 = vsel %vm670, %v1455, %v1474
        %v1477 = vshrl.u32 %v495, 16
        %v1479 = vrot.slane %v1477, 7
        %v1480 = vshll.u32 %v495, 16
        %v1482 = vor.u32 %v1479, %v1480
        %v1483 = vsel %vm670, %v1463, %v1482
        %v1485 = vshrl.u32 %v578, 16
        %v1487 = vrot.slane %v1485, 7
        %v1488 = vshll.u32 %v578, 16
        %v1490 = vor.u32 %v1487, %v1488
        %v1491 = vsel %vm670, %v1471, %v1490
        %v1493 = vshrl.u32 %v496, 16
        %v1495 = vrot.slane %v1493, 7
        %v1496 = vshll.u32 %v496, 16
        %v1498 = vor.u32 %v1495, %v1496
        %v1499 = vsel %vm670, %v1479, %v1498
        %v1501 = vshrl.u32 %v586, 16
        %v1503 = vrot.slane %v1501, 7
        %v1504 = vshll.u32 %v586, 16
        %v1506 = vor.u32 %v1503, %v1504
        %v1507 = vsel %vm670, %v1487, %v1506
        %v1509 = vshrl.u32 %v497, 16
        %v1511 = vrot.slane %v1509, 7
        %v1512 = vshll.u32 %v497, 16
        %v1514 = vor.u32 %v1511, %v1512
        %v1515 = vsel %vm670, %v1495, %v1514
        %v1517 = vshrl.u32 %v594, 16
        %v1519 = vrot.slane %v1517, 7
        %v1520 = vshll.u32 %v594, 16
        %v1522 = vor.u32 %v1519, %v1520
        %v1523 = vsel %vm670, %v1503, %v1522
        %v1525 = vshrl.u32 %v498, 16
        %v1527 = vrot.slane %v1525, 7
        %v1528 = vshll.u32 %v498, 16
        %v1530 = vor.u32 %v1527, %v1528
        %v1531 = vsel %vm670, %v1511, %v1530
        %v1533 = vshrl.u32 %v602, 16
        %v1535 = vrot.slane %v1533, 7
        %v1536 = vshll.u32 %v602, 16
        %v1538 = vor.u32 %v1535, %v1536
        %v1539 = vsel %vm670, %v1519, %v1538
        %v1541 = vshrl.u32 %v499, 16
        %v1543 = vrot.slane %v1541, 7
        %v1544 = vshll.u32 %v499, 16
        %v1546 = vor.u32 %v1543, %v1544
        %v1547 = vsel %vm670, %v1527, %v1546
        %v1549 = vshrl.u32 %v610, 16
        %v1551 = vrot.slane %v1549, 7
        %v1552 = vshll.u32 %v610, 16
        %v1554 = vor.u32 %v1551, %v1552
        %v1555 = vsel %vm670, %v1535, %v1554
        %v1557 = vshrl.u32 %v500, 16
        %v1559 = vrot.slane %v1557, 7
        %v1560 = vshll.u32 %v500, 16
        %v1562 = vor.u32 %v1559, %v1560
        %v1563 = vsel %vm670, %v1543, %v1562
        %v1565 = vshrl.u32 %v618, 16
        %v1567 = vrot.slane %v1565, 7
        %v1568 = vshll.u32 %v618, 16
        %v1570 = vor.u32 %v1567, %v1568
        %v1571 = vsel %vm670, %v1551, %v1570
        %v1573 = vshrl.u32 %v501, 16
        %v1575 = vrot.slane %v1573, 7
        %v1576 = vshll.u32 %v501, 16
        %v1578 = vor.u32 %v1575, %v1576
        %v1579 = vsel %vm670, %v1559, %v1578
        %v1581 = vshrl.u32 %v626, 16
        %v1583 = vrot.slane %v1581, 7
        %v1584 = vshll.u32 %v626, 16
        %v1586 = vor.u32 %v1583, %v1584
        %v1587 = vsel %vm670, %v1567, %v1586
        %v1589 = vshrl.u32 %v502, 16
        %v1591 = vrot.slane %v1589, 7
        %v1592 = vshll.u32 %v502, 16
        %v1594 = vor.u32 %v1591, %v1592
        %v1595 = vsel %vm670, %v1575, %v1594
        %v1597 = vshrl.u32 %v629, 16
        %v1599 = vrot.slane %v1597, 7
        %v1600 = vshll.u32 %v629, 16
        %v1602 = vor.u32 %v1599, %v1600
        %v1603 = vsel %vm670, %v1583, %v1602
        %v1668 = vunpack.c.l.b16 %v630
        %v1669 = vunpack.c.l.b16 %v631
        %v1670 = vunpack.c.l.b16 %v632
        %v1671 = vunpack.c.l.b16 %v633
        %v1672 = vunpack.c.l.b16 %v634
        %v1673 = vunpack.c.l.b16 %v635
        %v1674 = vunpack.c.l.b16 %v636
        %v1675 = vunpack.c.l.b16 %v637
        %v1676 = vunpack.c.l.b16 %v638
        %v1677 = vunpack.c.l.b16 %v639
        %v1678 = vunpack.c.l.b16 %v640
        %v1679 = vunpack.c.l.b16 %v641
        %v1680 = vunpack.c.l.b16 %v642
        %v1681 = vunpack.c.l.b16 %v643
        %v1682 = vunpack.c.l.b16 %v644
        %v1683 = vunpack.c.l.b16 %v645
        %v1684 = vunpack.c.l.b16 %v646
        %v1685 = vunpack.c.l.b16 %v647
        %v1686 = vunpack.c.l.b16 %v648
        %v1687 = vunpack.c.l.b16 %v649
        %v1688 = vunpack.c.l.b16 %v650
        %v1689 = vunpack.c.l.b16 %v651
        %v1690 = vunpack.c.l.b16 %v652
        %v1691 = vunpack.c.l.b16 %v653
        %v1692 = vunpack.c.l.b16 %v654
        %v1693 = vunpack.c.l.b16 %v655
        %v1694 = vunpack.c.l.b16 %v656
        %v1695 = vunpack.c.l.b16 %v657
        %v1696 = vunpack.c.l.b16 %v658
        %v1697 = vunpack.c.l.b16 %v659
        %v1698 = vunpack.c.l.b16 %v660
        %v1699 = vunpack.c.l.b16 %v661
        %v1700 = vpack.c.b16 %v1669, %v1668
        %v1701 = vpack.c.b16 %v1671, %v1670
        %v1702 = vpack.c.b16 %v1673, %v1672
        %v1703 = vpack.c.b16 %v1675, %v1674
        %v1704 = vpack.c.b16 %v1677, %v1676
        %v1705 = vpack.c.b16 %v1679, %v1678
        %v1706 = vpack.c.b16 %v1681, %v1680
        %v1707 = vpack.c.b16 %v1683, %v1682
        %v1708 = vpack.c.b16 %v1685, %v1684
        %v1709 = vpack.c.b16 %v1687, %v1686
        %v1710 = vpack.c.b16 %v1689, %v1688
        %v1711 = vpack.c.b16 %v1691, %v1690
        %v1712 = vpack.c.b16 %v1693, %v1692
        %v1713 = vpack.c.b16 %v1695, %v1694
        %v1714 = vpack.c.b16 %v1697, %v1696
        %v1715 = vpack.c.b16 %v1699, %v1698
        %1732 = vmatprep.subr.bf16.mxu0 0
        %1733 = vmatpush1.bf16.msra.mxu0 %v1700
        %1734 = vmatprep.subr.bf16.mxu0 0
        %1735 = vmatpush1.bf16.msra.mxu0 %v1701
        %1736 = vmatprep.subr.bf16.mxu0 0
        %1737 = vmatpush1.bf16.msra.mxu0 %v1702
        %1738 = vmatprep.subr.bf16.mxu0 0
        %1739 = vmatpush1.bf16.msra.mxu0 %v1703
        %1740 = vmatprep.subr.bf16.mxu0 0
        %1741 = vmatpush1.bf16.msra.mxu0 %v1704
        %1742 = vmatprep.subr.bf16.mxu0 0
        %1743 = vmatpush1.bf16.msra.mxu0 %v1705
        %1744 = vmatprep.subr.bf16.mxu0 0
        %1745 = vmatpush1.bf16.msra.mxu0 %v1706
        %1746 = vmatprep.subr.bf16.mxu0 0
        %1747 = vmatpush1.bf16.msra.mxu0 %v1707
        %1748 = vmatprep.subr.bf16.mxu0 0
        %1749 = vmatpush1.bf16.msra.mxu0 %v1708
        %1750 = vmatprep.subr.bf16.mxu0 0
        %1751 = vmatpush1.bf16.msra.mxu0 %v1709
        %1752 = vmatprep.subr.bf16.mxu0 0
        %1753 = vmatpush1.bf16.msra.mxu0 %v1710
        %1754 = vmatprep.subr.bf16.mxu0 0
        %1755 = vmatpush1.bf16.msra.mxu0 %v1711
        %1756 = vmatprep.subr.bf16.mxu0 0
        %1757 = vmatpush1.bf16.msra.mxu0 %v1712
        %1758 = vmatprep.subr.bf16.mxu0 0
        %1759 = vmatpush1.bf16.msra.mxu0 %v1713
        %1760 = vmatprep.subr.bf16.mxu0 0
        %1761 = vmatpush1.bf16.msra.mxu0 %v1714
        %1762 = vmatprep.subr.bf16.mxu0 0
        %1763 = vmatpush1.bf16.msra.mxu0 %v1715
        %1764 = vmatprep.mubr.bf16.mxu0 %v1363
        %1765 = vmatmul.mubr.bf16.gmra.mrb[0].mxu0 %v1351
        %v1766 = vpop.f32.mrb[0].mxu0
        %v1767 = vadd.f32 %v1214, %v1766
        %v1768 = vpop.f32.mrb[0].mxu0
        %v1769 = vpop.f32.mrb[0].mxu0
        %v1770 = vadd.f32 %v1217, %v1769
        %v1771 = vpop.f32.mrb[0].mxu0
        %1772 = vmatprep.mubr.bf16.mxu0 %v1379
        %1773 = vmatmul.mubr.bf16.gmra.mrb[0].mxu0 %v1371
        %v1774 = vpop.f32.mrb[0].mxu0
        %v1775 = vadd.f32 %v1222, %v1774
        %v1776 = vpop.f32.mrb[0].mxu0
        %v1777 = vpop.f32.mrb[0].mxu0
        %v1778 = vadd.f32 %v1225, %v1777
        %v1779 = vpop.f32.mrb[0].mxu0
        %1780 = vmatprep.mubr.bf16.mxu0 %v1395
        %1781 = vmatmul.mubr.bf16.gmra.mrb[0].mxu0 %v1387
        %v1782 = vpop.f32.mrb[0].mxu0
        %v1783 = vadd.f32 %v1230, %v1782
        %v1784 = vpop.f32.mrb[0].mxu0
        %v1785 = vpop.f32.mrb[0].mxu0
        %v1786 = vadd.f32 %v1233, %v1785
        %v1787 = vpop.f32.mrb[0].mxu0
        %1788 = vmatprep.mubr.bf16.mxu0 %v1411
        %1789 = vmatmul.mubr.bf16.gmra.mrb[0].mxu0 %v1403
        %v1790 = vpop.f32.mrb[0].mxu0
        %v1791 = vadd.f32 %v1238, %v1790
        %v1792 = vpop.f32.mrb[0].mxu0
        %v1793 = vpop.f32.mrb[0].mxu0
        %v1794 = vadd.f32 %v1241, %v1793
        %v1795 = vpop.f32.mrb[0].mxu0
        %1796 = vmatprep.mubr.bf16.mxu0 %v1427
        %1797 = vmatmul.mubr.bf16.gmra.mrb[0].mxu0 %v1419
        %v1798 = vpop.f32.mrb[0].mxu0
        %v1799 = vadd.f32 %v1246, %v1798
        %v1800 = vpop.f32.mrb[0].mxu0
        %v1801 = vpop.f32.mrb[0].mxu0
        %v1802 = vadd.f32 %v1249, %v1801
        %v1803 = vpop.f32.mrb[0].mxu0
        %1804 = vmatprep.mubr.bf16.mxu0 %v1443
        %1805 = vmatmul.mubr.bf16.gmra.mrb[0].mxu0 %v1435
        %v1806 = vpop.f32.mrb[0].mxu0
        %v1807 = vadd.f32 %v1254, %v1806
        %v1808 = vpop.f32.mrb[0].mxu0
        %v1809 = vpop.f32.mrb[0].mxu0
        %v1810 = vadd.f32 %v1257, %v1809
        %v1811 = vpop.f32.mrb[0].mxu0
        %1812 = vmatprep.mubr.bf16.mxu0 %v1459
        %1813 = vmatmul.mubr.bf16.gmra.mrb[0].mxu0 %v1451
        %v1814 = vpop.f32.mrb[0].mxu0
        %v1815 = vadd.f32 %v1262, %v1814
        %v1816 = vpop.f32.mrb[0].mxu0
        %v1817 = vpop.f32.mrb[0].mxu0
        %v1818 = vadd.f32 %v1265, %v1817
        %v1819 = vpop.f32.mrb[0].mxu0
        %1820 = vmatprep.mubr.bf16.mxu0 %v1475
        %1821 = vmatmul.mubr.bf16.gmra.mrb[0].mxu0 %v1467
        %v1822 = vpop.f32.mrb[0].mxu0
        %v1823 = vadd.f32 %v1270, %v1822
        %v1824 = vpop.f32.mrb[0].mxu0
        %v1825 = vpop.f32.mrb[0].mxu0
        %v1826 = vadd.f32 %v1273, %v1825
        %v1827 = vpop.f32.mrb[0].mxu0
        %1828 = vmatprep.mubr.bf16.mxu0 %v1491
        %1829 = vmatmul.mubr.bf16.gmra.mrb[0].mxu0 %v1483
        %v1830 = vpop.f32.mrb[0].mxu0
        %v1831 = vadd.f32 %v1278, %v1830
        %v1832 = vpop.f32.mrb[0].mxu0
        %v1833 = vpop.f32.mrb[0].mxu0
        %v1834 = vadd.f32 %v1281, %v1833
        %v1835 = vpop.f32.mrb[0].mxu0
        %1836 = vmatprep.mubr.bf16.mxu0 %v1507
        %1837 = vmatmul.mubr.bf16.gmra.mrb[0].mxu0 %v1499
        %v1838 = vpop.f32.mrb[0].mxu0
        %v1839 = vadd.f32 %v1286, %v1838
        %v1840 = vpop.f32.mrb[0].mxu0
        %v1841 = vpop.f32.mrb[0].mxu0
        %v1842 = vadd.f32 %v1289, %v1841
        %v1843 = vpop.f32.mrb[0].mxu0
        %1844 = vmatprep.mubr.bf16.mxu0 %v1523
        %1845 = vmatmul.mubr.bf16.gmra.mrb[0].mxu0 %v1515
        %v1846 = vpop.f32.mrb[0].mxu0
        %v1847 = vadd.f32 %v1294, %v1846
        %v1848 = vpop.f32.mrb[0].mxu0
        %v1849 = vpop.f32.mrb[0].mxu0
        %v1850 = vadd.f32 %v1297, %v1849
        %v1851 = vpop.f32.mrb[0].mxu0
        %1852 = vmatprep.mubr.bf16.mxu0 %v1539
        %1853 = vmatmul.mubr.bf16.gmra.mrb[0].mxu0 %v1531
        %v1854 = vpop.f32.mrb[0].mxu0
        %v1855 = vadd.f32 %v1302, %v1854
        %v1856 = vpop.f32.mrb[0].mxu0
        %v1857 = vpop.f32.mrb[0].mxu0
        %v1858 = vadd.f32 %v1305, %v1857
        %v1859 = vpop.f32.mrb[0].mxu0
        %1860 = vmatprep.mubr.bf16.mxu0 %v1555
        %1861 = vmatmul.mubr.bf16.gmra.mrb[0].mxu0 %v1547
        %v1862 = vpop.f32.mrb[0].mxu0
        %v1863 = vadd.f32 %v1310, %v1862
        %v1864 = vpop.f32.mrb[0].mxu0
        %v1865 = vpop.f32.mrb[0].mxu0
        %v1866 = vadd.f32 %v1313, %v1865
        %v1867 = vpop.f32.mrb[0].mxu0
        %1868 = vmatprep.mubr.bf16.mxu0 %v1571
        %1869 = vmatmul.mubr.bf16.gmra.mrb[0].mxu0 %v1563
        %v1870 = vpop.f32.mrb[0].mxu0
        %v1871 = vadd.f32 %v1318, %v1870
        %v1872 = vpop.f32.mrb[0].mxu0
        %v1873 = vpop.f32.mrb[0].mxu0
        %v1874 = vadd.f32 %v1321, %v1873
        %v1875 = vpop.f32.mrb[0].mxu0
        %1876 = vmatprep.mubr.bf16.mxu0 %v1587
        %1877 = vmatmul.mubr.bf16.gmra.mrb[0].mxu0 %v1579
        %v1878 = vpop.f32.mrb[0].mxu0
        %v1879 = vadd.f32 %v1326, %v1878
        %v1880 = vpop.f32.mrb[0].mxu0
        %v1881 = vpop.f32.mrb[0].mxu0
        %v1882 = vadd.f32 %v1329, %v1881
        %v1883 = vpop.f32.mrb[0].mxu0
        %1884 = vmatprep.mubr.bf16.mxu0 %v1603
        %1885 = vmatmul.mubr.bf16.gmra.mrb[0].mxu0 %v1595
        %v1886 = vpop.f32.mrb[0].mxu0
        %v1887 = vadd.f32 %v1334, %v1886
        %v1888 = vpop.f32.mrb[0].mxu0
        %v1889 = vpop.f32.mrb[0].mxu0
        %v1890 = vadd.f32 %v1337, %v1889
        %v1891 = vpop.f32.mrb[0].mxu0
        %1892 = vdwg.mxu0
        %v1893 = vld [vmem:[#allocation2 + $0x10] sm:$0xff]
        %v1894 = vld [vmem:[#allocation2 + $0x18] sm:$0xff]
        %v1895 = vld [vmem:[#allocation2 + $0x20] sm:$0xff]
        %v1896 = vld [vmem:[#allocation2 + $0x28] sm:$0xff]
        %v1897 = vld [vmem:[#allocation2 + $0x30] sm:$0xff]
        %v1898 = vld [vmem:[#allocation2 + $0x38] sm:$0xff]
        %v1899 = vld [vmem:[#allocation2 + $0x40] sm:$0xff]
        %v1900 = vld [vmem:[#allocation2 + $0x48] sm:$0xff]
        %v1901 = vld [vmem:[#allocation2 + $0x50] sm:$0xff]
        %v1902 = vld [vmem:[#allocation2 + $0x58] sm:$0xff]
        %v1903 = vld [vmem:[#allocation2 + $0x60] sm:$0xff]
        %v1904 = vld [vmem:[#allocation2 + $0x68] sm:$0xff]
        %v1905 = vld [vmem:[#allocation2 + $0x70] sm:$0xff]
        %v1906 = vld [vmem:[#allocation2 + $0x78] sm:$0xff]
        %v1907 = vld [vmem:[#allocation2 + $0x80] sm:$0xff]
        %v1908 = vld [vmem:[#allocation2 + $0x88] sm:$0xff]
        %v1909 = vld [vmem:[#allocation2 + $0x90] sm:$0x1]
        %v1910 = vsel %vm679, %v1893, 0
        %v1911 = vsel %vm680, %v1894, 0
        %v1912 = vsel %vm680, %v1895, 0
        %v1913 = vsel %vm680, %v1896, 0
        %v1914 = vsel %vm680, %v1897, 0
        %v1915 = vsel %vm680, %v1898, 0
        %v1916 = vsel %vm680, %v1899, 0
        %v1917 = vsel %vm680, %v1900, 0
        %v1918 = vsel %vm680, %v1901, 0
        %v1919 = vsel %vm680, %v1902, 0
        %v1920 = vsel %vm680, %v1903, 0
        %v1921 = vsel %vm680, %v1904, 0
        %v1922 = vsel %vm680, %v1905, 0
        %v1923 = vsel %vm680, %v1906, 0
        %v1924 = vsel %vm680, %v1907, 0
        %v1925 = vsel %vm680, %v1908, 0
        %v1926 = vsel %vm681, %v1909, 0
        %v1928 = vshrl.u32 %v1910, 16
        %v1930 = vshll.u32 %v1910, 16
        %v1932 = vrot.slane %v1930, 1
        %v1933 = vor.u32 %v1928, %v1932
        %v1935 = vshll.u32 %v1911, 16
        %v1937 = vrot.slane %v1935, 1
        %v1938 = vsel %vm474, %v1933, %v1937
        %v1939 = vshrl.u32 %v1911, 16
        %v1941 = vor.u32 %v1939, %v1937
        %v1943 = vshll.u32 %v1912, 16
        %v1945 = vrot.slane %v1943, 1
        %v1946 = vsel %vm474, %v1941, %v1945
        %v1947 = vshrl.u32 %v1912, 16
        %v1949 = vor.u32 %v1947, %v1945
        %v1951 = vshll.u32 %v1913, 16
        %v1953 = vrot.slane %v1951, 1
        %v1954 = vsel %vm474, %v1949, %v1953
        %v1955 = vshrl.u32 %v1913, 16
        %v1957 = vor.u32 %v1955, %v1953
        %v1959 = vshll.u32 %v1914, 16
        %v1961 = vrot.slane %v1959, 1
        %v1962 = vsel %vm474, %v1957, %v1961
        %v1963 = vshrl.u32 %v1914, 16
        %v1965 = vor.u32 %v1963, %v1961
        %v1967 = vshll.u32 %v1915, 16
        %v1969 = vrot.slane %v1967, 1
        %v1970 = vsel %vm474, %v1965, %v1969
        %v1971 = vshrl.u32 %v1915, 16
        %v1973 = vor.u32 %v1971, %v1969
        %v1975 = vshll.u32 %v1916, 16
        %v1977 = vrot.slane %v1975, 1
        %v1978 = vsel %vm474, %v1973, %v1977
        %v1979 = vshrl.u32 %v1916, 16
        %v1981 = vor.u32 %v1979, %v1977
        %v1983 = vshll.u32 %v1917, 16
        %v1985 = vrot.slane %v1983, 1
        %v1986 = vsel %vm474, %v1981, %v1985
        %v1987 = vshrl.u32 %v1917, 16
        %v1989 = vor.u32 %v1987, %v1985
        %v1991 = vshll.u32 %v1918, 16
        %v1993 = vrot.slane %v1991, 1
        %v1994 = vsel %vm474, %v1989, %v1993
        %v1995 = vshrl.u32 %v1918, 16
        %v1997 = vor.u32 %v1995, %v1993
        %v1999 = vshll.u32 %v1919, 16
        %v2001 = vrot.slane %v1999, 1
        %v2002 = vsel %vm474, %v1997, %v2001
        %v2003 = vshrl.u32 %v1919, 16
        %v2005 = vor.u32 %v2003, %v2001
        %v2007 = vshll.u32 %v1920, 16
        %v2009 = vrot.slane %v2007, 1
        %v2010 = vsel %vm474, %v2005, %v2009
        %v2011 = vshrl.u32 %v1920, 16
        %v2013 = vor.u32 %v2011, %v2009
        %v2015 = vshll.u32 %v1921, 16
        %v2017 = vrot.slane %v2015, 1
        %v2018 = vsel %vm474, %v2013, %v2017
        %v2019 = vshrl.u32 %v1921, 16
        %v2021 = vor.u32 %v2019, %v2017
        %v2023 = vshll.u32 %v1922, 16
        %v2025 = vrot.slane %v2023, 1
        %v2026 = vsel %vm474, %v2021, %v2025
        %v2027 = vshrl.u32 %v1922, 16
        %v2029 = vor.u32 %v2027, %v2025
        %v2031 = vshll.u32 %v1923, 16
        %v2033 = vrot.slane %v2031, 1
        %v2034 = vsel %vm474, %v2029, %v2033
        %v2035 = vshrl.u32 %v1923, 16
        %v2037 = vor.u32 %v2035, %v2033
        %v2039 = vshll.u32 %v1924, 16
        %v2041 = vrot.slane %v2039, 1
        %v2042 = vsel %vm474, %v2037, %v2041
        %v2043 = vshrl.u32 %v1924, 16
        %v2045 = vor.u32 %v2043, %v2041
        %v2047 = vshll.u32 %v1925, 16
        %v2049 = vrot.slane %v2047, 1
        %v2050 = vsel %vm474, %v2045, %v2049
        %v2051 = vshrl.u32 %v1925, 16
        %v2053 = vor.u32 %v2051, %v2049
        %v2055 = vshll.u32 %v1926, 16
        %v2057 = vrot.slane %v2055, 1
        %v2058 = vsel %vm474, %v2053, %v2057
        %v2075 = vld [vmem:[#allocation6 + $0x100] sm:$0xf]
        %v2076 = vld [vmem:[#allocation6 + $0x104] sm:$0xf]
        %v2077 = vld [vmem:[#allocation6 + $0x108] sm:$0xf]
        %v2078 = vld [vmem:[#allocation6 + $0x10c] sm:$0xf]
        %v2079 = vld [vmem:[#allocation6 + $0x110] sm:$0xf]
        %v2080 = vld [vmem:[#allocation6 + $0x114] sm:$0xf]
        %v2081 = vld [vmem:[#allocation6 + $0x118] sm:$0xf]
        %v2082 = vld [vmem:[#allocation6 + $0x11c] sm:$0xf]
        %v2083 = vld [vmem:[#allocation6 + $0x120] sm:$0xf]
        %v2084 = vld [vmem:[#allocation6 + $0x124] sm:$0xf]
        %v2085 = vld [vmem:[#allocation6 + $0x128] sm:$0xf]
        %v2086 = vld [vmem:[#allocation6 + $0x12c] sm:$0xf]
        %v2087 = vld [vmem:[#allocation6 + $0x130] sm:$0xf]
        %v2088 = vld [vmem:[#allocation6 + $0x134] sm:$0xf]
        %v2089 = vld [vmem:[#allocation6 + $0x138] sm:$0xf]
        %v2090 = vld [vmem:[#allocation6 + $0x13c] sm:$0xf]
        %v2091 = vld [vmem:[#allocation6 + $0x140] sm:$0xf]
        %v2092 = vld [vmem:[#allocation6 + $0x144] sm:$0xf]
        %v2093 = vld [vmem:[#allocation6 + $0x148] sm:$0xf]
        %v2094 = vld [vmem:[#allocation6 + $0x14c] sm:$0xf]
        %v2095 = vld [vmem:[#allocation6 + $0x150] sm:$0xf]
        %v2096 = vld [vmem:[#allocation6 + $0x154] sm:$0xf]
        %v2097 = vld [vmem:[#allocation6 + $0x158] sm:$0xf]
        %v2098 = vld [vmem:[#allocation6 + $0x15c] sm:$0xf]
        %v2099 = vld [vmem:[#allocation6 + $0x160] sm:$0xf]
        %v2100 = vld [vmem:[#allocation6 + $0x164] sm:$0xf]
        %v2101 = vld [vmem:[#allocation6 + $0x168] sm:$0xf]
        %v2102 = vld [vmem:[#allocation6 + $0x16c] sm:$0xf]
        %v2103 = vld [vmem:[#allocation6 + $0x170] sm:$0xf]
        %v2104 = vld [vmem:[#allocation6 + $0x174] sm:$0xf]
        %v2105 = vld [vmem:[#allocation6 + $0x178] sm:$0xf]
        %v2106 = vld [vmem:[#allocation6 + $0x17c] sm:$0xf]
        %v2139 = vunpack.c.l.b16 %v2075
        %v2140 = vunpack.c.l.b16 %v2076
        %v2141 = vunpack.c.l.b16 %v2077
        %v2142 = vunpack.c.l.b16 %v2078
        %v2143 = vunpack.c.l.b16 %v2079
        %v2144 = vunpack.c.l.b16 %v2080
        %v2145 = vunpack.c.l.b16 %v2081
        %v2146 = vunpack.c.l.b16 %v2082
        %v2147 = vunpack.c.l.b16 %v2083
        %v2148 = vunpack.c.l.b16 %v2084
        %v2149 = vunpack.c.l.b16 %v2085
        %v2150 = vunpack.c.l.b16 %v2086
        %v2151 = vunpack.c.l.b16 %v2087
        %v2152 = vunpack.c.l.b16 %v2088
        %v2153 = vunpack.c.l.b16 %v2089
        %v2154 = vunpack.c.l.b16 %v2090
        %v2155 = vunpack.c.l.b16 %v2091
        %v2156 = vunpack.c.l.b16 %v2092
        %v2157 = vunpack.c.l.b16 %v2093
        %v2158 = vunpack.c.l.b16 %v2094
        %v2159 = vunpack.c.l.b16 %v2095
        %v2160 = vunpack.c.l.b16 %v2096
        %v2161 = vunpack.c.l.b16 %v2097
        %v2162 = vunpack.c.l.b16 %v2098
        %v2163 = vunpack.c.l.b16 %v2099
        %v2164 = vunpack.c.l.b16 %v2100
        %v2165 = vunpack.c.l.b16 %v2101
        %v2166 = vunpack.c.l.b16 %v2102
        %v2167 = vunpack.c.l.b16 %v2103
        %v2168 = vunpack.c.l.b16 %v2104
        %v2169 = vunpack.c.l.b16 %v2105
        %v2170 = vunpack.c.l.b16 %v2106
        %v2171 = vpack.c.b16 %v2140, %v2139
        %v2172 = vpack.c.b16 %v2142, %v2141
        %v2173 = vpack.c.b16 %v2144, %v2143
        %v2174 = vpack.c.b16 %v2146, %v2145
        %v2175 = vpack.c.b16 %v2148, %v2147
        %v2176 = vpack.c.b16 %v2150, %v2149
        %v2177 = vpack.c.b16 %v2152, %v2151
        %v2178 = vpack.c.b16 %v2154, %v2153
        %v2179 = vpack.c.b16 %v2156, %v2155
        %v2180 = vpack.c.b16 %v2158, %v2157
        %v2181 = vpack.c.b16 %v2160, %v2159
        %v2182 = vpack.c.b16 %v2162, %v2161
        %v2183 = vpack.c.b16 %v2164, %v2163
        %v2184 = vpack.c.b16 %v2166, %v2165
        %v2185 = vpack.c.b16 %v2168, %v2167
        %v2186 = vpack.c.b16 %v2170, %v2169
        %2203 = vmatprep.subr.bf16.mxu0 0
        %2204 = vmatpush1.bf16.msra.mxu0 %v2171
        %2205 = vmatprep.subr.bf16.mxu0 0
        %2206 = vmatpush1.bf16.msra.mxu0 %v2172
        %2207 = vmatprep.subr.bf16.mxu0 0
        %2208 = vmatpush1.bf16.msra.mxu0 %v2173
        %2209 = vmatprep.subr.bf16.mxu0 0
        %2210 = vmatpush1.bf16.msra.mxu0 %v2174
        %2211 = vmatprep.subr.bf16.mxu0 0
        %2212 = vmatpush1.bf16.msra.mxu0 %v2175
        %2213 = vmatprep.subr.bf16.mxu0 0
        %2214 = vmatpush1.bf16.msra.mxu0 %v2176
        %2215 = vmatprep.subr.bf16.mxu0 0
        %2216 = vmatpush1.bf16.msra.mxu0 %v2177
        %2217 = vmatprep.subr.bf16.mxu0 0
        %2218 = vmatpush1.bf16.msra.mxu0 %v2178
        %2219 = vmatprep.subr.bf16.mxu0 0
        %2220 = vmatpush1.bf16.msra.mxu0 %v2179
        %2221 = vmatprep.subr.bf16.mxu0 0
        %2222 = vmatpush1.bf16.msra.mxu0 %v2180
        %2223 = vmatprep.subr.bf16.mxu0 0
        %2224 = vmatpush1.bf16.msra.mxu0 %v2181
        %2225 = vmatprep.subr.bf16.mxu0 0
        %2226 = vmatpush1.bf16.msra.mxu0 %v2182
        %2227 = vmatprep.subr.bf16.mxu0 0
        %2228 = vmatpush1.bf16.msra.mxu0 %v2183
        %2229 = vmatprep.subr.bf16.mxu0 0
        %2230 = vmatpush1.bf16.msra.mxu0 %v2184
        %2231 = vmatprep.subr.bf16.mxu0 0
        %2232 = vmatpush1.bf16.msra.mxu0 %v2185
        %2233 = vmatprep.subr.bf16.mxu0 0
        %2234 = vmatpush1.bf16.msra.mxu0 %v2186
        %2235 = vmatprep.mubr.bf16.mxu0 %v1938
        %2236 = vmatmul.mubr.bf16.gmra.mrb[0].mxu0 %v452
        %v2237 = vpop.f32.mrb[0].mxu0
        %v2238 = vadd.f32 0.0, %v2237
        %v2239 = vpop.f32.mrb[0].mxu0
        %v2240 = vpop.f32.mrb[0].mxu0
        %v2241 = vadd.f32 0.0, %v2240
        %v2242 = vpop.f32.mrb[0].mxu0
        %2243 = vmatprep.mubr.bf16.mxu0 %v1946
        %2244 = vmatmul.mubr.bf16.gmra.mrb[0].mxu0 %v453
        %v2245 = vpop.f32.mrb[0].mxu0
        %v2246 = vadd.f32 0.0, %v2245
        %v2247 = vpop.f32.mrb[0].mxu0
        %v2248 = vpop.f32.mrb[0].mxu0
        %v2249 = vadd.f32 0.0, %v2248
        %v2250 = vpop.f32.mrb[0].mxu0
        %2251 = vmatprep.mubr.bf16.mxu0 %v1954
        %2252 = vmatmul.mubr.bf16.gmra.mrb[0].mxu0 %v454
        %v2253 = vpop.f32.mrb[0].mxu0
        %v2254 = vadd.f32 0.0, %v2253
        %v2255 = vpop.f32.mrb[0].mxu0
        %v2256 = vpop.f32.mrb[0].mxu0
        %v2257 = vadd.f32 0.0, %v2256
        %v2258 = vpop.f32.mrb[0].mxu0
        %2259 = vmatprep.mubr.bf16.mxu0 %v1962
        %2260 = vmatmul.mubr.bf16.gmra.mrb[0].mxu0 %v455
        %v2261 = vpop.f32.mrb[0].mxu0
        %v2262 = vadd.f32 0.0, %v2261
        %v2263 = vpop.f32.mrb[0].mxu0
        %v2264 = vpop.f32.mrb[0].mxu0
        %v2265 = vadd.f32 0.0, %v2264
        %v2266 = vpop.f32.mrb[0].mxu0
        %2267 = vmatprep.mubr.bf16.mxu0 %v1970
        %2268 = vmatmul.mubr.bf16.gmra.mrb[0].mxu0 %v456
        %v2269 = vpop.f32.mrb[0].mxu0
        %v2270 = vadd.f32 0.0, %v2269
        %v2271 = vpop.f32.mrb[0].mxu0
        %v2272 = vpop.f32.mrb[0].mxu0
        %v2273 = vadd.f32 0.0, %v2272
        %v2274 = vpop.f32.mrb[0].mxu0
        %2275 = vmatprep.mubr.bf16.mxu0 %v1978
        %2276 = vmatmul.mubr.bf16.gmra.mrb[0].mxu0 %v457
        %v2277 = vpop.f32.mrb[0].mxu0
        %v2278 = vadd.f32 0.0, %v2277
        %v2279 = vpop.f32.mrb[0].mxu0
        %v2280 = vpop.f32.mrb[0].mxu0
        %v2281 = vadd.f32 0.0, %v2280
        %v2282 = vpop.f32.mrb[0].mxu0
        %2283 = vmatprep.mubr.bf16.mxu0 %v1986
        %2284 = vmatmul.mubr.bf16.gmra.mrb[0].mxu0 %v458
        %v2285 = vpop.f32.mrb[0].mxu0
        %v2286 = vadd.f32 0.0, %v2285
        %v2287 = vpop.f32.mrb[0].mxu0
        %v2288 = vpop.f32.mrb[0].mxu0
        %v2289 = vadd.f32 0.0, %v2288
        %v2290 = vpop.f32.mrb[0].mxu0
        %2291 = vmatprep.mubr.bf16.mxu0 %v1994
        %2292 = vmatmul.mubr.bf16.gmra.mrb[0].mxu0 %v459
        %v2293 = vpop.f32.mrb[0].mxu0
        %v2294 = vadd.f32 0.0, %v2293
        %v2295 = vpop.f32.mrb[0].mxu0
        %v2296 = vpop.f32.mrb[0].mxu0
        %v2297 = vadd.f32 0.0, %v2296
        %v2298 = vpop.f32.mrb[0].mxu0
        %2299 = vmatprep.mubr.bf16.mxu0 %v2002
        %2300 = vmatmul.mubr.bf16.gmra.mrb[0].mxu0 %v460
        %v2301 = vpop.f32.mrb[0].mxu0
        %v2302 = vadd.f32 0.0, %v2301
        %v2303 = vpop.f32.mrb[0].mxu0
        %v2304 = vpop.f32.mrb[0].mxu0
        %v2305 = vadd.f32 0.0, %v2304
        %v2306 = vpop.f32.mrb[0].mxu0
        %2307 = vmatprep.mubr.bf16.mxu0 %v2010
        %2308 = vmatmul.mubr.bf16.gmra.mrb[0].mxu0 %v461
        %v2309 = vpop.f32.mrb[0].mxu0
        %v2310 = vadd.f32 0.0, %v2309
        %v2311 = vpop.f32.mrb[0].mxu0
        %v2312 = vpop.f32.mrb[0].mxu0
        %v2313 = vadd.f32 0.0, %v2312
        %v2314 = vpop.f32.mrb[0].mxu0
        %2315 = vmatprep.mubr.bf16.mxu0 %v2018
        %2316 = vmatmul.mubr.bf16.gmra.mrb[0].mxu0 %v462
        %v2317 = vpop.f32.mrb[0].mxu0
        %v2318 = vadd.f32 0.0, %v2317
        %v2319 = vpop.f32.mrb[0].mxu0
        %v2320 = vpop.f32.mrb[0].mxu0
        %v2321 = vadd.f32 0.0, %v2320
        %v2322 = vpop.f32.mrb[0].mxu0
        %2323 = vmatprep.mubr.bf16.mxu0 %v2026
        %2324 = vmatmul.mubr.bf16.gmra.mrb[0].mxu0 %v463
        %v2325 = vpop.f32.mrb[0].mxu0
        %v2326 = vadd.f32 0.0, %v2325
        %v2327 = vpop.f32.mrb[0].mxu0
        %v2328 = vpop.f32.mrb[0].mxu0
        %v2329 = vadd.f32 0.0, %v2328
        %v2330 = vpop.f32.mrb[0].mxu0
        %2331 = vmatprep.mubr.bf16.mxu0 %v2034
        %2332 = vmatmul.mubr.bf16.gmra.mrb[0].mxu0 %v464
        %v2333 = vpop.f32.mrb[0].mxu0
        %v2334 = vadd.f32 0.0, %v2333
        %v2335 = vpop.f32.mrb[0].mxu0
        %v2336 = vpop.f32.mrb[0].mxu0
        %v2337 = vadd.f32 0.0, %v2336
        %v2338 = vpop.f32.mrb[0].mxu0
        %2339 = vmatprep.mubr.bf16.mxu0 %v2042
        %2340 = vmatmul.mubr.bf16.gmra.mrb[0].mxu0 %v465
        %v2341 = vpop.f32.mrb[0].mxu0
        %v2342 = vadd.f32 0.0, %v2341
        %v2343 = vpop.f32.mrb[0].mxu0
        %v2344 = vpop.f32.mrb[0].mxu0
        %v2345 = vadd.f32 0.0, %v2344
        %v2346 = vpop.f32.mrb[0].mxu0
        %2347 = vmatprep.mubr.bf16.mxu0 %v2050
        %2348 = vmatmul.mubr.bf16.gmra.mrb[0].mxu0 %v466
        %v2349 = vpop.f32.mrb[0].mxu0
        %v2350 = vadd.f32 0.0, %v2349
        %v2351 = vpop.f32.mrb[0].mxu0
        %v2352 = vpop.f32.mrb[0].mxu0
        %v2353 = vadd.f32 0.0, %v2352
        %v2354 = vpop.f32.mrb[0].mxu0
        %2355 = vmatprep.mubr.bf16.mxu0 %v2058
        %2356 = vmatmul.mubr.bf16.gmra.mrb[0].mxu0 %v700
        %v2357 = vpop.f32.mrb[0].mxu0
        %v2358 = vadd.f32 0.0, %v2357
        %v2359 = vpop.f32.mrb[0].mxu0
        %v2360 = vpop.f32.mrb[0].mxu0
        %v2361 = vadd.f32 0.0, %v2360
        %v2362 = vpop.f32.mrb[0].mxu0
        %2363 = vdwg.mxu0
        %v2364 = vadd.f32 %v1767, %v2238
        %v2365 = vadd.f32 %v1770, %v2241
        %v2366 = vadd.f32 %v1775, %v2246
        %v2367 = vadd.f32 %v1778, %v2249
        %v2368 = vadd.f32 %v1783, %v2254
        %v2369 = vadd.f32 %v1786, %v2257
        %v2370 = vadd.f32 %v1791, %v2262
        %v2371 = vadd.f32 %v1794, %v2265
        %v2372 = vadd.f32 %v1799, %v2270
        %v2373 = vadd.f32 %v1802, %v2273
        %v2374 = vadd.f32 %v1807, %v2278
        %v2375 = vadd.f32 %v1810, %v2281
        %v2376 = vadd.f32 %v1815, %v2286
        %v2377 = vadd.f32 %v1818, %v2289
        %v2378 = vadd.f32 %v1823, %v2294
        %v2379 = vadd.f32 %v1826, %v2297
        %v2380 = vadd.f32 %v1831, %v2302
        %v2381 = vadd.f32 %v1834, %v2305
        %v2382 = vadd.f32 %v1839, %v2310
        %v2383 = vadd.f32 %v1842, %v2313
        %v2384 = vadd.f32 %v1847, %v2318
        %v2385 = vadd.f32 %v1850, %v2321
        %v2386 = vadd.f32 %v1855, %v2326
        %v2387 = vadd.f32 %v1858, %v2329
        %v2388 = vadd.f32 %v1863, %v2334
        %v2389 = vadd.f32 %v1866, %v2337
        %v2390 = vadd.f32 %v1871, %v2342
        %v2391 = vadd.f32 %v1874, %v2345
        %v2392 = vadd.f32 %v1879, %v2350
        %v2393 = vadd.f32 %v1882, %v2353
        %v2394 = vadd.f32 %v1887, %v2358
        %v2395 = vadd.f32 %v1890, %v2361
        %v2396 = vld [vmem:[#allocation2 + $0x10] sm:$0x80]
        %v2397 = vld [vmem:[#allocation2 + $0x90] sm:$0xff]
        %v2398 = vsel %vm483, %v2396, 0
        %v2399 = vsel %vm484, %v1894, 0
        %v2400 = vsel %vm484, %v1895, 0
        %v2401 = vsel %vm484, %v1896, 0
        %v2402 = vsel %vm484, %v1897, 0
        %v2403 = vsel %vm484, %v1898, 0
        %v2404 = vsel %vm484, %v1899, 0
        %v2405 = vsel %vm484, %v1900, 0
        %v2406 = vsel %vm484, %v1901, 0
        %v2407 = vsel %vm484, %v1902, 0
        %v2408 = vsel %vm484, %v1903, 0
        %v2409 = vsel %vm484, %v1904, 0
        %v2410 = vsel %vm484, %v1905, 0
        %v2411 = vsel %vm484, %v1906, 0
        %v2412 = vsel %vm484, %v1907, 0
        %v2413 = vsel %vm484, %v1908, 0
        %v2414 = vsel %vm485, %v2397, 0
        %v2416 = vshll.u32 %v1894, 16
        %v2418 = vrot.slane %v2416, 1
        %v2419 = vshrl.u32 %v1894, 16
        %v2421 = vor.u32 %v2419, %v2418
        %v2423 = vshll.u32 %v1895, 16
        %v2425 = vrot.slane %v2423, 1
        %v2426 = vsel %vm474, %v2421, %v2425
        %v2427 = vshrl.u32 %v1895, 16
        %v2429 = vor.u32 %v2427, %v2425
        %v2431 = vshll.u32 %v1896, 16
        %v2433 = vrot.slane %v2431, 1
        %v2434 = vsel %vm474, %v2429, %v2433
        %v2435 = vshrl.u32 %v1896, 16
        %v2437 = vor.u32 %v2435, %v2433
        %v2439 = vshll.u32 %v1897, 16
        %v2441 = vrot.slane %v2439, 1
        %v2442 = vsel %vm474, %v2437, %v2441
        %v2443 = vshrl.u32 %v1897, 16
        %v2445 = vor.u32 %v2443, %v2441
        %v2447 = vshll.u32 %v1898, 16
        %v2449 = vrot.slane %v2447, 1
        %v2450 = vsel %vm474, %v2445, %v2449
        %v2451 = vshrl.u32 %v1898, 16
        %v2453 = vor.u32 %v2451, %v2449
        %v2455 = vshll.u32 %v1899, 16
        %v2457 = vrot.slane %v2455, 1
        %v2458 = vsel %vm474, %v2453, %v2457
        %v2459 = vshrl.u32 %v1899, 16
        %v2461 = vor.u32 %v2459, %v2457
        %v2463 = vshll.u32 %v1900, 16
        %v2465 = vrot.slane %v2463, 1
        %v2466 = vsel %vm474, %v2461, %v2465
        %v2467 = vshrl.u32 %v1900, 16
        %v2469 = vor.u32 %v2467, %v2465
        %v2471 = vshll.u32 %v1901, 16
        %v2473 = vrot.slane %v2471, 1
        %v2474 = vsel %vm474, %v2469, %v2473
        %v2475 = vshrl.u32 %v1901, 16
        %v2477 = vor.u32 %v2475, %v2473
        %v2479 = vshll.u32 %v1902, 16
        %v2481 = vrot.slane %v2479, 1
        %v2482 = vsel %vm474, %v2477, %v2481
        %v2483 = vshrl.u32 %v1902, 16
        %v2485 = vor.u32 %v2483, %v2481
        %v2487 = vshll.u32 %v1903, 16
        %v2489 = vrot.slane %v2487, 1
        %v2490 = vsel %vm474, %v2485, %v2489
        %v2491 = vshrl.u32 %v1903, 16
        %v2493 = vor.u32 %v2491, %v2489
        %v2495 = vshll.u32 %v1904, 16
        %v2497 = vrot.slane %v2495, 1
        %v2498 = vsel %vm474, %v2493, %v2497
        %v2499 = vshrl.u32 %v1904, 16
        %v2501 = vor.u32 %v2499, %v2497
        %v2503 = vshll.u32 %v1905, 16
        %v2505 = vrot.slane %v2503, 1
        %v2506 = vsel %vm474, %v2501, %v2505
        %v2507 = vshrl.u32 %v1905, 16
        %v2509 = vor.u32 %v2507, %v2505
        %v2511 = vshll.u32 %v1906, 16
        %v2513 = vrot.slane %v2511, 1
        %v2514 = vsel %vm474, %v2509, %v2513
        %v2515 = vshrl.u32 %v1906, 16
        %v2517 = vor.u32 %v2515, %v2513
        %v2519 = vshll.u32 %v1907, 16
        %v2521 = vrot.slane %v2519, 1
        %v2522 = vsel %vm474, %v2517, %v2521
        %v2523 = vshrl.u32 %v1907, 16
        %v2525 = vor.u32 %v2523, %v2521
        %v2527 = vshll.u32 %v1908, 16
        %v2529 = vrot.slane %v2527, 1
        %v2530 = vsel %vm474, %v2525, %v2529
        %v2531 = vshrl.u32 %v1908, 16
        %v2533 = vor.u32 %v2531, %v2529
        %v2535 = vshll.u32 %v2397, 16
        %v2537 = vrot.slane %v2535, 1
        %v2538 = vsel %vm474, %v2533, %v2537
        %v2539 = vshrl.u32 %v2397, 16
        %v2541 = vor.u32 %v2539, %v2537
        %v2542 = vld [vmem:[#allocation6 + $0x180] sm:$0xf]
        %v2543 = vld [vmem:[#allocation6 + $0x184] sm:$0xf]
        %v2544 = vld [vmem:[#allocation6 + $0x188] sm:$0xf]
        %v2545 = vld [vmem:[#allocation6 + $0x18c] sm:$0xf]
        %v2546 = vld [vmem:[#allocation6 + $0x190] sm:$0xf]
        %v2547 = vld [vmem:[#allocation6 + $0x194] sm:$0xf]
        %v2548 = vld [vmem:[#allocation6 + $0x198] sm:$0xf]
        %v2549 = vld [vmem:[#allocation6 + $0x19c] sm:$0xf]
        %v2550 = vld [vmem:[#allocation6 + $0x1a0] sm:$0xf]
        %v2551 = vld [vmem:[#allocation6 + $0x1a4] sm:$0xf]
        %v2552 = vld [vmem:[#allocation6 + $0x1a8] sm:$0xf]
        %v2553 = vld [vmem:[#allocation6 + $0x1ac] sm:$0xf]
        %v2554 = vld [vmem:[#allocation6 + $0x1b0] sm:$0xf]
        %v2555 = vld [vmem:[#allocation6 + $0x1b4] sm:$0xf]
        %v2556 = vld [vmem:[#allocation6 + $0x1b8] sm:$0xf]
        %v2557 = vld [vmem:[#allocation6 + $0x1bc] sm:$0xf]
        %v2558 = vld [vmem:[#allocation6 + $0x1c0] sm:$0xf]
        %v2559 = vld [vmem:[#allocation6 + $0x1c4] sm:$0xf]
        %v2560 = vld [vmem:[#allocation6 + $0x1c8] sm:$0xf]
        %v2561 = vld [vmem:[#allocation6 + $0x1cc] sm:$0xf]
        %v2562 = vld [vmem:[#allocation6 + $0x1d0] sm:$0xf]
        %v2563 = vld [vmem:[#allocation6 + $0x1d4] sm:$0xf]
        %v2564 = vld [vmem:[#allocation6 + $0x1d8] sm:$0xf]
        %v2565 = vld [vmem:[#allocation6 + $0x1dc] sm:$0xf]
        %v2566 = vld [vmem:[#allocation6 + $0x1e0] sm:$0xf]
        %v2567 = vld [vmem:[#allocation6 + $0x1e4] sm:$0xf]
        %v2568 = vld [vmem:[#allocation6 + $0x1e8] sm:$0xf]
        %v2569 = vld [vmem:[#allocation6 + $0x1ec] sm:$0xf]
        %v2570 = vld [vmem:[#allocation6 + $0x1f0] sm:$0xf]
        %v2571 = vld [vmem:[#allocation6 + $0x1f4] sm:$0xf]
        %v2572 = vld [vmem:[#allocation6 + $0x1f8] sm:$0xf]
        %v2573 = vld [vmem:[#allocation6 + $0x1fc] sm:$0xf]
        %v2575 = vshrl.u32 %v2398, 16
        %v2577 = vrot.slane %v2575, 7
        %v2579 = vshrl.u32 %v2399, 16
        %v2581 = vrot.slane %v2579, 7
        %v2582 = vshll.u32 %v2399, 16
        %v2584 = vor.u32 %v2581, %v2582
        %v2585 = vsel %vm670, %v2577, %v2584
        %v2587 = vshrl.u32 %v2418, 16
        %v2589 = vrot.slane %v2587, 7
        %v2591 = vshrl.u32 %v2426, 16
        %v2593 = vrot.slane %v2591, 7
        %v2594 = vshll.u32 %v2426, 16
        %v2596 = vor.u32 %v2593, %v2594
        %v2597 = vsel %vm670, %v2589, %v2596
        %v2599 = vshrl.u32 %v2400, 16
        %v2601 = vrot.slane %v2599, 7
        %v2602 = vshll.u32 %v2400, 16
        %v2604 = vor.u32 %v2601, %v2602
        %v2605 = vsel %vm670, %v2581, %v2604
        %v2607 = vshrl.u32 %v2434, 16
        %v2609 = vrot.slane %v2607, 7
        %v2610 = vshll.u32 %v2434, 16
        %v2612 = vor.u32 %v2609, %v2610
        %v2613 = vsel %vm670, %v2593, %v2612
        %v2615 = vshrl.u32 %v2401, 16
        %v2617 = vrot.slane %v2615, 7
        %v2618 = vshll.u32 %v2401, 16
        %v2620 = vor.u32 %v2617, %v2618
        %v2621 = vsel %vm670, %v2601, %v2620
        %v2623 = vshrl.u32 %v2442, 16
        %v2625 = vrot.slane %v2623, 7
        %v2626 = vshll.u32 %v2442, 16
        %v2628 = vor.u32 %v2625, %v2626
        %v2629 = vsel %vm670, %v2609, %v2628
        %v2631 = vshrl.u32 %v2402, 16
        %v2633 = vrot.slane %v2631, 7
        %v2634 = vshll.u32 %v2402, 16
        %v2636 = vor.u32 %v2633, %v2634
        %v2637 = vsel %vm670, %v2617, %v2636
        %v2639 = vshrl.u32 %v2450, 16
        %v2641 = vrot.slane %v2639, 7
        %v2642 = vshll.u32 %v2450, 16
        %v2644 = vor.u32 %v2641, %v2642
        %v2645 = vsel %vm670, %v2625, %v2644
        %v2647 = vshrl.u32 %v2403, 16
        %v2649 = vrot.slane %v2647, 7
        %v2650 = vshll.u32 %v2403, 16
        %v2652 = vor.u32 %v2649, %v2650
        %v2653 = vsel %vm670, %v2633, %v2652
        %v2655 = vshrl.u32 %v2458, 16
        %v2657 = vrot.slane %v2655, 7
        %v2658 = vshll.u32 %v2458, 16
        %v2660 = vor.u32 %v2657, %v2658
        %v2661 = vsel %vm670, %v2641, %v2660
        %v2663 = vshrl.u32 %v2404, 16
        %v2665 = vrot.slane %v2663, 7
        %v2666 = vshll.u32 %v2404, 16
        %v2668 = vor.u32 %v2665, %v2666
        %v2669 = vsel %vm670, %v2649, %v2668
        %v2671 = vshrl.u32 %v2466, 16
        %v2673 = vrot.slane %v2671, 7
        %v2674 = vshll.u32 %v2466, 16
        %v2676 = vor.u32 %v2673, %v2674
        %v2677 = vsel %vm670, %v2657, %v2676
        %v2679 = vshrl.u32 %v2405, 16
        %v2681 = vrot.slane %v2679, 7
        %v2682 = vshll.u32 %v2405, 16
        %v2684 = vor.u32 %v2681, %v2682
        %v2685 = vsel %vm670, %v2665, %v2684
        %v2687 = vshrl.u32 %v2474, 16
        %v2689 = vrot.slane %v2687, 7
        %v2690 = vshll.u32 %v2474, 16
        %v2692 = vor.u32 %v2689, %v2690
        %v2693 = vsel %vm670, %v2673, %v2692
        %v2695 = vshrl.u32 %v2406, 16
        %v2697 = vrot.slane %v2695, 7
        %v2698 = vshll.u32 %v2406, 16
        %v2700 = vor.u32 %v2697, %v2698
        %v2701 = vsel %vm670, %v2681, %v2700
        %v2703 = vshrl.u32 %v2482, 16
        %v2705 = vrot.slane %v2703, 7
        %v2706 = vshll.u32 %v2482, 16
        %v2708 = vor.u32 %v2705, %v2706
        %v2709 = vsel %vm670, %v2689, %v2708
        %v2711 = vshrl.u32 %v2407, 16
        %v2713 = vrot.slane %v2711, 7
        %v2714 = vshll.u32 %v2407, 16
        %v2716 = vor.u32 %v2713, %v2714
        %v2717 = vsel %vm670, %v2697, %v2716
        %v2719 = vshrl.u32 %v2490, 16
        %v2721 = vrot.slane %v2719, 7
        %v2722 = vshll.u32 %v2490, 16
        %v2724 = vor.u32 %v2721, %v2722
        %v2725 = vsel %vm670, %v2705, %v2724
        %v2727 = vshrl.u32 %v2408, 16
        %v2729 = vrot.slane %v2727, 7
        %v2730 = vshll.u32 %v2408, 16
        %v2732 = vor.u32 %v2729, %v2730
        %v2733 = vsel %vm670, %v2713, %v2732
        %v2735 = vshrl.u32 %v2498, 16
        %v2737 = vrot.slane %v2735, 7
        %v2738 = vshll.u32 %v2498, 16
        %v2740 = vor.u32 %v2737, %v2738
        %v2741 = vsel %vm670, %v2721, %v2740
        %v2743 = vshrl.u32 %v2409, 16
        %v2745 = vrot.slane %v2743, 7
        %v2746 = vshll.u32 %v2409, 16
        %v2748 = vor.u32 %v2745, %v2746
        %v2749 = vsel %vm670, %v2729, %v2748
        %v2751 = vshrl.u32 %v2506, 16
        %v2753 = vrot.slane %v2751, 7
        %v2754 = vshll.u32 %v2506, 16
        %v2756 = vor.u32 %v2753, %v2754
        %v2757 = vsel %vm670, %v2737, %v2756
        %v2759 = vshrl.u32 %v2410, 16
        %v2761 = vrot.slane %v2759, 7
        %v2762 = vshll.u32 %v2410, 16
        %v2764 = vor.u32 %v2761, %v2762
        %v2765 = vsel %vm670, %v2745, %v2764
        %v2767 = vshrl.u32 %v2514, 16
        %v2769 = vrot.slane %v2767, 7
        %v2770 = vshll.u32 %v2514, 16
        %v2772 = vor.u32 %v2769, %v2770
        %v2773 = vsel %vm670, %v2753, %v2772
        %v2775 = vshrl.u32 %v2411, 16
        %v2777 = vrot.slane %v2775, 7
        %v2778 = vshll.u32 %v2411, 16
        %v2780 = vor.u32 %v2777, %v2778
        %v2781 = vsel %vm670, %v2761, %v2780
        %v2783 = vshrl.u32 %v2522, 16
        %v2785 = vrot.slane %v2783, 7
        %v2786 = vshll.u32 %v2522, 16
        %v2788 = vor.u32 %v2785, %v2786
        %v2789 = vsel %vm670, %v2769, %v2788
        %v2791 = vshrl.u32 %v2412, 16
        %v2793 = vrot.slane %v2791, 7
        %v2794 = vshll.u32 %v2412, 16
        %v2796 = vor.u32 %v2793, %v2794
        %v2797 = vsel %vm670, %v2777, %v2796
        %v2799 = vshrl.u32 %v2530, 16
        %v2801 = vrot.slane %v2799, 7
        %v2802 = vshll.u32 %v2530, 16
        %v2804 = vor.u32 %v2801, %v2802
        %v2805 = vsel %vm670, %v2785, %v2804
        %v2807 = vshrl.u32 %v2413, 16
        %v2809 = vrot.slane %v2807, 7
        %v2810 = vshll.u32 %v2413, 16
        %v2812 = vor.u32 %v2809, %v2810
        %v2813 = vsel %vm670, %v2793, %v2812
        %v2815 = vshrl.u32 %v2538, 16
        %v2817 = vrot.slane %v2815, 7
        %v2818 = vshll.u32 %v2538, 16
        %v2820 = vor.u32 %v2817, %v2818
        %v2821 = vsel %vm670, %v2801, %v2820
        %v2823 = vshrl.u32 %v2414, 16
        %v2825 = vrot.slane %v2823, 7
        %v2826 = vshll.u32 %v2414, 16
        %v2828 = vor.u32 %v2825, %v2826
        %v2829 = vsel %vm670, %v2809, %v2828
        %v2831 = vshrl.u32 %v2541, 16
        %v2833 = vrot.slane %v2831, 7
        %v2834 = vshll.u32 %v2541, 16
        %v2836 = vor.u32 %v2833, %v2834
        %v2837 = vsel %vm670, %v2817, %v2836
        %v2902 = vunpack.c.l.b16 %v2542
        %v2903 = vunpack.c.l.b16 %v2543
        %v2904 = vunpack.c.l.b16 %v2544
        %v2905 = vunpack.c.l.b16 %v2545
        %v2906 = vunpack.c.l.b16 %v2546
        %v2907 = vunpack.c.l.b16 %v2547
        %v2908 = vunpack.c.l.b16 %v2548
        %v2909 = vunpack.c.l.b16 %v2549
        %v2910 = vunpack.c.l.b16 %v2550
        %v2911 = vunpack.c.l.b16 %v2551
        %v2912 = vunpack.c.l.b16 %v2552
        %v2913 = vunpack.c.l.b16 %v2553
        %v2914 = vunpack.c.l.b16 %v2554
        %v2915 = vunpack.c.l.b16 %v2555
        %v2916 = vunpack.c.l.b16 %v2556
        %v2917 = vunpack.c.l.b16 %v2557
        %v2918 = vunpack.c.l.b16 %v2558
        %v2919 = vunpack.c.l.b16 %v2559
        %v2920 = vunpack.c.l.b16 %v2560
        %v2921 = vunpack.c.l.b16 %v2561
        %v2922 = vunpack.c.l.b16 %v2562
        %v2923 = vunpack.c.l.b16 %v2563
        %v2924 = vunpack.c.l.b16 %v2564
        %v2925 = vunpack.c.l.b16 %v2565
        %v2926 = vunpack.c.l.b16 %v2566
        %v2927 = vunpack.c.l.b16 %v2567
        %v2928 = vunpack.c.l.b16 %v2568
        %v2929 = vunpack.c.l.b16 %v2569
        %v2930 = vunpack.c.l.b16 %v2570
        %v2931 = vunpack.c.l.b16 %v2571
        %v2932 = vunpack.c.l.b16 %v2572
        %v2933 = vunpack.c.l.b16 %v2573
        %v2934 = vpack.c.b16 %v2903, %v2902
        %v2935 = vpack.c.b16 %v2905, %v2904
        %v2936 = vpack.c.b16 %v2907, %v2906
        %v2937 = vpack.c.b16 %v2909, %v2908
        %v2938 = vpack.c.b16 %v2911, %v2910
        %v2939 = vpack.c.b16 %v2913, %v2912
        %v2940 = vpack.c.b16 %v2915, %v2914
        %v2941 = vpack.c.b16 %v2917, %v2916
        %v2942 = vpack.c.b16 %v2919, %v2918
        %v2943 = vpack.c.b16 %v2921, %v2920
        %v2944 = vpack.c.b16 %v2923, %v2922
        %v2945 = vpack.c.b16 %v2925, %v2924
        %v2946 = vpack.c.b16 %v2927, %v2926
        %v2947 = vpack.c.b16 %v2929, %v2928
        %v2948 = vpack.c.b16 %v2931, %v2930
        %v2949 = vpack.c.b16 %v2933, %v2932
        %2966 = vmatprep.subr.bf16.mxu0 0
        %2967 = vmatpush1.bf16.msra.mxu0 %v2934
        %2968 = vmatprep.subr.bf16.mxu0 0
        %2969 = vmatpush1.bf16.msra.mxu0 %v2935
        %2970 = vmatprep.subr.bf16.mxu0 0
        %2971 = vmatpush1.bf16.msra.mxu0 %v2936
        %2972 = vmatprep.subr.bf16.mxu0 0
        %2973 = vmatpush1.bf16.msra.mxu0 %v2937
        %2974 = vmatprep.subr.bf16.mxu0 0
        %2975 = vmatpush1.bf16.msra.mxu0 %v2938
        %2976 = vmatprep.subr.bf16.mxu0 0
        %2977 = vmatpush1.bf16.msra.mxu0 %v2939
        %2978 = vmatprep.subr.bf16.mxu0 0
        %2979 = vmatpush1.bf16.msra.mxu0 %v2940
        %2980 = vmatprep.subr.bf16.mxu0 0
        %2981 = vmatpush1.bf16.msra.mxu0 %v2941
        %2982 = vmatprep.subr.bf16.mxu0 0
        %2983 = vmatpush1.bf16.msra.mxu0 %v2942
        %2984 = vmatprep.subr.bf16.mxu0 0
        %2985 = vmatpush1.bf16.msra.mxu0 %v2943
        %2986 = vmatprep.subr.bf16.mxu0 0
        %2987 = vmatpush1.bf16.msra.mxu0 %v2944
        %2988 = vmatprep.subr.bf16.mxu0 0
        %2989 = vmatpush1.bf16.msra.mxu0 %v2945
        %2990 = vmatprep.subr.bf16.mxu0 0
        %2991 = vmatpush1.bf16.msra.mxu0 %v2946
        %2992 = vmatprep.subr.bf16.mxu0 0
        %2993 = vmatpush1.bf16.msra.mxu0 %v2947
        %2994 = vmatprep.subr.bf16.mxu0 0
        %2995 = vmatpush1.bf16.msra.mxu0 %v2948
        %2996 = vmatprep.subr.bf16.mxu0 0
        %2997 = vmatpush1.bf16.msra.mxu0 %v2949
        %2998 = vmatprep.mubr.bf16.mxu0 %v2597
        %2999 = vmatmul.mubr.bf16.gmra.mrb[0].mxu0 %v2585
        %v3000 = vpop.f32.mrb[0].mxu0
        %v3001 = vadd.f32 0.0, %v3000
        %v3002 = vpop.f32.mrb[0].mxu0
        %v3003 = vpop.f32.mrb[0].mxu0
        %v3004 = vadd.f32 0.0, %v3003
        %v3005 = vpop.f32.mrb[0].mxu0
        %3006 = vmatprep.mubr.bf16.mxu0 %v2613
        %3007 = vmatmul.mubr.bf16.gmra.mrb[0].mxu0 %v2605
        %v3008 = vpop.f32.mrb[0].mxu0
        %v3009 = vadd.f32 0.0, %v3008
        %v3010 = vpop.f32.mrb[0].mxu0
        %v3011 = vpop.f32.mrb[0].mxu0
        %v3012 = vadd.f32 0.0, %v3011
        %v3013 = vpop.f32.mrb[0].mxu0
        %3014 = vmatprep.mubr.bf16.mxu0 %v2629
        %3015 = vmatmul.mubr.bf16.gmra.mrb[0].mxu0 %v2621
        %v3016 = vpop.f32.mrb[0].mxu0
        %v3017 = vadd.f32 0.0, %v3016
        %v3018 = vpop.f32.mrb[0].mxu0
        %v3019 = vpop.f32.mrb[0].mxu0
        %v3020 = vadd.f32 0.0, %v3019
        %v3021 = vpop.f32.mrb[0].mxu0
        %3022 = vmatprep.mubr.bf16.mxu0 %v2645
        %3023 = vmatmul.mubr.bf16.gmra.mrb[0].mxu0 %v2637
        %v3024 = vpop.f32.mrb[0].mxu0
        %v3025 = vadd.f32 0.0, %v3024
        %v3026 = vpop.f32.mrb[0].mxu0
        %v3027 = vpop.f32.mrb[0].mxu0
        %v3028 = vadd.f32 0.0, %v3027
        %v3029 = vpop.f32.mrb[0].mxu0
        %3030 = vmatprep.mubr.bf16.mxu0 %v2661
        %3031 = vmatmul.mubr.bf16.gmra.mrb[0].mxu0 %v2653
        %v3032 = vpop.f32.mrb[0].mxu0
        %v3033 = vadd.f32 0.0, %v3032
        %v3034 = vpop.f32.mrb[0].mxu0
        %v3035 = vpop.f32.mrb[0].mxu0
        %v3036 = vadd.f32 0.0, %v3035
        %v3037 = vpop.f32.mrb[0].mxu0
        %3038 = vmatprep.mubr.bf16.mxu0 %v2677
        %3039 = vmatmul.mubr.bf16.gmra.mrb[0].mxu0 %v2669
        %v3040 = vpop.f32.mrb[0].mxu0
        %v3041 = vadd.f32 0.0, %v3040
        %v3042 = vpop.f32.mrb[0].mxu0
        %v3043 = vpop.f32.mrb[0].mxu0
        %v3044 = vadd.f32 0.0, %v3043
        %v3045 = vpop.f32.mrb[0].mxu0
        %3046 = vmatprep.mubr.bf16.mxu0 %v2693
        %3047 = vmatmul.mubr.bf16.gmra.mrb[0].mxu0 %v2685
        %v3048 = vpop.f32.mrb[0].mxu0
        %v3049 = vadd.f32 0.0, %v3048
        %v3050 = vpop.f32.mrb[0].mxu0
        %v3051 = vpop.f32.mrb[0].mxu0
        %v3052 = vadd.f32 0.0, %v3051
        %v3053 = vpop.f32.mrb[0].mxu0
        %3054 = vmatprep.mubr.bf16.mxu0 %v2709
        %3055 = vmatmul.mubr.bf16.gmra.mrb[0].mxu0 %v2701
        %v3056 = vpop.f32.mrb[0].mxu0
        %v3057 = vadd.f32 0.0, %v3056
        %v3058 = vpop.f32.mrb[0].mxu0
        %v3059 = vpop.f32.mrb[0].mxu0
        %v3060 = vadd.f32 0.0, %v3059
        %v3061 = vpop.f32.mrb[0].mxu0
        %3062 = vmatprep.mubr.bf16.mxu0 %v2725
        %3063 = vmatmul.mubr.bf16.gmra.mrb[0].mxu0 %v2717
        %v3064 = vpop.f32.mrb[0].mxu0
        %v3065 = vadd.f32 0.0, %v3064
        %v3066 = vpop.f32.mrb[0].mxu0
        %v3067 = vpop.f32.mrb[0].mxu0
        %v3068 = vadd.f32 0.0, %v3067
        %v3069 = vpop.f32.mrb[0].mxu0
        %3070 = vmatprep.mubr.bf16.mxu0 %v2741
        %3071 = vmatmul.mubr.bf16.gmra.mrb[0].mxu0 %v2733
        %v3072 = vpop.f32.mrb[0].mxu0
        %v3073 = vadd.f32 0.0, %v3072
        %v3074 = vpop.f32.mrb[0].mxu0
        %v3075 = vpop.f32.mrb[0].mxu0
        %v3076 = vadd.f32 0.0, %v3075
        %v3077 = vpop.f32.mrb[0].mxu0
        %3078 = vmatprep.mubr.bf16.mxu0 %v2757
        %3079 = vmatmul.mubr.bf16.gmra.mrb[0].mxu0 %v2749
        %v3080 = vpop.f32.mrb[0].mxu0
        %v3081 = vadd.f32 0.0, %v3080
        %v3082 = vpop.f32.mrb[0].mxu0
        %v3083 = vpop.f32.mrb[0].mxu0
        %v3084 = vadd.f32 0.0, %v3083
        %v3085 = vpop.f32.mrb[0].mxu0
        %3086 = vmatprep.mubr.bf16.mxu0 %v2773
        %3087 = vmatmul.mubr.bf16.gmra.mrb[0].mxu0 %v2765
        %v3088 = vpop.f32.mrb[0].mxu0
        %v3089 = vadd.f32 0.0, %v3088
        %v3090 = vpop.f32.mrb[0].mxu0
        %v3091 = vpop.f32.mrb[0].mxu0
        %v3092 = vadd.f32 0.0, %v3091
        %v3093 = vpop.f32.mrb[0].mxu0
        %3094 = vmatprep.mubr.bf16.mxu0 %v2789
        %3095 = vmatmul.mubr.bf16.gmra.mrb[0].mxu0 %v2781
        %v3096 = vpop.f32.mrb[0].mxu0
        %v3097 = vadd.f32 0.0, %v3096
        %v3098 = vpop.f32.mrb[0].mxu0
        %v3099 = vpop.f32.mrb[0].mxu0
        %v3100 = vadd.f32 0.0, %v3099
        %v3101 = vpop.f32.mrb[0].mxu0
        %3102 = vmatprep.mubr.bf16.mxu0 %v2805
        %3103 = vmatmul.mubr.bf16.gmra.mrb[0].mxu0 %v2797
        %v3104 = vpop.f32.mrb[0].mxu0
        %v3105 = vadd.f32 0.0, %v3104
        %v3106 = vpop.f32.mrb[0].mxu0
        %v3107 = vpop.f32.mrb[0].mxu0
        %v3108 = vadd.f32 0.0, %v3107
        %v3109 = vpop.f32.mrb[0].mxu0
        %3110 = vmatprep.mubr.bf16.mxu0 %v2821
        %3111 = vmatmul.mubr.bf16.gmra.mrb[0].mxu0 %v2813
        %v3112 = vpop.f32.mrb[0].mxu0
        %v3113 = vadd.f32 0.0, %v3112
        %v3114 = vpop.f32.mrb[0].mxu0
        %v3115 = vpop.f32.mrb[0].mxu0
        %v3116 = vadd.f32 0.0, %v3115
        %v3117 = vpop.f32.mrb[0].mxu0
        %3118 = vmatprep.mubr.bf16.mxu0 %v2837
        %3119 = vmatmul.mubr.bf16.gmra.mrb[0].mxu0 %v2829
        %v3120 = vpop.f32.mrb[0].mxu0
        %v3121 = vadd.f32 0.0, %v3120
        %v3122 = vpop.f32.mrb[0].mxu0
        %v3123 = vpop.f32.mrb[0].mxu0
        %v3124 = vadd.f32 0.0, %v3123
        %v3125 = vpop.f32.mrb[0].mxu0
        %3126 = vdwg.mxu0
        %v3127 = vadd.f32 %v2364, %v3001
        %v3128 = vadd.f32 %v2365, %v3004
        %v3129 = vadd.f32 %v2366, %v3009
        %v3130 = vadd.f32 %v2367, %v3012
        %v3131 = vadd.f32 %v2368, %v3017
        %v3132 = vadd.f32 %v2369, %v3020
        %v3133 = vadd.f32 %v2370, %v3025
        %v3134 = vadd.f32 %v2371, %v3028
        %v3135 = vadd.f32 %v2372, %v3033
        %v3136 = vadd.f32 %v2373, %v3036
        %v3137 = vadd.f32 %v2374, %v3041
        %v3138 = vadd.f32 %v2375, %v3044
        %v3139 = vadd.f32 %v2376, %v3049
        %v3140 = vadd.f32 %v2377, %v3052
        %v3141 = vadd.f32 %v2378, %v3057
        %v3142 = vadd.f32 %v2379, %v3060
        %v3143 = vadd.f32 %v2380, %v3065
        %v3144 = vadd.f32 %v2381, %v3068
        %v3145 = vadd.f32 %v2382, %v3073
        %v3146 = vadd.f32 %v2383, %v3076
        %v3147 = vadd.f32 %v2384, %v3081
        %v3148 = vadd.f32 %v2385, %v3084
        %v3149 = vadd.f32 %v2386, %v3089
        %v3150 = vadd.f32 %v2387, %v3092
        %v3151 = vadd.f32 %v2388, %v3097
        %v3152 = vadd.f32 %v2389, %v3100
        %v3153 = vadd.f32 %v2390, %v3105
        %v3154 = vadd.f32 %v2391, %v3108
        %v3155 = vadd.f32 %v2392, %v3113
        %v3156 = vadd.f32 %v2393, %v3116
        %v3157 = vadd.f32 %v2394, %v3121
        %v3158 = vadd.f32 %v2395, %v3124
        %v3159 = vld [vmem:[#allocation2 + $0x18] sm:$0xff]
        %v3160 = vld [vmem:[#allocation2 + $0x20] sm:$0xff]
        %v3161 = vld [vmem:[#allocation2 + $0x28] sm:$0xff]
        %v3162 = vld [vmem:[#allocation2 + $0x30] sm:$0xff]
        %v3163 = vld [vmem:[#allocation2 + $0x38] sm:$0xff]
        %v3164 = vld [vmem:[#allocation2 + $0x40] sm:$0xff]
        %v3165 = vld [vmem:[#allocation2 + $0x48] sm:$0xff]
        %v3166 = vld [vmem:[#allocation2 + $0x50] sm:$0xff]
        %v3167 = vld [vmem:[#allocation2 + $0x58] sm:$0xff]
        %v3168 = vld [vmem:[#allocation2 + $0x60] sm:$0xff]
        %v3169 = vld [vmem:[#allocation2 + $0x68] sm:$0xff]
        %v3170 = vld [vmem:[#allocation2 + $0x70] sm:$0xff]
        %v3171 = vld [vmem:[#allocation2 + $0x78] sm:$0xff]
        %v3172 = vld [vmem:[#allocation2 + $0x80] sm:$0xff]
        %v3173 = vld [vmem:[#allocation2 + $0x88] sm:$0xff]
        %v3174 = vld [vmem:[#allocation2 + $0x90] sm:$0xff]
        %v3175 = vld [vmem:[#allocation2 + $0x98] sm:$0x1]
        %v3176 = vsel %vm679, %v3159, 0
        %v3177 = vsel %vm680, %v3160, 0
        %v3178 = vsel %vm680, %v3161, 0
        %v3179 = vsel %vm680, %v3162, 0
        %v3180 = vsel %vm680, %v3163, 0
        %v3181 = vsel %vm680, %v3164, 0
        %v3182 = vsel %vm680, %v3165, 0
        %v3183 = vsel %vm680, %v3166, 0
        %v3184 = vsel %vm680, %v3167, 0
        %v3185 = vsel %vm680, %v3168, 0
        %v3186 = vsel %vm680, %v3169, 0
        %v3187 = vsel %vm680, %v3170, 0
        %v3188 = vsel %vm680, %v3171, 0
        %v3189 = vsel %vm680, %v3172, 0
        %v3190 = vsel %vm680, %v3173, 0
        %v3191 = vsel %vm680, %v3174, 0
        %v3192 = vsel %vm681, %v3175, 0
        %v3193 = vld [vmem:[#allocation6 + $0x200] sm:$0xf]
        %v3194 = vld [vmem:[#allocation6 + $0x204] sm:$0xf]
        %v3195 = vld [vmem:[#allocation6 + $0x208] sm:$0xf]
        %v3196 = vld [vmem:[#allocation6 + $0x20c] sm:$0xf]
        %v3197 = vld [vmem:[#allocation6 + $0x210] sm:$0xf]
        %v3198 = vld [vmem:[#allocation6 + $0x214] sm:$0xf]
        %v3199 = vld [vmem:[#allocation6 + $0x218] sm:$0xf]
        %v3200 = vld [vmem:[#allocation6 + $0x21c] sm:$0xf]
        %v3201 = vld [vmem:[#allocation6 + $0x220] sm:$0xf]
        %v3202 = vld [vmem:[#allocation6 + $0x224] sm:$0xf]
        %v3203 = vld [vmem:[#allocation6 + $0x228] sm:$0xf]
        %v3204 = vld [vmem:[#allocation6 + $0x22c] sm:$0xf]
        %v3205 = vld [vmem:[#allocation6 + $0x230] sm:$0xf]
        %v3206 = vld [vmem:[#allocation6 + $0x234] sm:$0xf]
        %v3207 = vld [vmem:[#allocation6 + $0x238] sm:$0xf]
        %v3208 = vld [vmem:[#allocation6 + $0x23c] sm:$0xf]
        %v3210 = vshrl.u32 %v3176, 16
        %v3212 = vshll.u32 %v3176, 16
        %v3214 = vrot.slane %v3212, 1
        %v3215 = vor.u32 %v3210, %v3214
        %v3217 = vshll.u32 %v3177, 16
        %v3219 = vrot.slane %v3217, 1
        %v3220 = vsel %vm474, %v3215, %v3219
        %v3221 = vshrl.u32 %v3177, 16
        %v3223 = vor.u32 %v3221, %v3219
        %v3225 = vshll.u32 %v3178, 16
        %v3227 = vrot.slane %v3225, 1
        %v3228 = vsel %vm474, %v3223, %v3227
        %v3229 = vshrl.u32 %v3178, 16
        %v3231 = vor.u32 %v3229, %v3227
        %v3233 = vshll.u32 %v3179, 16
        %v3235 = vrot.slane %v3233, 1
        %v3236 = vsel %vm474, %v3231, %v3235
        %v3237 = vshrl.u32 %v3179, 16
        %v3239 = vor.u32 %v3237, %v3235
        %v3241 = vshll.u32 %v3180, 16
        %v3243 = vrot.slane %v3241, 1
        %v3244 = vsel %vm474, %v3239, %v3243
        %v3245 = vshrl.u32 %v3180, 16
        %v3247 = vor.u32 %v3245, %v3243
        %v3249 = vshll.u32 %v3181, 16
        %v3251 = vrot.slane %v3249, 1
        %v3252 = vsel %vm474, %v3247, %v3251
        %v3253 = vshrl.u32 %v3181, 16
        %v3255 = vor.u32 %v3253, %v3251
        %v3257 = vshll.u32 %v3182, 16
        %v3259 = vrot.slane %v3257, 1
        %v3260 = vsel %vm474, %v3255, %v3259
        %v3261 = vshrl.u32 %v3182, 16
        %v3263 = vor.u32 %v3261, %v3259
        %v3265 = vshll.u32 %v3183, 16
        %v3267 = vrot.slane %v3265, 1
        %v3268 = vsel %vm474, %v3263, %v3267
        %v3269 = vshrl.u32 %v3183, 16
        %v3271 = vor.u32 %v3269, %v3267
        %v3273 = vshll.u32 %v3184, 16
        %v3275 = vrot.slane %v3273, 1
        %v3276 = vsel %vm474, %v3271, %v3275
        %v3277 = vshrl.u32 %v3184, 16
        %v3279 = vor.u32 %v3277, %v3275
        %v3281 = vshll.u32 %v3185, 16
        %v3283 = vrot.slane %v3281, 1
        %v3284 = vsel %vm474, %v3279, %v3283
        %v3285 = vshrl.u32 %v3185, 16
        %v3287 = vor.u32 %v3285, %v3283
        %v3289 = vshll.u32 %v3186, 16
        %v3291 = vrot.slane %v3289, 1
        %v3292 = vsel %vm474, %v3287, %v3291
        %v3293 = vshrl.u32 %v3186, 16
        %v3295 = vor.u32 %v3293, %v3291
        %v3297 = vshll.u32 %v3187, 16
        %v3299 = vrot.slane %v3297, 1
        %v3300 = vsel %vm474, %v3295, %v3299
        %v3301 = vshrl.u32 %v3187, 16
        %v3303 = vor.u32 %v3301, %v3299
        %v3305 = vshll.u32 %v3188, 16
        %v3307 = vrot.slane %v3305, 1
        %v3308 = vsel %vm474, %v3303, %v3307
        %v3309 = vshrl.u32 %v3188, 16
        %v3311 = vor.u32 %v3309, %v3307
        %v3313 = vshll.u32 %v3189, 16
        %v3315 = vrot.slane %v3313, 1
        %v3316 = vsel %vm474, %v3311, %v3315
        %v3317 = vshrl.u32 %v3189, 16
        %v3319 = vor.u32 %v3317, %v3315
        %v3321 = vshll.u32 %v3190, 16
        %v3323 = vrot.slane %v3321, 1
        %v3324 = vsel %vm474, %v3319, %v3323
        %v3325 = vshrl.u32 %v3190, 16
        %v3327 = vor.u32 %v3325, %v3323
        %v3329 = vshll.u32 %v3191, 16
        %v3331 = vrot.slane %v3329, 1
        %v3332 = vsel %vm474, %v3327, %v3331
        %v3333 = vshrl.u32 %v3191, 16
        %v3335 = vor.u32 %v3333, %v3331
        %v3337 = vshll.u32 %v3192, 16
        %v3339 = vrot.slane %v3337, 1
        %v3340 = vsel %vm474, %v3335, %v3339
        %v3373 = vunpack.c.l.b16 %v3193
        %v3374 = vunpack.c.l.b16 %v3194
        %v3375 = vunpack.c.l.b16 %v3195
        %v3376 = vunpack.c.l.b16 %v3196
        %v3377 = vunpack.c.l.b16 %v3197
        %v3378 = vunpack.c.l.b16 %v3198
        %v3379 = vunpack.c.l.b16 %v3199
        %v3380 = vunpack.c.l.b16 %v3200
        %v3381 = vunpack.c.l.b16 %v3201
        %v3382 = vunpack.c.l.b16 %v3202
        %v3383 = vunpack.c.l.b16 %v3203
        %v3384 = vunpack.c.l.b16 %v3204
        %v3385 = vunpack.c.l.b16 %v3205
        %v3386 = vunpack.c.l.b16 %v3206
        %v3387 = vunpack.c.l.b16 %v3207
        %v3388 = vunpack.c.l.b16 %v3208
        %v3389 = vpack.c.b16 %v3374, %v3373
        %v3390 = vpack.c.b16 %v3376, %v3375
        %v3391 = vpack.c.b16 %v3378, %v3377
        %v3392 = vpack.c.b16 %v3380, %v3379
        %v3393 = vpack.c.b16 %v3382, %v3381
        %v3394 = vpack.c.b16 %v3384, %v3383
        %v3395 = vpack.c.b16 %v3386, %v3385
        %v3396 = vpack.c.b16 %v3388, %v3387
        %3405 = vmatprep.subr.bf16.mxu0 0
        %3406 = vmatpush1.bf16.msra.mxu0 %v3389
        %3407 = vmatprep.subr.bf16.mxu0 0
        %3408 = vmatpush1.bf16.msra.mxu0 %v3390
        %3409 = vmatprep.subr.bf16.mxu0 0
        %3410 = vmatpush1.bf16.msra.mxu0 %v3391
        %3411 = vmatprep.subr.bf16.mxu0 0
        %3412 = vmatpush1.bf16.msra.mxu0 %v3392
        %3413 = vmatprep.subr.bf16.mxu0 0
        %3414 = vmatpush1.bf16.msra.mxu0 %v3393
        %3415 = vmatprep.subr.bf16.mxu0 0
        %3416 = vmatpush1.bf16.msra.mxu0 %v3394
        %3417 = vmatprep.subr.bf16.mxu0 0
        %3418 = vmatpush1.bf16.msra.mxu0 %v3395
        %3419 = vmatprep.subr.bf16.mxu0 0
        %3420 = vmatpush1.bf16.msra.mxu0 %v3396
        %3421 = vmatprep.subr.bf16.mxu0 0
        %3422 = vmatpush1.bf16.msra.mxu0 0
        %3423 = vmatprep.subr.bf16.mxu0 0
        %3424 = vmatpush1.bf16.msra.mxu0 0
        %3425 = vmatprep.subr.bf16.mxu0 0
        %3426 = vmatpush1.bf16.msra.mxu0 0
        %3427 = vmatprep.subr.bf16.mxu0 0
        %3428 = vmatpush1.bf16.msra.mxu0 0
        %3429 = vmatprep.subr.bf16.mxu0 0
        %3430 = vmatpush1.bf16.msra.mxu0 0
        %3431 = vmatprep.subr.bf16.mxu0 0
        %3432 = vmatpush1.bf16.msra.mxu0 0
        %3433 = vmatprep.subr.bf16.mxu0 0
        %3434 = vmatpush1.bf16.msra.mxu0 0
        %3435 = vmatprep.subr.bf16.mxu0 0
        %3436 = vmatpush1.bf16.msra.mxu0 0
        %3437 = vmatprep.mubr.bf16.mxu0 0
        %3438 = vmatmul.mubr.bf16.gmra.mrb[0].mxu0 %v3220
        %v3439 = vpop.f32.mrb[0].mxu0
        %v3440 = vadd.f32 0.0, %v3439
        %v3441 = vpop.f32.mrb[0].mxu0
        %v3442 = vpop.f32.mrb[0].mxu0
        %v3443 = vadd.f32 0.0, %v3442
        %v3444 = vpop.f32.mrb[0].mxu0
        %3445 = vmatprep.mubr.bf16.mxu0 0
        %3446 = vmatmul.mubr.bf16.gmra.mrb[0].mxu0 %v3228
        %v3447 = vpop.f32.mrb[0].mxu0
        %v3448 = vadd.f32 0.0, %v3447
        %v3449 = vpop.f32.mrb[0].mxu0
        %v3450 = vpop.f32.mrb[0].mxu0
        %v3451 = vadd.f32 0.0, %v3450
        %v3452 = vpop.f32.mrb[0].mxu0
        %3453 = vmatprep.mubr.bf16.mxu0 0
        %3454 = vmatmul.mubr.bf16.gmra.mrb[0].mxu0 %v3236
        %v3455 = vpop.f32.mrb[0].mxu0
        %v3456 = vadd.f32 0.0, %v3455
        %v3457 = vpop.f32.mrb[0].mxu0
        %v3458 = vpop.f32.mrb[0].mxu0
        %v3459 = vadd.f32 0.0, %v3458
        %v3460 = vpop.f32.mrb[0].mxu0
        %3461 = vmatprep.mubr.bf16.mxu0 0
        %3462 = vmatmul.mubr.bf16.gmra.mrb[0].mxu0 %v3244
        %v3463 = vpop.f32.mrb[0].mxu0
        %v3464 = vadd.f32 0.0, %v3463
        %v3465 = vpop.f32.mrb[0].mxu0
        %v3466 = vpop.f32.mrb[0].mxu0
        %v3467 = vadd.f32 0.0, %v3466
        %v3468 = vpop.f32.mrb[0].mxu0
        %3469 = vmatprep.mubr.bf16.mxu0 0
        %3470 = vmatmul.mubr.bf16.gmra.mrb[0].mxu0 %v3252
        %v3471 = vpop.f32.mrb[0].mxu0
        %v3472 = vadd.f32 0.0, %v3471
        %v3473 = vpop.f32.mrb[0].mxu0
        %v3474 = vpop.f32.mrb[0].mxu0
        %v3475 = vadd.f32 0.0, %v3474
        %v3476 = vpop.f32.mrb[0].mxu0
        %3477 = vmatprep.mubr.bf16.mxu0 0
        %3478 = vmatmul.mubr.bf16.gmra.mrb[0].mxu0 %v3260
        %v3479 = vpop.f32.mrb[0].mxu0
        %v3480 = vadd.f32 0.0, %v3479
        %v3481 = vpop.f32.mrb[0].mxu0
        %v3482 = vpop.f32.mrb[0].mxu0
        %v3483 = vadd.f32 0.0, %v3482
        %v3484 = vpop.f32.mrb[0].mxu0
        %3485 = vmatprep.mubr.bf16.mxu0 0
        %3486 = vmatmul.mubr.bf16.gmra.mrb[0].mxu0 %v3268
        %v3487 = vpop.f32.mrb[0].mxu0
        %v3488 = vadd.f32 0.0, %v3487
        %v3489 = vpop.f32.mrb[0].mxu0
        %v3490 = vpop.f32.mrb[0].mxu0
        %v3491 = vadd.f32 0.0, %v3490
        %v3492 = vpop.f32.mrb[0].mxu0
        %3493 = vmatprep.mubr.bf16.mxu0 0
        %3494 = vmatmul.mubr.bf16.gmra.mrb[0].mxu0 %v3276
        %v3495 = vpop.f32.mrb[0].mxu0
        %v3496 = vadd.f32 0.0, %v3495
        %v3497 = vpop.f32.mrb[0].mxu0
        %v3498 = vpop.f32.mrb[0].mxu0
        %v3499 = vadd.f32 0.0, %v3498
        %v3500 = vpop.f32.mrb[0].mxu0
        %3501 = vmatprep.mubr.bf16.mxu0 0
        %3502 = vmatmul.mubr.bf16.gmra.mrb[0].mxu0 %v3284
        %v3503 = vpop.f32.mrb[0].mxu0
        %v3504 = vadd.f32 0.0, %v3503
        %v3505 = vpop.f32.mrb[0].mxu0
        %v3506 = vpop.f32.mrb[0].mxu0
        %v3507 = vadd.f32 0.0, %v3506
        %v3508 = vpop.f32.mrb[0].mxu0
        %3509 = vmatprep.mubr.bf16.mxu0 0
        %3510 = vmatmul.mubr.bf16.gmra.mrb[0].mxu0 %v3292
        %v3511 = vpop.f32.mrb[0].mxu0
        %v3512 = vadd.f32 0.0, %v3511
        %v3513 = vpop.f32.mrb[0].mxu0
        %v3514 = vpop.f32.mrb[0].mxu0
        %v3515 = vadd.f32 0.0, %v3514
        %v3516 = vpop.f32.mrb[0].mxu0
        %3517 = vmatprep.mubr.bf16.mxu0 0
        %3518 = vmatmul.mubr.bf16.gmra.mrb[0].mxu0 %v3300
        %v3519 = vpop.f32.mrb[0].mxu0
        %v3520 = vadd.f32 0.0, %v3519
        %v3521 = vpop.f32.mrb[0].mxu0
        %v3522 = vpop.f32.mrb[0].mxu0
        %v3523 = vadd.f32 0.0, %v3522
        %v3524 = vpop.f32.mrb[0].mxu0
        %3525 = vmatprep.mubr.bf16.mxu0 0
        %3526 = vmatmul.mubr.bf16.gmra.mrb[0].mxu0 %v3308
        %v3527 = vpop.f32.mrb[0].mxu0
        %v3528 = vadd.f32 0.0, %v3527
        %v3529 = vpop.f32.mrb[0].mxu0
        %v3530 = vpop.f32.mrb[0].mxu0
        %v3531 = vadd.f32 0.0, %v3530
        %v3532 = vpop.f32.mrb[0].mxu0
        %3533 = vmatprep.mubr.bf16.mxu0 0
        %3534 = vmatmul.mubr.bf16.gmra.mrb[0].mxu0 %v3316
        %v3535 = vpop.f32.mrb[0].mxu0
        %v3536 = vadd.f32 0.0, %v3535
        %v3537 = vpop.f32.mrb[0].mxu0
        %v3538 = vpop.f32.mrb[0].mxu0
        %v3539 = vadd.f32 0.0, %v3538
        %v3540 = vpop.f32.mrb[0].mxu0
        %3541 = vmatprep.mubr.bf16.mxu0 0
        %3542 = vmatmul.mubr.bf16.gmra.mrb[0].mxu0 %v3324
        %v3543 = vpop.f32.mrb[0].mxu0
        %v3544 = vadd.f32 0.0, %v3543
        %v3545 = vpop.f32.mrb[0].mxu0
        %v3546 = vpop.f32.mrb[0].mxu0
        %v3547 = vadd.f32 0.0, %v3546
        %v3548 = vpop.f32.mrb[0].mxu0
        %3549 = vmatprep.mubr.bf16.mxu0 0
        %3550 = vmatmul.mubr.bf16.gmra.mrb[0].mxu0 %v3332
        %v3551 = vpop.f32.mrb[0].mxu0
        %v3552 = vadd.f32 0.0, %v3551
        %v3553 = vpop.f32.mrb[0].mxu0
        %v3554 = vpop.f32.mrb[0].mxu0
        %v3555 = vadd.f32 0.0, %v3554
        %v3556 = vpop.f32.mrb[0].mxu0
        %3557 = vmatprep.mubr.bf16.mxu0 0
        %3558 = vmatmul.mubr.bf16.gmra.mrb[0].mxu0 %v3340
        %v3559 = vpop.f32.mrb[0].mxu0
        %v3560 = vadd.f32 0.0, %v3559
        %v3561 = vpop.f32.mrb[0].mxu0
        %v3562 = vpop.f32.mrb[0].mxu0
        %v3563 = vadd.f32 0.0, %v3562
        %v3564 = vpop.f32.mrb[0].mxu0
        %3565 = vdwg.mxu0
        %v3566 = vadd.f32 %v3127, %v3440
        %v3567 = vadd.f32 %v3128, %v3443
        %v3568 = vadd.f32 %v3129, %v3448
        %v3569 = vadd.f32 %v3130, %v3451
        %v3570 = vadd.f32 %v3131, %v3456
        %v3571 = vadd.f32 %v3132, %v3459
        %v3572 = vadd.f32 %v3133, %v3464
        %v3573 = vadd.f32 %v3134, %v3467
        %v3574 = vadd.f32 %v3135, %v3472
        %v3575 = vadd.f32 %v3136, %v3475
        %v3576 = vadd.f32 %v3137, %v3480
        %v3577 = vadd.f32 %v3138, %v3483
        %v3578 = vadd.f32 %v3139, %v3488
        %v3579 = vadd.f32 %v3140, %v3491
        %v3580 = vadd.f32 %v3141, %v3496
        %v3581 = vadd.f32 %v3142, %v3499
        %v3582 = vadd.f32 %v3143, %v3504
        %v3583 = vadd.f32 %v3144, %v3507
        %v3584 = vadd.f32 %v3145, %v3512
        %v3585 = vadd.f32 %v3146, %v3515
        %v3586 = vadd.f32 %v3147, %v3520
        %v3587 = vadd.f32 %v3148, %v3523
        %v3588 = vadd.f32 %v3149, %v3528
        %v3589 = vadd.f32 %v3150, %v3531
        %v3590 = vadd.f32 %v3151, %v3536
        %v3591 = vadd.f32 %v3152, %v3539
        %v3592 = vadd.f32 %v3153, %v3544
        %v3593 = vadd.f32 %v3154, %v3547
        %v3594 = vadd.f32 %v3155, %v3552
        %v3595 = vadd.f32 %v3156, %v3555
        %v3596 = vadd.f32 %v3157, %v3560
        %v3597 = vadd.f32 %v3158, %v3563
        %v3598 = vld [vmem:[%s2] sm:$0x1]
        %v3600 = vlaneseq
        %v3601 = vshrl.u32 %v3600, 7
        %v3602 = vsub.s32 0, %v3601
        %v3603 = vrot.slane %v3598, %v3602
        %v3605 = vadd.f32 %v3566, %v3603
        %v3606 = vadd.f32 %v3567, %v3603
        %v3607 = vadd.f32 %v3568, %v3603
        %v3608 = vadd.f32 %v3569, %v3603
        %v3609 = vadd.f32 %v3570, %v3603
        %v3610 = vadd.f32 %v3571, %v3603
        %v3611 = vadd.f32 %v3572, %v3603
        %v3612 = vadd.f32 %v3573, %v3603
        %v3613 = vadd.f32 %v3574, %v3603
        %v3614 = vadd.f32 %v3575, %v3603
        %v3615 = vadd.f32 %v3576, %v3603
        %v3616 = vadd.f32 %v3577, %v3603
        %v3617 = vadd.f32 %v3578, %v3603
        %v3618 = vadd.f32 %v3579, %v3603
        %v3619 = vadd.f32 %v3580, %v3603
        %v3620 = vadd.f32 %v3581, %v3603
        %v3621 = vadd.f32 %v3582, %v3603
        %v3622 = vadd.f32 %v3583, %v3603
        %v3623 = vadd.f32 %v3584, %v3603
        %v3624 = vadd.f32 %v3585, %v3603
        %v3625 = vadd.f32 %v3586, %v3603
        %v3626 = vadd.f32 %v3587, %v3603
        %v3627 = vadd.f32 %v3588, %v3603
        %v3628 = vadd.f32 %v3589, %v3603
        %v3629 = vadd.f32 %v3590, %v3603
        %v3630 = vadd.f32 %v3591, %v3603
        %v3631 = vadd.f32 %v3592, %v3603
        %v3632 = vadd.f32 %v3593, %v3603
        %v3633 = vadd.f32 %v3594, %v3603
        %v3634 = vadd.f32 %v3595, %v3603
        %v3635 = vadd.f32 %v3596, %v3603
        %v3636 = vadd.f32 %v3597, %v3603
        %v3637 = vmax.f32 %v3605, 0.0
        %v3638 = vmax.f32 %v3606, 0.0
        %v3639 = vmax.f32 %v3607, 0.0
        %v3640 = vmax.f32 %v3608, 0.0
        %v3641 = vmax.f32 %v3609, 0.0
        %v3642 = vmax.f32 %v3610, 0.0
        %v3643 = vmax.f32 %v3611, 0.0
        %v3644 = vmax.f32 %v3612, 0.0
        %v3645 = vmax.f32 %v3613, 0.0
        %v3646 = vmax.f32 %v3614, 0.0
        %v3647 = vmax.f32 %v3615, 0.0
        %v3648 = vmax.f32 %v3616, 0.0
        %v3649 = vmax.f32 %v3617, 0.0
        %v3650 = vmax.f32 %v3618, 0.0
        %v3651 = vmax.f32 %v3619, 0.0
        %v3652 = vmax.f32 %v3620, 0.0
        %v3653 = vmax.f32 %v3621, 0.0
        %v3654 = vmax.f32 %v3622, 0.0
        %v3655 = vmax.f32 %v3623, 0.0
        %v3656 = vmax.f32 %v3624, 0.0
        %v3657 = vmax.f32 %v3625, 0.0
        %v3658 = vmax.f32 %v3626, 0.0
        %v3659 = vmax.f32 %v3627, 0.0
        %v3660 = vmax.f32 %v3628, 0.0
        %v3661 = vmax.f32 %v3629, 0.0
        %v3662 = vmax.f32 %v3630, 0.0
        %v3663 = vmax.f32 %v3631, 0.0
        %v3664 = vmax.f32 %v3632, 0.0
        %v3665 = vmax.f32 %v3633, 0.0
        %v3666 = vmax.f32 %v3634, 0.0
        %v3667 = vmax.f32 %v3635, 0.0
        %v3668 = vmax.f32 %v3636, 0.0
        %v3669 = vpack.c.bf16 %v3638, %v3637
        %v3670 = vpack.c.bf16 %v3640, %v3639
        %v3671 = vpack.c.bf16 %v3642, %v3641
        %v3672 = vpack.c.bf16 %v3644, %v3643
        %v3673 = vpack.c.bf16 %v3646, %v3645
        %v3674 = vpack.c.bf16 %v3648, %v3647
        %v3675 = vpack.c.bf16 %v3650, %v3649
        %v3676 = vpack.c.bf16 %v3652, %v3651
        %v3677 = vpack.c.bf16 %v3654, %v3653
        %v3678 = vpack.c.bf16 %v3656, %v3655
        %v3679 = vpack.c.bf16 %v3658, %v3657
        %v3680 = vpack.c.bf16 %v3660, %v3659
        %v3681 = vpack.c.bf16 %v3662, %v3661
        %v3682 = vpack.c.bf16 %v3664, %v3663
        %v3683 = vpack.c.bf16 %v3666, %v3665
        %v3684 = vpack.c.bf16 %v3668, %v3667
        %v3685 = vadd.bf16 %v452, %v3669
        %v3686 = vadd.bf16 %v453, %v3670
        %v3687 = vadd.bf16 %v454, %v3671
        %v3688 = vadd.bf16 %v455, %v3672
        %v3689 = vadd.bf16 %v456, %v3673
        %v3690 = vadd.bf16 %v457, %v3674
        %v3691 = vadd.bf16 %v458, %v3675
        %v3692 = vadd.bf16 %v459, %v3676
        %v3693 = vadd.bf16 %v460, %v3677
        %v3694 = vadd.bf16 %v461, %v3678
        %v3695 = vadd.bf16 %v462, %v3679
        %v3696 = vadd.bf16 %v463, %v3680
        %v3697 = vadd.bf16 %v464, %v3681
        %v3698 = vadd.bf16 %v465, %v3682
        %v3699 = vadd.bf16 %v466, %v3683
        %v3700 = vadd.bf16 %v700, %v3684
        %3701 = vst [vmem:[#allocation2 + $0x10] sm:$0xff] %v3685
        %3702 = vst [vmem:[#allocation2 + $0x18] sm:$0xff] %v3686
        %3703 = vst [vmem:[#allocation2 + $0x20] sm:$0xff] %v3687
        %3704 = vst [vmem:[#allocation2 + $0x28] sm:$0xff] %v3688
        %3705 = vst [vmem:[#allocation2 + $0x30] sm:$0xff] %v3689
        %3706 = vst [vmem:[#allocation2 + $0x38] sm:$0xff] %v3690
        %3707 = vst [vmem:[#allocation2 + $0x40] sm:$0xff] %v3691
        %3708 = vst [vmem:[#allocation2 + $0x48] sm:$0xff] %v3692
        %3709 = vst [vmem:[#allocation2 + $0x50] sm:$0xff] %v3693
        %3710 = vst [vmem:[#allocation2 + $0x58] sm:$0xff] %v3694
        %3711 = vst [vmem:[#allocation2 + $0x60] sm:$0xff] %v3695
        %3712 = vst [vmem:[#allocation2 + $0x68] sm:$0xff] %v3696
        %3713 = vst [vmem:[#allocation2 + $0x70] sm:$0xff] %v3697
        %3714 = vst [vmem:[#allocation2 + $0x78] sm:$0xff] %v3698
        %3715 = vst [vmem:[#allocation2 + $0x80] sm:$0xff] %v3699
        %3716 = vst [vmem:[#allocation2 + $0x88] sm:$0xff] %v3700
        %v3717 = vld [vmem:[#allocation2] sm:$0x80]
        %v3718 = vld [vmem:[#allocation2 + $0x8] sm:$0xff]
        %v3719 = vld [vmem:[#allocation2 + $0x10] sm:$0xff]
        %v3720 = vld [vmem:[#allocation2 + $0x18] sm:$0xff]
        %v3721 = vld [vmem:[#allocation2 + $0x20] sm:$0xff]
        %v3722 = vld [vmem:[#allocation2 + $0x28] sm:$0xff]
        %v3723 = vld [vmem:[#allocation2 + $0x30] sm:$0xff]
        %v3724 = vld [vmem:[#allocation2 + $0x38] sm:$0xff]
        %v3725 = vld [vmem:[#allocation2 + $0x40] sm:$0xff]
        %v3726 = vld [vmem:[#allocation2 + $0x48] sm:$0xff]
        %v3727 = vld [vmem:[#allocation2 + $0x50] sm:$0xff]
        %v3728 = vld [vmem:[#allocation2 + $0x58] sm:$0xff]
        %v3729 = vld [vmem:[#allocation2 + $0x60] sm:$0xff]
        %v3730 = vld [vmem:[#allocation2 + $0x68] sm:$0xff]
        %v3731 = vld [vmem:[#allocation2 + $0x70] sm:$0xff]
        %v3732 = vld [vmem:[#allocation2 + $0x78] sm:$0xff]
        %v3733 = vld [vmem:[#allocation2 + $0x80] sm:$0xff]
        %v3734 = vsel %vm483, %v3717, 0
        %v3735 = vsel %vm484, %v3718, 0
        %v3736 = vsel %vm484, %v3719, 0
        %v3737 = vsel %vm484, %v3720, 0
        %v3738 = vsel %vm484, %v3721, 0
        %v3739 = vsel %vm484, %v3722, 0
        %v3740 = vsel %vm484, %v3723, 0
        %v3741 = vsel %vm484, %v3724, 0
        %v3742 = vsel %vm484, %v3725, 0
        %v3743 = vsel %vm484, %v3726, 0
        %v3744 = vsel %vm484, %v3727, 0
        %v3745 = vsel %vm484, %v3728, 0
        %v3746 = vsel %vm484, %v3729, 0
        %v3747 = vsel %vm484, %v3730, 0
        %v3748 = vsel %vm484, %v3731, 0
        %v3749 = vsel %vm484, %v3732, 0
        %v3750 = vsel %vm485, %v3733, 0
        %v3752 = vshll.u32 %v3718, 16
        %v3754 = vrot.slane %v3752, 1
        %v3755 = vshrl.u32 %v3718, 16
        %v3757 = vor.u32 %v3755, %v3754
        %v3759 = vshll.u32 %v3719, 16
        %v3761 = vrot.slane %v3759, 1
        %v3762 = vsel %vm474, %v3757, %v3761
        %v3763 = vshrl.u32 %v3719, 16
        %v3765 = vor.u32 %v3763, %v3761
        %v3767 = vshll.u32 %v3720, 16
        %v3769 = vrot.slane %v3767, 1
        %v3770 = vsel %vm474, %v3765, %v3769
        %v3771 = vshrl.u32 %v3720, 16
        %v3773 = vor.u32 %v3771, %v3769
        %v3775 = vshll.u32 %v3721, 16
        %v3777 = vrot.slane %v3775, 1
        %v3778 = vsel %vm474, %v3773, %v3777
        %v3779 = vshrl.u32 %v3721, 16
        %v3781 = vor.u32 %v3779, %v3777
        %v3783 = vshll.u32 %v3722, 16
        %v3785 = vrot.slane %v3783, 1
        %v3786 = vsel %vm474, %v3781, %v3785
        %v3787 = vshrl.u32 %v3722, 16
        %v3789 = vor.u32 %v3787, %v3785
        %v3791 = vshll.u32 %v3723, 16
        %v3793 = vrot.slane %v3791, 1
        %v3794 = vsel %vm474, %v3789, %v3793
        %v3795 = vshrl.u32 %v3723, 16
        %v3797 = vor.u32 %v3795, %v3793
        %v3799 = vshll.u32 %v3724, 16
        %v3801 = vrot.slane %v3799, 1
        %v3802 = vsel %vm474, %v3797, %v3801
        %v3803 = vshrl.u32 %v3724, 16
        %v3805 = vor.u32 %v3803, %v3801
        %v3807 = vshll.u32 %v3725, 16
        %v3809 = vrot.slane %v3807, 1
        %v3810 = vsel %vm474, %v3805, %v3809
        %v3811 = vshrl.u32 %v3725, 16
        %v3813 = vor.u32 %v3811, %v3809
        %v3815 = vshll.u32 %v3726, 16
        %v3817 = vrot.slane %v3815, 1
        %v3818 = vsel %vm474, %v3813, %v3817
        %v3819 = vshrl.u32 %v3726, 16
        %v3821 = vor.u32 %v3819, %v3817
        %v3823 = vshll.u32 %v3727, 16
        %v3825 = vrot.slane %v3823, 1
        %v3826 = vsel %vm474, %v3821, %v3825
        %v3827 = vshrl.u32 %v3727, 16
        %v3829 = vor.u32 %v3827, %v3825
        %v3831 = vshll.u32 %v3728, 16
        %v3833 = vrot.slane %v3831, 1
        %v3834 = vsel %vm474, %v3829, %v3833
        %v3835 = vshrl.u32 %v3728, 16
        %v3837 = vor.u32 %v3835, %v3833
        %v3839 = vshll.u32 %v3729, 16
        %v3841 = vrot.slane %v3839, 1
        %v3842 = vsel %vm474, %v3837, %v3841
        %v3843 = vshrl.u32 %v3729, 16
        %v3845 = vor.u32 %v3843, %v3841
        %v3847 = vshll.u32 %v3730, 16
        %v3849 = vrot.slane %v3847, 1
        %v3850 = vsel %vm474, %v3845, %v3849
        %v3851 = vshrl.u32 %v3730, 16
        %v3853 = vor.u32 %v3851, %v3849
        %v3855 = vshll.u32 %v3731, 16
        %v3857 = vrot.slane %v3855, 1
        %v3858 = vsel %vm474, %v3853, %v3857
        %v3859 = vshrl.u32 %v3731, 16
        %v3861 = vor.u32 %v3859, %v3857
        %v3863 = vshll.u32 %v3732, 16
        %v3865 = vrot.slane %v3863, 1
        %v3866 = vsel %vm474, %v3861, %v3865
        %v3867 = vshrl.u32 %v3732, 16
        %v3869 = vor.u32 %v3867, %v3865
        %v3871 = vshll.u32 %v3733, 16
        %v3873 = vrot.slane %v3871, 1
        %v3874 = vsel %vm474, %v3869, %v3873
        %v3875 = vshrl.u32 %v3733, 16
        %v3877 = vor.u32 %v3875, %v3873
        %s3878 = scalar_lea.vmem [#allocation6], 576
        %v3879 = vld [vmem:[%s3878] sm:$0xf]
        %v3880 = vld [vmem:[%s3878 + $0x4] sm:$0xf]
        %v3881 = vld [vmem:[%s3878 + $0x8] sm:$0xf]
        %v3882 = vld [vmem:[%s3878 + $0xc] sm:$0xf]
        %v3883 = vld [vmem:[%s3878 + $0x10] sm:$0xf]
        %v3884 = vld [vmem:[%s3878 + $0x14] sm:$0xf]
        %v3885 = vld [vmem:[%s3878 + $0x18] sm:$0xf]
        %v3886 = vld [vmem:[%s3878 + $0x1c] sm:$0xf]
        %v3887 = vld [vmem:[%s3878 + $0x20] sm:$0xf]
        %v3888 = vld [vmem:[%s3878 + $0x24] sm:$0xf]
        %v3889 = vld [vmem:[%s3878 + $0x28] sm:$0xf]
        %v3890 = vld [vmem:[%s3878 + $0x2c] sm:$0xf]
        %v3891 = vld [vmem:[%s3878 + $0x30] sm:$0xf]
        %v3892 = vld [vmem:[%s3878 + $0x34] sm:$0xf]
        %v3893 = vld [vmem:[%s3878 + $0x38] sm:$0xf]
        %v3894 = vld [vmem:[%s3878 + $0x3c] sm:$0xf]
        %v3895 = vld [vmem:[%s3878 + $0x40] sm:$0xf]
        %v3896 = vld [vmem:[%s3878 + $0x44] sm:$0xf]
        %v3897 = vld [vmem:[%s3878 + $0x48] sm:$0xf]
        %v3898 = vld [vmem:[%s3878 + $0x4c] sm:$0xf]
        %v3899 = vld [vmem:[%s3878 + $0x50] sm:$0xf]
        %v3900 = vld [vmem:[%s3878 + $0x54] sm:$0xf]
        %v3901 = vld [vmem:[%s3878 + $0x58] sm:$0xf]
        %v3902 = vld [vmem:[%s3878 + $0x5c] sm:$0xf]
        %v3903 = vld [vmem:[%s3878 + $0x60] sm:$0xf]
        %v3904 = vld [vmem:[%s3878 + $0x64] sm:$0xf]
        %v3905 = vld [vmem:[%s3878 + $0x68] sm:$0xf]
        %v3906 = vld [vmem:[%s3878 + $0x6c] sm:$0xf]
        %v3907 = vld [vmem:[%s3878 + $0x70] sm:$0xf]
        %v3908 = vld [vmem:[%s3878 + $0x74] sm:$0xf]
        %v3909 = vld [vmem:[%s3878 + $0x78] sm:$0xf]
        %v3910 = vld [vmem:[%s3878 + $0x7c] sm:$0xf]
        %v3911 = vld [vmem:[#allocation2 + $0x88] sm:$0x1]
        %v3912 = vsel %vm679, %v3718, 0
        %v3913 = vsel %vm680, %v3719, 0
        %v3914 = vsel %vm680, %v3720, 0
        %v3915 = vsel %vm680, %v3721, 0
        %v3916 = vsel %vm680, %v3722, 0
        %v3917 = vsel %vm680, %v3723, 0
        %v3918 = vsel %vm680, %v3724, 0
        %v3919 = vsel %vm680, %v3725, 0
        %v3920 = vsel %vm680, %v3726, 0
        %v3921 = vsel %vm680, %v3727, 0
        %v3922 = vsel %vm680, %v3728, 0
        %v3923 = vsel %vm680, %v3729, 0
        %v3924 = vsel %vm680, %v3730, 0
        %v3925 = vsel %vm680, %v3731, 0
        %v3926 = vsel %vm680, %v3732, 0
        %v3927 = vsel %vm680, %v3733, 0
        %v3928 = vsel %vm681, %v3911, 0
        %v3929 = vld [vmem:[#allocation2 + $0x8] sm:$0x80]
        %v3930 = vld [vmem:[#allocation2 + $0x88] sm:$0xff]
        %v3931 = vsel %vm483, %v3929, 0
        %v3932 = vsel %vm484, %v3733, 0
        %v3933 = vsel %vm485, %v3930, 0
        %v3951 = vrot.slane %v3931, 7
        %v3952 = vrot.slane %v3736, 7
        %v3953 = vsel %vm721, %v3951, %v3952
        %v3954 = vrot.slane %v3737, 7
        %v3955 = vsel %vm721, %v3952, %v3954
        %v3956 = vrot.slane %v3738, 7
        %v3957 = vsel %vm721, %v3954, %v3956
        %v3958 = vrot.slane %v3739, 7
        %v3959 = vsel %vm721, %v3956, %v3958
        %v3960 = vrot.slane %v3740, 7
        %v3961 = vsel %vm721, %v3958, %v3960
        %v3962 = vrot.slane %v3741, 7
        %v3963 = vsel %vm721, %v3960, %v3962
        %v3964 = vrot.slane %v3742, 7
        %v3965 = vsel %vm721, %v3962, %v3964
        %v3966 = vrot.slane %v3743, 7
        %v3967 = vsel %vm721, %v3964, %v3966
        %v3968 = vrot.slane %v3744, 7
        %v3969 = vsel %vm721, %v3966, %v3968
        %v3970 = vrot.slane %v3745, 7
        %v3971 = vsel %vm721, %v3968, %v3970
        %v3972 = vrot.slane %v3746, 7
        %v3973 = vsel %vm721, %v3970, %v3972
        %v3974 = vrot.slane %v3747, 7
        %v3975 = vsel %vm721, %v3972, %v3974
        %v3976 = vrot.slane %v3748, 7
        %v3977 = vsel %vm721, %v3974, %v3976
        %v3978 = vrot.slane %v3749, 7
        %v3979 = vsel %vm721, %v3976, %v3978
        %v3980 = vrot.slane %v3932, 7
        %v3981 = vsel %vm721, %v3978, %v3980
        %v3982 = vrot.slane %v3933, 7
        %v3983 = vsel %vm721, %v3980, %v3982
        %v3984 = vld [vmem:[%s3878 + $0x80] sm:$0xf]
        %v3985 = vld [vmem:[%s3878 + $0x84] sm:$0xf]
        %v3986 = vld [vmem:[%s3878 + $0x88] sm:$0xf]
        %v3987 = vld [vmem:[%s3878 + $0x8c] sm:$0xf]
        %v3988 = vld [vmem:[%s3878 + $0x90] sm:$0xf]
        %v3989 = vld [vmem:[%s3878 + $0x94] sm:$0xf]
        %v3990 = vld [vmem:[%s3878 + $0x98] sm:$0xf]
        %v3991 = vld [vmem:[%s3878 + $0x9c] sm:$0xf]
        %v3992 = vld [vmem:[%s3878 + $0xa0] sm:$0xf]
        %v3993 = vld [vmem:[%s3878 + $0xa4] sm:$0xf]
        %v3994 = vld [vmem:[%s3878 + $0xa8] sm:$0xf]
        %v3995 = vld [vmem:[%s3878 + $0xac] sm:$0xf]
        %v3996 = vld [vmem:[%s3878 + $0xb0] sm:$0xf]
        %v3997 = vld [vmem:[%s3878 + $0xb4] sm:$0xf]
        %v3998 = vld [vmem:[%s3878 + $0xb8] sm:$0xf]
        %v3999 = vld [vmem:[%s3878 + $0xbc] sm:$0xf]
        %v4000 = vld [vmem:[%s3878 + $0xc0] sm:$0xf]
        %v4001 = vld [vmem:[%s3878 + $0xc4] sm:$0xf]
        %v4002 = vld [vmem:[%s3878 + $0xc8] sm:$0xf]
        %v4003 = vld [vmem:[%s3878 + $0xcc] sm:$0xf]
        %v4004 = vld [vmem:[%s3878 + $0xd0] sm:$0xf]
        %v4005 = vld [vmem:[%s3878 + $0xd4] sm:$0xf]
        %v4006 = vld [vmem:[%s3878 + $0xd8] sm:$0xf]
        %v4007 = vld [vmem:[%s3878 + $0xdc] sm:$0xf]
        %v4008 = vld [vmem:[%s3878 + $0xe0] sm:$0xf]
        %v4009 = vld [vmem:[%s3878 + $0xe4] sm:$0xf]
        %v4010 = vld [vmem:[%s3878 + $0xe8] sm:$0xf]
        %v4011 = vld [vmem:[%s3878 + $0xec] sm:$0xf]
        %v4012 = vld [vmem:[%s3878 + $0xf0] sm:$0xf]
        %v4013 = vld [vmem:[%s3878 + $0xf4] sm:$0xf]
        %v4014 = vld [vmem:[%s3878 + $0xf8] sm:$0xf]
        %v4015 = vld [vmem:[%s3878 + $0xfc] sm:$0xf]
        %v4017 = vshrl.u32 %v3912, 16
        %v4019 = vshll.u32 %v3912, 16
        %v4021 = vrot.slane %v4019, 1
        %v4022 = vor.u32 %v4017, %v4021
        %v4024 = vshll.u32 %v3913, 16
        %v4026 = vrot.slane %v4024, 1
        %v4027 = vsel %vm474, %v4022, %v4026
        %v4029 = vshrl.u32 %v3953, 16
        %v4031 = vshll.u32 %v3953, 16
        %v4033 = vrot.slane %v4031, 1
        %v4034 = vor.u32 %v4029, %v4033
        %v4036 = vshll.u32 %v3955, 16
        %v4038 = vrot.slane %v4036, 1
        %v4039 = vsel %vm474, %v4034, %v4038
        %v4040 = vshrl.u32 %v3913, 16
        %v4042 = vor.u32 %v4040, %v4026
        %v4044 = vshll.u32 %v3914, 16
        %v4046 = vrot.slane %v4044, 1
        %v4047 = vsel %vm474, %v4042, %v4046
        %v4048 = vshrl.u32 %v3955, 16
        %v4050 = vor.u32 %v4048, %v4038
        %v4052 = vshll.u32 %v3957, 16
        %v4054 = vrot.slane %v4052, 1
        %v4055 = vsel %vm474, %v4050, %v4054
        %v4056 = vshrl.u32 %v3914, 16
        %v4058 = vor.u32 %v4056, %v4046
        %v4060 = vshll.u32 %v3915, 16
        %v4062 = vrot.slane %v4060, 1
        %v4063 = vsel %vm474, %v4058, %v4062
        %v4064 = vshrl.u32 %v3957, 16
        %v4066 = vor.u32 %v4064, %v4054
        %v4068 = vshll.u32 %v3959, 16
        %v4070 = vrot.slane %v4068, 1
        %v4071 = vsel %vm474, %v4066, %v4070
        %v4072 = vshrl.u32 %v3915, 16
        %v4074 = vor.u32 %v4072, %v4062
        %v4076 = vshll.u32 %v3916, 16
        %v4078 = vrot.slane %v4076, 1
        %v4079 = vsel %vm474, %v4074, %v4078
        %v4080 = vshrl.u32 %v3959, 16
        %v4082 = vor.u32 %v4080, %v4070
        %v4084 = vshll.u32 %v3961, 16
        %v4086 = vrot.slane %v4084, 1
        %v4087 = vsel %vm474, %v4082, %v4086
        %v4088 = vshrl.u32 %v3916, 16
        %v4090 = vor.u32 %v4088, %v4078
        %v4092 = vshll.u32 %v3917, 16
        %v4094 = vrot.slane %v4092, 1
        %v4095 = vsel %vm474, %v4090, %v4094
        %v4096 = vshrl.u32 %v3961, 16
        %v4098 = vor.u32 %v4096, %v4086
        %v4100 = vshll.u32 %v3963, 16
        %v4102 = vrot.slane %v4100, 1
        %v4103 = vsel %vm474, %v4098, %v4102
        %v4104 = vshrl.u32 %v3917, 16
        %v4106 = vor.u32 %v4104, %v4094
        %v4108 = vshll.u32 %v3918, 16
        %v4110 = vrot.slane %v4108, 1
        %v4111 = vsel %vm474, %v4106, %v4110
        %v4112 = vshrl.u32 %v3963, 16
        %v4114 = vor.u32 %v4112, %v4102
        %v4116 = vshll.u32 %v3965, 16
        %v4118 = vrot.slane %v4116, 1
        %v4119 = vsel %vm474, %v4114, %v4118
        %v4120 = vshrl.u32 %v3918, 16
        %v4122 = vor.u32 %v4120, %v4110
        %v4124 = vshll.u32 %v3919, 16
        %v4126 = vrot.slane %v4124, 1
        %v4127 = vsel %vm474, %v4122, %v4126
        %v4128 = vshrl.u32 %v3965, 16
        %v4130 = vor.u32 %v4128, %v4118
        %v4132 = vshll.u32 %v3967, 16
        %v4134 = vrot.slane %v4132, 1
        %v4135 = vsel %vm474, %v4130, %v4134
        %v4136 = vshrl.u32 %v3919, 16
        %v4138 = vor.u32 %v4136, %v4126
        %v4140 = vshll.u32 %v3920, 16
        %v4142 = vrot.slane %v4140, 1
        %v4143 = vsel %vm474, %v4138, %v4142
        %v4144 = vshrl.u32 %v3967, 16
        %v4146 = vor.u32 %v4144, %v4134
        %v4148 = vshll.u32 %v3969, 16
        %v4150 = vrot.slane %v4148, 1
        %v4151 = vsel %vm474, %v4146, %v4150
        %v4152 = vshrl.u32 %v3920, 16
        %v4154 = vor.u32 %v4152, %v4142
        %v4156 = vshll.u32 %v3921, 16
        %v4158 = vrot.slane %v4156, 1
        %v4159 = vsel %vm474, %v4154, %v4158
        %v4160 = vshrl.u32 %v3969, 16
        %v4162 = vor.u32 %v4160, %v4150
        %v4164 = vshll.u32 %v3971, 16
        %v4166 = vrot.slane %v4164, 1
        %v4167 = vsel %vm474, %v4162, %v4166
        %v4168 = vshrl.u32 %v3921, 16
        %v4170 = vor.u32 %v4168, %v4158
        %v4172 = vshll.u32 %v3922, 16
        %v4174 = vrot.slane %v4172, 1
        %v4175 = vsel %vm474, %v4170, %v4174
        %v4176 = vshrl.u32 %v3971, 16
        %v4178 = vor.u32 %v4176, %v4166
        %v4180 = vshll.u32 %v3973, 16
        %v4182 = vrot.slane %v4180, 1
        %v4183 = vsel %vm474, %v4178, %v4182
        %v4184 = vshrl.u32 %v3922, 16
        %v4186 = vor.u32 %v4184, %v4174
        %v4188 = vshll.u32 %v3923, 16
        %v4190 = vrot.slane %v4188, 1
        %v4191 = vsel %vm474, %v4186, %v4190
        %v4192 = vshrl.u32 %v3973, 16
        %v4194 = vor.u32 %v4192, %v4182
        %v4196 = vshll.u32 %v3975, 16
        %v4198 = vrot.slane %v4196, 1
        %v4199 = vsel %vm474, %v4194, %v4198
        %v4200 = vshrl.u32 %v3923, 16
        %v4202 = vor.u32 %v4200, %v4190
        %v4204 = vshll.u32 %v3924, 16
        %v4206 = vrot.slane %v4204, 1
        %v4207 = vsel %vm474, %v4202, %v4206
        %v4208 = vshrl.u32 %v3975, 16
        %v4210 = vor.u32 %v4208, %v4198
        %v4212 = vshll.u32 %v3977, 16
        %v4214 = vrot.slane %v4212, 1
        %v4215 = vsel %vm474, %v4210, %v4214
        %v4216 = vshrl.u32 %v3924, 16
        %v4218 = vor.u32 %v4216, %v4206
        %v4220 = vshll.u32 %v3925, 16
        %v4222 = vrot.slane %v4220, 1
        %v4223 = vsel %vm474, %v4218, %v4222
        %v4224 = vshrl.u32 %v3977, 16
        %v4226 = vor.u32 %v4224, %v4214
        %v4228 = vshll.u32 %v3979, 16
        %v4230 = vrot.slane %v4228, 1
        %v4231 = vsel %vm474, %v4226, %v4230
        %v4232 = vshrl.u32 %v3925, 16
        %v4234 = vor.u32 %v4232, %v4222
        %v4236 = vshll.u32 %v3926, 16
        %v4238 = vrot.slane %v4236, 1
        %v4239 = vsel %vm474, %v4234, %v4238
        %v4240 = vshrl.u32 %v3979, 16
        %v4242 = vor.u32 %v4240, %v4230
        %v4244 = vshll.u32 %v3981, 16
        %v4246 = vrot.slane %v4244, 1
        %v4247 = vsel %vm474, %v4242, %v4246
        %v4248 = vshrl.u32 %v3926, 16
        %v4250 = vor.u32 %v4248, %v4238
        %v4252 = vshll.u32 %v3927, 16
        %v4254 = vrot.slane %v4252, 1
        %v4255 = vsel %vm474, %v4250, %v4254
        %v4256 = vshrl.u32 %v3981, 16
        %v4258 = vor.u32 %v4256, %v4246
        %v4260 = vshll.u32 %v3983, 16
        %v4262 = vrot.slane %v4260, 1
        %v4263 = vsel %vm474, %v4258, %v4262
        %v4264 = vshrl.u32 %v3927, 16
        %v4266 = vor.u32 %v4264, %v4254
        %v4268 = vshll.u32 %v3928, 16
        %v4270 = vrot.slane %v4268, 1
        %v4271 = vsel %vm474, %v4266, %v4270
        %v4272 = vshrl.u32 %v3983, 16
        %v4274 = vor.u32 %v4272, %v4262
        %v4276 = vshll.u32 %v3982, 16
        %v4278 = vrot.slane %v4276, 1
        %v4279 = vsel %vm474, %v4274, %v4278
        %v4344 = vunpack.c.l.b16 %v3984
        %v4345 = vunpack.c.l.b16 %v3985
        %v4346 = vunpack.c.l.b16 %v3986
        %v4347 = vunpack.c.l.b16 %v3987
        %v4348 = vunpack.c.l.b16 %v3988
        %v4349 = vunpack.c.l.b16 %v3989
        %v4350 = vunpack.c.l.b16 %v3990
        %v4351 = vunpack.c.l.b16 %v3991
        %v4352 = vunpack.c.l.b16 %v3992
        %v4353 = vunpack.c.l.b16 %v3993
        %v4354 = vunpack.c.l.b16 %v3994
        %v4355 = vunpack.c.l.b16 %v3995
        %v4356 = vunpack.c.l.b16 %v3996
        %v4357 = vunpack.c.l.b16 %v3997
        %v4358 = vunpack.c.l.b16 %v3998
        %v4359 = vunpack.c.l.b16 %v3999
        %v4360 = vunpack.c.l.b16 %v4000
        %v4361 = vunpack.c.l.b16 %v4001
        %v4362 = vunpack.c.l.b16 %v4002
        %v4363 = vunpack.c.l.b16 %v4003
        %v4364 = vunpack.c.l.b16 %v4004
        %v4365 = vunpack.c.l.b16 %v4005
        %v4366 = vunpack.c.l.b16 %v4006
        %v4367 = vunpack.c.l.b16 %v4007
        %v4368 = vunpack.c.l.b16 %v4008
        %v4369 = vunpack.c.l.b16 %v4009
        %v4370 = vunpack.c.l.b16 %v4010
        %v4371 = vunpack.c.l.b16 %v4011
        %v4372 = vunpack.c.l.b16 %v4012
        %v4373 = vunpack.c.l.b16 %v4013
        %v4374 = vunpack.c.l.b16 %v4014
        %v4375 = vunpack.c.l.b16 %v4015
        %v4376 = vpack.c.b16 %v4345, %v4344
        %v4377 = vpack.c.b16 %v4347, %v4346
        %v4378 = vpack.c.b16 %v4349, %v4348
        %v4379 = vpack.c.b16 %v4351, %v4350
        %v4380 = vpack.c.b16 %v4353, %v4352
        %v4381 = vpack.c.b16 %v4355, %v4354
        %v4382 = vpack.c.b16 %v4357, %v4356
        %v4383 = vpack.c.b16 %v4359, %v4358
        %v4384 = vpack.c.b16 %v4361, %v4360
        %v4385 = vpack.c.b16 %v4363, %v4362
        %v4386 = vpack.c.b16 %v4365, %v4364
        %v4387 = vpack.c.b16 %v4367, %v4366
        %v4388 = vpack.c.b16 %v4369, %v4368
        %v4389 = vpack.c.b16 %v4371, %v4370
        %v4390 = vpack.c.b16 %v4373, %v4372
        %v4391 = vpack.c.b16 %v4375, %v4374
        %4408 = vmatprep.subr.bf16.mxu0 0
        %4409 = vmatpush1.bf16.msra.mxu0 %v4376
        %4410 = vmatprep.subr.bf16.mxu0 0
        %4411 = vmatpush1.bf16.msra.mxu0 %v4377
        %4412 = vmatprep.subr.bf16.mxu0 0
        %4413 = vmatpush1.bf16.msra.mxu0 %v4378
        %4414 = vmatprep.subr.bf16.mxu0 0
        %4415 = vmatpush1.bf16.msra.mxu0 %v4379
        %4416 = vmatprep.subr.bf16.mxu0 0
        %4417 = vmatpush1.bf16.msra.mxu0 %v4380
        %4418 = vmatprep.subr.bf16.mxu0 0
        %4419 = vmatpush1.bf16.msra.mxu0 %v4381
        %4420 = vmatprep.subr.bf16.mxu0 0
        %4421 = vmatpush1.bf16.msra.mxu0 %v4382
        %4422 = vmatprep.subr.bf16.mxu0 0
        %4423 = vmatpush1.bf16.msra.mxu0 %v4383
        %4424 = vmatprep.subr.bf16.mxu0 0
        %4425 = vmatpush1.bf16.msra.mxu0 %v4384
        %4426 = vmatprep.subr.bf16.mxu0 0
        %4427 = vmatpush1.bf16.msra.mxu0 %v4385
        %4428 = vmatprep.subr.bf16.mxu0 0
        %4429 = vmatpush1.bf16.msra.mxu0 %v4386
        %4430 = vmatprep.subr.bf16.mxu0 0
        %4431 = vmatpush1.bf16.msra.mxu0 %v4387
        %4432 = vmatprep.subr.bf16.mxu0 0
        %4433 = vmatpush1.bf16.msra.mxu0 %v4388
        %4434 = vmatprep.subr.bf16.mxu0 0
        %4435 = vmatpush1.bf16.msra.mxu0 %v4389
        %4436 = vmatprep.subr.bf16.mxu0 0
        %4437 = vmatpush1.bf16.msra.mxu0 %v4390
        %4438 = vmatprep.subr.bf16.mxu0 0
        %4439 = vmatpush1.bf16.msra.mxu0 %v4391
        %4440 = vmatprep.mubr.bf16.mxu0 %v4039
        %4441 = vmatmul.mubr.bf16.gmra.mrb[0].mxu0 %v4027
        %v4442 = vpop.f32.mrb[0].mxu0
        %v4443 = vadd.f32 0.0, %v4442
        %v4444 = vpop.f32.mrb[0].mxu0
        %v4445 = vpop.f32.mrb[0].mxu0
        %v4446 = vadd.f32 0.0, %v4445
        %v4447 = vpop.f32.mrb[0].mxu0
        %4448 = vmatprep.mubr.bf16.mxu0 %v4055
        %4449 = vmatmul.mubr.bf16.gmra.mrb[0].mxu0 %v4047
        %v4450 = vpop.f32.mrb[0].mxu0
        %v4451 = vadd.f32 0.0, %v4450
        %v4452 = vpop.f32.mrb[0].mxu0
        %v4453 = vpop.f32.mrb[0].mxu0
        %v4454 = vadd.f32 0.0, %v4453
        %v4455 = vpop.f32.mrb[0].mxu0
        %4456 = vmatprep.mubr.bf16.mxu0 %v4071
        %4457 = vmatmul.mubr.bf16.gmra.mrb[0].mxu0 %v4063
        %v4458 = vpop.f32.mrb[0].mxu0
        %v4459 = vadd.f32 0.0, %v4458
        %v4460 = vpop.f32.mrb[0].mxu0
        %v4461 = vpop.f32.mrb[0].mxu0
        %v4462 = vadd.f32 0.0, %v4461
        %v4463 = vpop.f32.mrb[0].mxu0
        %4464 = vmatprep.mubr.bf16.mxu0 %v4087
        %4465 = vmatmul.mubr.bf16.gmra.mrb[0].mxu0 %v4079
        %v4466 = vpop.f32.mrb[0].mxu0
        %v4467 = vadd.f32 0.0, %v4466
        %v4468 = vpop.f32.mrb[0].mxu0
        %v4469 = vpop.f32.mrb[0].mxu0
        %v4470 = vadd.f32 0.0, %v4469
        %v4471 = vpop.f32.mrb[0].mxu0
        %4472 = vmatprep.mubr.bf16.mxu0 %v4103
        %4473 = vmatmul.mubr.bf16.gmra.mrb[0].mxu0 %v4095
        %v4474 = vpop.f32.mrb[0].mxu0
        %v4475 = vadd.f32 0.0, %v4474
        %v4476 = vpop.f32.mrb[0].mxu0
        %v4477 = vpop.f32.mrb[0].mxu0
        %v4478 = vadd.f32 0.0, %v4477
        %v4479 = vpop.f32.mrb[0].mxu0
        %4480 = vmatprep.mubr.bf16.mxu0 %v4119
        %4481 = vmatmul.mubr.bf16.gmra.mrb[0].mxu0 %v4111
        %v4482 = vpop.f32.mrb[0].mxu0
        %v4483 = vadd.f32 0.0, %v4482
        %v4484 = vpop.f32.mrb[0].mxu0
        %v4485 = vpop.f32.mrb[0].mxu0
        %v4486 = vadd.f32 0.0, %v4485
        %v4487 = vpop.f32.mrb[0].mxu0
        %4488 = vmatprep.mubr.bf16.mxu0 %v4135
        %4489 = vmatmul.mubr.bf16.gmra.mrb[0].mxu0 %v4127
        %v4490 = vpop.f32.mrb[0].mxu0
        %v4491 = vadd.f32 0.0, %v4490
        %v4492 = vpop.f32.mrb[0].mxu0
        %v4493 = vpop.f32.mrb[0].mxu0
        %v4494 = vadd.f32 0.0, %v4493
        %v4495 = vpop.f32.mrb[0].mxu0
        %4496 = vmatprep.mubr.bf16.mxu0 %v4151
        %4497 = vmatmul.mubr.bf16.gmra.mrb[0].mxu0 %v4143
        %v4498 = vpop.f32.mrb[0].mxu0
        %v4499 = vadd.f32 0.0, %v4498
        %v4500 = vpop.f32.mrb[0].mxu0
        %v4501 = vpop.f32.mrb[0].mxu0
        %v4502 = vadd.f32 0.0, %v4501
        %v4503 = vpop.f32.mrb[0].mxu0
        %4504 = vmatprep.mubr.bf16.mxu0 %v4167
        %4505 = vmatmul.mubr.bf16.gmra.mrb[0].mxu0 %v4159
        %v4506 = vpop.f32.mrb[0].mxu0
        %v4507 = vadd.f32 0.0, %v4506
        %v4508 = vpop.f32.mrb[0].mxu0
        %v4509 = vpop.f32.mrb[0].mxu0
        %v4510 = vadd.f32 0.0, %v4509
        %v4511 = vpop.f32.mrb[0].mxu0
        %4512 = vmatprep.mubr.bf16.mxu0 %v4183
        %4513 = vmatmul.mubr.bf16.gmra.mrb[0].mxu0 %v4175
        %v4514 = vpop.f32.mrb[0].mxu0
        %v4515 = vadd.f32 0.0, %v4514
        %v4516 = vpop.f32.mrb[0].mxu0
        %v4517 = vpop.f32.mrb[0].mxu0
        %v4518 = vadd.f32 0.0, %v4517
        %v4519 = vpop.f32.mrb[0].mxu0
        %4520 = vmatprep.mubr.bf16.mxu0 %v4199
        %4521 = vmatmul.mubr.bf16.gmra.mrb[0].mxu0 %v4191
        %v4522 = vpop.f32.mrb[0].mxu0
        %v4523 = vadd.f32 0.0, %v4522
        %v4524 = vpop.f32.mrb[0].mxu0
        %v4525 = vpop.f32.mrb[0].mxu0
        %v4526 = vadd.f32 0.0, %v4525
        %v4527 = vpop.f32.mrb[0].mxu0
        %4528 = vmatprep.mubr.bf16.mxu0 %v4215
        %4529 = vmatmul.mubr.bf16.gmra.mrb[0].mxu0 %v4207
        %v4530 = vpop.f32.mrb[0].mxu0
        %v4531 = vadd.f32 0.0, %v4530
        %v4532 = vpop.f32.mrb[0].mxu0
        %v4533 = vpop.f32.mrb[0].mxu0
        %v4534 = vadd.f32 0.0, %v4533
        %v4535 = vpop.f32.mrb[0].mxu0
        %4536 = vmatprep.mubr.bf16.mxu0 %v4231
        %4537 = vmatmul.mubr.bf16.gmra.mrb[0].mxu0 %v4223
        %v4538 = vpop.f32.mrb[0].mxu0
        %v4539 = vadd.f32 0.0, %v4538
        %v4540 = vpop.f32.mrb[0].mxu0
        %v4541 = vpop.f32.mrb[0].mxu0
        %v4542 = vadd.f32 0.0, %v4541
        %v4543 = vpop.f32.mrb[0].mxu0
        %4544 = vmatprep.mubr.bf16.mxu0 %v4247
        %4545 = vmatmul.mubr.bf16.gmra.mrb[0].mxu0 %v4239
        %v4546 = vpop.f32.mrb[0].mxu0
        %v4547 = vadd.f32 0.0, %v4546
        %v4548 = vpop.f32.mrb[0].mxu0
        %v4549 = vpop.f32.mrb[0].mxu0
        %v4550 = vadd.f32 0.0, %v4549
        %v4551 = vpop.f32.mrb[0].mxu0
        %4552 = vmatprep.mubr.bf16.mxu0 %v4263
        %4553 = vmatmul.mubr.bf16.gmra.mrb[0].mxu0 %v4255
        %v4554 = vpop.f32.mrb[0].mxu0
        %v4555 = vadd.f32 0.0, %v4554
        %v4556 = vpop.f32.mrb[0].mxu0
        %v4557 = vpop.f32.mrb[0].mxu0
        %v4558 = vadd.f32 0.0, %v4557
        %v4559 = vpop.f32.mrb[0].mxu0
        %4560 = vmatprep.mubr.bf16.mxu0 %v4279
        %4561 = vmatmul.mubr.bf16.gmra.mrb[0].mxu0 %v4271
        %v4562 = vpop.f32.mrb[0].mxu0
        %v4563 = vadd.f32 0.0, %v4562
        %v4564 = vpop.f32.mrb[0].mxu0
        %v4565 = vpop.f32.mrb[0].mxu0
        %v4566 = vadd.f32 0.0, %v4565
        %v4567 = vpop.f32.mrb[0].mxu0
        %4568 = vdwg.mxu0
        %v4570 = vshrl.u32 %v3734, 16
        %v4572 = vrot.slane %v4570, 7
        %v4574 = vshrl.u32 %v3735, 16
        %v4576 = vrot.slane %v4574, 7
        %v4577 = vshll.u32 %v3735, 16
        %v4579 = vor.u32 %v4576, %v4577
        %v4580 = vsel %vm670, %v4572, %v4579
        %v4582 = vshrl.u32 %v3754, 16
        %v4584 = vrot.slane %v4582, 7
        %v4586 = vshrl.u32 %v3762, 16
        %v4588 = vrot.slane %v4586, 7
        %v4589 = vshll.u32 %v3762, 16
        %v4591 = vor.u32 %v4588, %v4589
        %v4592 = vsel %vm670, %v4584, %v4591
        %v4594 = vshrl.u32 %v3736, 16
        %v4596 = vrot.slane %v4594, 7
        %v4597 = vshll.u32 %v3736, 16
        %v4599 = vor.u32 %v4596, %v4597
        %v4600 = vsel %vm670, %v4576, %v4599
        %v4602 = vshrl.u32 %v3770, 16
        %v4604 = vrot.slane %v4602, 7
        %v4605 = vshll.u32 %v3770, 16
        %v4607 = vor.u32 %v4604, %v4605
        %v4608 = vsel %vm670, %v4588, %v4607
        %v4610 = vshrl.u32 %v3737, 16
        %v4612 = vrot.slane %v4610, 7
        %v4613 = vshll.u32 %v3737, 16
        %v4615 = vor.u32 %v4612, %v4613
        %v4616 = vsel %vm670, %v4596, %v4615
        %v4618 = vshrl.u32 %v3778, 16
        %v4620 = vrot.slane %v4618, 7
        %v4621 = vshll.u32 %v3778, 16
        %v4623 = vor.u32 %v4620, %v4621
        %v4624 = vsel %vm670, %v4604, %v4623
        %v4626 = vshrl.u32 %v3738, 16
        %v4628 = vrot.slane %v4626, 7
        %v4629 = vshll.u32 %v3738, 16
        %v4631 = vor.u32 %v4628, %v4629
        %v4632 = vsel %vm670, %v4612, %v4631
        %v4634 = vshrl.u32 %v3786, 16
        %v4636 = vrot.slane %v4634, 7
        %v4637 = vshll.u32 %v3786, 16
        %v4639 = vor.u32 %v4636, %v4637
        %v4640 = vsel %vm670, %v4620, %v4639
        %v4642 = vshrl.u32 %v3739, 16
        %v4644 = vrot.slane %v4642, 7
        %v4645 = vshll.u32 %v3739, 16
        %v4647 = vor.u32 %v4644, %v4645
        %v4648 = vsel %vm670, %v4628, %v4647
        %v4650 = vshrl.u32 %v3794, 16
        %v4652 = vrot.slane %v4650, 7
        %v4653 = vshll.u32 %v3794, 16
        %v4655 = vor.u32 %v4652, %v4653
        %v4656 = vsel %vm670, %v4636, %v4655
        %v4658 = vshrl.u32 %v3740, 16
        %v4660 = vrot.slane %v4658, 7
        %v4661 = vshll.u32 %v3740, 16
        %v4663 = vor.u32 %v4660, %v4661
        %v4664 = vsel %vm670, %v4644, %v4663
        %v4666 = vshrl.u32 %v3802, 16
        %v4668 = vrot.slane %v4666, 7
        %v4669 = vshll.u32 %v3802, 16
        %v4671 = vor.u32 %v4668, %v4669
        %v4672 = vsel %vm670, %v4652, %v4671
        %v4674 = vshrl.u32 %v3741, 16
        %v4676 = vrot.slane %v4674, 7
        %v4677 = vshll.u32 %v3741, 16
        %v4679 = vor.u32 %v4676, %v4677
        %v4680 = vsel %vm670, %v4660, %v4679
        %v4682 = vshrl.u32 %v3810, 16
        %v4684 = vrot.slane %v4682, 7
        %v4685 = vshll.u32 %v3810, 16
        %v4687 = vor.u32 %v4684, %v4685
        %v4688 = vsel %vm670, %v4668, %v4687
        %v4690 = vshrl.u32 %v3742, 16
        %v4692 = vrot.slane %v4690, 7
        %v4693 = vshll.u32 %v3742, 16
        %v4695 = vor.u32 %v4692, %v4693
        %v4696 = vsel %vm670, %v4676, %v4695
        %v4698 = vshrl.u32 %v3818, 16
        %v4700 = vrot.slane %v4698, 7
        %v4701 = vshll.u32 %v3818, 16
        %v4703 = vor.u32 %v4700, %v4701
        %v4704 = vsel %vm670, %v4684, %v4703
        %v4706 = vshrl.u32 %v3743, 16
        %v4708 = vrot.slane %v4706, 7
        %v4709 = vshll.u32 %v3743, 16
        %v4711 = vor.u32 %v4708, %v4709
        %v4712 = vsel %vm670, %v4692, %v4711
        %v4714 = vshrl.u32 %v3826, 16
        %v4716 = vrot.slane %v4714, 7
        %v4717 = vshll.u32 %v3826, 16
        %v4719 = vor.u32 %v4716, %v4717
        %v4720 = vsel %vm670, %v4700, %v4719
        %v4722 = vshrl.u32 %v3744, 16
        %v4724 = vrot.slane %v4722, 7
        %v4725 = vshll.u32 %v3744, 16
        %v4727 = vor.u32 %v4724, %v4725
        %v4728 = vsel %vm670, %v4708, %v4727
        %v4730 = vshrl.u32 %v3834, 16
        %v4732 = vrot.slane %v4730, 7
        %v4733 = vshll.u32 %v3834, 16
        %v4735 = vor.u32 %v4732, %v4733
        %v4736 = vsel %vm670, %v4716, %v4735
        %v4738 = vshrl.u32 %v3745, 16
        %v4740 = vrot.slane %v4738, 7
        %v4741 = vshll.u32 %v3745, 16
        %v4743 = vor.u32 %v4740, %v4741
        %v4744 = vsel %vm670, %v4724, %v4743
        %v4746 = vshrl.u32 %v3842, 16
        %v4748 = vrot.slane %v4746, 7
        %v4749 = vshll.u32 %v3842, 16
        %v4751 = vor.u32 %v4748, %v4749
        %v4752 = vsel %vm670, %v4732, %v4751
        %v4754 = vshrl.u32 %v3746, 16
        %v4756 = vrot.slane %v4754, 7
        %v4757 = vshll.u32 %v3746, 16
        %v4759 = vor.u32 %v4756, %v4757
        %v4760 = vsel %vm670, %v4740, %v4759
        %v4762 = vshrl.u32 %v3850, 16
        %v4764 = vrot.slane %v4762, 7
        %v4765 = vshll.u32 %v3850, 16
        %v4767 = vor.u32 %v4764, %v4765
        %v4768 = vsel %vm670, %v4748, %v4767
        %v4770 = vshrl.u32 %v3747, 16
        %v4772 = vrot.slane %v4770, 7
        %v4773 = vshll.u32 %v3747, 16
        %v4775 = vor.u32 %v4772, %v4773
        %v4776 = vsel %vm670, %v4756, %v4775
        %v4778 = vshrl.u32 %v3858, 16
        %v4780 = vrot.slane %v4778, 7
        %v4781 = vshll.u32 %v3858, 16
        %v4783 = vor.u32 %v4780, %v4781
        %v4784 = vsel %vm670, %v4764, %v4783
        %v4786 = vshrl.u32 %v3748, 16
        %v4788 = vrot.slane %v4786, 7
        %v4789 = vshll.u32 %v3748, 16
        %v4791 = vor.u32 %v4788, %v4789
        %v4792 = vsel %vm670, %v4772, %v4791
        %v4794 = vshrl.u32 %v3866, 16
        %v4796 = vrot.slane %v4794, 7
        %v4797 = vshll.u32 %v3866, 16
        %v4799 = vor.u32 %v4796, %v4797
        %v4800 = vsel %vm670, %v4780, %v4799
        %v4802 = vshrl.u32 %v3749, 16
        %v4804 = vrot.slane %v4802, 7
        %v4805 = vshll.u32 %v3749, 16
        %v4807 = vor.u32 %v4804, %v4805
        %v4808 = vsel %vm670, %v4788, %v4807
        %v4810 = vshrl.u32 %v3874, 16
        %v4812 = vrot.slane %v4810, 7
        %v4813 = vshll.u32 %v3874, 16
        %v4815 = vor.u32 %v4812, %v4813
        %v4816 = vsel %vm670, %v4796, %v4815
        %v4818 = vshrl.u32 %v3750, 16
        %v4820 = vrot.slane %v4818, 7
        %v4821 = vshll.u32 %v3750, 16
        %v4823 = vor.u32 %v4820, %v4821
        %v4824 = vsel %vm670, %v4804, %v4823
        %v4826 = vshrl.u32 %v3877, 16
        %v4828 = vrot.slane %v4826, 7
        %v4829 = vshll.u32 %v3877, 16
        %v4831 = vor.u32 %v4828, %v4829
        %v4832 = vsel %vm670, %v4812, %v4831
        %v4897 = vunpack.c.l.b16 %v3879
        %v4898 = vunpack.c.l.b16 %v3880
        %v4899 = vunpack.c.l.b16 %v3881
        %v4900 = vunpack.c.l.b16 %v3882
        %v4901 = vunpack.c.l.b16 %v3883
        %v4902 = vunpack.c.l.b16 %v3884
        %v4903 = vunpack.c.l.b16 %v3885
        %v4904 = vunpack.c.l.b16 %v3886
        %v4905 = vunpack.c.l.b16 %v3887
        %v4906 = vunpack.c.l.b16 %v3888
        %v4907 = vunpack.c.l.b16 %v3889
        %v4908 = vunpack.c.l.b16 %v3890
        %v4909 = vunpack.c.l.b16 %v3891
        %v4910 = vunpack.c.l.b16 %v3892
        %v4911 = vunpack.c.l.b16 %v3893
        %v4912 = vunpack.c.l.b16 %v3894
        %v4913 = vunpack.c.l.b16 %v3895
        %v4914 = vunpack.c.l.b16 %v3896
        %v4915 = vunpack.c.l.b16 %v3897
        %v4916 = vunpack.c.l.b16 %v3898
        %v4917 = vunpack.c.l.b16 %v3899
        %v4918 = vunpack.c.l.b16 %v3900
        %v4919 = vunpack.c.l.b16 %v3901
        %v4920 = vunpack.c.l.b16 %v3902
        %v4921 = vunpack.c.l.b16 %v3903
        %v4922 = vunpack.c.l.b16 %v3904
        %v4923 = vunpack.c.l.b16 %v3905
        %v4924 = vunpack.c.l.b16 %v3906
        %v4925 = vunpack.c.l.b16 %v3907
        %v4926 = vunpack.c.l.b16 %v3908
        %v4927 = vunpack.c.l.b16 %v3909
        %v4928 = vunpack.c.l.b16 %v3910
        %v4929 = vpack.c.b16 %v4898, %v4897
        %v4930 = vpack.c.b16 %v4900, %v4899
        %v4931 = vpack.c.b16 %v4902, %v4901
        %v4932 = vpack.c.b16 %v4904, %v4903
        %v4933 = vpack.c.b16 %v4906, %v4905
        %v4934 = vpack.c.b16 %v4908, %v4907
        %v4935 = vpack.c.b16 %v4910, %v4909
        %v4936 = vpack.c.b16 %v4912, %v4911
        %v4937 = vpack.c.b16 %v4914, %v4913
        %v4938 = vpack.c.b16 %v4916, %v4915
        %v4939 = vpack.c.b16 %v4918, %v4917
        %v4940 = vpack.c.b16 %v4920, %v4919
        %v4941 = vpack.c.b16 %v4922, %v4921
        %v4942 = vpack.c.b16 %v4924, %v4923
        %v4943 = vpack.c.b16 %v4926, %v4925
        %v4944 = vpack.c.b16 %v4928, %v4927
        %4961 = vmatprep.subr.bf16.mxu0 0
        %4962 = vmatpush1.bf16.msra.mxu0 %v4929
        %4963 = vmatprep.subr.bf16.mxu0 0
        %4964 = vmatpush1.bf16.msra.mxu0 %v4930
        %4965 = vmatprep.subr.bf16.mxu0 0
        %4966 = vmatpush1.bf16.msra.mxu0 %v4931
        %4967 = vmatprep.subr.bf16.mxu0 0
        %4968 = vmatpush1.bf16.msra.mxu0 %v4932
        %4969 = vmatprep.subr.bf16.mxu0 0
        %4970 = vmatpush1.bf16.msra.mxu0 %v4933
        %4971 = vmatprep.subr.bf16.mxu0 0
        %4972 = vmatpush1.bf16.msra.mxu0 %v4934
        %4973 = vmatprep.subr.bf16.mxu0 0
        %4974 = vmatpush1.bf16.msra.mxu0 %v4935
        %4975 = vmatprep.subr.bf16.mxu0 0
        %4976 = vmatpush1.bf16.msra.mxu0 %v4936
        %4977 = vmatprep.subr.bf16.mxu0 0
        %4978 = vmatpush1.bf16.msra.mxu0 %v4937
        %4979 = vmatprep.subr.bf16.mxu0 0
        %4980 = vmatpush1.bf16.msra.mxu0 %v4938
        %4981 = vmatprep.subr.bf16.mxu0 0
        %4982 = vmatpush1.bf16.msra.mxu0 %v4939
        %4983 = vmatprep.subr.bf16.mxu0 0
        %4984 = vmatpush1.bf16.msra.mxu0 %v4940
        %4985 = vmatprep.subr.bf16.mxu0 0
        %4986 = vmatpush1.bf16.msra.mxu0 %v4941
        %4987 = vmatprep.subr.bf16.mxu0 0
        %4988 = vmatpush1.bf16.msra.mxu0 %v4942
        %4989 = vmatprep.subr.bf16.mxu0 0
        %4990 = vmatpush1.bf16.msra.mxu0 %v4943
        %4991 = vmatprep.subr.bf16.mxu0 0
        %4992 = vmatpush1.bf16.msra.mxu0 %v4944
        %4993 = vmatprep.mubr.bf16.mxu0 %v4592
        %4994 = vmatmul.mubr.bf16.gmra.mrb[0].mxu0 %v4580
        %v4995 = vpop.f32.mrb[0].mxu0
        %v4996 = vadd.f32 %v4443, %v4995
        %v4997 = vpop.f32.mrb[0].mxu0
        %v4998 = vpop.f32.mrb[0].mxu0
        %v4999 = vadd.f32 %v4446, %v4998
        %v5000 = vpop.f32.mrb[0].mxu0
        %5001 = vmatprep.mubr.bf16.mxu0 %v4608
        %5002 = vmatmul.mubr.bf16.gmra.mrb[0].mxu0 %v4600
        %v5003 = vpop.f32.mrb[0].mxu0
        %v5004 = vadd.f32 %v4451, %v5003
        %v5005 = vpop.f32.mrb[0].mxu0
        %v5006 = vpop.f32.mrb[0].mxu0
        %v5007 = vadd.f32 %v4454, %v5006
        %v5008 = vpop.f32.mrb[0].mxu0
        %5009 = vmatprep.mubr.bf16.mxu0 %v4624
        %5010 = vmatmul.mubr.bf16.gmra.mrb[0].mxu0 %v4616
        %v5011 = vpop.f32.mrb[0].mxu0
        %v5012 = vadd.f32 %v4459, %v5011
        %v5013 = vpop.f32.mrb[0].mxu0
        %v5014 = vpop.f32.mrb[0].mxu0
        %v5015 = vadd.f32 %v4462, %v5014
        %v5016 = vpop.f32.mrb[0].mxu0
        %5017 = vmatprep.mubr.bf16.mxu0 %v4640
        %5018 = vmatmul.mubr.bf16.gmra.mrb[0].mxu0 %v4632
        %v5019 = vpop.f32.mrb[0].mxu0
        %v5020 = vadd.f32 %v4467, %v5019
        %v5021 = vpop.f32.mrb[0].mxu0
        %v5022 = vpop.f32.mrb[0].mxu0
        %v5023 = vadd.f32 %v4470, %v5022
        %v5024 = vpop.f32.mrb[0].mxu0
        %5025 = vmatprep.mubr.bf16.mxu0 %v4656
        %5026 = vmatmul.mubr.bf16.gmra.mrb[0].mxu0 %v4648
        %v5027 = vpop.f32.mrb[0].mxu0
        %v5028 = vadd.f32 %v4475, %v5027
        %v5029 = vpop.f32.mrb[0].mxu0
        %v5030 = vpop.f32.mrb[0].mxu0
        %v5031 = vadd.f32 %v4478, %v5030
        %v5032 = vpop.f32.mrb[0].mxu0
        %5033 = vmatprep.mubr.bf16.mxu0 %v4672
        %5034 = vmatmul.mubr.bf16.gmra.mrb[0].mxu0 %v4664
        %v5035 = vpop.f32.mrb[0].mxu0
        %v5036 = vadd.f32 %v4483, %v5035
        %v5037 = vpop.f32.mrb[0].mxu0
        %v5038 = vpop.f32.mrb[0].mxu0
        %v5039 = vadd.f32 %v4486, %v5038
        %v5040 = vpop.f32.mrb[0].mxu0
        %5041 = vmatprep.mubr.bf16.mxu0 %v4688
        %5042 = vmatmul.mubr.bf16.gmra.mrb[0].mxu0 %v4680
        %v5043 = vpop.f32.mrb[0].mxu0
        %v5044 = vadd.f32 %v4491, %v5043
        %v5045 = vpop.f32.mrb[0].mxu0
        %v5046 = vpop.f32.mrb[0].mxu0
        %v5047 = vadd.f32 %v4494, %v5046
        %v5048 = vpop.f32.mrb[0].mxu0
        %5049 = vmatprep.mubr.bf16.mxu0 %v4704
        %5050 = vmatmul.mubr.bf16.gmra.mrb[0].mxu0 %v4696
        %v5051 = vpop.f32.mrb[0].mxu0
        %v5052 = vadd.f32 %v4499, %v5051
        %v5053 = vpop.f32.mrb[0].mxu0
        %v5054 = vpop.f32.mrb[0].mxu0
        %v5055 = vadd.f32 %v4502, %v5054
        %v5056 = vpop.f32.mrb[0].mxu0
        %5057 = vmatprep.mubr.bf16.mxu0 %v4720
        %5058 = vmatmul.mubr.bf16.gmra.mrb[0].mxu0 %v4712
        %v5059 = vpop.f32.mrb[0].mxu0
        %v5060 = vadd.f32 %v4507, %v5059
        %v5061 = vpop.f32.mrb[0].mxu0
        %v5062 = vpop.f32.mrb[0].mxu0
        %v5063 = vadd.f32 %v4510, %v5062
        %v5064 = vpop.f32.mrb[0].mxu0
        %5065 = vmatprep.mubr.bf16.mxu0 %v4736
        %5066 = vmatmul.mubr.bf16.gmra.mrb[0].mxu0 %v4728
        %v5067 = vpop.f32.mrb[0].mxu0
        %v5068 = vadd.f32 %v4515, %v5067
        %v5069 = vpop.f32.mrb[0].mxu0
        %v5070 = vpop.f32.mrb[0].mxu0
        %v5071 = vadd.f32 %v4518, %v5070
        %v5072 = vpop.f32.mrb[0].mxu0
        %5073 = vmatprep.mubr.bf16.mxu0 %v4752
        %5074 = vmatmul.mubr.bf16.gmra.mrb[0].mxu0 %v4744
        %v5075 = vpop.f32.mrb[0].mxu0
        %v5076 = vadd.f32 %v4523, %v5075
        %v5077 = vpop.f32.mrb[0].mxu0
        %v5078 = vpop.f32.mrb[0].mxu0
        %v5079 = vadd.f32 %v4526, %v5078
        %v5080 = vpop.f32.mrb[0].mxu0
        %5081 = vmatprep.mubr.bf16.mxu0 %v4768
        %5082 = vmatmul.mubr.bf16.gmra.mrb[0].mxu0 %v4760
        %v5083 = vpop.f32.mrb[0].mxu0
        %v5084 = vadd.f32 %v4531, %v5083
        %v5085 = vpop.f32.mrb[0].mxu0
        %v5086 = vpop.f32.mrb[0].mxu0
        %v5087 = vadd.f32 %v4534, %v5086
        %v5088 = vpop.f32.mrb[0].mxu0
        %5089 = vmatprep.mubr.bf16.mxu0 %v4784
        %5090 = vmatmul.mubr.bf16.gmra.mrb[0].mxu0 %v4776
        %v5091 = vpop.f32.mrb[0].mxu0
        %v5092 = vadd.f32 %v4539, %v5091
        %v5093 = vpop.f32.mrb[0].mxu0
        %v5094 = vpop.f32.mrb[0].mxu0
        %v5095 = vadd.f32 %v4542, %v5094
        %v5096 = vpop.f32.mrb[0].mxu0
        %5097 = vmatprep.mubr.bf16.mxu0 %v4800
        %5098 = vmatmul.mubr.bf16.gmra.mrb[0].mxu0 %v4792
        %v5099 = vpop.f32.mrb[0].mxu0
        %v5100 = vadd.f32 %v4547, %v5099
        %v5101 = vpop.f32.mrb[0].mxu0
        %v5102 = vpop.f32.mrb[0].mxu0
        %v5103 = vadd.f32 %v4550, %v5102
        %v5104 = vpop.f32.mrb[0].mxu0
        %5105 = vmatprep.mubr.bf16.mxu0 %v4816
        %5106 = vmatmul.mubr.bf16.gmra.mrb[0].mxu0 %v4808
        %v5107 = vpop.f32.mrb[0].mxu0
        %v5108 = vadd.f32 %v4555, %v5107
        %v5109 = vpop.f32.mrb[0].mxu0
        %v5110 = vpop.f32.mrb[0].mxu0
        %v5111 = vadd.f32 %v4558, %v5110
        %v5112 = vpop.f32.mrb[0].mxu0
        %5113 = vmatprep.mubr.bf16.mxu0 %v4832
        %5114 = vmatmul.mubr.bf16.gmra.mrb[0].mxu0 %v4824
        %v5115 = vpop.f32.mrb[0].mxu0
        %v5116 = vadd.f32 %v4563, %v5115
        %v5117 = vpop.f32.mrb[0].mxu0
        %v5118 = vpop.f32.mrb[0].mxu0
        %v5119 = vadd.f32 %v4566, %v5118
        %v5120 = vpop.f32.mrb[0].mxu0
        %5121 = vdwg.mxu0
        %v5122 = vld [vmem:[#allocation2 + $0x10] sm:$0xff]
        %v5123 = vld [vmem:[#allocation2 + $0x18] sm:$0xff]
        %v5124 = vld [vmem:[#allocation2 + $0x20] sm:$0xff]
        %v5125 = vld [vmem:[#allocation2 + $0x28] sm:$0xff]
        %v5126 = vld [vmem:[#allocation2 + $0x30] sm:$0xff]
        %v5127 = vld [vmem:[#allocation2 + $0x38] sm:$0xff]
        %v5128 = vld [vmem:[#allocation2 + $0x40] sm:$0xff]
        %v5129 = vld [vmem:[#allocation2 + $0x48] sm:$0xff]
        %v5130 = vld [vmem:[#allocation2 + $0x50] sm:$0xff]
        %v5131 = vld [vmem:[#allocation2 + $0x58] sm:$0xff]
        %v5132 = vld [vmem:[#allocation2 + $0x60] sm:$0xff]
        %v5133 = vld [vmem:[#allocation2 + $0x68] sm:$0xff]
        %v5134 = vld [vmem:[#allocation2 + $0x70] sm:$0xff]
        %v5135 = vld [vmem:[#allocation2 + $0x78] sm:$0xff]
        %v5136 = vld [vmem:[#allocation2 + $0x80] sm:$0xff]
        %v5137 = vld [vmem:[#allocation2 + $0x88] sm:$0xff]
        %v5138 = vld [vmem:[#allocation2 + $0x90] sm:$0x1]
        %v5139 = vsel %vm679, %v5122, 0
        %v5140 = vsel %vm680, %v5123, 0
        %v5141 = vsel %vm680, %v5124, 0
        %v5142 = vsel %vm680, %v5125, 0
        %v5143 = vsel %vm680, %v5126, 0
        %v5144 = vsel %vm680, %v5127, 0
        %v5145 = vsel %vm680, %v5128, 0
        %v5146 = vsel %vm680, %v5129, 0
        %v5147 = vsel %vm680, %v5130, 0
        %v5148 = vsel %vm680, %v5131, 0
        %v5149 = vsel %vm680, %v5132, 0
        %v5150 = vsel %vm680, %v5133, 0
        %v5151 = vsel %vm680, %v5134, 0
        %v5152 = vsel %vm680, %v5135, 0
        %v5153 = vsel %vm680, %v5136, 0
        %v5154 = vsel %vm680, %v5137, 0
        %v5155 = vsel %vm681, %v5138, 0
        %v5157 = vshrl.u32 %v5139, 16
        %v5159 = vshll.u32 %v5139, 16
        %v5161 = vrot.slane %v5159, 1
        %v5162 = vor.u32 %v5157, %v5161
        %v5164 = vshll.u32 %v5140, 16
        %v5166 = vrot.slane %v5164, 1
        %v5167 = vsel %vm474, %v5162, %v5166
        %v5168 = vshrl.u32 %v5140, 16
        %v5170 = vor.u32 %v5168, %v5166
        %v5172 = vshll.u32 %v5141, 16
        %v5174 = vrot.slane %v5172, 1
        %v5175 = vsel %vm474, %v5170, %v5174
        %v5176 = vshrl.u32 %v5141, 16
        %v5178 = vor.u32 %v5176, %v5174
        %v5180 = vshll.u32 %v5142, 16
        %v5182 = vrot.slane %v5180, 1
        %v5183 = vsel %vm474, %v5178, %v5182
        %v5184 = vshrl.u32 %v5142, 16
        %v5186 = vor.u32 %v5184, %v5182
        %v5188 = vshll.u32 %v5143, 16
        %v5190 = vrot.slane %v5188, 1
        %v5191 = vsel %vm474, %v5186, %v5190
        %v5192 = vshrl.u32 %v5143, 16
        %v5194 = vor.u32 %v5192, %v5190
        %v5196 = vshll.u32 %v5144, 16
        %v5198 = vrot.slane %v5196, 1
        %v5199 = vsel %vm474, %v5194, %v5198
        %v5200 = vshrl.u32 %v5144, 16
        %v5202 = vor.u32 %v5200, %v5198
        %v5204 = vshll.u32 %v5145, 16
        %v5206 = vrot.slane %v5204, 1
        %v5207 = vsel %vm474, %v5202, %v5206
        %v5208 = vshrl.u32 %v5145, 16
        %v5210 = vor.u32 %v5208, %v5206
        %v5212 = vshll.u32 %v5146, 16
        %v5214 = vrot.slane %v5212, 1
        %v5215 = vsel %vm474, %v5210, %v5214
        %v5216 = vshrl.u32 %v5146, 16
        %v5218 = vor.u32 %v5216, %v5214
        %v5220 = vshll.u32 %v5147, 16
        %v5222 = vrot.slane %v5220, 1
        %v5223 = vsel %vm474, %v5218, %v5222
        %v5224 = vshrl.u32 %v5147, 16
        %v5226 = vor.u32 %v5224, %v5222
        %v5228 = vshll.u32 %v5148, 16
        %v5230 = vrot.slane %v5228, 1
        %v5231 = vsel %vm474, %v5226, %v5230
        %v5232 = vshrl.u32 %v5148, 16
        %v5234 = vor.u32 %v5232, %v5230
        %v5236 = vshll.u32 %v5149, 16
        %v5238 = vrot.slane %v5236, 1
        %v5239 = vsel %vm474, %v5234, %v5238
        %v5240 = vshrl.u32 %v5149, 16
        %v5242 = vor.u32 %v5240, %v5238
        %v5244 = vshll.u32 %v5150, 16
        %v5246 = vrot.slane %v5244, 1
        %v5247 = vsel %vm474, %v5242, %v5246
        %v5248 = vshrl.u32 %v5150, 16
        %v5250 = vor.u32 %v5248, %v5246
        %v5252 = vshll.u32 %v5151, 16
        %v5254 = vrot.slane %v5252, 1
        %v5255 = vsel %vm474, %v5250, %v5254
        %v5256 = vshrl.u32 %v5151, 16
        %v5258 = vor.u32 %v5256, %v5254
        %v5260 = vshll.u32 %v5152, 16
        %v5262 = vrot.slane %v5260, 1
        %v5263 = vsel %vm474, %v5258, %v5262
        %v5264 = vshrl.u32 %v5152, 16
        %v5266 = vor.u32 %v5264, %v5262
        %v5268 = vshll.u32 %v5153, 16
        %v5270 = vrot.slane %v5268, 1
        %v5271 = vsel %vm474, %v5266, %v5270
        %v5272 = vshrl.u32 %v5153, 16
        %v5274 = vor.u32 %v5272, %v5270
        %v5276 = vshll.u32 %v5154, 16
        %v5278 = vrot.slane %v5276, 1
        %v5279 = vsel %vm474, %v5274, %v5278
        %v5280 = vshrl.u32 %v5154, 16
        %v5282 = vor.u32 %v5280, %v5278
        %v5284 = vshll.u32 %v5155, 16
        %v5286 = vrot.slane %v5284, 1
        %v5287 = vsel %vm474, %v5282, %v5286
        %v5304 = vld [vmem:[%s3878 + $0x100] sm:$0xf]
        %v5305 = vld [vmem:[%s3878 + $0x104] sm:$0xf]
        %v5306 = vld [vmem:[%s3878 + $0x108] sm:$0xf]
        %v5307 = vld [vmem:[%s3878 + $0x10c] sm:$0xf]
        %v5308 = vld [vmem:[%s3878 + $0x110] sm:$0xf]
        %v5309 = vld [vmem:[%s3878 + $0x114] sm:$0xf]
        %v5310 = vld [vmem:[%s3878 + $0x118] sm:$0xf]
        %v5311 = vld [vmem:[%s3878 + $0x11c] sm:$0xf]
        %v5312 = vld [vmem:[%s3878 + $0x120] sm:$0xf]
        %v5313 = vld [vmem:[%s3878 + $0x124] sm:$0xf]
        %v5314 = vld [vmem:[%s3878 + $0x128] sm:$0xf]
        %v5315 = vld [vmem:[%s3878 + $0x12c] sm:$0xf]
        %v5316 = vld [vmem:[%s3878 + $0x130] sm:$0xf]
        %v5317 = vld [vmem:[%s3878 + $0x134] sm:$0xf]
        %v5318 = vld [vmem:[%s3878 + $0x138] sm:$0xf]
        %v5319 = vld [vmem:[%s3878 + $0x13c] sm:$0xf]
        %v5320 = vld [vmem:[%s3878 + $0x140] sm:$0xf]
        %v5321 = vld [vmem:[%s3878 + $0x144] sm:$0xf]
        %v5322 = vld [vmem:[%s3878 + $0x148] sm:$0xf]
        %v5323 = vld [vmem:[%s3878 + $0x14c] sm:$0xf]
        %v5324 = vld [vmem:[%s3878 + $0x150] sm:$0xf]
        %v5325 = vld [vmem:[%s3878 + $0x154] sm:$0xf]
        %v5326 = vld [vmem:[%s3878 + $0x158] sm:$0xf]
        %v5327 = vld [vmem:[%s3878 + $0x15c] sm:$0xf]
        %v5328 = vld [vmem:[%s3878 + $0x160] sm:$0xf]
        %v5329 = vld [vmem:[%s3878 + $0x164] sm:$0xf]
        %v5330 = vld [vmem:[%s3878 + $0x168] sm:$0xf]
        %v5331 = vld [vmem:[%s3878 + $0x16c] sm:$0xf]
        %v5332 = vld [vmem:[%s3878 + $0x170] sm:$0xf]
        %v5333 = vld [vmem:[%s3878 + $0x174] sm:$0xf]
        %v5334 = vld [vmem:[%s3878 + $0x178] sm:$0xf]
        %v5335 = vld [vmem:[%s3878 + $0x17c] sm:$0xf]
        %v5368 = vunpack.c.l.b16 %v5304
        %v5369 = vunpack.c.l.b16 %v5305
        %v5370 = vunpack.c.l.b16 %v5306
        %v5371 = vunpack.c.l.b16 %v5307
        %v5372 = vunpack.c.l.b16 %v5308
        %v5373 = vunpack.c.l.b16 %v5309
        %v5374 = vunpack.c.l.b16 %v5310
        %v5375 = vunpack.c.l.b16 %v5311
        %v5376 = vunpack.c.l.b16 %v5312
        %v5377 = vunpack.c.l.b16 %v5313
        %v5378 = vunpack.c.l.b16 %v5314
        %v5379 = vunpack.c.l.b16 %v5315
        %v5380 = vunpack.c.l.b16 %v5316
        %v5381 = vunpack.c.l.b16 %v5317
        %v5382 = vunpack.c.l.b16 %v5318
        %v5383 = vunpack.c.l.b16 %v5319
        %v5384 = vunpack.c.l.b16 %v5320
        %v5385 = vunpack.c.l.b16 %v5321
        %v5386 = vunpack.c.l.b16 %v5322
        %v5387 = vunpack.c.l.b16 %v5323
        %v5388 = vunpack.c.l.b16 %v5324
        %v5389 = vunpack.c.l.b16 %v5325
        %v5390 = vunpack.c.l.b16 %v5326
        %v5391 = vunpack.c.l.b16 %v5327
        %v5392 = vunpack.c.l.b16 %v5328
        %v5393 = vunpack.c.l.b16 %v5329
        %v5394 = vunpack.c.l.b16 %v5330
        %v5395 = vunpack.c.l.b16 %v5331
        %v5396 = vunpack.c.l.b16 %v5332
        %v5397 = vunpack.c.l.b16 %v5333
        %v5398 = vunpack.c.l.b16 %v5334
        %v5399 = vunpack.c.l.b16 %v5335
        %v5400 = vpack.c.b16 %v5369, %v5368
        %v5401 = vpack.c.b16 %v5371, %v5370
        %v5402 = vpack.c.b16 %v5373, %v5372
        %v5403 = vpack.c.b16 %v5375, %v5374
        %v5404 = vpack.c.b16 %v5377, %v5376
        %v5405 = vpack.c.b16 %v5379, %v5378
        %v5406 = vpack.c.b16 %v5381, %v5380
        %v5407 = vpack.c.b16 %v5383, %v5382
        %v5408 = vpack.c.b16 %v5385, %v5384
        %v5409 = vpack.c.b16 %v5387, %v5386
        %v5410 = vpack.c.b16 %v5389, %v5388
        %v5411 = vpack.c.b16 %v5391, %v5390
        %v5412 = vpack.c.b16 %v5393, %v5392
        %v5413 = vpack.c.b16 %v5395, %v5394
        %v5414 = vpack.c.b16 %v5397, %v5396
        %v5415 = vpack.c.b16 %v5399, %v5398
        %5432 = vmatprep.subr.bf16.mxu0 0
        %5433 = vmatpush1.bf16.msra.mxu0 %v5400
        %5434 = vmatprep.subr.bf16.mxu0 0
        %5435 = vmatpush1.bf16.msra.mxu0 %v5401
        %5436 = vmatprep.subr.bf16.mxu0 0
        %5437 = vmatpush1.bf16.msra.mxu0 %v5402
        %5438 = vmatprep.subr.bf16.mxu0 0
        %5439 = vmatpush1.bf16.msra.mxu0 %v5403
        %5440 = vmatprep.subr.bf16.mxu0 0
        %5441 = vmatpush1.bf16.msra.mxu0 %v5404
        %5442 = vmatprep.subr.bf16.mxu0 0
        %5443 = vmatpush1.bf16.msra.mxu0 %v5405
        %5444 = vmatprep.subr.bf16.mxu0 0
        %5445 = vmatpush1.bf16.msra.mxu0 %v5406
        %5446 = vmatprep.subr.bf16.mxu0 0
        %5447 = vmatpush1.bf16.msra.mxu0 %v5407
        %5448 = vmatprep.subr.bf16.mxu0 0
        %5449 = vmatpush1.bf16.msra.mxu0 %v5408
        %5450 = vmatprep.subr.bf16.mxu0 0
        %5451 = vmatpush1.bf16.msra.mxu0 %v5409
        %5452 = vmatprep.subr.bf16.mxu0 0
        %5453 = vmatpush1.bf16.msra.mxu0 %v5410
        %5454 = vmatprep.subr.bf16.mxu0 0
        %5455 = vmatpush1.bf16.msra.mxu0 %v5411
        %5456 = vmatprep.subr.bf16.mxu0 0
        %5457 = vmatpush1.bf16.msra.mxu0 %v5412
        %5458 = vmatprep.subr.bf16.mxu0 0
        %5459 = vmatpush1.bf16.msra.mxu0 %v5413
        %5460 = vmatprep.subr.bf16.mxu0 0
        %5461 = vmatpush1.bf16.msra.mxu0 %v5414
        %5462 = vmatprep.subr.bf16.mxu0 0
        %5463 = vmatpush1.bf16.msra.mxu0 %v5415
        %5464 = vmatprep.mubr.bf16.mxu0 %v5167
        %5465 = vmatmul.mubr.bf16.gmra.mrb[0].mxu0 %v3719
        %v5466 = vpop.f32.mrb[0].mxu0
        %v5467 = vadd.f32 0.0, %v5466
        %v5468 = vpop.f32.mrb[0].mxu0
        %v5469 = vpop.f32.mrb[0].mxu0
        %v5470 = vadd.f32 0.0, %v5469
        %v5471 = vpop.f32.mrb[0].mxu0
        %5472 = vmatprep.mubr.bf16.mxu0 %v5175
        %5473 = vmatmul.mubr.bf16.gmra.mrb[0].mxu0 %v3720
        %v5474 = vpop.f32.mrb[0].mxu0
        %v5475 = vadd.f32 0.0, %v5474
        %v5476 = vpop.f32.mrb[0].mxu0
        %v5477 = vpop.f32.mrb[0].mxu0
        %v5478 = vadd.f32 0.0, %v5477
        %v5479 = vpop.f32.mrb[0].mxu0
        %5480 = vmatprep.mubr.bf16.mxu0 %v5183
        %5481 = vmatmul.mubr.bf16.gmra.mrb[0].mxu0 %v3721
        %v5482 = vpop.f32.mrb[0].mxu0
        %v5483 = vadd.f32 0.0, %v5482
        %v5484 = vpop.f32.mrb[0].mxu0
        %v5485 = vpop.f32.mrb[0].mxu0
        %v5486 = vadd.f32 0.0, %v5485
        %v5487 = vpop.f32.mrb[0].mxu0
        %5488 = vmatprep.mubr.bf16.mxu0 %v5191
        %5489 = vmatmul.mubr.bf16.gmra.mrb[0].mxu0 %v3722
        %v5490 = vpop.f32.mrb[0].mxu0
        %v5491 = vadd.f32 0.0, %v5490
        %v5492 = vpop.f32.mrb[0].mxu0
        %v5493 = vpop.f32.mrb[0].mxu0
        %v5494 = vadd.f32 0.0, %v5493
        %v5495 = vpop.f32.mrb[0].mxu0
        %5496 = vmatprep.mubr.bf16.mxu0 %v5199
        %5497 = vmatmul.mubr.bf16.gmra.mrb[0].mxu0 %v3723
        %v5498 = vpop.f32.mrb[0].mxu0
        %v5499 = vadd.f32 0.0, %v5498
        %v5500 = vpop.f32.mrb[0].mxu0
        %v5501 = vpop.f32.mrb[0].mxu0
        %v5502 = vadd.f32 0.0, %v5501
        %v5503 = vpop.f32.mrb[0].mxu0
        %5504 = vmatprep.mubr.bf16.mxu0 %v5207
        %5505 = vmatmul.mubr.bf16.gmra.mrb[0].mxu0 %v3724
        %v5506 = vpop.f32.mrb[0].mxu0
        %v5507 = vadd.f32 0.0, %v5506
        %v5508 = vpop.f32.mrb[0].mxu0
        %v5509 = vpop.f32.mrb[0].mxu0
        %v5510 = vadd.f32 0.0, %v5509
        %v5511 = vpop.f32.mrb[0].mxu0
        %5512 = vmatprep.mubr.bf16.mxu0 %v5215
        %5513 = vmatmul.mubr.bf16.gmra.mrb[0].mxu0 %v3725
        %v5514 = vpop.f32.mrb[0].mxu0
        %v5515 = vadd.f32 0.0, %v5514
        %v5516 = vpop.f32.mrb[0].mxu0
        %v5517 = vpop.f32.mrb[0].mxu0
        %v5518 = vadd.f32 0.0, %v5517
        %v5519 = vpop.f32.mrb[0].mxu0
        %5520 = vmatprep.mubr.bf16.mxu0 %v5223
        %5521 = vmatmul.mubr.bf16.gmra.mrb[0].mxu0 %v3726
        %v5522 = vpop.f32.mrb[0].mxu0
        %v5523 = vadd.f32 0.0, %v5522
        %v5524 = vpop.f32.mrb[0].mxu0
        %v5525 = vpop.f32.mrb[0].mxu0
        %v5526 = vadd.f32 0.0, %v5525
        %v5527 = vpop.f32.mrb[0].mxu0
        %5528 = vmatprep.mubr.bf16.mxu0 %v5231
        %5529 = vmatmul.mubr.bf16.gmra.mrb[0].mxu0 %v3727
        %v5530 = vpop.f32.mrb[0].mxu0
        %v5531 = vadd.f32 0.0, %v5530
        %v5532 = vpop.f32.mrb[0].mxu0
        %v5533 = vpop.f32.mrb[0].mxu0
        %v5534 = vadd.f32 0.0, %v5533
        %v5535 = vpop.f32.mrb[0].mxu0
        %5536 = vmatprep.mubr.bf16.mxu0 %v5239
        %5537 = vmatmul.mubr.bf16.gmra.mrb[0].mxu0 %v3728
        %v5538 = vpop.f32.mrb[0].mxu0
        %v5539 = vadd.f32 0.0, %v5538
        %v5540 = vpop.f32.mrb[0].mxu0
        %v5541 = vpop.f32.mrb[0].mxu0
        %v5542 = vadd.f32 0.0, %v5541
        %v5543 = vpop.f32.mrb[0].mxu0
        %5544 = vmatprep.mubr.bf16.mxu0 %v5247
        %5545 = vmatmul.mubr.bf16.gmra.mrb[0].mxu0 %v3729
        %v5546 = vpop.f32.mrb[0].mxu0
        %v5547 = vadd.f32 0.0, %v5546
        %v5548 = vpop.f32.mrb[0].mxu0
        %v5549 = vpop.f32.mrb[0].mxu0
        %v5550 = vadd.f32 0.0, %v5549
        %v5551 = vpop.f32.mrb[0].mxu0
        %5552 = vmatprep.mubr.bf16.mxu0 %v5255
        %5553 = vmatmul.mubr.bf16.gmra.mrb[0].mxu0 %v3730
        %v5554 = vpop.f32.mrb[0].mxu0
        %v5555 = vadd.f32 0.0, %v5554
        %v5556 = vpop.f32.mrb[0].mxu0
        %v5557 = vpop.f32.mrb[0].mxu0
        %v5558 = vadd.f32 0.0, %v5557
        %v5559 = vpop.f32.mrb[0].mxu0
        %5560 = vmatprep.mubr.bf16.mxu0 %v5263
        %5561 = vmatmul.mubr.bf16.gmra.mrb[0].mxu0 %v3731
        %v5562 = vpop.f32.mrb[0].mxu0
        %v5563 = vadd.f32 0.0, %v5562
        %v5564 = vpop.f32.mrb[0].mxu0
        %v5565 = vpop.f32.mrb[0].mxu0
        %v5566 = vadd.f32 0.0, %v5565
        %v5567 = vpop.f32.mrb[0].mxu0
        %5568 = vmatprep.mubr.bf16.mxu0 %v5271
        %5569 = vmatmul.mubr.bf16.gmra.mrb[0].mxu0 %v3732
        %v5570 = vpop.f32.mrb[0].mxu0
        %v5571 = vadd.f32 0.0, %v5570
        %v5572 = vpop.f32.mrb[0].mxu0
        %v5573 = vpop.f32.mrb[0].mxu0
        %v5574 = vadd.f32 0.0, %v5573
        %v5575 = vpop.f32.mrb[0].mxu0
        %5576 = vmatprep.mubr.bf16.mxu0 %v5279
        %5577 = vmatmul.mubr.bf16.gmra.mrb[0].mxu0 %v3733
        %v5578 = vpop.f32.mrb[0].mxu0
        %v5579 = vadd.f32 0.0, %v5578
        %v5580 = vpop.f32.mrb[0].mxu0
        %v5581 = vpop.f32.mrb[0].mxu0
        %v5582 = vadd.f32 0.0, %v5581
        %v5583 = vpop.f32.mrb[0].mxu0
        %5584 = vmatprep.mubr.bf16.mxu0 %v5287
        %5585 = vmatmul.mubr.bf16.gmra.mrb[0].mxu0 %v3930
        %v5586 = vpop.f32.mrb[0].mxu0
        %v5587 = vadd.f32 0.0, %v5586
        %v5588 = vpop.f32.mrb[0].mxu0
        %v5589 = vpop.f32.mrb[0].mxu0
        %v5590 = vadd.f32 0.0, %v5589
        %v5591 = vpop.f32.mrb[0].mxu0
        %5592 = vdwg.mxu0
        %v5593 = vadd.f32 %v4996, %v5467
        %v5594 = vadd.f32 %v4999, %v5470
        %v5595 = vadd.f32 %v5004, %v5475
        %v5596 = vadd.f32 %v5007, %v5478
        %v5597 = vadd.f32 %v5012, %v5483
        %v5598 = vadd.f32 %v5015, %v5486
        %v5599 = vadd.f32 %v5020, %v5491
        %v5600 = vadd.f32 %v5023, %v5494
        %v5601 = vadd.f32 %v5028, %v5499
        %v5602 = vadd.f32 %v5031, %v5502
        %v5603 = vadd.f32 %v5036, %v5507
        %v5604 = vadd.f32 %v5039, %v5510
        %v5605 = vadd.f32 %v5044, %v5515
        %v5606 = vadd.f32 %v5047, %v5518
        %v5607 = vadd.f32 %v5052, %v5523
        %v5608 = vadd.f32 %v5055, %v5526
        %v5609 = vadd.f32 %v5060, %v5531
        %v5610 = vadd.f32 %v5063, %v5534
        %v5611 = vadd.f32 %v5068, %v5539
        %v5612 = vadd.f32 %v5071, %v5542
        %v5613 = vadd.f32 %v5076, %v5547
        %v5614 = vadd.f32 %v5079, %v5550
        %v5615 = vadd.f32 %v5084, %v5555
        %v5616 = vadd.f32 %v5087, %v5558
        %v5617 = vadd.f32 %v5092, %v5563
        %v5618 = vadd.f32 %v5095, %v5566
        %v5619 = vadd.f32 %v5100, %v5571
        %v5620 = vadd.f32 %v5103, %v5574
        %v5621 = vadd.f32 %v5108, %v5579
        %v5622 = vadd.f32 %v5111, %v5582
        %v5623 = vadd.f32 %v5116, %v5587
        %v5624 = vadd.f32 %v5119, %v5590
        %v5625 = vld [vmem:[#allocation2 + $0x10] sm:$0x80]
        %v5626 = vld [vmem:[#allocation2 + $0x90] sm:$0xff]
        %v5627 = vsel %vm483, %v5625, 0
        %v5628 = vsel %vm484, %v5123, 0
        %v5629 = vsel %vm484, %v5124, 0
        %v5630 = vsel %vm484, %v5125, 0
        %v5631 = vsel %vm484, %v5126, 0
        %v5632 = vsel %vm484, %v5127, 0
        %v5633 = vsel %vm484, %v5128, 0
        %v5634 = vsel %vm484, %v5129, 0
        %v5635 = vsel %vm484, %v5130, 0
        %v5636 = vsel %vm484, %v5131, 0
        %v5637 = vsel %vm484, %v5132, 0
        %v5638 = vsel %vm484, %v5133, 0
        %v5639 = vsel %vm484, %v5134, 0
        %v5640 = vsel %vm484, %v5135, 0
        %v5641 = vsel %vm484, %v5136, 0
        %v5642 = vsel %vm484, %v5137, 0
        %v5643 = vsel %vm485, %v5626, 0
        %v5645 = vshll.u32 %v5123, 16
        %v5647 = vrot.slane %v5645, 1
        %v5648 = vshrl.u32 %v5123, 16
        %v5650 = vor.u32 %v5648, %v5647
        %v5652 = vshll.u32 %v5124, 16
        %v5654 = vrot.slane %v5652, 1
        %v5655 = vsel %vm474, %v5650, %v5654
        %v5656 = vshrl.u32 %v5124, 16
        %v5658 = vor.u32 %v5656, %v5654
        %v5660 = vshll.u32 %v5125, 16
        %v5662 = vrot.slane %v5660, 1
        %v5663 = vsel %vm474, %v5658, %v5662
        %v5664 = vshrl.u32 %v5125, 16
        %v5666 = vor.u32 %v5664, %v5662
        %v5668 = vshll.u32 %v5126, 16
        %v5670 = vrot.slane %v5668, 1
        %v5671 = vsel %vm474, %v5666, %v5670
        %v5672 = vshrl.u32 %v5126, 16
        %v5674 = vor.u32 %v5672, %v5670
        %v5676 = vshll.u32 %v5127, 16
        %v5678 = vrot.slane %v5676, 1
        %v5679 = vsel %vm474, %v5674, %v5678
        %v5680 = vshrl.u32 %v5127, 16
        %v5682 = vor.u32 %v5680, %v5678
        %v5684 = vshll.u32 %v5128, 16
        %v5686 = vrot.slane %v5684, 1
        %v5687 = vsel %vm474, %v5682, %v5686
        %v5688 = vshrl.u32 %v5128, 16
        %v5690 = vor.u32 %v5688, %v5686
        %v5692 = vshll.u32 %v5129, 16
        %v5694 = vrot.slane %v5692, 1
        %v5695 = vsel %vm474, %v5690, %v5694
        %v5696 = vshrl.u32 %v5129, 16
        %v5698 = vor.u32 %v5696, %v5694
        %v5700 = vshll.u32 %v5130, 16
        %v5702 = vrot.slane %v5700, 1
        %v5703 = vsel %vm474, %v5698, %v5702
        %v5704 = vshrl.u32 %v5130, 16
        %v5706 = vor.u32 %v5704, %v5702
        %v5708 = vshll.u32 %v5131, 16
        %v5710 = vrot.slane %v5708, 1
        %v5711 = vsel %vm474, %v5706, %v5710
        %v5712 = vshrl.u32 %v5131, 16
        %v5714 = vor.u32 %v5712, %v5710
        %v5716 = vshll.u32 %v5132, 16
        %v5718 = vrot.slane %v5716, 1
        %v5719 = vsel %vm474, %v5714, %v5718
        %v5720 = vshrl.u32 %v5132, 16
        %v5722 = vor.u32 %v5720, %v5718
        %v5724 = vshll.u32 %v5133, 16
        %v5726 = vrot.slane %v5724, 1
        %v5727 = vsel %vm474, %v5722, %v5726
        %v5728 = vshrl.u32 %v5133, 16
        %v5730 = vor.u32 %v5728, %v5726
        %v5732 = vshll.u32 %v5134, 16
        %v5734 = vrot.slane %v5732, 1
        %v5735 = vsel %vm474, %v5730, %v5734
        %v5736 = vshrl.u32 %v5134, 16
        %v5738 = vor.u32 %v5736, %v5734
        %v5740 = vshll.u32 %v5135, 16
        %v5742 = vrot.slane %v5740, 1
        %v5743 = vsel %vm474, %v5738, %v5742
        %v5744 = vshrl.u32 %v5135, 16
        %v5746 = vor.u32 %v5744, %v5742
        %v5748 = vshll.u32 %v5136, 16
        %v5750 = vrot.slane %v5748, 1
        %v5751 = vsel %vm474, %v5746, %v5750
        %v5752 = vshrl.u32 %v5136, 16
        %v5754 = vor.u32 %v5752, %v5750
        %v5756 = vshll.u32 %v5137, 16
        %v5758 = vrot.slane %v5756, 1
        %v5759 = vsel %vm474, %v5754, %v5758
        %v5760 = vshrl.u32 %v5137, 16
        %v5762 = vor.u32 %v5760, %v5758
        %v5764 = vshll.u32 %v5626, 16
        %v5766 = vrot.slane %v5764, 1
        %v5767 = vsel %vm474, %v5762, %v5766
        %v5768 = vshrl.u32 %v5626, 16
        %v5770 = vor.u32 %v5768, %v5766
        %v5771 = vld [vmem:[%s3878 + $0x180] sm:$0xf]
        %v5772 = vld [vmem:[%s3878 + $0x184] sm:$0xf]
        %v5773 = vld [vmem:[%s3878 + $0x188] sm:$0xf]
        %v5774 = vld [vmem:[%s3878 + $0x18c] sm:$0xf]
        %v5775 = vld [vmem:[%s3878 + $0x190] sm:$0xf]
        %v5776 = vld [vmem:[%s3878 + $0x194] sm:$0xf]
        %v5777 = vld [vmem:[%s3878 + $0x198] sm:$0xf]
        %v5778 = vld [vmem:[%s3878 + $0x19c] sm:$0xf]
        %v5779 = vld [vmem:[%s3878 + $0x1a0] sm:$0xf]
        %v5780 = vld [vmem:[%s3878 + $0x1a4] sm:$0xf]
        %v5781 = vld [vmem:[%s3878 + $0x1a8] sm:$0xf]
        %v5782 = vld [vmem:[%s3878 + $0x1ac] sm:$0xf]
        %v5783 = vld [vmem:[%s3878 + $0x1b0] sm:$0xf]
        %v5784 = vld [vmem:[%s3878 + $0x1b4] sm:$0xf]
        %v5785 = vld [vmem:[%s3878 + $0x1b8] sm:$0xf]
        %v5786 = vld [vmem:[%s3878 + $0x1bc] sm:$0xf]
        %v5787 = vld [vmem:[%s3878 + $0x1c0] sm:$0xf]
        %v5788 = vld [vmem:[%s3878 + $0x1c4] sm:$0xf]
        %v5789 = vld [vmem:[%s3878 + $0x1c8] sm:$0xf]
        %v5790 = vld [vmem:[%s3878 + $0x1cc] sm:$0xf]
        %v5791 = vld [vmem:[%s3878 + $0x1d0] sm:$0xf]
        %v5792 = vld [vmem:[%s3878 + $0x1d4] sm:$0xf]
        %v5793 = vld [vmem:[%s3878 + $0x1d8] sm:$0xf]
        %v5794 = vld [vmem:[%s3878 + $0x1dc] sm:$0xf]
        %v5795 = vld [vmem:[%s3878 + $0x1e0] sm:$0xf]
        %v5796 = vld [vmem:[%s3878 + $0x1e4] sm:$0xf]
        %v5797 = vld [vmem:[%s3878 + $0x1e8] sm:$0xf]
        %v5798 = vld [vmem:[%s3878 + $0x1ec] sm:$0xf]
        %v5799 = vld [vmem:[%s3878 + $0x1f0] sm:$0xf]
        %v5800 = vld [vmem:[%s3878 + $0x1f4] sm:$0xf]
        %v5801 = vld [vmem:[%s3878 + $0x1f8] sm:$0xf]
        %v5802 = vld [vmem:[%s3878 + $0x1fc] sm:$0xf]
        %v5804 = vshrl.u32 %v5627, 16
        %v5806 = vrot.slane %v5804, 7
        %v5808 = vshrl.u32 %v5628, 16
        %v5810 = vrot.slane %v5808, 7
        %v5811 = vshll.u32 %v5628, 16
        %v5813 = vor.u32 %v5810, %v5811
        %v5814 = vsel %vm670, %v5806, %v5813
        %v5816 = vshrl.u32 %v5647, 16
        %v5818 = vrot.slane %v5816, 7
        %v5820 = vshrl.u32 %v5655, 16
        %v5822 = vrot.slane %v5820, 7
        %v5823 = vshll.u32 %v5655, 16
        %v5825 = vor.u32 %v5822, %v5823
        %v5826 = vsel %vm670, %v5818, %v5825
        %v5828 = vshrl.u32 %v5629, 16
        %v5830 = vrot.slane %v5828, 7
        %v5831 = vshll.u32 %v5629, 16
        %v5833 = vor.u32 %v5830, %v5831
        %v5834 = vsel %vm670, %v5810, %v5833
        %v5836 = vshrl.u32 %v5663, 16
        %v5838 = vrot.slane %v5836, 7
        %v5839 = vshll.u32 %v5663, 16
        %v5841 = vor.u32 %v5838, %v5839
        %v5842 = vsel %vm670, %v5822, %v5841
        %v5844 = vshrl.u32 %v5630, 16
        %v5846 = vrot.slane %v5844, 7
        %v5847 = vshll.u32 %v5630, 16
        %v5849 = vor.u32 %v5846, %v5847
        %v5850 = vsel %vm670, %v5830, %v5849
        %v5852 = vshrl.u32 %v5671, 16
        %v5854 = vrot.slane %v5852, 7
        %v5855 = vshll.u32 %v5671, 16
        %v5857 = vor.u32 %v5854, %v5855
        %v5858 = vsel %vm670, %v5838, %v5857
        %v5860 = vshrl.u32 %v5631, 16
        %v5862 = vrot.slane %v5860, 7
        %v5863 = vshll.u32 %v5631, 16
        %v5865 = vor.u32 %v5862, %v5863
        %v5866 = vsel %vm670, %v5846, %v5865
        %v5868 = vshrl.u32 %v5679, 16
        %v5870 = vrot.slane %v5868, 7
        %v5871 = vshll.u32 %v5679, 16
        %v5873 = vor.u32 %v5870, %v5871
        %v5874 = vsel %vm670, %v5854, %v5873
        %v5876 = vshrl.u32 %v5632, 16
        %v5878 = vrot.slane %v5876, 7
        %v5879 = vshll.u32 %v5632, 16
        %v5881 = vor.u32 %v5878, %v5879
        %v5882 = vsel %vm670, %v5862, %v5881
        %v5884 = vshrl.u32 %v5687, 16
        %v5886 = vrot.slane %v5884, 7
        %v5887 = vshll.u32 %v5687, 16
        %v5889 = vor.u32 %v5886, %v5887
        %v5890 = vsel %vm670, %v5870, %v5889
        %v5892 = vshrl.u32 %v5633, 16
        %v5894 = vrot.slane %v5892, 7
        %v5895 = vshll.u32 %v5633, 16
        %v5897 = vor.u32 %v5894, %v5895
        %v5898 = vsel %vm670, %v5878, %v5897
        %v5900 = vshrl.u32 %v5695, 16
        %v5902 = vrot.slane %v5900, 7
        %v5903 = vshll.u32 %v5695, 16
        %v5905 = vor.u32 %v5902, %v5903
        %v5906 = vsel %vm670, %v5886, %v5905
        %v5908 = vshrl.u32 %v5634, 16
        %v5910 = vrot.slane %v5908, 7
        %v5911 = vshll.u32 %v5634, 16
        %v5913 = vor.u32 %v5910, %v5911
        %v5914 = vsel %vm670, %v5894, %v5913
        %v5916 = vshrl.u32 %v5703, 16
        %v5918 = vrot.slane %v5916, 7
        %v5919 = vshll.u32 %v5703, 16
        %v5921 = vor.u32 %v5918, %v5919
        %v5922 = vsel %vm670, %v5902, %v5921
        %v5924 = vshrl.u32 %v5635, 16
        %v5926 = vrot.slane %v5924, 7
        %v5927 = vshll.u32 %v5635, 16
        %v5929 = vor.u32 %v5926, %v5927
        %v5930 = vsel %vm670, %v5910, %v5929
        %v5932 = vshrl.u32 %v5711, 16
        %v5934 = vrot.slane %v5932, 7
        %v5935 = vshll.u32 %v5711, 16
        %v5937 = vor.u32 %v5934, %v5935
        %v5938 = vsel %vm670, %v5918, %v5937
        %v5940 = vshrl.u32 %v5636, 16
        %v5942 = vrot.slane %v5940, 7
        %v5943 = vshll.u32 %v5636, 16
        %v5945 = vor.u32 %v5942, %v5943
        %v5946 = vsel %vm670, %v5926, %v5945
        %v5948 = vshrl.u32 %v5719, 16
        %v5950 = vrot.slane %v5948, 7
        %v5951 = vshll.u32 %v5719, 16
        %v5953 = vor.u32 %v5950, %v5951
        %v5954 = vsel %vm670, %v5934, %v5953
        %v5956 = vshrl.u32 %v5637, 16
        %v5958 = vrot.slane %v5956, 7
        %v5959 = vshll.u32 %v5637, 16
        %v5961 = vor.u32 %v5958, %v5959
        %v5962 = vsel %vm670, %v5942, %v5961
        %v5964 = vshrl.u32 %v5727, 16
        %v5966 = vrot.slane %v5964, 7
        %v5967 = vshll.u32 %v5727, 16
        %v5969 = vor.u32 %v5966, %v5967
        %v5970 = vsel %vm670, %v5950, %v5969
        %v5972 = vshrl.u32 %v5638, 16
        %v5974 = vrot.slane %v5972, 7
        %v5975 = vshll.u32 %v5638, 16
        %v5977 = vor.u32 %v5974, %v5975
        %v5978 = vsel %vm670, %v5958, %v5977
        %v5980 = vshrl.u32 %v5735, 16
        %v5982 = vrot.slane %v5980, 7
        %v5983 = vshll.u32 %v5735, 16
        %v5985 = vor.u32 %v5982, %v5983
        %v5986 = vsel %vm670, %v5966, %v5985
        %v5988 = vshrl.u32 %v5639, 16
        %v5990 = vrot.slane %v5988, 7
        %v5991 = vshll.u32 %v5639, 16
        %v5993 = vor.u32 %v5990, %v5991
        %v5994 = vsel %vm670, %v5974, %v5993
        %v5996 = vshrl.u32 %v5743, 16
        %v5998 = vrot.slane %v5996, 7
        %v5999 = vshll.u32 %v5743, 16
        %v6001 = vor.u32 %v5998, %v5999
        %v6002 = vsel %vm670, %v5982, %v6001
        %v6004 = vshrl.u32 %v5640, 16
        %v6006 = vrot.slane %v6004, 7
        %v6007 = vshll.u32 %v5640, 16
        %v6009 = vor.u32 %v6006, %v6007
        %v6010 = vsel %vm670, %v5990, %v6009
        %v6012 = vshrl.u32 %v5751, 16
        %v6014 = vrot.slane %v6012, 7
        %v6015 = vshll.u32 %v5751, 16
        %v6017 = vor.u32 %v6014, %v6015
        %v6018 = vsel %vm670, %v5998, %v6017
        %v6020 = vshrl.u32 %v5641, 16
        %v6022 = vrot.slane %v6020, 7
        %v6023 = vshll.u32 %v5641, 16
        %v6025 = vor.u32 %v6022, %v6023
        %v6026 = vsel %vm670, %v6006, %v6025
        %v6028 = vshrl.u32 %v5759, 16
        %v6030 = vrot.slane %v6028, 7
        %v6031 = vshll.u32 %v5759, 16
        %v6033 = vor.u32 %v6030, %v6031
        %v6034 = vsel %vm670, %v6014, %v6033
        %v6036 = vshrl.u32 %v5642, 16
        %v6038 = vrot.slane %v6036, 7
        %v6039 = vshll.u32 %v5642, 16
        %v6041 = vor.u32 %v6038, %v6039
        %v6042 = vsel %vm670, %v6022, %v6041
        %v6044 = vshrl.u32 %v5767, 16
        %v6046 = vrot.slane %v6044, 7
        %v6047 = vshll.u32 %v5767, 16
        %v6049 = vor.u32 %v6046, %v6047
        %v6050 = vsel %vm670, %v6030, %v6049
        %v6052 = vshrl.u32 %v5643, 16
        %v6054 = vrot.slane %v6052, 7
        %v6055 = vshll.u32 %v5643, 16
        %v6057 = vor.u32 %v6054, %v6055
        %v6058 = vsel %vm670, %v6038, %v6057
        %v6060 = vshrl.u32 %v5770, 16
        %v6062 = vrot.slane %v6060, 7
        %v6063 = vshll.u32 %v5770, 16
        %v6065 = vor.u32 %v6062, %v6063
        %v6066 = vsel %vm670, %v6046, %v6065
        %v6131 = vunpack.c.l.b16 %v5771
        %v6132 = vunpack.c.l.b16 %v5772
        %v6133 = vunpack.c.l.b16 %v5773
        %v6134 = vunpack.c.l.b16 %v5774
        %v6135 = vunpack.c.l.b16 %v5775
        %v6136 = vunpack.c.l.b16 %v5776
        %v6137 = vunpack.c.l.b16 %v5777
        %v6138 = vunpack.c.l.b16 %v5778
        %v6139 = vunpack.c.l.b16 %v5779
        %v6140 = vunpack.c.l.b16 %v5780
        %v6141 = vunpack.c.l.b16 %v5781
        %v6142 = vunpack.c.l.b16 %v5782
        %v6143 = vunpack.c.l.b16 %v5783
        %v6144 = vunpack.c.l.b16 %v5784
        %v6145 = vunpack.c.l.b16 %v5785
        %v6146 = vunpack.c.l.b16 %v5786
        %v6147 = vunpack.c.l.b16 %v5787
        %v6148 = vunpack.c.l.b16 %v5788
        %v6149 = vunpack.c.l.b16 %v5789
        %v6150 = vunpack.c.l.b16 %v5790
        %v6151 = vunpack.c.l.b16 %v5791
        %v6152 = vunpack.c.l.b16 %v5792
        %v6153 = vunpack.c.l.b16 %v5793
        %v6154 = vunpack.c.l.b16 %v5794
        %v6155 = vunpack.c.l.b16 %v5795
        %v6156 = vunpack.c.l.b16 %v5796
        %v6157 = vunpack.c.l.b16 %v5797
        %v6158 = vunpack.c.l.b16 %v5798
        %v6159 = vunpack.c.l.b16 %v5799
        %v6160 = vunpack.c.l.b16 %v5800
        %v6161 = vunpack.c.l.b16 %v5801
        %v6162 = vunpack.c.l.b16 %v5802
        %v6163 = vpack.c.b16 %v6132, %v6131
        %v6164 = vpack.c.b16 %v6134, %v6133
        %v6165 = vpack.c.b16 %v6136, %v6135
        %v6166 = vpack.c.b16 %v6138, %v6137
        %v6167 = vpack.c.b16 %v6140, %v6139
        %v6168 = vpack.c.b16 %v6142, %v6141
        %v6169 = vpack.c.b16 %v6144, %v6143
        %v6170 = vpack.c.b16 %v6146, %v6145
        %v6171 = vpack.c.b16 %v6148, %v6147
        %v6172 = vpack.c.b16 %v6150, %v6149
        %v6173 = vpack.c.b16 %v6152, %v6151
        %v6174 = vpack.c.b16 %v6154, %v6153
        %v6175 = vpack.c.b16 %v6156, %v6155
        %v6176 = vpack.c.b16 %v6158, %v6157
        %v6177 = vpack.c.b16 %v6160, %v6159
        %v6178 = vpack.c.b16 %v6162, %v6161
        %6195 = vmatprep.subr.bf16.mxu0 0
        %6196 = vmatpush1.bf16.msra.mxu0 %v6163
        %6197 = vmatprep.subr.bf16.mxu0 0
        %6198 = vmatpush1.bf16.msra.mxu0 %v6164
        %6199 = vmatprep.subr.bf16.mxu0 0
        %6200 = vmatpush1.bf16.msra.mxu0 %v6165
        %6201 = vmatprep.subr.bf16.mxu0 0
        %6202 = vmatpush1.bf16.msra.mxu0 %v6166
        %6203 = vmatprep.subr.bf16.mxu0 0
        %6204 = vmatpush1.bf16.msra.mxu0 %v6167
        %6205 = vmatprep.subr.bf16.mxu0 0
        %6206 = vmatpush1.bf16.msra.mxu0 %v6168
        %6207 = vmatprep.subr.bf16.mxu0 0
        %6208 = vmatpush1.bf16.msra.mxu0 %v6169
        %6209 = vmatprep.subr.bf16.mxu0 0
        %6210 = vmatpush1.bf16.msra.mxu0 %v6170
        %6211 = vmatprep.subr.bf16.mxu0 0
        %6212 = vmatpush1.bf16.msra.mxu0 %v6171
        %6213 = vmatprep.subr.bf16.mxu0 0
        %6214 = vmatpush1.bf16.msra.mxu0 %v6172
        %6215 = vmatprep.subr.bf16.mxu0 0
        %6216 = vmatpush1.bf16.msra.mxu0 %v6173
        %6217 = vmatprep.subr.bf16.mxu0 0
        %6218 = vmatpush1.bf16.msra.mxu0 %v6174
        %6219 = vmatprep.subr.bf16.mxu0 0
        %6220 = vmatpush1.bf16.msra.mxu0 %v6175
        %6221 = vmatprep.subr.bf16.mxu0 0
        %6222 = vmatpush1.bf16.msra.mxu0 %v6176
        %6223 = vmatprep.subr.bf16.mxu0 0
        %6224 = vmatpush1.bf16.msra.mxu0 %v6177
        %6225 = vmatprep.subr.bf16.mxu0 0
        %6226 = vmatpush1.bf16.msra.mxu0 %v6178
        %6227 = vmatprep.mubr.bf16.mxu0 %v5826
        %6228 = vmatmul.mubr.bf16.gmra.mrb[0].mxu0 %v5814
        %v6229 = vpop.f32.mrb[0].mxu0
        %v6230 = vadd.f32 0.0, %v6229
        %v6231 = vpop.f32.mrb[0].mxu0
        %v6232 = vpop.f32.mrb[0].mxu0
        %v6233 = vadd.f32 0.0, %v6232
        %v6234 = vpop.f32.mrb[0].mxu0
        %6235 = vmatprep.mubr.bf16.mxu0 %v5842
        %6236 = vmatmul.mubr.bf16.gmra.mrb[0].mxu0 %v5834
        %v6237 = vpop.f32.mrb[0].mxu0
        %v6238 = vadd.f32 0.0, %v6237
        %v6239 = vpop.f32.mrb[0].mxu0
        %v6240 = vpop.f32.mrb[0].mxu0
        %v6241 = vadd.f32 0.0, %v6240
        %v6242 = vpop.f32.mrb[0].mxu0
        %6243 = vmatprep.mubr.bf16.mxu0 %v5858
        %6244 = vmatmul.mubr.bf16.gmra.mrb[0].mxu0 %v5850
        %v6245 = vpop.f32.mrb[0].mxu0
        %v6246 = vadd.f32 0.0, %v6245
        %v6247 = vpop.f32.mrb[0].mxu0
        %v6248 = vpop.f32.mrb[0].mxu0
        %v6249 = vadd.f32 0.0, %v6248
        %v6250 = vpop.f32.mrb[0].mxu0
        %6251 = vmatprep.mubr.bf16.mxu0 %v5874
        %6252 = vmatmul.mubr.bf16.gmra.mrb[0].mxu0 %v5866
        %v6253 = vpop.f32.mrb[0].mxu0
        %v6254 = vadd.f32 0.0, %v6253
        %v6255 = vpop.f32.mrb[0].mxu0
        %v6256 = vpop.f32.mrb[0].mxu0
        %v6257 = vadd.f32 0.0, %v6256
        %v6258 = vpop.f32.mrb[0].mxu0
        %6259 = vmatprep.mubr.bf16.mxu0 %v5890
        %6260 = vmatmul.mubr.bf16.gmra.mrb[0].mxu0 %v5882
        %v6261 = vpop.f32.mrb[0].mxu0
        %v6262 = vadd.f32 0.0, %v6261
        %v6263 = vpop.f32.mrb[0].mxu0
        %v6264 = vpop.f32.mrb[0].mxu0
        %v6265 = vadd.f32 0.0, %v6264
        %v6266 = vpop.f32.mrb[0].mxu0
        %6267 = vmatprep.mubr.bf16.mxu0 %v5906
        %6268 = vmatmul.mubr.bf16.gmra.mrb[0].mxu0 %v5898
        %v6269 = vpop.f32.mrb[0].mxu0
        %v6270 = vadd.f32 0.0, %v6269
        %v6271 = vpop.f32.mrb[0].mxu0
        %v6272 = vpop.f32.mrb[0].mxu0
        %v6273 = vadd.f32 0.0, %v6272
        %v6274 = vpop.f32.mrb[0].mxu0
        %6275 = vmatprep.mubr.bf16.mxu0 %v5922
        %6276 = vmatmul.mubr.bf16.gmra.mrb[0].mxu0 %v5914
        %v6277 = vpop.f32.mrb[0].mxu0
        %v6278 = vadd.f32 0.0, %v6277
        %v6279 = vpop.f32.mrb[0].mxu0
        %v6280 = vpop.f32.mrb[0].mxu0
        %v6281 = vadd.f32 0.0, %v6280
        %v6282 = vpop.f32.mrb[0].mxu0
        %6283 = vmatprep.mubr.bf16.mxu0 %v5938
        %6284 = vmatmul.mubr.bf16.gmra.mrb[0].mxu0 %v5930
        %v6285 = vpop.f32.mrb[0].mxu0
        %v6286 = vadd.f32 0.0, %v6285
        %v6287 = vpop.f32.mrb[0].mxu0
        %v6288 = vpop.f32.mrb[0].mxu0
        %v6289 = vadd.f32 0.0, %v6288
        %v6290 = vpop.f32.mrb[0].mxu0
        %6291 = vmatprep.mubr.bf16.mxu0 %v5954
        %6292 = vmatmul.mubr.bf16.gmra.mrb[0].mxu0 %v5946
        %v6293 = vpop.f32.mrb[0].mxu0
        %v6294 = vadd.f32 0.0, %v6293
        %v6295 = vpop.f32.mrb[0].mxu0
        %v6296 = vpop.f32.mrb[0].mxu0
        %v6297 = vadd.f32 0.0, %v6296
        %v6298 = vpop.f32.mrb[0].mxu0
        %6299 = vmatprep.mubr.bf16.mxu0 %v5970
        %6300 = vmatmul.mubr.bf16.gmra.mrb[0].mxu0 %v5962
        %v6301 = vpop.f32.mrb[0].mxu0
        %v6302 = vadd.f32 0.0, %v6301
        %v6303 = vpop.f32.mrb[0].mxu0
        %v6304 = vpop.f32.mrb[0].mxu0
        %v6305 = vadd.f32 0.0, %v6304
        %v6306 = vpop.f32.mrb[0].mxu0
        %6307 = vmatprep.mubr.bf16.mxu0 %v5986
        %6308 = vmatmul.mubr.bf16.gmra.mrb[0].mxu0 %v5978
        %v6309 = vpop.f32.mrb[0].mxu0
        %v6310 = vadd.f32 0.0, %v6309
        %v6311 = vpop.f32.mrb[0].mxu0
        %v6312 = vpop.f32.mrb[0].mxu0
        %v6313 = vadd.f32 0.0, %v6312
        %v6314 = vpop.f32.mrb[0].mxu0
        %6315 = vmatprep.mubr.bf16.mxu0 %v6002
        %6316 = vmatmul.mubr.bf16.gmra.mrb[0].mxu0 %v5994
        %v6317 = vpop.f32.mrb[0].mxu0
        %v6318 = vadd.f32 0.0, %v6317
        %v6319 = vpop.f32.mrb[0].mxu0
        %v6320 = vpop.f32.mrb[0].mxu0
        %v6321 = vadd.f32 0.0, %v6320
        %v6322 = vpop.f32.mrb[0].mxu0
        %6323 = vmatprep.mubr.bf16.mxu0 %v6018
        %6324 = vmatmul.mubr.bf16.gmra.mrb[0].mxu0 %v6010
        %v6325 = vpop.f32.mrb[0].mxu0
        %v6326 = vadd.f32 0.0, %v6325
        %v6327 = vpop.f32.mrb[0].mxu0
        %v6328 = vpop.f32.mrb[0].mxu0
        %v6329 = vadd.f32 0.0, %v6328
        %v6330 = vpop.f32.mrb[0].mxu0
        %6331 = vmatprep.mubr.bf16.mxu0 %v6034
        %6332 = vmatmul.mubr.bf16.gmra.mrb[0].mxu0 %v6026
        %v6333 = vpop.f32.mrb[0].mxu0
        %v6334 = vadd.f32 0.0, %v6333
        %v6335 = vpop.f32.mrb[0].mxu0
        %v6336 = vpop.f32.mrb[0].mxu0
        %v6337 = vadd.f32 0.0, %v6336
        %v6338 = vpop.f32.mrb[0].mxu0
        %6339 = vmatprep.mubr.bf16.mxu0 %v6050
        %6340 = vmatmul.mubr.bf16.gmra.mrb[0].mxu0 %v6042
        %v6341 = vpop.f32.mrb[0].mxu0
        %v6342 = vadd.f32 0.0, %v6341
        %v6343 = vpop.f32.mrb[0].mxu0
        %v6344 = vpop.f32.mrb[0].mxu0
        %v6345 = vadd.f32 0.0, %v6344
        %v6346 = vpop.f32.mrb[0].mxu0
        %6347 = vmatprep.mubr.bf16.mxu0 %v6066
        %6348 = vmatmul.mubr.bf16.gmra.mrb[0].mxu0 %v6058
        %v6349 = vpop.f32.mrb[0].mxu0
        %v6350 = vadd.f32 0.0, %v6349
        %v6351 = vpop.f32.mrb[0].mxu0
        %v6352 = vpop.f32.mrb[0].mxu0
        %v6353 = vadd.f32 0.0, %v6352
        %v6354 = vpop.f32.mrb[0].mxu0
        %6355 = vdwg.mxu0
        %v6356 = vadd.f32 %v5593, %v6230
        %v6357 = vadd.f32 %v5594, %v6233
        %v6358 = vadd.f32 %v5595, %v6238
        %v6359 = vadd.f32 %v5596, %v6241
        %v6360 = vadd.f32 %v5597, %v6246
        %v6361 = vadd.f32 %v5598, %v6249
        %v6362 = vadd.f32 %v5599, %v6254
        %v6363 = vadd.f32 %v5600, %v6257
        %v6364 = vadd.f32 %v5601, %v6262
        %v6365 = vadd.f32 %v5602, %v6265
        %v6366 = vadd.f32 %v5603, %v6270
        %v6367 = vadd.f32 %v5604, %v6273
        %v6368 = vadd.f32 %v5605, %v6278
        %v6369 = vadd.f32 %v5606, %v6281
        %v6370 = vadd.f32 %v5607, %v6286
        %v6371 = vadd.f32 %v5608, %v6289
        %v6372 = vadd.f32 %v5609, %v6294
        %v6373 = vadd.f32 %v5610, %v6297
        %v6374 = vadd.f32 %v5611, %v6302
        %v6375 = vadd.f32 %v5612, %v6305
        %v6376 = vadd.f32 %v5613, %v6310
        %v6377 = vadd.f32 %v5614, %v6313
        %v6378 = vadd.f32 %v5615, %v6318
        %v6379 = vadd.f32 %v5616, %v6321
        %v6380 = vadd.f32 %v5617, %v6326
        %v6381 = vadd.f32 %v5618, %v6329
        %v6382 = vadd.f32 %v5619, %v6334
        %v6383 = vadd.f32 %v5620, %v6337
        %v6384 = vadd.f32 %v5621, %v6342
        %v6385 = vadd.f32 %v5622, %v6345
        %v6386 = vadd.f32 %v5623, %v6350
        %v6387 = vadd.f32 %v5624, %v6353
        %v6388 = vld [vmem:[#allocation2 + $0x18] sm:$0xff]
        %v6389 = vld [vmem:[#allocation2 + $0x20] sm:$0xff]
        %v6390 = vld [vmem:[#allocation2 + $0x28] sm:$0xff]
        %v6391 = vld [vmem:[#allocation2 + $0x30] sm:$0xff]
        %v6392 = vld [vmem:[#allocation2 + $0x38] sm:$0xff]
        %v6393 = vld [vmem:[#allocation2 + $0x40] sm:$0xff]
        %v6394 = vld [vmem:[#allocation2 + $0x48] sm:$0xff]
        %v6395 = vld [vmem:[#allocation2 + $0x50] sm:$0xff]
        %v6396 = vld [vmem:[#allocation2 + $0x58] sm:$0xff]
        %v6397 = vld [vmem:[#allocation2 + $0x60] sm:$0xff]
        %v6398 = vld [vmem:[#allocation2 + $0x68] sm:$0xff]
        %v6399 = vld [vmem:[#allocation2 + $0x70] sm:$0xff]
        %v6400 = vld [vmem:[#allocation2 + $0x78] sm:$0xff]
        %v6401 = vld [vmem:[#allocation2 + $0x80] sm:$0xff]
        %v6402 = vld [vmem:[#allocation2 + $0x88] sm:$0xff]
        %v6403 = vld [vmem:[#allocation2 + $0x90] sm:$0xff]
        %v6404 = vld [vmem:[#allocation2 + $0x98] sm:$0x1]
        %v6405 = vsel %vm679, %v6388, 0
        %v6406 = vsel %vm680, %v6389, 0
        %v6407 = vsel %vm680, %v6390, 0
        %v6408 = vsel %vm680, %v6391, 0
        %v6409 = vsel %vm680, %v6392, 0
        %v6410 = vsel %vm680, %v6393, 0
        %v6411 = vsel %vm680, %v6394, 0
        %v6412 = vsel %vm680, %v6395, 0
        %v6413 = vsel %vm680, %v6396, 0
        %v6414 = vsel %vm680, %v6397, 0
        %v6415 = vsel %vm680, %v6398, 0
        %v6416 = vsel %vm680, %v6399, 0
        %v6417 = vsel %vm680, %v6400, 0
        %v6418 = vsel %vm680, %v6401, 0
        %v6419 = vsel %vm680, %v6402, 0
        %v6420 = vsel %vm680, %v6403, 0
        %v6421 = vsel %vm681, %v6404, 0
        %v6422 = vld [vmem:[%s3878 + $0x200] sm:$0xf]
        %v6423 = vld [vmem:[%s3878 + $0x204] sm:$0xf]
        %v6424 = vld [vmem:[%s3878 + $0x208] sm:$0xf]
        %v6425 = vld [vmem:[%s3878 + $0x20c] sm:$0xf]
        %v6426 = vld [vmem:[%s3878 + $0x210] sm:$0xf]
        %v6427 = vld [vmem:[%s3878 + $0x214] sm:$0xf]
        %v6428 = vld [vmem:[%s3878 + $0x218] sm:$0xf]
        %v6429 = vld [vmem:[%s3878 + $0x21c] sm:$0xf]
        %v6430 = vld [vmem:[%s3878 + $0x220] sm:$0xf]
        %v6431 = vld [vmem:[%s3878 + $0x224] sm:$0xf]
        %v6432 = vld [vmem:[%s3878 + $0x228] sm:$0xf]
        %v6433 = vld [vmem:[%s3878 + $0x22c] sm:$0xf]
        %v6434 = vld [vmem:[%s3878 + $0x230] sm:$0xf]
        %v6435 = vld [vmem:[%s3878 + $0x234] sm:$0xf]
        %v6436 = vld [vmem:[%s3878 + $0x238] sm:$0xf]
        %v6437 = vld [vmem:[%s3878 + $0x23c] sm:$0xf]
        %v6439 = vshrl.u32 %v6405, 16
        %v6441 = vshll.u32 %v6405, 16
        %v6443 = vrot.slane %v6441, 1
        %v6444 = vor.u32 %v6439, %v6443
        %v6446 = vshll.u32 %v6406, 16
        %v6448 = vrot.slane %v6446, 1
        %v6449 = vsel %vm474, %v6444, %v6448
        %v6450 = vshrl.u32 %v6406, 16
        %v6452 = vor.u32 %v6450, %v6448
        %v6454 = vshll.u32 %v6407, 16
        %v6456 = vrot.slane %v6454, 1
        %v6457 = vsel %vm474, %v6452, %v6456
        %v6458 = vshrl.u32 %v6407, 16
        %v6460 = vor.u32 %v6458, %v6456
        %v6462 = vshll.u32 %v6408, 16
        %v6464 = vrot.slane %v6462, 1
        %v6465 = vsel %vm474, %v6460, %v6464
        %v6466 = vshrl.u32 %v6408, 16
        %v6468 = vor.u32 %v6466, %v6464
        %v6470 = vshll.u32 %v6409, 16
        %v6472 = vrot.slane %v6470, 1
        %v6473 = vsel %vm474, %v6468, %v6472
        %v6474 = vshrl.u32 %v6409, 16
        %v6476 = vor.u32 %v6474, %v6472
        %v6478 = vshll.u32 %v6410, 16
        %v6480 = vrot.slane %v6478, 1
        %v6481 = vsel %vm474, %v6476, %v6480
        %v6482 = vshrl.u32 %v6410, 16
        %v6484 = vor.u32 %v6482, %v6480
        %v6486 = vshll.u32 %v6411, 16
        %v6488 = vrot.slane %v6486, 1
        %v6489 = vsel %vm474, %v6484, %v6488
        %v6490 = vshrl.u32 %v6411, 16
        %v6492 = vor.u32 %v6490, %v6488
        %v6494 = vshll.u32 %v6412, 16
        %v6496 = vrot.slane %v6494, 1
        %v6497 = vsel %vm474, %v6492, %v6496
        %v6498 = vshrl.u32 %v6412, 16
        %v6500 = vor.u32 %v6498, %v6496
        %v6502 = vshll.u32 %v6413, 16
        %v6504 = vrot.slane %v6502, 1
        %v6505 = vsel %vm474, %v6500, %v6504
        %v6506 = vshrl.u32 %v6413, 16
        %v6508 = vor.u32 %v6506, %v6504
        %v6510 = vshll.u32 %v6414, 16
        %v6512 = vrot.slane %v6510, 1
        %v6513 = vsel %vm474, %v6508, %v6512
        %v6514 = vshrl.u32 %v6414, 16
        %v6516 = vor.u32 %v6514, %v6512
        %v6518 = vshll.u32 %v6415, 16
        %v6520 = vrot.slane %v6518, 1
        %v6521 = vsel %vm474, %v6516, %v6520
        %v6522 = vshrl.u32 %v6415, 16
        %v6524 = vor.u32 %v6522, %v6520
        %v6526 = vshll.u32 %v6416, 16
        %v6528 = vrot.slane %v6526, 1
        %v6529 = vsel %vm474, %v6524, %v6528
        %v6530 = vshrl.u32 %v6416, 16
        %v6532 = vor.u32 %v6530, %v6528
        %v6534 = vshll.u32 %v6417, 16
        %v6536 = vrot.slane %v6534, 1
        %v6537 = vsel %vm474, %v6532, %v6536
        %v6538 = vshrl.u32 %v6417, 16
        %v6540 = vor.u32 %v6538, %v6536
        %v6542 = vshll.u32 %v6418, 16
        %v6544 = vrot.slane %v6542, 1
        %v6545 = vsel %vm474, %v6540, %v6544
        %v6546 = vshrl.u32 %v6418, 16
        %v6548 = vor.u32 %v6546, %v6544
        %v6550 = vshll.u32 %v6419, 16
        %v6552 = vrot.slane %v6550, 1
        %v6553 = vsel %vm474, %v6548, %v6552
        %v6554 = vshrl.u32 %v6419, 16
        %v6556 = vor.u32 %v6554, %v6552
        %v6558 = vshll.u32 %v6420, 16
        %v6560 = vrot.slane %v6558, 1
        %v6561 = vsel %vm474, %v6556, %v6560
        %v6562 = vshrl.u32 %v6420, 16
        %v6564 = vor.u32 %v6562, %v6560
        %v6566 = vshll.u32 %v6421, 16
        %v6568 = vrot.slane %v6566, 1
        %v6569 = vsel %vm474, %v6564, %v6568
        %v6602 = vunpack.c.l.b16 %v6422
        %v6603 = vunpack.c.l.b16 %v6423
        %v6604 = vunpack.c.l.b16 %v6424
        %v6605 = vunpack.c.l.b16 %v6425
        %v6606 = vunpack.c.l.b16 %v6426
        %v6607 = vunpack.c.l.b16 %v6427
        %v6608 = vunpack.c.l.b16 %v6428
        %v6609 = vunpack.c.l.b16 %v6429
        %v6610 = vunpack.c.l.b16 %v6430
        %v6611 = vunpack.c.l.b16 %v6431
        %v6612 = vunpack.c.l.b16 %v6432
        %v6613 = vunpack.c.l.b16 %v6433
        %v6614 = vunpack.c.l.b16 %v6434
        %v6615 = vunpack.c.l.b16 %v6435
        %v6616 = vunpack.c.l.b16 %v6436
        %v6617 = vunpack.c.l.b16 %v6437
        %v6618 = vpack.c.b16 %v6603, %v6602
        %v6619 = vpack.c.b16 %v6605, %v6604
        %v6620 = vpack.c.b16 %v6607, %v6606
        %v6621 = vpack.c.b16 %v6609, %v6608
        %v6622 = vpack.c.b16 %v6611, %v6610
        %v6623 = vpack.c.b16 %v6613, %v6612
        %v6624 = vpack.c.b16 %v6615, %v6614
        %v6625 = vpack.c.b16 %v6617, %v6616
        %6634 = vmatprep.subr.bf16.mxu0 0
        %6635 = vmatpush1.bf16.msra.mxu0 %v6618
        %6636 = vmatprep.subr.bf16.mxu0 0
        %6637 = vmatpush1.bf16.msra.mxu0 %v6619
        %6638 = vmatprep.subr.bf16.mxu0 0
        %6639 = vmatpush1.bf16.msra.mxu0 %v6620
        %6640 = vmatprep.subr.bf16.mxu0 0
        %6641 = vmatpush1.bf16.msra.mxu0 %v6621
        %6642 = vmatprep.subr.bf16.mxu0 0
        %6643 = vmatpush1.bf16.msra.mxu0 %v6622
        %6644 = vmatprep.subr.bf16.mxu0 0
        %6645 = vmatpush1.bf16.msra.mxu0 %v6623
        %6646 = vmatprep.subr.bf16.mxu0 0
        %6647 = vmatpush1.bf16.msra.mxu0 %v6624
        %6648 = vmatprep.subr.bf16.mxu0 0
        %6649 = vmatpush1.bf16.msra.mxu0 %v6625
        %6650 = vmatprep.subr.bf16.mxu0 0
        %6651 = vmatpush1.bf16.msra.mxu0 0
        %6652 = vmatprep.subr.bf16.mxu0 0
        %6653 = vmatpush1.bf16.msra.mxu0 0
        %6654 = vmatprep.subr.bf16.mxu0 0
        %6655 = vmatpush1.bf16.msra.mxu0 0
        %6656 = vmatprep.subr.bf16.mxu0 0
        %6657 = vmatpush1.bf16.msra.mxu0 0
        %6658 = vmatprep.subr.bf16.mxu0 0
        %6659 = vmatpush1.bf16.msra.mxu0 0
        %6660 = vmatprep.subr.bf16.mxu0 0
        %6661 = vmatpush1.bf16.msra.mxu0 0
        %6662 = vmatprep.subr.bf16.mxu0 0
        %6663 = vmatpush1.bf16.msra.mxu0 0
        %6664 = vmatprep.subr.bf16.mxu0 0
        %6665 = vmatpush1.bf16.msra.mxu0 0
        %6666 = vmatprep.mubr.bf16.mxu0 0
        %6667 = vmatmul.mubr.bf16.gmra.mrb[0].mxu0 %v6449
        %v6668 = vpop.f32.mrb[0].mxu0
        %v6669 = vadd.f32 0.0, %v6668
        %v6670 = vpop.f32.mrb[0].mxu0
        %v6671 = vpop.f32.mrb[0].mxu0
        %v6672 = vadd.f32 0.0, %v6671
        %v6673 = vpop.f32.mrb[0].mxu0
        %6674 = vmatprep.mubr.bf16.mxu0 0
        %6675 = vmatmul.mubr.bf16.gmra.mrb[0].mxu0 %v6457
        %v6676 = vpop.f32.mrb[0].mxu0
        %v6677 = vadd.f32 0.0, %v6676
        %v6678 = vpop.f32.mrb[0].mxu0
        %v6679 = vpop.f32.mrb[0].mxu0
        %v6680 = vadd.f32 0.0, %v6679
        %v6681 = vpop.f32.mrb[0].mxu0
        %6682 = vmatprep.mubr.bf16.mxu0 0
        %6683 = vmatmul.mubr.bf16.gmra.mrb[0].mxu0 %v6465
        %v6684 = vpop.f32.mrb[0].mxu0
        %v6685 = vadd.f32 0.0, %v6684
        %v6686 = vpop.f32.mrb[0].mxu0
        %v6687 = vpop.f32.mrb[0].mxu0
        %v6688 = vadd.f32 0.0, %v6687
        %v6689 = vpop.f32.mrb[0].mxu0
        %6690 = vmatprep.mubr.bf16.mxu0 0
        %6691 = vmatmul.mubr.bf16.gmra.mrb[0].mxu0 %v6473
        %v6692 = vpop.f32.mrb[0].mxu0
        %v6693 = vadd.f32 0.0, %v6692
        %v6694 = vpop.f32.mrb[0].mxu0
        %v6695 = vpop.f32.mrb[0].mxu0
        %v6696 = vadd.f32 0.0, %v6695
        %v6697 = vpop.f32.mrb[0].mxu0
        %6698 = vmatprep.mubr.bf16.mxu0 0
        %6699 = vmatmul.mubr.bf16.gmra.mrb[0].mxu0 %v6481
        %v6700 = vpop.f32.mrb[0].mxu0
        %v6701 = vadd.f32 0.0, %v6700
        %v6702 = vpop.f32.mrb[0].mxu0
        %v6703 = vpop.f32.mrb[0].mxu0
        %v6704 = vadd.f32 0.0, %v6703
        %v6705 = vpop.f32.mrb[0].mxu0
        %6706 = vmatprep.mubr.bf16.mxu0 0
        %6707 = vmatmul.mubr.bf16.gmra.mrb[0].mxu0 %v6489
        %v6708 = vpop.f32.mrb[0].mxu0
        %v6709 = vadd.f32 0.0, %v6708
        %v6710 = vpop.f32.mrb[0].mxu0
        %v6711 = vpop.f32.mrb[0].mxu0
        %v6712 = vadd.f32 0.0, %v6711
        %v6713 = vpop.f32.mrb[0].mxu0
        %6714 = vmatprep.mubr.bf16.mxu0 0
        %6715 = vmatmul.mubr.bf16.gmra.mrb[0].mxu0 %v6497
        %v6716 = vpop.f32.mrb[0].mxu0
        %v6717 = vadd.f32 0.0, %v6716
        %v6718 = vpop.f32.mrb[0].mxu0
        %v6719 = vpop.f32.mrb[0].mxu0
        %v6720 = vadd.f32 0.0, %v6719
        %v6721 = vpop.f32.mrb[0].mxu0
        %6722 = vmatprep.mubr.bf16.mxu0 0
        %6723 = vmatmul.mubr.bf16.gmra.mrb[0].mxu0 %v6505
        %v6724 = vpop.f32.mrb[0].mxu0
        %v6725 = vadd.f32 0.0, %v6724
        %v6726 = vpop.f32.mrb[0].mxu0
        %v6727 = vpop.f32.mrb[0].mxu0
        %v6728 = vadd.f32 0.0, %v6727
        %v6729 = vpop.f32.mrb[0].mxu0
        %6730 = vmatprep.mubr.bf16.mxu0 0
        %6731 = vmatmul.mubr.bf16.gmra.mrb[0].mxu0 %v6513
        %v6732 = vpop.f32.mrb[0].mxu0
        %v6733 = vadd.f32 0.0, %v6732
        %v6734 = vpop.f32.mrb[0].mxu0
        %v6735 = vpop.f32.mrb[0].mxu0
        %v6736 = vadd.f32 0.0, %v6735
        %v6737 = vpop.f32.mrb[0].mxu0
        %6738 = vmatprep.mubr.bf16.mxu0 0
        %6739 = vmatmul.mubr.bf16.gmra.mrb[0].mxu0 %v6521
        %v6740 = vpop.f32.mrb[0].mxu0
        %v6741 = vadd.f32 0.0, %v6740
        %v6742 = vpop.f32.mrb[0].mxu0
        %v6743 = vpop.f32.mrb[0].mxu0
        %v6744 = vadd.f32 0.0, %v6743
        %v6745 = vpop.f32.mrb[0].mxu0
        %6746 = vmatprep.mubr.bf16.mxu0 0
        %6747 = vmatmul.mubr.bf16.gmra.mrb[0].mxu0 %v6529
        %v6748 = vpop.f32.mrb[0].mxu0
        %v6749 = vadd.f32 0.0, %v6748
        %v6750 = vpop.f32.mrb[0].mxu0
        %v6751 = vpop.f32.mrb[0].mxu0
        %v6752 = vadd.f32 0.0, %v6751
        %v6753 = vpop.f32.mrb[0].mxu0
        %6754 = vmatprep.mubr.bf16.mxu0 0
        %6755 = vmatmul.mubr.bf16.gmra.mrb[0].mxu0 %v6537
        %v6756 = vpop.f32.mrb[0].mxu0
        %v6757 = vadd.f32 0.0, %v6756
        %v6758 = vpop.f32.mrb[0].mxu0
        %v6759 = vpop.f32.mrb[0].mxu0
        %v6760 = vadd.f32 0.0, %v6759
        %v6761 = vpop.f32.mrb[0].mxu0
        %6762 = vmatprep.mubr.bf16.mxu0 0
        %6763 = vmatmul.mubr.bf16.gmra.mrb[0].mxu0 %v6545
        %v6764 = vpop.f32.mrb[0].mxu0
        %v6765 = vadd.f32 0.0, %v6764
        %v6766 = vpop.f32.mrb[0].mxu0
        %v6767 = vpop.f32.mrb[0].mxu0
        %v6768 = vadd.f32 0.0, %v6767
        %v6769 = vpop.f32.mrb[0].mxu0
        %6770 = vmatprep.mubr.bf16.mxu0 0
        %6771 = vmatmul.mubr.bf16.gmra.mrb[0].mxu0 %v6553
        %v6772 = vpop.f32.mrb[0].mxu0
        %v6773 = vadd.f32 0.0, %v6772
        %v6774 = vpop.f32.mrb[0].mxu0
        %v6775 = vpop.f32.mrb[0].mxu0
        %v6776 = vadd.f32 0.0, %v6775
        %v6777 = vpop.f32.mrb[0].mxu0
        %6778 = vmatprep.mubr.bf16.mxu0 0
        %6779 = vmatmul.mubr.bf16.gmra.mrb[0].mxu0 %v6561
        %v6780 = vpop.f32.mrb[0].mxu0
        %v6781 = vadd.f32 0.0, %v6780
        %v6782 = vpop.f32.mrb[0].mxu0
        %v6783 = vpop.f32.mrb[0].mxu0
        %v6784 = vadd.f32 0.0, %v6783
        %v6785 = vpop.f32.mrb[0].mxu0
        %6786 = vmatprep.mubr.bf16.mxu0 0
        %6787 = vmatmul.mubr.bf16.gmra.mrb[0].mxu0 %v6569
        %v6788 = vpop.f32.mrb[0].mxu0
        %v6789 = vadd.f32 0.0, %v6788
        %v6790 = vpop.f32.mrb[0].mxu0
        %v6791 = vpop.f32.mrb[0].mxu0
        %v6792 = vadd.f32 0.0, %v6791
        %v6793 = vpop.f32.mrb[0].mxu0
        %6794 = vdwg.mxu0
        %v6795 = vadd.f32 %v6356, %v6669
        %v6796 = vadd.f32 %v6357, %v6672
        %v6797 = vadd.f32 %v6358, %v6677
        %v6798 = vadd.f32 %v6359, %v6680
        %v6799 = vadd.f32 %v6360, %v6685
        %v6800 = vadd.f32 %v6361, %v6688
        %v6801 = vadd.f32 %v6362, %v6693
        %v6802 = vadd.f32 %v6363, %v6696
        %v6803 = vadd.f32 %v6364, %v6701
        %v6804 = vadd.f32 %v6365, %v6704
        %v6805 = vadd.f32 %v6366, %v6709
        %v6806 = vadd.f32 %v6367, %v6712
        %v6807 = vadd.f32 %v6368, %v6717
        %v6808 = vadd.f32 %v6369, %v6720
        %v6809 = vadd.f32 %v6370, %v6725
        %v6810 = vadd.f32 %v6371, %v6728
        %v6811 = vadd.f32 %v6372, %v6733
        %v6812 = vadd.f32 %v6373, %v6736
        %v6813 = vadd.f32 %v6374, %v6741
        %v6814 = vadd.f32 %v6375, %v6744
        %v6815 = vadd.f32 %v6376, %v6749
        %v6816 = vadd.f32 %v6377, %v6752
        %v6817 = vadd.f32 %v6378, %v6757
        %v6818 = vadd.f32 %v6379, %v6760
        %v6819 = vadd.f32 %v6380, %v6765
        %v6820 = vadd.f32 %v6381, %v6768
        %v6821 = vadd.f32 %v6382, %v6773
        %v6822 = vadd.f32 %v6383, %v6776
        %v6823 = vadd.f32 %v6384, %v6781
        %v6824 = vadd.f32 %v6385, %v6784
        %v6825 = vadd.f32 %v6386, %v6789
        %v6826 = vadd.f32 %v6387, %v6792
        %s6827 = scalar_lea.vmem %s2, 1
        %v6828 = vld [vmem:[%s6827] sm:$0x1]
        %v6830 = vlaneseq
        %v6831 = vshrl.u32 %v6830, 7
        %v6832 = vsub.s32 0, %v6831
        %v6833 = vrot.slane %v6828, %v6832
        %v6835 = vadd.f32 %v6795, %v6833
        %v6836 = vadd.f32 %v6796, %v6833
        %v6837 = vadd.f32 %v6797, %v6833
        %v6838 = vadd.f32 %v6798, %v6833
        %v6839 = vadd.f32 %v6799, %v6833
        %v6840 = vadd.f32 %v6800, %v6833
        %v6841 = vadd.f32 %v6801, %v6833
        %v6842 = vadd.f32 %v6802, %v6833
        %v6843 = vadd.f32 %v6803, %v6833
        %v6844 = vadd.f32 %v6804, %v6833
        %v6845 = vadd.f32 %v6805, %v6833
        %v6846 = vadd.f32 %v6806, %v6833
        %v6847 = vadd.f32 %v6807, %v6833
        %v6848 = vadd.f32 %v6808, %v6833
        %v6849 = vadd.f32 %v6809, %v6833
        %v6850 = vadd.f32 %v6810, %v6833
        %v6851 = vadd.f32 %v6811, %v6833
        %v6852 = vadd.f32 %v6812, %v6833
        %v6853 = vadd.f32 %v6813, %v6833
        %v6854 = vadd.f32 %v6814, %v6833
        %v6855 = vadd.f32 %v6815, %v6833
        %v6856 = vadd.f32 %v6816, %v6833
        %v6857 = vadd.f32 %v6817, %v6833
        %v6858 = vadd.f32 %v6818, %v6833
        %v6859 = vadd.f32 %v6819, %v6833
        %v6860 = vadd.f32 %v6820, %v6833
        %v6861 = vadd.f32 %v6821, %v6833
        %v6862 = vadd.f32 %v6822, %v6833
        %v6863 = vadd.f32 %v6823, %v6833
        %v6864 = vadd.f32 %v6824, %v6833
        %v6865 = vadd.f32 %v6825, %v6833
        %v6866 = vadd.f32 %v6826, %v6833
        %v6867 = vmax.f32 %v6835, 0.0
        %v6868 = vmax.f32 %v6836, 0.0
        %v6869 = vmax.f32 %v6837, 0.0
        %v6870 = vmax.f32 %v6838, 0.0
        %v6871 = vmax.f32 %v6839, 0.0
        %v6872 = vmax.f32 %v6840, 0.0
        %v6873 = vmax.f32 %v6841, 0.0
        %v6874 = vmax.f32 %v6842, 0.0
        %v6875 = vmax.f32 %v6843, 0.0
        %v6876 = vmax.f32 %v6844, 0.0
        %v6877 = vmax.f32 %v6845, 0.0
        %v6878 = vmax.f32 %v6846, 0.0
        %v6879 = vmax.f32 %v6847, 0.0
        %v6880 = vmax.f32 %v6848, 0.0
        %v6881 = vmax.f32 %v6849, 0.0
        %v6882 = vmax.f32 %v6850, 0.0
        %v6883 = vmax.f32 %v6851, 0.0
        %v6884 = vmax.f32 %v6852, 0.0
        %v6885 = vmax.f32 %v6853, 0.0
        %v6886 = vmax.f32 %v6854, 0.0
        %v6887 = vmax.f32 %v6855, 0.0
        %v6888 = vmax.f32 %v6856, 0.0
        %v6889 = vmax.f32 %v6857, 0.0
        %v6890 = vmax.f32 %v6858, 0.0
        %v6891 = vmax.f32 %v6859, 0.0
        %v6892 = vmax.f32 %v6860, 0.0
        %v6893 = vmax.f32 %v6861, 0.0
        %v6894 = vmax.f32 %v6862, 0.0
        %v6895 = vmax.f32 %v6863, 0.0
        %v6896 = vmax.f32 %v6864, 0.0
        %v6897 = vmax.f32 %v6865, 0.0
        %v6898 = vmax.f32 %v6866, 0.0
        %v6899 = vpack.c.bf16 %v6868, %v6867
        %v6900 = vpack.c.bf16 %v6870, %v6869
        %v6901 = vpack.c.bf16 %v6872, %v6871
        %v6902 = vpack.c.bf16 %v6874, %v6873
        %v6903 = vpack.c.bf16 %v6876, %v6875
        %v6904 = vpack.c.bf16 %v6878, %v6877
        %v6905 = vpack.c.bf16 %v6880, %v6879
        %v6906 = vpack.c.bf16 %v6882, %v6881
        %v6907 = vpack.c.bf16 %v6884, %v6883
        %v6908 = vpack.c.bf16 %v6886, %v6885
        %v6909 = vpack.c.bf16 %v6888, %v6887
        %v6910 = vpack.c.bf16 %v6890, %v6889
        %v6911 = vpack.c.bf16 %v6892, %v6891
        %v6912 = vpack.c.bf16 %v6894, %v6893
        %v6913 = vpack.c.bf16 %v6896, %v6895
        %v6914 = vpack.c.bf16 %v6898, %v6897
        %v6915 = vadd.bf16 %v3719, %v6899
        %v6916 = vadd.bf16 %v3720, %v6900
        %v6917 = vadd.bf16 %v3721, %v6901
        %v6918 = vadd.bf16 %v3722, %v6902
        %v6919 = vadd.bf16 %v3723, %v6903
        %v6920 = vadd.bf16 %v3724, %v6904
        %v6921 = vadd.bf16 %v3725, %v6905
        %v6922 = vadd.bf16 %v3726, %v6906
        %v6923 = vadd.bf16 %v3727, %v6907
        %v6924 = vadd.bf16 %v3728, %v6908
        %v6925 = vadd.bf16 %v3729, %v6909
        %v6926 = vadd.bf16 %v3730, %v6910
        %v6927 = vadd.bf16 %v3731, %v6911
        %v6928 = vadd.bf16 %v3732, %v6912
        %v6929 = vadd.bf16 %v3733, %v6913
        %v6930 = vadd.bf16 %v3930, %v6914
        %6931 = vst [vmem:[#allocation2 + $0x10] sm:$0xff] %v6915
        %6932 = vst [vmem:[#allocation2 + $0x18] sm:$0xff] %v6916
        %6933 = vst [vmem:[#allocation2 + $0x20] sm:$0xff] %v6917
        %6934 = vst [vmem:[#allocation2 + $0x28] sm:$0xff] %v6918
        %6935 = vst [vmem:[#allocation2 + $0x30] sm:$0xff] %v6919
        %6936 = vst [vmem:[#allocation2 + $0x38] sm:$0xff] %v6920
        %6937 = vst [vmem:[#allocation2 + $0x40] sm:$0xff] %v6921
        %6938 = vst [vmem:[#allocation2 + $0x48] sm:$0xff] %v6922
        %6939 = vst [vmem:[#allocation2 + $0x50] sm:$0xff] %v6923
        %6940 = vst [vmem:[#allocation2 + $0x58] sm:$0xff] %v6924
        %6941 = vst [vmem:[#allocation2 + $0x60] sm:$0xff] %v6925
        %6942 = vst [vmem:[#allocation2 + $0x68] sm:$0xff] %v6926
        %6943 = vst [vmem:[#allocation2 + $0x70] sm:$0xff] %v6927
        %6944 = vst [vmem:[#allocation2 + $0x78] sm:$0xff] %v6928
        %6945 = vst [vmem:[#allocation2 + $0x80] sm:$0xff] %v6929
        %6946 = vst [vmem:[#allocation2 + $0x88] sm:$0xff] %v6930
        %v6947 = vld [vmem:[#allocation2] sm:$0x80]
        %v6948 = vld [vmem:[#allocation2 + $0x8] sm:$0xff]
        %v6949 = vld [vmem:[#allocation2 + $0x10] sm:$0xff]
        %v6950 = vld [vmem:[#allocation2 + $0x18] sm:$0xff]
        %v6951 = vld [vmem:[#allocation2 + $0x20] sm:$0xff]
        %v6952 = vld [vmem:[#allocation2 + $0x28] sm:$0xff]
        %v6953 = vld [vmem:[#allocation2 + $0x30] sm:$0xff]
        %v6954 = vld [vmem:[#allocation2 + $0x38] sm:$0xff]
        %v6955 = vld [vmem:[#allocation2 + $0x40] sm:$0xff]
        %v6956 = vld [vmem:[#allocation2 + $0x48] sm:$0xff]
        %v6957 = vld [vmem:[#allocation2 + $0x50] sm:$0xff]
        %v6958 = vld [vmem:[#allocation2 + $0x58] sm:$0xff]
        %v6959 = vld [vmem:[#allocation2 + $0x60] sm:$0xff]
        %v6960 = vld [vmem:[#allocation2 + $0x68] sm:$0xff]
        %v6961 = vld [vmem:[#allocation2 + $0x70] sm:$0xff]
        %v6962 = vld [vmem:[#allocation2 + $0x78] sm:$0xff]
        %v6963 = vld [vmem:[#allocation2 + $0x80] sm:$0xff]
        %v6964 = vsel %vm483, %v6947, 0
        %v6965 = vsel %vm484, %v6948, 0
        %v6966 = vsel %vm484, %v6949, 0
        %v6967 = vsel %vm484, %v6950, 0
        %v6968 = vsel %vm484, %v6951, 0
        %v6969 = vsel %vm484, %v6952, 0
        %v6970 = vsel %vm484, %v6953, 0
        %v6971 = vsel %vm484, %v6954, 0
        %v6972 = vsel %vm484, %v6955, 0
        %v6973 = vsel %vm484, %v6956, 0
        %v6974 = vsel %vm484, %v6957, 0
        %v6975 = vsel %vm484, %v6958, 0
        %v6976 = vsel %vm484, %v6959, 0
        %v6977 = vsel %vm484, %v6960, 0
        %v6978 = vsel %vm484, %v6961, 0
        %v6979 = vsel %vm484, %v6962, 0
        %v6980 = vsel %vm485, %v6963, 0
        %v6982 = vshll.u32 %v6948, 16
        %v6984 = vrot.slane %v6982, 1
        %v6985 = vshrl.u32 %v6948, 16
        %v6987 = vor.u32 %v6985, %v6984
        %v6989 = vshll.u32 %v6949, 16
        %v6991 = vrot.slane %v6989, 1
        %v6992 = vsel %vm474, %v6987, %v6991
        %v6993 = vshrl.u32 %v6949, 16
        %v6995 = vor.u32 %v6993, %v6991
        %v6997 = vshll.u32 %v6950, 16
        %v6999 = vrot.slane %v6997, 1
        %v7000 = vsel %vm474, %v6995, %v6999
        %v7001 = vshrl.u32 %v6950, 16
        %v7003 = vor.u32 %v7001, %v6999
        %v7005 = vshll.u32 %v6951, 16
        %v7007 = vrot.slane %v7005, 1
        %v7008 = vsel %vm474, %v7003, %v7007
        %v7009 = vshrl.u32 %v6951, 16
        %v7011 = vor.u32 %v7009, %v7007
        %v7013 = vshll.u32 %v6952, 16
        %v7015 = vrot.slane %v7013, 1
        %v7016 = vsel %vm474, %v7011, %v7015
        %v7017 = vshrl.u32 %v6952, 16
        %v7019 = vor.u32 %v7017, %v7015
        %v7021 = vshll.u32 %v6953, 16
        %v7023 = vrot.slane %v7021, 1
        %v7024 = vsel %vm474, %v7019, %v7023
        %v7025 = vshrl.u32 %v6953, 16
        %v7027 = vor.u32 %v7025, %v7023
        %v7029 = vshll.u32 %v6954, 16
        %v7031 = vrot.slane %v7029, 1
        %v7032 = vsel %vm474, %v7027, %v7031
        %v7033 = vshrl.u32 %v6954, 16
        %v7035 = vor.u32 %v7033, %v7031
        %v7037 = vshll.u32 %v6955, 16
        %v7039 = vrot.slane %v7037, 1
        %v7040 = vsel %vm474, %v7035, %v7039
        %v7041 = vshrl.u32 %v6955, 16
        %v7043 = vor.u32 %v7041, %v7039
        %v7045 = vshll.u32 %v6956, 16
        %v7047 = vrot.slane %v7045, 1
        %v7048 = vsel %vm474, %v7043, %v7047
        %v7049 = vshrl.u32 %v6956, 16
        %v7051 = vor.u32 %v7049, %v7047
        %v7053 = vshll.u32 %v6957, 16
        %v7055 = vrot.slane %v7053, 1
        %v7056 = vsel %vm474, %v7051, %v7055
        %v7057 = vshrl.u32 %v6957, 16
        %v7059 = vor.u32 %v7057, %v7055
        %v7061 = vshll.u32 %v6958, 16
        %v7063 = vrot.slane %v7061, 1
        %v7064 = vsel %vm474, %v7059, %v7063
        %v7065 = vshrl.u32 %v6958, 16
        %v7067 = vor.u32 %v7065, %v7063
        %v7069 = vshll.u32 %v6959, 16
        %v7071 = vrot.slane %v7069, 1
        %v7072 = vsel %vm474, %v7067, %v7071
        %v7073 = vshrl.u32 %v6959, 16
        %v7075 = vor.u32 %v7073, %v7071
        %v7077 = vshll.u32 %v6960, 16
        %v7079 = vrot.slane %v7077, 1
        %v7080 = vsel %vm474, %v7075, %v7079
        %v7081 = vshrl.u32 %v6960, 16
        %v7083 = vor.u32 %v7081, %v7079
        %v7085 = vshll.u32 %v6961, 16
        %v7087 = vrot.slane %v7085, 1
        %v7088 = vsel %vm474, %v7083, %v7087
        %v7089 = vshrl.u32 %v6961, 16
        %v7091 = vor.u32 %v7089, %v7087
        %v7093 = vshll.u32 %v6962, 16
        %v7095 = vrot.slane %v7093, 1
        %v7096 = vsel %vm474, %v7091, %v7095
        %v7097 = vshrl.u32 %v6962, 16
        %v7099 = vor.u32 %v7097, %v7095
        %v7101 = vshll.u32 %v6963, 16
        %v7103 = vrot.slane %v7101, 1
        %v7104 = vsel %vm474, %v7099, %v7103
        %v7105 = vshrl.u32 %v6963, 16
        %v7107 = vor.u32 %v7105, %v7103
        %s7108 = scalar_lea.vmem [#allocation6], 1152
        %v7109 = vld [vmem:[%s7108] sm:$0xf]
        %v7110 = vld [vmem:[%s7108 + $0x4] sm:$0xf]
        %v7111 = vld [vmem:[%s7108 + $0x8] sm:$0xf]
        %v7112 = vld [vmem:[%s7108 + $0xc] sm:$0xf]
        %v7113 = vld [vmem:[%s7108 + $0x10] sm:$0xf]
        %v7114 = vld [vmem:[%s7108 + $0x14] sm:$0xf]
        %v7115 = vld [vmem:[%s7108 + $0x18] sm:$0xf]
        %v7116 = vld [vmem:[%s7108 + $0x1c] sm:$0xf]
        %v7117 = vld [vmem:[%s7108 + $0x20] sm:$0xf]
        %v7118 = vld [vmem:[%s7108 + $0x24] sm:$0xf]
        %v7119 = vld [vmem:[%s7108 + $0x28] sm:$0xf]
        %v7120 = vld [vmem:[%s7108 + $0x2c] sm:$0xf]
        %v7121 = vld [vmem:[%s7108 + $0x30] sm:$0xf]
        %v7122 = vld [vmem:[%s7108 + $0x34] sm:$0xf]
        %v7123 = vld [vmem:[%s7108 + $0x38] sm:$0xf]
        %v7124 = vld [vmem:[%s7108 + $0x3c] sm:$0xf]
        %v7125 = vld [vmem:[%s7108 + $0x40] sm:$0xf]
        %v7126 = vld [vmem:[%s7108 + $0x44] sm:$0xf]
        %v7127 = vld [vmem:[%s7108 + $0x48] sm:$0xf]
        %v7128 = vld [vmem:[%s7108 + $0x4c] sm:$0xf]
        %v7129 = vld [vmem:[%s7108 + $0x50] sm:$0xf]
        %v7130 = vld [vmem:[%s7108 + $0x54] sm:$0xf]
        %v7131 = vld [vmem:[%s7108 + $0x58] sm:$0xf]
        %v7132 = vld [vmem:[%s7108 + $0x5c] sm:$0xf]
        %v7133 = vld [vmem:[%s7108 + $0x60] sm:$0xf]
        %v7134 = vld [vmem:[%s7108 + $0x64] sm:$0xf]
        %v7135 = vld [vmem:[%s7108 + $0x68] sm:$0xf]
        %v7136 = vld [vmem:[%s7108 + $0x6c] sm:$0xf]
        %v7137 = vld [vmem:[%s7108 + $0x70] sm:$0xf]
        %v7138 = vld [vmem:[%s7108 + $0x74] sm:$0xf]
        %v7139 = vld [vmem:[%s7108 + $0x78] sm:$0xf]
        %v7140 = vld [vmem:[%s7108 + $0x7c] sm:$0xf]
        %v7141 = vld [vmem:[#allocation2 + $0x88] sm:$0x1]
        %v7142 = vsel %vm679, %v6948, 0
        %v7143 = vsel %vm680, %v6949, 0
        %v7144 = vsel %vm680, %v6950, 0
        %v7145 = vsel %vm680, %v6951, 0
        %v7146 = vsel %vm680, %v6952, 0
        %v7147 = vsel %vm680, %v6953, 0
        %v7148 = vsel %vm680, %v6954, 0
        %v7149 = vsel %vm680, %v6955, 0
        %v7150 = vsel %vm680, %v6956, 0
        %v7151 = vsel %vm680, %v6957, 0
        %v7152 = vsel %vm680, %v6958, 0
        %v7153 = vsel %vm680, %v6959, 0
        %v7154 = vsel %vm680, %v6960, 0
        %v7155 = vsel %vm680, %v6961, 0
        %v7156 = vsel %vm680, %v6962, 0
        %v7157 = vsel %vm680, %v6963, 0
        %v7158 = vsel %vm681, %v7141, 0
        %v7159 = vld [vmem:[#allocation2 + $0x8] sm:$0x80]
        %v7160 = vld [vmem:[#allocation2 + $0x88] sm:$0xff]
        %v7161 = vsel %vm483, %v7159, 0
        %v7162 = vsel %vm484, %v6963, 0
        %v7163 = vsel %vm485, %v7160, 0
        %v7181 = vrot.slane %v7161, 7
        %v7182 = vrot.slane %v6966, 7
        %v7183 = vsel %vm721, %v7181, %v7182
        %v7184 = vrot.slane %v6967, 7
        %v7185 = vsel %vm721, %v7182, %v7184
        %v7186 = vrot.slane %v6968, 7
        %v7187 = vsel %vm721, %v7184, %v7186
        %v7188 = vrot.slane %v6969, 7
        %v7189 = vsel %vm721, %v7186, %v7188
        %v7190 = vrot.slane %v6970, 7
        %v7191 = vsel %vm721, %v7188, %v7190
        %v7192 = vrot.slane %v6971, 7
        %v7193 = vsel %vm721, %v7190, %v7192
        %v7194 = vrot.slane %v6972, 7
        %v7195 = vsel %vm721, %v7192, %v7194
        %v7196 = vrot.slane %v6973, 7
        %v7197 = vsel %vm721, %v7194, %v7196
        %v7198 = vrot.slane %v6974, 7
        %v7199 = vsel %vm721, %v7196, %v7198
        %v7200 = vrot.slane %v6975, 7
        %v7201 = vsel %vm721, %v7198, %v7200
        %v7202 = vrot.slane %v6976, 7
        %v7203 = vsel %vm721, %v7200, %v7202
        %v7204 = vrot.slane %v6977, 7
        %v7205 = vsel %vm721, %v7202, %v7204
        %v7206 = vrot.slane %v6978, 7
        %v7207 = vsel %vm721, %v7204, %v7206
        %v7208 = vrot.slane %v6979, 7
        %v7209 = vsel %vm721, %v7206, %v7208
        %v7210 = vrot.slane %v7162, 7
        %v7211 = vsel %vm721, %v7208, %v7210
        %v7212 = vrot.slane %v7163, 7
        %v7213 = vsel %vm721, %v7210, %v7212
        %v7214 = vld [vmem:[%s7108 + $0x80] sm:$0xf]
        %v7215 = vld [vmem:[%s7108 + $0x84] sm:$0xf]
        %v7216 = vld [vmem:[%s7108 + $0x88] sm:$0xf]
        %v7217 = vld [vmem:[%s7108 + $0x8c] sm:$0xf]
        %v7218 = vld [vmem:[%s7108 + $0x90] sm:$0xf]
        %v7219 = vld [vmem:[%s7108 + $0x94] sm:$0xf]
        %v7220 = vld [vmem:[%s7108 + $0x98] sm:$0xf]
        %v7221 = vld [vmem:[%s7108 + $0x9c] sm:$0xf]
        %v7222 = vld [vmem:[%s7108 + $0xa0] sm:$0xf]
        %v7223 = vld [vmem:[%s7108 + $0xa4] sm:$0xf]
        %v7224 = vld [vmem:[%s7108 + $0xa8] sm:$0xf]
        %v7225 = vld [vmem:[%s7108 + $0xac] sm:$0xf]
        %v7226 = vld [vmem:[%s7108 + $0xb0] sm:$0xf]
        %v7227 = vld [vmem:[%s7108 + $0xb4] sm:$0xf]
        %v7228 = vld [vmem:[%s7108 + $0xb8] sm:$0xf]
        %v7229 = vld [vmem:[%s7108 + $0xbc] sm:$0xf]
        %v7230 = vld [vmem:[%s7108 + $0xc0] sm:$0xf]
        %v7231 = vld [vmem:[%s7108 + $0xc4] sm:$0xf]
        %v7232 = vld [vmem:[%s7108 + $0xc8] sm:$0xf]
        %v7233 = vld [vmem:[%s7108 + $0xcc] sm:$0xf]
        %v7234 = vld [vmem:[%s7108 + $0xd0] sm:$0xf]
        %v7235 = vld [vmem:[%s7108 + $0xd4] sm:$0xf]
        %v7236 = vld [vmem:[%s7108 + $0xd8] sm:$0xf]
        %v7237 = vld [vmem:[%s7108 + $0xdc] sm:$0xf]
        %v7238 = vld [vmem:[%s7108 + $0xe0] sm:$0xf]
        %v7239 = vld [vmem:[%s7108 + $0xe4] sm:$0xf]
        %v7240 = vld [vmem:[%s7108 + $0xe8] sm:$0xf]
        %v7241 = vld [vmem:[%s7108 + $0xec] sm:$0xf]
        %v7242 = vld [vmem:[%s7108 + $0xf0] sm:$0xf]
        %v7243 = vld [vmem:[%s7108 + $0xf4] sm:$0xf]
        %v7244 = vld [vmem:[%s7108 + $0xf8] sm:$0xf]
        %v7245 = vld [vmem:[%s7108 + $0xfc] sm:$0xf]
        %v7247 = vshrl.u32 %v7142, 16
        %v7249 = vshll.u32 %v7142, 16
        %v7251 = vrot.slane %v7249, 1
        %v7252 = vor.u32 %v7247, %v7251
        %v7254 = vshll.u32 %v7143, 16
        %v7256 = vrot.slane %v7254, 1
        %v7257 = vsel %vm474, %v7252, %v7256
        %v7259 = vshrl.u32 %v7183, 16
        %v7261 = vshll.u32 %v7183, 16
        %v7263 = vrot.slane %v7261, 1
        %v7264 = vor.u32 %v7259, %v7263
        %v7266 = vshll.u32 %v7185, 16
        %v7268 = vrot.slane %v7266, 1
        %v7269 = vsel %vm474, %v7264, %v7268
        %v7270 = vshrl.u32 %v7143, 16
        %v7272 = vor.u32 %v7270, %v7256
        %v7274 = vshll.u32 %v7144, 16
        %v7276 = vrot.slane %v7274, 1
        %v7277 = vsel %vm474, %v7272, %v7276
        %v7278 = vshrl.u32 %v7185, 16
        %v7280 = vor.u32 %v7278, %v7268
        %v7282 = vshll.u32 %v7187, 16
        %v7284 = vrot.slane %v7282, 1
        %v7285 = vsel %vm474, %v7280, %v7284
        %v7286 = vshrl.u32 %v7144, 16
        %v7288 = vor.u32 %v7286, %v7276
        %v7290 = vshll.u32 %v7145, 16
        %v7292 = vrot.slane %v7290, 1
        %v7293 = vsel %vm474, %v7288, %v7292
        %v7294 = vshrl.u32 %v7187, 16
        %v7296 = vor.u32 %v7294, %v7284
        %v7298 = vshll.u32 %v7189, 16
        %v7300 = vrot.slane %v7298, 1
        %v7301 = vsel %vm474, %v7296, %v7300
        %v7302 = vshrl.u32 %v7145, 16
        %v7304 = vor.u32 %v7302, %v7292
        %v7306 = vshll.u32 %v7146, 16
        %v7308 = vrot.slane %v7306, 1
        %v7309 = vsel %vm474, %v7304, %v7308
        %v7310 = vshrl.u32 %v7189, 16
        %v7312 = vor.u32 %v7310, %v7300
        %v7314 = vshll.u32 %v7191, 16
        %v7316 = vrot.slane %v7314, 1
        %v7317 = vsel %vm474, %v7312, %v7316
        %v7318 = vshrl.u32 %v7146, 16
        %v7320 = vor.u32 %v7318, %v7308
        %v7322 = vshll.u32 %v7147, 16
        %v7324 = vrot.slane %v7322, 1
        %v7325 = vsel %vm474, %v7320, %v7324
        %v7326 = vshrl.u32 %v7191, 16
        %v7328 = vor.u32 %v7326, %v7316
        %v7330 = vshll.u32 %v7193, 16
        %v7332 = vrot.slane %v7330, 1
        %v7333 = vsel %vm474, %v7328, %v7332
        %v7334 = vshrl.u32 %v7147, 16
        %v7336 = vor.u32 %v7334, %v7324
        %v7338 = vshll.u32 %v7148, 16
        %v7340 = vrot.slane %v7338, 1
        %v7341 = vsel %vm474, %v7336, %v7340
        %v7342 = vshrl.u32 %v7193, 16
        %v7344 = vor.u32 %v7342, %v7332
        %v7346 = vshll.u32 %v7195, 16
        %v7348 = vrot.slane %v7346, 1
        %v7349 = vsel %vm474, %v7344, %v7348
        %v7350 = vshrl.u32 %v7148, 16
        %v7352 = vor.u32 %v7350, %v7340
        %v7354 = vshll.u32 %v7149, 16
        %v7356 = vrot.slane %v7354, 1
        %v7357 = vsel %vm474, %v7352, %v7356
        %v7358 = vshrl.u32 %v7195, 16
        %v7360 = vor.u32 %v7358, %v7348
        %v7362 = vshll.u32 %v7197, 16
        %v7364 = vrot.slane %v7362, 1
        %v7365 = vsel %vm474, %v7360, %v7364
        %v7366 = vshrl.u32 %v7149, 16
        %v7368 = vor.u32 %v7366, %v7356
        %v7370 = vshll.u32 %v7150, 16
        %v7372 = vrot.slane %v7370, 1
        %v7373 = vsel %vm474, %v7368, %v7372
        %v7374 = vshrl.u32 %v7197, 16
        %v7376 = vor.u32 %v7374, %v7364
        %v7378 = vshll.u32 %v7199, 16
        %v7380 = vrot.slane %v7378, 1
        %v7381 = vsel %vm474, %v7376, %v7380
        %v7382 = vshrl.u32 %v7150, 16
        %v7384 = vor.u32 %v7382, %v7372
        %v7386 = vshll.u32 %v7151, 16
        %v7388 = vrot.slane %v7386, 1
        %v7389 = vsel %vm474, %v7384, %v7388
        %v7390 = vshrl.u32 %v7199, 16
        %v7392 = vor.u32 %v7390, %v7380
        %v7394 = vshll.u32 %v7201, 16
        %v7396 = vrot.slane %v7394, 1
        %v7397 = vsel %vm474, %v7392, %v7396
        %v7398 = vshrl.u32 %v7151, 16
        %v7400 = vor.u32 %v7398, %v7388
        %v7402 = vshll.u32 %v7152, 16
        %v7404 = vrot.slane %v7402, 1
        %v7405 = vsel %vm474, %v7400, %v7404
        %v7406 = vshrl.u32 %v7201, 16
        %v7408 = vor.u32 %v7406, %v7396
        %v7410 = vshll.u32 %v7203, 16
        %v7412 = vrot.slane %v7410, 1
        %v7413 = vsel %vm474, %v7408, %v7412
        %v7414 = vshrl.u32 %v7152, 16
        %v7416 = vor.u32 %v7414, %v7404
        %v7418 = vshll.u32 %v7153, 16
        %v7420 = vrot.slane %v7418, 1
        %v7421 = vsel %vm474, %v7416, %v7420
        %v7422 = vshrl.u32 %v7203, 16
        %v7424 = vor.u32 %v7422, %v7412
        %v7426 = vshll.u32 %v7205, 16
        %v7428 = vrot.slane %v7426, 1
        %v7429 = vsel %vm474, %v7424, %v7428
        %v7430 = vshrl.u32 %v7153, 16
        %v7432 = vor.u32 %v7430, %v7420
        %v7434 = vshll.u32 %v7154, 16
        %v7436 = vrot.slane %v7434, 1
        %v7437 = vsel %vm474, %v7432, %v7436
        %v7438 = vshrl.u32 %v7205, 16
        %v7440 = vor.u32 %v7438, %v7428
        %v7442 = vshll.u32 %v7207, 16
        %v7444 = vrot.slane %v7442, 1
        %v7445 = vsel %vm474, %v7440, %v7444
        %v7446 = vshrl.u32 %v7154, 16
        %v7448 = vor.u32 %v7446, %v7436
        %v7450 = vshll.u32 %v7155, 16
        %v7452 = vrot.slane %v7450, 1
        %v7453 = vsel %vm474, %v7448, %v7452
        %v7454 = vshrl.u32 %v7207, 16
        %v7456 = vor.u32 %v7454, %v7444
        %v7458 = vshll.u32 %v7209, 16
        %v7460 = vrot.slane %v7458, 1
        %v7461 = vsel %vm474, %v7456, %v7460
        %v7462 = vshrl.u32 %v7155, 16
        %v7464 = vor.u32 %v7462, %v7452
        %v7466 = vshll.u32 %v7156, 16
        %v7468 = vrot.slane %v7466, 1
        %v7469 = vsel %vm474, %v7464, %v7468
        %v7470 = vshrl.u32 %v7209, 16
        %v7472 = vor.u32 %v7470, %v7460
        %v7474 = vshll.u32 %v7211, 16
        %v7476 = vrot.slane %v7474, 1
        %v7477 = vsel %vm474, %v7472, %v7476
        %v7478 = vshrl.u32 %v7156, 16
        %v7480 = vor.u32 %v7478, %v7468
        %v7482 = vshll.u32 %v7157, 16
        %v7484 = vrot.slane %v7482, 1
        %v7485 = vsel %vm474, %v7480, %v7484
        %v7486 = vshrl.u32 %v7211, 16
        %v7488 = vor.u32 %v7486, %v7476
        %v7490 = vshll.u32 %v7213, 16
        %v7492 = vrot.slane %v7490, 1
        %v7493 = vsel %vm474, %v7488, %v7492
        %v7494 = vshrl.u32 %v7157, 16
        %v7496 = vor.u32 %v7494, %v7484
        %v7498 = vshll.u32 %v7158, 16
        %v7500 = vrot.slane %v7498, 1
        %v7501 = vsel %vm474, %v7496, %v7500
        %v7502 = vshrl.u32 %v7213, 16
        %v7504 = vor.u32 %v7502, %v7492
        %v7506 = vshll.u32 %v7212, 16
        %v7508 = vrot.slane %v7506, 1
        %v7509 = vsel %vm474, %v7504, %v7508
        %v7574 = vunpack.c.l.b16 %v7214
        %v7575 = vunpack.c.l.b16 %v7215
        %v7576 = vunpack.c.l.b16 %v7216
        %v7577 = vunpack.c.l.b16 %v7217
        %v7578 = vunpack.c.l.b16 %v7218
        %v7579 = vunpack.c.l.b16 %v7219
        %v7580 = vunpack.c.l.b16 %v7220
        %v7581 = vunpack.c.l.b16 %v7221
        %v7582 = vunpack.c.l.b16 %v7222
        %v7583 = vunpack.c.l.b16 %v7223
        %v7584 = vunpack.c.l.b16 %v7224
        %v7585 = vunpack.c.l.b16 %v7225
        %v7586 = vunpack.c.l.b16 %v7226
        %v7587 = vunpack.c.l.b16 %v7227
        %v7588 = vunpack.c.l.b16 %v7228
        %v7589 = vunpack.c.l.b16 %v7229
        %v7590 = vunpack.c.l.b16 %v7230
        %v7591 = vunpack.c.l.b16 %v7231
        %v7592 = vunpack.c.l.b16 %v7232
        %v7593 = vunpack.c.l.b16 %v7233
        %v7594 = vunpack.c.l.b16 %v7234
        %v7595 = vunpack.c.l.b16 %v7235
        %v7596 = vunpack.c.l.b16 %v7236
        %v7597 = vunpack.c.l.b16 %v7237
        %v7598 = vunpack.c.l.b16 %v7238
        %v7599 = vunpack.c.l.b16 %v7239
        %v7600 = vunpack.c.l.b16 %v7240
        %v7601 = vunpack.c.l.b16 %v7241
        %v7602 = vunpack.c.l.b16 %v7242
        %v7603 = vunpack.c.l.b16 %v7243
        %v7604 = vunpack.c.l.b16 %v7244
        %v7605 = vunpack.c.l.b16 %v7245
        %v7606 = vpack.c.b16 %v7575, %v7574
        %v7607 = vpack.c.b16 %v7577, %v7576
        %v7608 = vpack.c.b16 %v7579, %v7578
        %v7609 = vpack.c.b16 %v7581, %v7580
        %v7610 = vpack.c.b16 %v7583, %v7582
        %v7611 = vpack.c.b16 %v7585, %v7584
        %v7612 = vpack.c.b16 %v7587, %v7586
        %v7613 = vpack.c.b16 %v7589, %v7588
        %v7614 = vpack.c.b16 %v7591, %v7590
        %v7615 = vpack.c.b16 %v7593, %v7592
        %v7616 = vpack.c.b16 %v7595, %v7594
        %v7617 = vpack.c.b16 %v7597, %v7596
        %v7618 = vpack.c.b16 %v7599, %v7598
        %v7619 = vpack.c.b16 %v7601, %v7600
        %v7620 = vpack.c.b16 %v7603, %v7602
        %v7621 = vpack.c.b16 %v7605, %v7604
        %7638 = vmatprep.subr.bf16.mxu0 0
        %7639 = vmatpush1.bf16.msra.mxu0 %v7606
        %7640 = vmatprep.subr.bf16.mxu0 0
        %7641 = vmatpush1.bf16.msra.mxu0 %v7607
        %7642 = vmatprep.subr.bf16.mxu0 0
        %7643 = vmatpush1.bf16.msra.mxu0 %v7608
        %7644 = vmatprep.subr.bf16.mxu0 0
        %7645 = vmatpush1.bf16.msra.mxu0 %v7609
        %7646 = vmatprep.subr.bf16.mxu0 0
        %7647 = vmatpush1.bf16.msra.mxu0 %v7610
        %7648 = vmatprep.subr.bf16.mxu0 0
        %7649 = vmatpush1.bf16.msra.mxu0 %v7611
        %7650 = vmatprep.subr.bf16.mxu0 0
        %7651 = vmatpush1.bf16.msra.mxu0 %v7612
        %7652 = vmatprep.subr.bf16.mxu0 0
        %7653 = vmatpush1.bf16.msra.mxu0 %v7613
        %7654 = vmatprep.subr.bf16.mxu0 0
        %7655 = vmatpush1.bf16.msra.mxu0 %v7614
        %7656 = vmatprep.subr.bf16.mxu0 0
        %7657 = vmatpush1.bf16.msra.mxu0 %v7615
        %7658 = vmatprep.subr.bf16.mxu0 0
        %7659 = vmatpush1.bf16.msra.mxu0 %v7616
        %7660 = vmatprep.subr.bf16.mxu0 0
        %7661 = vmatpush1.bf16.msra.mxu0 %v7617
        %7662 = vmatprep.subr.bf16.mxu0 0
        %7663 = vmatpush1.bf16.msra.mxu0 %v7618
        %7664 = vmatprep.subr.bf16.mxu0 0
        %7665 = vmatpush1.bf16.msra.mxu0 %v7619
        %7666 = vmatprep.subr.bf16.mxu0 0
        %7667 = vmatpush1.bf16.msra.mxu0 %v7620
        %7668 = vmatprep.subr.bf16.mxu0 0
        %7669 = vmatpush1.bf16.msra.mxu0 %v7621
        %7670 = vmatprep.mubr.bf16.mxu0 %v7269
        %7671 = vmatmul.mubr.bf16.gmra.mrb[0].mxu0 %v7257
        %v7672 = vpop.f32.mrb[0].mxu0
        %v7673 = vadd.f32 0.0, %v7672
        %v7674 = vpop.f32.mrb[0].mxu0
        %v7675 = vpop.f32.mrb[0].mxu0
        %v7676 = vadd.f32 0.0, %v7675
        %v7677 = vpop.f32.mrb[0].mxu0
        %7678 = vmatprep.mubr.bf16.mxu0 %v7285
        %7679 = vmatmul.mubr.bf16.gmra.mrb[0].mxu0 %v7277
        %v7680 = vpop.f32.mrb[0].mxu0
        %v7681 = vadd.f32 0.0, %v7680
        %v7682 = vpop.f32.mrb[0].mxu0
        %v7683 = vpop.f32.mrb[0].mxu0
        %v7684 = vadd.f32 0.0, %v7683
        %v7685 = vpop.f32.mrb[0].mxu0
        %7686 = vmatprep.mubr.bf16.mxu0 %v7301
        %7687 = vmatmul.mubr.bf16.gmra.mrb[0].mxu0 %v7293
        %v7688 = vpop.f32.mrb[0].mxu0
        %v7689 = vadd.f32 0.0, %v7688
        %v7690 = vpop.f32.mrb[0].mxu0
        %v7691 = vpop.f32.mrb[0].mxu0
        %v7692 = vadd.f32 0.0, %v7691
        %v7693 = vpop.f32.mrb[0].mxu0
        %7694 = vmatprep.mubr.bf16.mxu0 %v7317
        %7695 = vmatmul.mubr.bf16.gmra.mrb[0].mxu0 %v7309
        %v7696 = vpop.f32.mrb[0].mxu0
        %v7697 = vadd.f32 0.0, %v7696
        %v7698 = vpop.f32.mrb[0].mxu0
        %v7699 = vpop.f32.mrb[0].mxu0
        %v7700 = vadd.f32 0.0, %v7699
        %v7701 = vpop.f32.mrb[0].mxu0
        %7702 = vmatprep.mubr.bf16.mxu0 %v7333
        %7703 = vmatmul.mubr.bf16.gmra.mrb[0].mxu0 %v7325
        %v7704 = vpop.f32.mrb[0].mxu0
        %v7705 = vadd.f32 0.0, %v7704
        %v7706 = vpop.f32.mrb[0].mxu0
        %v7707 = vpop.f32.mrb[0].mxu0
        %v7708 = vadd.f32 0.0, %v7707
        %v7709 = vpop.f32.mrb[0].mxu0
        %7710 = vmatprep.mubr.bf16.mxu0 %v7349
        %7711 = vmatmul.mubr.bf16.gmra.mrb[0].mxu0 %v7341
        %v7712 = vpop.f32.mrb[0].mxu0
        %v7713 = vadd.f32 0.0, %v7712
        %v7714 = vpop.f32.mrb[0].mxu0
        %v7715 = vpop.f32.mrb[0].mxu0
        %v7716 = vadd.f32 0.0, %v7715
        %v7717 = vpop.f32.mrb[0].mxu0
        %7718 = vmatprep.mubr.bf16.mxu0 %v7365
        %7719 = vmatmul.mubr.bf16.gmra.mrb[0].mxu0 %v7357
        %v7720 = vpop.f32.mrb[0].mxu0
        %v7721 = vadd.f32 0.0, %v7720
        %v7722 = vpop.f32.mrb[0].mxu0
        %v7723 = vpop.f32.mrb[0].mxu0
        %v7724 = vadd.f32 0.0, %v7723
        %v7725 = vpop.f32.mrb[0].mxu0
        %7726 = vmatprep.mubr.bf16.mxu0 %v7381
        %7727 = vmatmul.mubr.bf16.gmra.mrb[0].mxu0 %v7373
        %v7728 = vpop.f32.mrb[0].mxu0
        %v7729 = vadd.f32 0.0, %v7728
        %v7730 = vpop.f32.mrb[0].mxu0
        %v7731 = vpop.f32.mrb[0].mxu0
        %v7732 = vadd.f32 0.0, %v7731
        %v7733 = vpop.f32.mrb[0].mxu0
        %7734 = vmatprep.mubr.bf16.mxu0 %v7397
        %7735 = vmatmul.mubr.bf16.gmra.mrb[0].mxu0 %v7389
        %v7736 = vpop.f32.mrb[0].mxu0
        %v7737 = vadd.f32 0.0, %v7736
        %v7738 = vpop.f32.mrb[0].mxu0
        %v7739 = vpop.f32.mrb[0].mxu0
        %v7740 = vadd.f32 0.0, %v7739
        %v7741 = vpop.f32.mrb[0].mxu0
        %7742 = vmatprep.mubr.bf16.mxu0 %v7413
        %7743 = vmatmul.mubr.bf16.gmra.mrb[0].mxu0 %v7405
        %v7744 = vpop.f32.mrb[0].mxu0
        %v7745 = vadd.f32 0.0, %v7744
        %v7746 = vpop.f32.mrb[0].mxu0
        %v7747 = vpop.f32.mrb[0].mxu0
        %v7748 = vadd.f32 0.0, %v7747
        %v7749 = vpop.f32.mrb[0].mxu0
        %7750 = vmatprep.mubr.bf16.mxu0 %v7429
        %7751 = vmatmul.mubr.bf16.gmra.mrb[0].mxu0 %v7421
        %v7752 = vpop.f32.mrb[0].mxu0
        %v7753 = vadd.f32 0.0, %v7752
        %v7754 = vpop.f32.mrb[0].mxu0
        %v7755 = vpop.f32.mrb[0].mxu0
        %v7756 = vadd.f32 0.0, %v7755
        %v7757 = vpop.f32.mrb[0].mxu0
        %7758 = vmatprep.mubr.bf16.mxu0 %v7445
        %7759 = vmatmul.mubr.bf16.gmra.mrb[0].mxu0 %v7437
        %v7760 = vpop.f32.mrb[0].mxu0
        %v7761 = vadd.f32 0.0, %v7760
        %v7762 = vpop.f32.mrb[0].mxu0
        %v7763 = vpop.f32.mrb[0].mxu0
        %v7764 = vadd.f32 0.0, %v7763
        %v7765 = vpop.f32.mrb[0].mxu0
        %7766 = vmatprep.mubr.bf16.mxu0 %v7461
        %7767 = vmatmul.mubr.bf16.gmra.mrb[0].mxu0 %v7453
        %v7768 = vpop.f32.mrb[0].mxu0
        %v7769 = vadd.f32 0.0, %v7768
        %v7770 = vpop.f32.mrb[0].mxu0
        %v7771 = vpop.f32.mrb[0].mxu0
        %v7772 = vadd.f32 0.0, %v7771
        %v7773 = vpop.f32.mrb[0].mxu0
        %7774 = vmatprep.mubr.bf16.mxu0 %v7477
        %7775 = vmatmul.mubr.bf16.gmra.mrb[0].mxu0 %v7469
        %v7776 = vpop.f32.mrb[0].mxu0
        %v7777 = vadd.f32 0.0, %v7776
        %v7778 = vpop.f32.mrb[0].mxu0
        %v7779 = vpop.f32.mrb[0].mxu0
        %v7780 = vadd.f32 0.0, %v7779
        %v7781 = vpop.f32.mrb[0].mxu0
        %7782 = vmatprep.mubr.bf16.mxu0 %v7493
        %7783 = vmatmul.mubr.bf16.gmra.mrb[0].mxu0 %v7485
        %v7784 = vpop.f32.mrb[0].mxu0
        %v7785 = vadd.f32 0.0, %v7784
        %v7786 = vpop.f32.mrb[0].mxu0
        %v7787 = vpop.f32.mrb[0].mxu0
        %v7788 = vadd.f32 0.0, %v7787
        %v7789 = vpop.f32.mrb[0].mxu0
        %7790 = vmatprep.mubr.bf16.mxu0 %v7509
        %7791 = vmatmul.mubr.bf16.gmra.mrb[0].mxu0 %v7501
        %v7792 = vpop.f32.mrb[0].mxu0
        %v7793 = vadd.f32 0.0, %v7792
        %v7794 = vpop.f32.mrb[0].mxu0
        %v7795 = vpop.f32.mrb[0].mxu0
        %v7796 = vadd.f32 0.0, %v7795
        %v7797 = vpop.f32.mrb[0].mxu0
        %7798 = vdwg.mxu0
        %v7800 = vshrl.u32 %v6964, 16
        %v7802 = vrot.slane %v7800, 7
        %v7804 = vshrl.u32 %v6965, 16
        %v7806 = vrot.slane %v7804, 7
        %v7807 = vshll.u32 %v6965, 16
        %v7809 = vor.u32 %v7806, %v7807
        %v7810 = vsel %vm670, %v7802, %v7809
        %v7812 = vshrl.u32 %v6984, 16
        %v7814 = vrot.slane %v7812, 7
        %v7816 = vshrl.u32 %v6992, 16
        %v7818 = vrot.slane %v7816, 7
        %v7819 = vshll.u32 %v6992, 16
        %v7821 = vor.u32 %v7818, %v7819
        %v7822 = vsel %vm670, %v7814, %v7821
        %v7824 = vshrl.u32 %v6966, 16
        %v7826 = vrot.slane %v7824, 7
        %v7827 = vshll.u32 %v6966, 16
        %v7829 = vor.u32 %v7826, %v7827
        %v7830 = vsel %vm670, %v7806, %v7829
        %v7832 = vshrl.u32 %v7000, 16
        %v7834 = vrot.slane %v7832, 7
        %v7835 = vshll.u32 %v7000, 16
        %v7837 = vor.u32 %v7834, %v7835
        %v7838 = vsel %vm670, %v7818, %v7837
        %v7840 = vshrl.u32 %v6967, 16
        %v7842 = vrot.slane %v7840, 7
        %v7843 = vshll.u32 %v6967, 16
        %v7845 = vor.u32 %v7842, %v7843
        %v7846 = vsel %vm670, %v7826, %v7845
        %v7848 = vshrl.u32 %v7008, 16
        %v7850 = vrot.slane %v7848, 7
        %v7851 = vshll.u32 %v7008, 16
        %v7853 = vor.u32 %v7850, %v7851
        %v7854 = vsel %vm670, %v7834, %v7853
        %v7856 = vshrl.u32 %v6968, 16
        %v7858 = vrot.slane %v7856, 7
        %v7859 = vshll.u32 %v6968, 16
        %v7861 = vor.u32 %v7858, %v7859
        %v7862 = vsel %vm670, %v7842, %v7861
        %v7864 = vshrl.u32 %v7016, 16
        %v7866 = vrot.slane %v7864, 7
        %v7867 = vshll.u32 %v7016, 16
        %v7869 = vor.u32 %v7866, %v7867
        %v7870 = vsel %vm670, %v7850, %v7869
        %v7872 = vshrl.u32 %v6969, 16
        %v7874 = vrot.slane %v7872, 7
        %v7875 = vshll.u32 %v6969, 16
        %v7877 = vor.u32 %v7874, %v7875
        %v7878 = vsel %vm670, %v7858, %v7877
        %v7880 = vshrl.u32 %v7024, 16
        %v7882 = vrot.slane %v7880, 7
        %v7883 = vshll.u32 %v7024, 16
        %v7885 = vor.u32 %v7882, %v7883
        %v7886 = vsel %vm670, %v7866, %v7885
        %v7888 = vshrl.u32 %v6970, 16
        %v7890 = vrot.slane %v7888, 7
        %v7891 = vshll.u32 %v6970, 16
        %v7893 = vor.u32 %v7890, %v7891
        %v7894 = vsel %vm670, %v7874, %v7893
        %v7896 = vshrl.u32 %v7032, 16
        %v7898 = vrot.slane %v7896, 7
        %v7899 = vshll.u32 %v7032, 16
        %v7901 = vor.u32 %v7898, %v7899
        %v7902 = vsel %vm670, %v7882, %v7901
        %v7904 = vshrl.u32 %v6971, 16
        %v7906 = vrot.slane %v7904, 7
        %v7907 = vshll.u32 %v6971, 16
        %v7909 = vor.u32 %v7906, %v7907
        %v7910 = vsel %vm670, %v7890, %v7909
        %v7912 = vshrl.u32 %v7040, 16
        %v7914 = vrot.slane %v7912, 7
        %v7915 = vshll.u32 %v7040, 16
        %v7917 = vor.u32 %v7914, %v7915
        %v7918 = vsel %vm670, %v7898, %v7917
        %v7920 = vshrl.u32 %v6972, 16
        %v7922 = vrot.slane %v7920, 7
        %v7923 = vshll.u32 %v6972, 16
        %v7925 = vor.u32 %v7922, %v7923
        %v7926 = vsel %vm670, %v7906, %v7925
        %v7928 = vshrl.u32 %v7048, 16
        %v7930 = vrot.slane %v7928, 7
        %v7931 = vshll.u32 %v7048, 16
        %v7933 = vor.u32 %v7930, %v7931
        %v7934 = vsel %vm670, %v7914, %v7933
        %v7936 = vshrl.u32 %v6973, 16
        %v7938 = vrot.slane %v7936, 7
        %v7939 = vshll.u32 %v6973, 16
        %v7941 = vor.u32 %v7938, %v7939
        %v7942 = vsel %vm670, %v7922, %v7941
        %v7944 = vshrl.u32 %v7056, 16
        %v7946 = vrot.slane %v7944, 7
        %v7947 = vshll.u32 %v7056, 16
        %v7949 = vor.u32 %v7946, %v7947
        %v7950 = vsel %vm670, %v7930, %v7949
        %v7952 = vshrl.u32 %v6974, 16
        %v7954 = vrot.slane %v7952, 7
        %v7955 = vshll.u32 %v6974, 16
        %v7957 = vor.u32 %v7954, %v7955
        %v7958 = vsel %vm670, %v7938, %v7957
        %v7960 = vshrl.u32 %v7064, 16
        %v7962 = vrot.slane %v7960, 7
        %v7963 = vshll.u32 %v7064, 16
        %v7965 = vor.u32 %v7962, %v7963
        %v7966 = vsel %vm670, %v7946, %v7965
        %v7968 = vshrl.u32 %v6975, 16
        %v7970 = vrot.slane %v7968, 7
        %v7971 = vshll.u32 %v6975, 16
        %v7973 = vor.u32 %v7970, %v7971
        %v7974 = vsel %vm670, %v7954, %v7973
        %v7976 = vshrl.u32 %v7072, 16
        %v7978 = vrot.slane %v7976, 7
        %v7979 = vshll.u32 %v7072, 16
        %v7981 = vor.u32 %v7978, %v7979
        %v7982 = vsel %vm670, %v7962, %v7981
        %v7984 = vshrl.u32 %v6976, 16
        %v7986 = vrot.slane %v7984, 7
        %v7987 = vshll.u32 %v6976, 16
        %v7989 = vor.u32 %v7986, %v7987
        %v7990 = vsel %vm670, %v7970, %v7989
        %v7992 = vshrl.u32 %v7080, 16
        %v7994 = vrot.slane %v7992, 7
        %v7995 = vshll.u32 %v7080, 16
        %v7997 = vor.u32 %v7994, %v7995
        %v7998 = vsel %vm670, %v7978, %v7997
        %v8000 = vshrl.u32 %v6977, 16
        %v8002 = vrot.slane %v8000, 7
        %v8003 = vshll.u32 %v6977, 16
        %v8005 = vor.u32 %v8002, %v8003
        %v8006 = vsel %vm670, %v7986, %v8005
        %v8008 = vshrl.u32 %v7088, 16
        %v8010 = vrot.slane %v8008, 7
        %v8011 = vshll.u32 %v7088, 16
        %v8013 = vor.u32 %v8010, %v8011
        %v8014 = vsel %vm670, %v7994, %v8013
        %v8016 = vshrl.u32 %v6978, 16
        %v8018 = vrot.slane %v8016, 7
        %v8019 = vshll.u32 %v6978, 16
        %v8021 = vor.u32 %v8018, %v8019
        %v8022 = vsel %vm670, %v8002, %v8021
        %v8024 = vshrl.u32 %v7096, 16
        %v8026 = vrot.slane %v8024, 7
        %v8027 = vshll.u32 %v7096, 16
        %v8029 = vor.u32 %v8026, %v8027
        %v8030 = vsel %vm670, %v8010, %v8029
        %v8032 = vshrl.u32 %v6979, 16
        %v8034 = vrot.slane %v8032, 7
        %v8035 = vshll.u32 %v6979, 16
        %v8037 = vor.u32 %v8034, %v8035
        %v8038 = vsel %vm670, %v8018, %v8037
        %v8040 = vshrl.u32 %v7104, 16
        %v8042 = vrot.slane %v8040, 7
        %v8043 = vshll.u32 %v7104, 16
        %v8045 = vor.u32 %v8042, %v8043
        %v8046 = vsel %vm670, %v8026, %v8045
        %v8048 = vshrl.u32 %v6980, 16
        %v8050 = vrot.slane %v8048, 7
        %v8051 = vshll.u32 %v6980, 16
        %v8053 = vor.u32 %v8050, %v8051
        %v8054 = vsel %vm670, %v8034, %v8053
        %v8056 = vshrl.u32 %v7107, 16
        %v8058 = vrot.slane %v8056, 7
        %v8059 = vshll.u32 %v7107, 16
        %v8061 = vor.u32 %v8058, %v8059
        %v8062 = vsel %vm670, %v8042, %v8061
        %v8127 = vunpack.c.l.b16 %v7109
        %v8128 = vunpack.c.l.b16 %v7110
        %v8129 = vunpack.c.l.b16 %v7111
        %v8130 = vunpack.c.l.b16 %v7112
        %v8131 = vunpack.c.l.b16 %v7113
        %v8132 = vunpack.c.l.b16 %v7114
        %v8133 = vunpack.c.l.b16 %v7115
        %v8134 = vunpack.c.l.b16 %v7116
        %v8135 = vunpack.c.l.b16 %v7117
        %v8136 = vunpack.c.l.b16 %v7118
        %v8137 = vunpack.c.l.b16 %v7119
        %v8138 = vunpack.c.l.b16 %v7120
        %v8139 = vunpack.c.l.b16 %v7121
        %v8140 = vunpack.c.l.b16 %v7122
        %v8141 = vunpack.c.l.b16 %v7123
        %v8142 = vunpack.c.l.b16 %v7124
        %v8143 = vunpack.c.l.b16 %v7125
        %v8144 = vunpack.c.l.b16 %v7126
        %v8145 = vunpack.c.l.b16 %v7127
        %v8146 = vunpack.c.l.b16 %v7128
        %v8147 = vunpack.c.l.b16 %v7129
        %v8148 = vunpack.c.l.b16 %v7130
        %v8149 = vunpack.c.l.b16 %v7131
        %v8150 = vunpack.c.l.b16 %v7132
        %v8151 = vunpack.c.l.b16 %v7133
        %v8152 = vunpack.c.l.b16 %v7134
        %v8153 = vunpack.c.l.b16 %v7135
        %v8154 = vunpack.c.l.b16 %v7136
        %v8155 = vunpack.c.l.b16 %v7137
        %v8156 = vunpack.c.l.b16 %v7138
        %v8157 = vunpack.c.l.b16 %v7139
        %v8158 = vunpack.c.l.b16 %v7140
        %v8159 = vpack.c.b16 %v8128, %v8127
        %v8160 = vpack.c.b16 %v8130, %v8129
        %v8161 = vpack.c.b16 %v8132, %v8131
        %v8162 = vpack.c.b16 %v8134, %v8133
        %v8163 = vpack.c.b16 %v8136, %v8135
        %v8164 = vpack.c.b16 %v8138, %v8137
        %v8165 = vpack.c.b16 %v8140, %v8139
        %v8166 = vpack.c.b16 %v8142, %v8141
        %v8167 = vpack.c.b16 %v8144, %v8143
        %v8168 = vpack.c.b16 %v8146, %v8145
        %v8169 = vpack.c.b16 %v8148, %v8147
        %v8170 = vpack.c.b16 %v8150, %v8149
        %v8171 = vpack.c.b16 %v8152, %v8151
        %v8172 = vpack.c.b16 %v8154, %v8153
        %v8173 = vpack.c.b16 %v8156, %v8155
        %v8174 = vpack.c.b16 %v8158, %v8157
        %8191 = vmatprep.subr.bf16.mxu0 0
        %8192 = vmatpush1.bf16.msra.mxu0 %v8159
        %8193 = vmatprep.subr.bf16.mxu0 0
        %8194 = vmatpush1.bf16.msra.mxu0 %v8160
        %8195 = vmatprep.subr.bf16.mxu0 0
        %8196 = vmatpush1.bf16.msra.mxu0 %v8161
        %8197 = vmatprep.subr.bf16.mxu0 0
        %8198 = vmatpush1.bf16.msra.mxu0 %v8162
        %8199 = vmatprep.subr.bf16.mxu0 0
        %8200 = vmatpush1.bf16.msra.mxu0 %v8163
        %8201 = vmatprep.subr.bf16.mxu0 0
        %8202 = vmatpush1.bf16.msra.mxu0 %v8164
        %8203 = vmatprep.subr.bf16.mxu0 0
        %8204 = vmatpush1.bf16.msra.mxu0 %v8165
        %8205 = vmatprep.subr.bf16.mxu0 0
        %8206 = vmatpush1.bf16.msra.mxu0 %v8166
        %8207 = vmatprep.subr.bf16.mxu0 0
        %8208 = vmatpush1.bf16.msra.mxu0 %v8167
        %8209 = vmatprep.subr.bf16.mxu0 0
        %8210 = vmatpush1.bf16.msra.mxu0 %v8168
        %8211 = vmatprep.subr.bf16.mxu0 0
        %8212 = vmatpush1.bf16.msra.mxu0 %v8169
        %8213 = vmatprep.subr.bf16.mxu0 0
        %8214 = vmatpush1.bf16.msra.mxu0 %v8170
        %8215 = vmatprep.subr.bf16.mxu0 0
        %8216 = vmatpush1.bf16.msra.mxu0 %v8171
        %8217 = vmatprep.subr.bf16.mxu0 0
        %8218 = vmatpush1.bf16.msra.mxu0 %v8172
        %8219 = vmatprep.subr.bf16.mxu0 0
        %8220 = vmatpush1.bf16.msra.mxu0 %v8173
        %8221 = vmatprep.subr.bf16.mxu0 0
        %8222 = vmatpush1.bf16.msra.mxu0 %v8174
        %8223 = vmatprep.mubr.bf16.mxu0 %v7822
        %8224 = vmatmul.mubr.bf16.gmra.mrb[0].mxu0 %v7810
        %v8225 = vpop.f32.mrb[0].mxu0
        %v8226 = vadd.f32 %v7673, %v8225
        %v8227 = vpop.f32.mrb[0].mxu0
        %v8228 = vpop.f32.mrb[0].mxu0
        %v8229 = vadd.f32 %v7676, %v8228
        %v8230 = vpop.f32.mrb[0].mxu0
        %8231 = vmatprep.mubr.bf16.mxu0 %v7838
        %8232 = vmatmul.mubr.bf16.gmra.mrb[0].mxu0 %v7830
        %v8233 = vpop.f32.mrb[0].mxu0
        %v8234 = vadd.f32 %v7681, %v8233
        %v8235 = vpop.f32.mrb[0].mxu0
        %v8236 = vpop.f32.mrb[0].mxu0
        %v8237 = vadd.f32 %v7684, %v8236
        %v8238 = vpop.f32.mrb[0].mxu0
        %8239 = vmatprep.mubr.bf16.mxu0 %v7854
        %8240 = vmatmul.mubr.bf16.gmra.mrb[0].mxu0 %v7846
        %v8241 = vpop.f32.mrb[0].mxu0
        %v8242 = vadd.f32 %v7689, %v8241
        %v8243 = vpop.f32.mrb[0].mxu0
        %v8244 = vpop.f32.mrb[0].mxu0
        %v8245 = vadd.f32 %v7692, %v8244
        %v8246 = vpop.f32.mrb[0].mxu0
        %8247 = vmatprep.mubr.bf16.mxu0 %v7870
        %8248 = vmatmul.mubr.bf16.gmra.mrb[0].mxu0 %v7862
        %v8249 = vpop.f32.mrb[0].mxu0
        %v8250 = vadd.f32 %v7697, %v8249
        %v8251 = vpop.f32.mrb[0].mxu0
        %v8252 = vpop.f32.mrb[0].mxu0
        %v8253 = vadd.f32 %v7700, %v8252
        %v8254 = vpop.f32.mrb[0].mxu0
        %8255 = vmatprep.mubr.bf16.mxu0 %v7886
        %8256 = vmatmul.mubr.bf16.gmra.mrb[0].mxu0 %v7878
        %v8257 = vpop.f32.mrb[0].mxu0
        %v8258 = vadd.f32 %v7705, %v8257
        %v8259 = vpop.f32.mrb[0].mxu0
        %v8260 = vpop.f32.mrb[0].mxu0
        %v8261 = vadd.f32 %v7708, %v8260
        %v8262 = vpop.f32.mrb[0].mxu0
        %8263 = vmatprep.mubr.bf16.mxu0 %v7902
        %8264 = vmatmul.mubr.bf16.gmra.mrb[0].mxu0 %v7894
        %v8265 = vpop.f32.mrb[0].mxu0
        %v8266 = vadd.f32 %v7713, %v8265
        %v8267 = vpop.f32.mrb[0].mxu0
        %v8268 = vpop.f32.mrb[0].mxu0
        %v8269 = vadd.f32 %v7716, %v8268
        %v8270 = vpop.f32.mrb[0].mxu0
        %8271 = vmatprep.mubr.bf16.mxu0 %v7918
        %8272 = vmatmul.mubr.bf16.gmra.mrb[0].mxu0 %v7910
        %v8273 = vpop.f32.mrb[0].mxu0
        %v8274 = vadd.f32 %v7721, %v8273
        %v8275 = vpop.f32.mrb[0].mxu0
        %v8276 = vpop.f32.mrb[0].mxu0
        %v8277 = vadd.f32 %v7724, %v8276
        %v8278 = vpop.f32.mrb[0].mxu0
        %8279 = vmatprep.mubr.bf16.mxu0 %v7934
        %8280 = vmatmul.mubr.bf16.gmra.mrb[0].mxu0 %v7926
        %v8281 = vpop.f32.mrb[0].mxu0
        %v8282 = vadd.f32 %v7729, %v8281
        %v8283 = vpop.f32.mrb[0].mxu0
        %v8284 = vpop.f32.mrb[0].mxu0
        %v8285 = vadd.f32 %v7732, %v8284
        %v8286 = vpop.f32.mrb[0].mxu0
        %8287 = vmatprep.mubr.bf16.mxu0 %v7950
        %8288 = vmatmul.mubr.bf16.gmra.mrb[0].mxu0 %v7942
        %v8289 = vpop.f32.mrb[0].mxu0
        %v8290 = vadd.f32 %v7737, %v8289
        %v8291 = vpop.f32.mrb[0].mxu0
        %v8292 = vpop.f32.mrb[0].mxu0
        %v8293 = vadd.f32 %v7740, %v8292
        %v8294 = vpop.f32.mrb[0].mxu0
        %8295 = vmatprep.mubr.bf16.mxu0 %v7966
        %8296 = vmatmul.mubr.bf16.gmra.mrb[0].mxu0 %v7958
        %v8297 = vpop.f32.mrb[0].mxu0
        %v8298 = vadd.f32 %v7745, %v8297
        %v8299 = vpop.f32.mrb[0].mxu0
        %v8300 = vpop.f32.mrb[0].mxu0
        %v8301 = vadd.f32 %v7748, %v8300
        %v8302 = vpop.f32.mrb[0].mxu0
        %8303 = vmatprep.mubr.bf16.mxu0 %v7982
        %8304 = vmatmul.mubr.bf16.gmra.mrb[0].mxu0 %v7974
        %v8305 = vpop.f32.mrb[0].mxu0
        %v8306 = vadd.f32 %v7753, %v8305
        %v8307 = vpop.f32.mrb[0].mxu0
        %v8308 = vpop.f32.mrb[0].mxu0
        %v8309 = vadd.f32 %v7756, %v8308
        %v8310 = vpop.f32.mrb[0].mxu0
        %8311 = vmatprep.mubr.bf16.mxu0 %v7998
        %8312 = vmatmul.mubr.bf16.gmra.mrb[0].mxu0 %v7990
        %v8313 = vpop.f32.mrb[0].mxu0
        %v8314 = vadd.f32 %v7761, %v8313
        %v8315 = vpop.f32.mrb[0].mxu0
        %v8316 = vpop.f32.mrb[0].mxu0
        %v8317 = vadd.f32 %v7764, %v8316
        %v8318 = vpop.f32.mrb[0].mxu0
        %8319 = vmatprep.mubr.bf16.mxu0 %v8014
        %8320 = vmatmul.mubr.bf16.gmra.mrb[0].mxu0 %v8006
        %v8321 = vpop.f32.mrb[0].mxu0
        %v8322 = vadd.f32 %v7769, %v8321
        %v8323 = vpop.f32.mrb[0].mxu0
        %v8324 = vpop.f32.mrb[0].mxu0
        %v8325 = vadd.f32 %v7772, %v8324
        %v8326 = vpop.f32.mrb[0].mxu0
        %8327 = vmatprep.mubr.bf16.mxu0 %v8030
        %8328 = vmatmul.mubr.bf16.gmra.mrb[0].mxu0 %v8022
        %v8329 = vpop.f32.mrb[0].mxu0
        %v8330 = vadd.f32 %v7777, %v8329
        %v8331 = vpop.f32.mrb[0].mxu0
        %v8332 = vpop.f32.mrb[0].mxu0
        %v8333 = vadd.f32 %v7780, %v8332
        %v8334 = vpop.f32.mrb[0].mxu0
        %8335 = vmatprep.mubr.bf16.mxu0 %v8046
        %8336 = vmatmul.mubr.bf16.gmra.mrb[0].mxu0 %v8038
        %v8337 = vpop.f32.mrb[0].mxu0
        %v8338 = vadd.f32 %v7785, %v8337
        %v8339 = vpop.f32.mrb[0].mxu0
        %v8340 = vpop.f32.mrb[0].mxu0
        %v8341 = vadd.f32 %v7788, %v8340
        %v8342 = vpop.f32.mrb[0].mxu0
        %8343 = vmatprep.mubr.bf16.mxu0 %v8062
        %8344 = vmatmul.mubr.bf16.gmra.mrb[0].mxu0 %v8054
        %v8345 = vpop.f32.mrb[0].mxu0
        %v8346 = vadd.f32 %v7793, %v8345
        %v8347 = vpop.f32.mrb[0].mxu0
        %v8348 = vpop.f32.mrb[0].mxu0
        %v8349 = vadd.f32 %v7796, %v8348
        %v8350 = vpop.f32.mrb[0].mxu0
        %8351 = vdwg.mxu0
        %v8352 = vld [vmem:[#allocation2 + $0x10] sm:$0xff]
        %v8353 = vld [vmem:[#allocation2 + $0x18] sm:$0xff]
        %v8354 = vld [vmem:[#allocation2 + $0x20] sm:$0xff]
        %v8355 = vld [vmem:[#allocation2 + $0x28] sm:$0xff]
        %v8356 = vld [vmem:[#allocation2 + $0x30] sm:$0xff]
        %v8357 = vld [vmem:[#allocation2 + $0x38] sm:$0xff]
        %v8358 = vld [vmem:[#allocation2 + $0x40] sm:$0xff]
        %v8359 = vld [vmem:[#allocation2 + $0x48] sm:$0xff]
        %v8360 = vld [vmem:[#allocation2 + $0x50] sm:$0xff]
        %v8361 = vld [vmem:[#allocation2 + $0x58] sm:$0xff]
        %v8362 = vld [vmem:[#allocation2 + $0x60] sm:$0xff]
        %v8363 = vld [vmem:[#allocation2 + $0x68] sm:$0xff]
        %v8364 = vld [vmem:[#allocation2 + $0x70] sm:$0xff]
        %v8365 = vld [vmem:[#allocation2 + $0x78] sm:$0xff]
        %v8366 = vld [vmem:[#allocation2 + $0x80] sm:$0xff]
        %v8367 = vld [vmem:[#allocation2 + $0x88] sm:$0xff]
        %v8368 = vld [vmem:[#allocation2 + $0x90] sm:$0x1]
        %v8369 = vsel %vm679, %v8352, 0
        %v8370 = vsel %vm680, %v8353, 0
        %v8371 = vsel %vm680, %v8354, 0
        %v8372 = vsel %vm680, %v8355, 0
        %v8373 = vsel %vm680, %v8356, 0
        %v8374 = vsel %vm680, %v8357, 0
        %v8375 = vsel %vm680, %v8358, 0
        %v8376 = vsel %vm680, %v8359, 0
        %v8377 = vsel %vm680, %v8360, 0
        %v8378 = vsel %vm680, %v8361, 0
        %v8379 = vsel %vm680, %v8362, 0
        %v8380 = vsel %vm680, %v8363, 0
        %v8381 = vsel %vm680, %v8364, 0
        %v8382 = vsel %vm680, %v8365, 0
        %v8383 = vsel %vm680, %v8366, 0
        %v8384 = vsel %vm680, %v8367, 0
        %v8385 = vsel %vm681, %v8368, 0
        %v8387 = vshrl.u32 %v8369, 16
        %v8389 = vshll.u32 %v8369, 16
        %v8391 = vrot.slane %v8389, 1
        %v8392 = vor.u32 %v8387, %v8391
        %v8394 = vshll.u32 %v8370, 16
        %v8396 = vrot.slane %v8394, 1
        %v8397 = vsel %vm474, %v8392, %v8396
        %v8398 = vshrl.u32 %v8370, 16
        %v8400 = vor.u32 %v8398, %v8396
        %v8402 = vshll.u32 %v8371, 16
        %v8404 = vrot.slane %v8402, 1
        %v8405 = vsel %vm474, %v8400, %v8404
        %v8406 = vshrl.u32 %v8371, 16
        %v8408 = vor.u32 %v8406, %v8404
        %v8410 = vshll.u32 %v8372, 16
        %v8412 = vrot.slane %v8410, 1
        %v8413 = vsel %vm474, %v8408, %v8412
        %v8414 = vshrl.u32 %v8372, 16
        %v8416 = vor.u32 %v8414, %v8412
        %v8418 = vshll.u32 %v8373, 16
        %v8420 = vrot.slane %v8418, 1
        %v8421 = vsel %vm474, %v8416, %v8420
        %v8422 = vshrl.u32 %v8373, 16
        %v8424 = vor.u32 %v8422, %v8420
        %v8426 = vshll.u32 %v8374, 16
        %v8428 = vrot.slane %v8426, 1
        %v8429 = vsel %vm474, %v8424, %v8428
        %v8430 = vshrl.u32 %v8374, 16
        %v8432 = vor.u32 %v8430, %v8428
        %v8434 = vshll.u32 %v8375, 16
        %v8436 = vrot.slane %v8434, 1
        %v8437 = vsel %vm474, %v8432, %v8436
        %v8438 = vshrl.u32 %v8375, 16
        %v8440 = vor.u32 %v8438, %v8436
        %v8442 = vshll.u32 %v8376, 16
        %v8444 = vrot.slane %v8442, 1
        %v8445 = vsel %vm474, %v8440, %v8444
        %v8446 = vshrl.u32 %v8376, 16
        %v8448 = vor.u32 %v8446, %v8444
        %v8450 = vshll.u32 %v8377, 16
        %v8452 = vrot.slane %v8450, 1
        %v8453 = vsel %vm474, %v8448, %v8452
        %v8454 = vshrl.u32 %v8377, 16
        %v8456 = vor.u32 %v8454, %v8452
        %v8458 = vshll.u32 %v8378, 16
        %v8460 = vrot.slane %v8458, 1
        %v8461 = vsel %vm474, %v8456, %v8460
        %v8462 = vshrl.u32 %v8378, 16
        %v8464 = vor.u32 %v8462, %v8460
        %v8466 = vshll.u32 %v8379, 16
        %v8468 = vrot.slane %v8466, 1
        %v8469 = vsel %vm474, %v8464, %v8468
        %v8470 = vshrl.u32 %v8379, 16
        %v8472 = vor.u32 %v8470, %v8468
        %v8474 = vshll.u32 %v8380, 16
        %v8476 = vrot.slane %v8474, 1
        %v8477 = vsel %vm474, %v8472, %v8476
        %v8478 = vshrl.u32 %v8380, 16
        %v8480 = vor.u32 %v8478, %v8476
        %v8482 = vshll.u32 %v8381, 16
        %v8484 = vrot.slane %v8482, 1
        %v8485 = vsel %vm474, %v8480, %v8484
        %v8486 = vshrl.u32 %v8381, 16
        %v8488 = vor.u32 %v8486, %v8484
        %v8490 = vshll.u32 %v8382, 16
        %v8492 = vrot.slane %v8490, 1
        %v8493 = vsel %vm474, %v8488, %v8492
        %v8494 = vshrl.u32 %v8382, 16
        %v8496 = vor.u32 %v8494, %v8492
        %v8498 = vshll.u32 %v8383, 16
        %v8500 = vrot.slane %v8498, 1
        %v8501 = vsel %vm474, %v8496, %v8500
        %v8502 = vshrl.u32 %v8383, 16
        %v8504 = vor.u32 %v8502, %v8500
        %v8506 = vshll.u32 %v8384, 16
        %v8508 = vrot.slane %v8506, 1
        %v8509 = vsel %vm474, %v8504, %v8508
        %v8510 = vshrl.u32 %v8384, 16
        %v8512 = vor.u32 %v8510, %v8508
        %v8514 = vshll.u32 %v8385, 16
        %v8516 = vrot.slane %v8514, 1
        %v8517 = vsel %vm474, %v8512, %v8516
        %v8534 = vld [vmem:[%s7108 + $0x100] sm:$0xf]
        %v8535 = vld [vmem:[%s7108 + $0x104] sm:$0xf]
        %v8536 = vld [vmem:[%s7108 + $0x108] sm:$0xf]
        %v8537 = vld [vmem:[%s7108 + $0x10c] sm:$0xf]
        %v8538 = vld [vmem:[%s7108 + $0x110] sm:$0xf]
        %v8539 = vld [vmem:[%s7108 + $0x114] sm:$0xf]
        %v8540 = vld [vmem:[%s7108 + $0x118] sm:$0xf]
        %v8541 = vld [vmem:[%s7108 + $0x11c] sm:$0xf]
        %v8542 = vld [vmem:[%s7108 + $0x120] sm:$0xf]
        %v8543 = vld [vmem:[%s7108 + $0x124] sm:$0xf]
        %v8544 = vld [vmem:[%s7108 + $0x128] sm:$0xf]
        %v8545 = vld [vmem:[%s7108 + $0x12c] sm:$0xf]
        %v8546 = vld [vmem:[%s7108 + $0x130] sm:$0xf]
        %v8547 = vld [vmem:[%s7108 + $0x134] sm:$0xf]
        %v8548 = vld [vmem:[%s7108 + $0x138] sm:$0xf]
        %v8549 = vld [vmem:[%s7108 + $0x13c] sm:$0xf]
        %v8550 = vld [vmem:[%s7108 + $0x140] sm:$0xf]
        %v8551 = vld [vmem:[%s7108 + $0x144] sm:$0xf]
        %v8552 = vld [vmem:[%s7108 + $0x148] sm:$0xf]
        %v8553 = vld [vmem:[%s7108 + $0x14c] sm:$0xf]
        %v8554 = vld [vmem:[%s7108 + $0x150] sm:$0xf]
        %v8555 = vld [vmem:[%s7108 + $0x154] sm:$0xf]
        %v8556 = vld [vmem:[%s7108 + $0x158] sm:$0xf]
        %v8557 = vld [vmem:[%s7108 + $0x15c] sm:$0xf]
        %v8558 = vld [vmem:[%s7108 + $0x160] sm:$0xf]
        %v8559 = vld [vmem:[%s7108 + $0x164] sm:$0xf]
        %v8560 = vld [vmem:[%s7108 + $0x168] sm:$0xf]
        %v8561 = vld [vmem:[%s7108 + $0x16c] sm:$0xf]
        %v8562 = vld [vmem:[%s7108 + $0x170] sm:$0xf]
        %v8563 = vld [vmem:[%s7108 + $0x174] sm:$0xf]
        %v8564 = vld [vmem:[%s7108 + $0x178] sm:$0xf]
        %v8565 = vld [vmem:[%s7108 + $0x17c] sm:$0xf]
        %v8598 = vunpack.c.l.b16 %v8534
        %v8599 = vunpack.c.l.b16 %v8535
        %v8600 = vunpack.c.l.b16 %v8536
        %v8601 = vunpack.c.l.b16 %v8537
        %v8602 = vunpack.c.l.b16 %v8538
        %v8603 = vunpack.c.l.b16 %v8539
        %v8604 = vunpack.c.l.b16 %v8540
        %v8605 = vunpack.c.l.b16 %v8541
        %v8606 = vunpack.c.l.b16 %v8542
        %v8607 = vunpack.c.l.b16 %v8543
        %v8608 = vunpack.c.l.b16 %v8544
        %v8609 = vunpack.c.l.b16 %v8545
        %v8610 = vunpack.c.l.b16 %v8546
        %v8611 = vunpack.c.l.b16 %v8547
        %v8612 = vunpack.c.l.b16 %v8548
        %v8613 = vunpack.c.l.b16 %v8549
        %v8614 = vunpack.c.l.b16 %v8550
        %v8615 = vunpack.c.l.b16 %v8551
        %v8616 = vunpack.c.l.b16 %v8552
        %v8617 = vunpack.c.l.b16 %v8553
        %v8618 = vunpack.c.l.b16 %v8554
        %v8619 = vunpack.c.l.b16 %v8555
        %v8620 = vunpack.c.l.b16 %v8556
        %v8621 = vunpack.c.l.b16 %v8557
        %v8622 = vunpack.c.l.b16 %v8558
        %v8623 = vunpack.c.l.b16 %v8559
        %v8624 = vunpack.c.l.b16 %v8560
        %v8625 = vunpack.c.l.b16 %v8561
        %v8626 = vunpack.c.l.b16 %v8562
        %v8627 = vunpack.c.l.b16 %v8563
        %v8628 = vunpack.c.l.b16 %v8564
        %v8629 = vunpack.c.l.b16 %v8565
        %v8630 = vpack.c.b16 %v8599, %v8598
        %v8631 = vpack.c.b16 %v8601, %v8600
        %v8632 = vpack.c.b16 %v8603, %v8602
        %v8633 = vpack.c.b16 %v8605, %v8604
        %v8634 = vpack.c.b16 %v8607, %v8606
        %v8635 = vpack.c.b16 %v8609, %v8608
        %v8636 = vpack.c.b16 %v8611, %v8610
        %v8637 = vpack.c.b16 %v8613, %v8612
        %v8638 = vpack.c.b16 %v8615, %v8614
        %v8639 = vpack.c.b16 %v8617, %v8616
        %v8640 = vpack.c.b16 %v8619, %v8618
        %v8641 = vpack.c.b16 %v8621, %v8620
        %v8642 = vpack.c.b16 %v8623, %v8622
        %v8643 = vpack.c.b16 %v8625, %v8624
        %v8644 = vpack.c.b16 %v8627, %v8626
        %v8645 = vpack.c.b16 %v8629, %v8628
        %8662 = vmatprep.subr.bf16.mxu0 0
        %8663 = vmatpush1.bf16.msra.mxu0 %v8630
        %8664 = vmatprep.subr.bf16.mxu0 0
        %8665 = vmatpush1.bf16.msra.mxu0 %v8631
        %8666 = vmatprep.subr.bf16.mxu0 0
        %8667 = vmatpush1.bf16.msra.mxu0 %v8632
        %8668 = vmatprep.subr.bf16.mxu0 0
        %8669 = vmatpush1.bf16.msra.mxu0 %v8633
        %8670 = vmatprep.subr.bf16.mxu0 0
        %8671 = vmatpush1.bf16.msra.mxu0 %v8634
        %8672 = vmatprep.subr.bf16.mxu0 0
        %8673 = vmatpush1.bf16.msra.mxu0 %v8635
        %8674 = vmatprep.subr.bf16.mxu0 0
        %8675 = vmatpush1.bf16.msra.mxu0 %v8636
        %8676 = vmatprep.subr.bf16.mxu0 0
        %8677 = vmatpush1.bf16.msra.mxu0 %v8637
        %8678 = vmatprep.subr.bf16.mxu0 0
        %8679 = vmatpush1.bf16.msra.mxu0 %v8638
        %8680 = vmatprep.subr.bf16.mxu0 0
        %8681 = vmatpush1.bf16.msra.mxu0 %v8639
        %8682 = vmatprep.subr.bf16.mxu0 0
        %8683 = vmatpush1.bf16.msra.mxu0 %v8640
        %8684 = vmatprep.subr.bf16.mxu0 0
        %8685 = vmatpush1.bf16.msra.mxu0 %v8641
        %8686 = vmatprep.subr.bf16.mxu0 0
        %8687 = vmatpush1.bf16.msra.mxu0 %v8642
        %8688 = vmatprep.subr.bf16.mxu0 0
        %8689 = vmatpush1.bf16.msra.mxu0 %v8643
        %8690 = vmatprep.subr.bf16.mxu0 0
        %8691 = vmatpush1.bf16.msra.mxu0 %v8644
        %8692 = vmatprep.subr.bf16.mxu0 0
        %8693 = vmatpush1.bf16.msra.mxu0 %v8645
        %8694 = vmatprep.mubr.bf16.mxu0 %v8397
        %8695 = vmatmul.mubr.bf16.gmra.mrb[0].mxu0 %v6949
        %v8696 = vpop.f32.mrb[0].mxu0
        %v8697 = vadd.f32 0.0, %v8696
        %v8698 = vpop.f32.mrb[0].mxu0
        %v8699 = vpop.f32.mrb[0].mxu0
        %v8700 = vadd.f32 0.0, %v8699
        %v8701 = vpop.f32.mrb[0].mxu0
        %8702 = vmatprep.mubr.bf16.mxu0 %v8405
        %8703 = vmatmul.mubr.bf16.gmra.mrb[0].mxu0 %v6950
        %v8704 = vpop.f32.mrb[0].mxu0
        %v8705 = vadd.f32 0.0, %v8704
        %v8706 = vpop.f32.mrb[0].mxu0
        %v8707 = vpop.f32.mrb[0].mxu0
        %v8708 = vadd.f32 0.0, %v8707
        %v8709 = vpop.f32.mrb[0].mxu0
        %8710 = vmatprep.mubr.bf16.mxu0 %v8413
        %8711 = vmatmul.mubr.bf16.gmra.mrb[0].mxu0 %v6951
        %v8712 = vpop.f32.mrb[0].mxu0
        %v8713 = vadd.f32 0.0, %v8712
        %v8714 = vpop.f32.mrb[0].mxu0
        %v8715 = vpop.f32.mrb[0].mxu0
        %v8716 = vadd.f32 0.0, %v8715
        %v8717 = vpop.f32.mrb[0].mxu0
        %8718 = vmatprep.mubr.bf16.mxu0 %v8421
        %8719 = vmatmul.mubr.bf16.gmra.mrb[0].mxu0 %v6952
        %v8720 = vpop.f32.mrb[0].mxu0
        %v8721 = vadd.f32 0.0, %v8720
        %v8722 = vpop.f32.mrb[0].mxu0
        %v8723 = vpop.f32.mrb[0].mxu0
        %v8724 = vadd.f32 0.0, %v8723
        %v8725 = vpop.f32.mrb[0].mxu0
        %8726 = vmatprep.mubr.bf16.mxu0 %v8429
        %8727 = vmatmul.mubr.bf16.gmra.mrb[0].mxu0 %v6953
        %v8728 = vpop.f32.mrb[0].mxu0
        %v8729 = vadd.f32 0.0, %v8728
        %v8730 = vpop.f32.mrb[0].mxu0
        %v8731 = vpop.f32.mrb[0].mxu0
        %v8732 = vadd.f32 0.0, %v8731
        %v8733 = vpop.f32.mrb[0].mxu0
        %8734 = vmatprep.mubr.bf16.mxu0 %v8437
        %8735 = vmatmul.mubr.bf16.gmra.mrb[0].mxu0 %v6954
        %v8736 = vpop.f32.mrb[0].mxu0
        %v8737 = vadd.f32 0.0, %v8736
        %v8738 = vpop.f32.mrb[0].mxu0
        %v8739 = vpop.f32.mrb[0].mxu0
        %v8740 = vadd.f32 0.0, %v8739
        %v8741 = vpop.f32.mrb[0].mxu0
        %8742 = vmatprep.mubr.bf16.mxu0 %v8445
        %8743 = vmatmul.mubr.bf16.gmra.mrb[0].mxu0 %v6955
        %v8744 = vpop.f32.mrb[0].mxu0
        %v8745 = vadd.f32 0.0, %v8744
        %v8746 = vpop.f32.mrb[0].mxu0
        %v8747 = vpop.f32.mrb[0].mxu0
        %v8748 = vadd.f32 0.0, %v8747
        %v8749 = vpop.f32.mrb[0].mxu0
        %8750 = vmatprep.mubr.bf16.mxu0 %v8453
        %8751 = vmatmul.mubr.bf16.gmra.mrb[0].mxu0 %v6956
        %v8752 = vpop.f32.mrb[0].mxu0
        %v8753 = vadd.f32 0.0, %v8752
        %v8754 = vpop.f32.mrb[0].mxu0
        %v8755 = vpop.f32.mrb[0].mxu0
        %v8756 = vadd.f32 0.0, %v8755
        %v8757 = vpop.f32.mrb[0].mxu0
        %8758 = vmatprep.mubr.bf16.mxu0 %v8461
        %8759 = vmatmul.mubr.bf16.gmra.mrb[0].mxu0 %v6957
        %v8760 = vpop.f32.mrb[0].mxu0
        %v8761 = vadd.f32 0.0, %v8760
        %v8762 = vpop.f32.mrb[0].mxu0
        %v8763 = vpop.f32.mrb[0].mxu0
        %v8764 = vadd.f32 0.0, %v8763
        %v8765 = vpop.f32.mrb[0].mxu0
        %8766 = vmatprep.mubr.bf16.mxu0 %v8469
        %8767 = vmatmul.mubr.bf16.gmra.mrb[0].mxu0 %v6958
        %v8768 = vpop.f32.mrb[0].mxu0
        %v8769 = vadd.f32 0.0, %v8768
        %v8770 = vpop.f32.mrb[0].mxu0
        %v8771 = vpop.f32.mrb[0].mxu0
        %v8772 = vadd.f32 0.0, %v8771
        %v8773 = vpop.f32.mrb[0].mxu0
        %8774 = vmatprep.mubr.bf16.mxu0 %v8477
        %8775 = vmatmul.mubr.bf16.gmra.mrb[0].mxu0 %v6959
        %v8776 = vpop.f32.mrb[0].mxu0
        %v8777 = vadd.f32 0.0, %v8776
        %v8778 = vpop.f32.mrb[0].mxu0
        %v8779 = vpop.f32.mrb[0].mxu0
        %v8780 = vadd.f32 0.0, %v8779
        %v8781 = vpop.f32.mrb[0].mxu0
        %8782 = vmatprep.mubr.bf16.mxu0 %v8485
        %8783 = vmatmul.mubr.bf16.gmra.mrb[0].mxu0 %v6960
        %v8784 = vpop.f32.mrb[0].mxu0
        %v8785 = vadd.f32 0.0, %v8784
        %v8786 = vpop.f32.mrb[0].mxu0
        %v8787 = vpop.f32.mrb[0].mxu0
        %v8788 = vadd.f32 0.0, %v8787
        %v8789 = vpop.f32.mrb[0].mxu0
        %8790 = vmatprep.mubr.bf16.mxu0 %v8493
        %8791 = vmatmul.mubr.bf16.gmra.mrb[0].mxu0 %v6961
        %v8792 = vpop.f32.mrb[0].mxu0
        %v8793 = vadd.f32 0.0, %v8792
        %v8794 = vpop.f32.mrb[0].mxu0
        %v8795 = vpop.f32.mrb[0].mxu0
        %v8796 = vadd.f32 0.0, %v8795
        %v8797 = vpop.f32.mrb[0].mxu0
        %8798 = vmatprep.mubr.bf16.mxu0 %v8501
        %8799 = vmatmul.mubr.bf16.gmra.mrb[0].mxu0 %v6962
        %v8800 = vpop.f32.mrb[0].mxu0
        %v8801 = vadd.f32 0.0, %v8800
        %v8802 = vpop.f32.mrb[0].mxu0
        %v8803 = vpop.f32.mrb[0].mxu0
        %v8804 = vadd.f32 0.0, %v8803
        %v8805 = vpop.f32.mrb[0].mxu0
        %8806 = vmatprep.mubr.bf16.mxu0 %v8509
        %8807 = vmatmul.mubr.bf16.gmra.mrb[0].mxu0 %v6963
        %v8808 = vpop.f32.mrb[0].mxu0
        %v8809 = vadd.f32 0.0, %v8808
        %v8810 = vpop.f32.mrb[0].mxu0
        %v8811 = vpop.f32.mrb[0].mxu0
        %v8812 = vadd.f32 0.0, %v8811
        %v8813 = vpop.f32.mrb[0].mxu0
        %8814 = vmatprep.mubr.bf16.mxu0 %v8517
        %8815 = vmatmul.mubr.bf16.gmra.mrb[0].mxu0 %v7160
        %v8816 = vpop.f32.mrb[0].mxu0
        %v8817 = vadd.f32 0.0, %v8816
        %v8818 = vpop.f32.mrb[0].mxu0
        %v8819 = vpop.f32.mrb[0].mxu0
        %v8820 = vadd.f32 0.0, %v8819
        %v8821 = vpop.f32.mrb[0].mxu0
        %8822 = vdwg.mxu0
        %v8823 = vadd.f32 %v8226, %v8697
        %v8824 = vadd.f32 %v8229, %v8700
        %v8825 = vadd.f32 %v8234, %v8705
        %v8826 = vadd.f32 %v8237, %v8708
        %v8827 = vadd.f32 %v8242, %v8713
        %v8828 = vadd.f32 %v8245, %v8716
        %v8829 = vadd.f32 %v8250, %v8721
        %v8830 = vadd.f32 %v8253, %v8724
        %v8831 = vadd.f32 %v8258, %v8729
        %v8832 = vadd.f32 %v8261, %v8732
        %v8833 = vadd.f32 %v8266, %v8737
        %v8834 = vadd.f32 %v8269, %v8740
        %v8835 = vadd.f32 %v8274, %v8745
        %v8836 = vadd.f32 %v8277, %v8748
        %v8837 = vadd.f32 %v8282, %v8753
        %v8838 = vadd.f32 %v8285, %v8756
        %v8839 = vadd.f32 %v8290, %v8761
        %v8840 = vadd.f32 %v8293, %v8764
        %v8841 = vadd.f32 %v8298, %v8769
        %v8842 = vadd.f32 %v8301, %v8772
        %v8843 = vadd.f32 %v8306, %v8777
        %v8844 = vadd.f32 %v8309, %v8780
        %v8845 = vadd.f32 %v8314, %v8785
        %v8846 = vadd.f32 %v8317, %v8788
        %v8847 = vadd.f32 %v8322, %v8793
        %v8848 = vadd.f32 %v8325, %v8796
        %v8849 = vadd.f32 %v8330, %v8801
        %v8850 = vadd.f32 %v8333, %v8804
        %v8851 = vadd.f32 %v8338, %v8809
        %v8852 = vadd.f32 %v8341, %v8812
        %v8853 = vadd.f32 %v8346, %v8817
        %v8854 = vadd.f32 %v8349, %v8820
        %v8855 = vld [vmem:[#allocation2 + $0x10] sm:$0x80]
        %v8856 = vld [vmem:[#allocation2 + $0x90] sm:$0xff]
        %v8857 = vsel %vm483, %v8855, 0
        %v8858 = vsel %vm484, %v8353, 0
        %v8859 = vsel %vm484, %v8354, 0
        %v8860 = vsel %vm484, %v8355, 0
        %v8861 = vsel %vm484, %v8356, 0
        %v8862 = vsel %vm484, %v8357, 0
        %v8863 = vsel %vm484, %v8358, 0
        %v8864 = vsel %vm484, %v8359, 0
        %v8865 = vsel %vm484, %v8360, 0
        %v8866 = vsel %vm484, %v8361, 0
        %v8867 = vsel %vm484, %v8362, 0
        %v8868 = vsel %vm484, %v8363, 0
        %v8869 = vsel %vm484, %v8364, 0
        %v8870 = vsel %vm484, %v8365, 0
        %v8871 = vsel %vm484, %v8366, 0
        %v8872 = vsel %vm484, %v8367, 0
        %v8873 = vsel %vm485, %v8856, 0
        %v8875 = vshll.u32 %v8353, 16
        %v8877 = vrot.slane %v8875, 1
        %v8878 = vshrl.u32 %v8353, 16
        %v8880 = vor.u32 %v8878, %v8877
        %v8882 = vshll.u32 %v8354, 16
        %v8884 = vrot.slane %v8882, 1
        %v8885 = vsel %vm474, %v8880, %v8884
        %v8886 = vshrl.u32 %v8354, 16
        %v8888 = vor.u32 %v8886, %v8884
        %v8890 = vshll.u32 %v8355, 16
        %v8892 = vrot.slane %v8890, 1
        %v8893 = vsel %vm474, %v8888, %v8892
        %v8894 = vshrl.u32 %v8355, 16
        %v8896 = vor.u32 %v8894, %v8892
        %v8898 = vshll.u32 %v8356, 16
        %v8900 = vrot.slane %v8898, 1
        %v8901 = vsel %vm474, %v8896, %v8900
        %v8902 = vshrl.u32 %v8356, 16
        %v8904 = vor.u32 %v8902, %v8900
        %v8906 = vshll.u32 %v8357, 16
        %v8908 = vrot.slane %v8906, 1
        %v8909 = vsel %vm474, %v8904, %v8908
        %v8910 = vshrl.u32 %v8357, 16
        %v8912 = vor.u32 %v8910, %v8908
        %v8914 = vshll.u32 %v8358, 16
        %v8916 = vrot.slane %v8914, 1
        %v8917 = vsel %vm474, %v8912, %v8916
        %v8918 = vshrl.u32 %v8358, 16
        %v8920 = vor.u32 %v8918, %v8916
        %v8922 = vshll.u32 %v8359, 16
        %v8924 = vrot.slane %v8922, 1
        %v8925 = vsel %vm474, %v8920, %v8924
        %v8926 = vshrl.u32 %v8359, 16
        %v8928 = vor.u32 %v8926, %v8924
        %v8930 = vshll.u32 %v8360, 16
        %v8932 = vrot.slane %v8930, 1
        %v8933 = vsel %vm474, %v8928, %v8932
        %v8934 = vshrl.u32 %v8360, 16
        %v8936 = vor.u32 %v8934, %v8932
        %v8938 = vshll.u32 %v8361, 16
        %v8940 = vrot.slane %v8938, 1
        %v8941 = vsel %vm474, %v8936, %v8940
        %v8942 = vshrl.u32 %v8361, 16
        %v8944 = vor.u32 %v8942, %v8940
        %v8946 = vshll.u32 %v8362, 16
        %v8948 = vrot.slane %v8946, 1
        %v8949 = vsel %vm474, %v8944, %v8948
        %v8950 = vshrl.u32 %v8362, 16
        %v8952 = vor.u32 %v8950, %v8948
        %v8954 = vshll.u32 %v8363, 16
        %v8956 = vrot.slane %v8954, 1
        %v8957 = vsel %vm474, %v8952, %v8956
        %v8958 = vshrl.u32 %v8363, 16
        %v8960 = vor.u32 %v8958, %v8956
        %v8962 = vshll.u32 %v8364, 16
        %v8964 = vrot.slane %v8962, 1
        %v8965 = vsel %vm474, %v8960, %v8964
        %v8966 = vshrl.u32 %v8364, 16
        %v8968 = vor.u32 %v8966, %v8964
        %v8970 = vshll.u32 %v8365, 16
        %v8972 = vrot.slane %v8970, 1
        %v8973 = vsel %vm474, %v8968, %v8972
        %v8974 = vshrl.u32 %v8365, 16
        %v8976 = vor.u32 %v8974, %v8972
        %v8978 = vshll.u32 %v8366, 16
        %v8980 = vrot.slane %v8978, 1
        %v8981 = vsel %vm474, %v8976, %v8980
        %v8982 = vshrl.u32 %v8366, 16
        %v8984 = vor.u32 %v8982, %v8980
        %v8986 = vshll.u32 %v8367, 16
        %v8988 = vrot.slane %v8986, 1
        %v8989 = vsel %vm474, %v8984, %v8988
        %v8990 = vshrl.u32 %v8367, 16
        %v8992 = vor.u32 %v8990, %v8988
        %v8994 = vshll.u32 %v8856, 16
        %v8996 = vrot.slane %v8994, 1
        %v8997 = vsel %vm474, %v8992, %v8996
        %v8998 = vshrl.u32 %v8856, 16
        %v9000 = vor.u32 %v8998, %v8996
        %v9001 = vld [vmem:[%s7108 + $0x180] sm:$0xf]
        %v9002 = vld [vmem:[%s7108 + $0x184] sm:$0xf]
        %v9003 = vld [vmem:[%s7108 + $0x188] sm:$0xf]
        %v9004 = vld [vmem:[%s7108 + $0x18c] sm:$0xf]
        %v9005 = vld [vmem:[%s7108 + $0x190] sm:$0xf]
        %v9006 = vld [vmem:[%s7108 + $0x194] sm:$0xf]
        %v9007 = vld [vmem:[%s7108 + $0x198] sm:$0xf]
        %v9008 = vld [vmem:[%s7108 + $0x19c] sm:$0xf]
        %v9009 = vld [vmem:[%s7108 + $0x1a0] sm:$0xf]
        %v9010 = vld [vmem:[%s7108 + $0x1a4] sm:$0xf]
        %v9011 = vld [vmem:[%s7108 + $0x1a8] sm:$0xf]
        %v9012 = vld [vmem:[%s7108 + $0x1ac] sm:$0xf]
        %v9013 = vld [vmem:[%s7108 + $0x1b0] sm:$0xf]
        %v9014 = vld [vmem:[%s7108 + $0x1b4] sm:$0xf]
        %v9015 = vld [vmem:[%s7108 + $0x1b8] sm:$0xf]
        %v9016 = vld [vmem:[%s7108 + $0x1bc] sm:$0xf]
        %v9017 = vld [vmem:[%s7108 + $0x1c0] sm:$0xf]
        %v9018 = vld [vmem:[%s7108 + $0x1c4] sm:$0xf]
        %v9019 = vld [vmem:[%s7108 + $0x1c8] sm:$0xf]
        %v9020 = vld [vmem:[%s7108 + $0x1cc] sm:$0xf]
        %v9021 = vld [vmem:[%s7108 + $0x1d0] sm:$0xf]
        %v9022 = vld [vmem:[%s7108 + $0x1d4] sm:$0xf]
        %v9023 = vld [vmem:[%s7108 + $0x1d8] sm:$0xf]
        %v9024 = vld [vmem:[%s7108 + $0x1dc] sm:$0xf]
        %v9025 = vld [vmem:[%s7108 + $0x1e0] sm:$0xf]
        %v9026 = vld [vmem:[%s7108 + $0x1e4] sm:$0xf]
        %v9027 = vld [vmem:[%s7108 + $0x1e8] sm:$0xf]
        %v9028 = vld [vmem:[%s7108 + $0x1ec] sm:$0xf]
        %v9029 = vld [vmem:[%s7108 + $0x1f0] sm:$0xf]
        %v9030 = vld [vmem:[%s7108 + $0x1f4] sm:$0xf]
        %v9031 = vld [vmem:[%s7108 + $0x1f8] sm:$0xf]
        %v9032 = vld [vmem:[%s7108 + $0x1fc] sm:$0xf]
        %v9034 = vshrl.u32 %v8857, 16
        %v9036 = vrot.slane %v9034, 7
        %v9038 = vshrl.u32 %v8858, 16
        %v9040 = vrot.slane %v9038, 7
        %v9041 = vshll.u32 %v8858, 16
        %v9043 = vor.u32 %v9040, %v9041
        %v9044 = vsel %vm670, %v9036, %v9043
        %v9046 = vshrl.u32 %v8877, 16
        %v9048 = vrot.slane %v9046, 7
        %v9050 = vshrl.u32 %v8885, 16
        %v9052 = vrot.slane %v9050, 7
        %v9053 = vshll.u32 %v8885, 16
        %v9055 = vor.u32 %v9052, %v9053
        %v9056 = vsel %vm670, %v9048, %v9055
        %v9058 = vshrl.u32 %v8859, 16
        %v9060 = vrot.slane %v9058, 7
        %v9061 = vshll.u32 %v8859, 16
        %v9063 = vor.u32 %v9060, %v9061
        %v9064 = vsel %vm670, %v9040, %v9063
        %v9066 = vshrl.u32 %v8893, 16
        %v9068 = vrot.slane %v9066, 7
        %v9069 = vshll.u32 %v8893, 16
        %v9071 = vor.u32 %v9068, %v9069
        %v9072 = vsel %vm670, %v9052, %v9071
        %v9074 = vshrl.u32 %v8860, 16
        %v9076 = vrot.slane %v9074, 7
        %v9077 = vshll.u32 %v8860, 16
        %v9079 = vor.u32 %v9076, %v9077
        %v9080 = vsel %vm670, %v9060, %v9079
        %v9082 = vshrl.u32 %v8901, 16
        %v9084 = vrot.slane %v9082, 7
        %v9085 = vshll.u32 %v8901, 16
        %v9087 = vor.u32 %v9084, %v9085
        %v9088 = vsel %vm670, %v9068, %v9087
        %v9090 = vshrl.u32 %v8861, 16
        %v9092 = vrot.slane %v9090, 7
        %v9093 = vshll.u32 %v8861, 16
        %v9095 = vor.u32 %v9092, %v9093
        %v9096 = vsel %vm670, %v9076, %v9095
        %v9098 = vshrl.u32 %v8909, 16
        %v9100 = vrot.slane %v9098, 7
        %v9101 = vshll.u32 %v8909, 16
        %v9103 = vor.u32 %v9100, %v9101
        %v9104 = vsel %vm670, %v9084, %v9103
        %v9106 = vshrl.u32 %v8862, 16
        %v9108 = vrot.slane %v9106, 7
        %v9109 = vshll.u32 %v8862, 16
        %v9111 = vor.u32 %v9108, %v9109
        %v9112 = vsel %vm670, %v9092, %v9111
        %v9114 = vshrl.u32 %v8917, 16
        %v9116 = vrot.slane %v9114, 7
        %v9117 = vshll.u32 %v8917, 16
        %v9119 = vor.u32 %v9116, %v9117
        %v9120 = vsel %vm670, %v9100, %v9119
        %v9122 = vshrl.u32 %v8863, 16
        %v9124 = vrot.slane %v9122, 7
        %v9125 = vshll.u32 %v8863, 16
        %v9127 = vor.u32 %v9124, %v9125
        %v9128 = vsel %vm670, %v9108, %v9127
        %v9130 = vshrl.u32 %v8925, 16
        %v9132 = vrot.slane %v9130, 7
        %v9133 = vshll.u32 %v8925, 16
        %v9135 = vor.u32 %v9132, %v9133
        %v9136 = vsel %vm670, %v9116, %v9135
        %v9138 = vshrl.u32 %v8864, 16
        %v9140 = vrot.slane %v9138, 7
        %v9141 = vshll.u32 %v8864, 16
        %v9143 = vor.u32 %v9140, %v9141
        %v9144 = vsel %vm670, %v9124, %v9143
        %v9146 = vshrl.u32 %v8933, 16
        %v9148 = vrot.slane %v9146, 7
        %v9149 = vshll.u32 %v8933, 16
        %v9151 = vor.u32 %v9148, %v9149
        %v9152 = vsel %vm670, %v9132, %v9151
        %v9154 = vshrl.u32 %v8865, 16
        %v9156 = vrot.slane %v9154, 7
        %v9157 = vshll.u32 %v8865, 16
        %v9159 = vor.u32 %v9156, %v9157
        %v9160 = vsel %vm670, %v9140, %v9159
        %v9162 = vshrl.u32 %v8941, 16
        %v9164 = vrot.slane %v9162, 7
        %v9165 = vshll.u32 %v8941, 16
        %v9167 = vor.u32 %v9164, %v9165
        %v9168 = vsel %vm670, %v9148, %v9167
        %v9170 = vshrl.u32 %v8866, 16
        %v9172 = vrot.slane %v9170, 7
        %v9173 = vshll.u32 %v8866, 16
        %v9175 = vor.u32 %v9172, %v9173
        %v9176 = vsel %vm670, %v9156, %v9175
        %v9178 = vshrl.u32 %v8949, 16
        %v9180 = vrot.slane %v9178, 7
        %v9181 = vshll.u32 %v8949, 16
        %v9183 = vor.u32 %v9180, %v9181
        %v9184 = vsel %vm670, %v9164, %v9183
        %v9186 = vshrl.u32 %v8867, 16
        %v9188 = vrot.slane %v9186, 7
        %v9189 = vshll.u32 %v8867, 16
        %v9191 = vor.u32 %v9188, %v9189
        %v9192 = vsel %vm670, %v9172, %v9191
        %v9194 = vshrl.u32 %v8957, 16
        %v9196 = vrot.slane %v9194, 7
        %v9197 = vshll.u32 %v8957, 16
        %v9199 = vor.u32 %v9196, %v9197
        %v9200 = vsel %vm670, %v9180, %v9199
        %v9202 = vshrl.u32 %v8868, 16
        %v9204 = vrot.slane %v9202, 7
        %v9205 = vshll.u32 %v8868, 16
        %v9207 = vor.u32 %v9204, %v9205
        %v9208 = vsel %vm670, %v9188, %v9207
        %v9210 = vshrl.u32 %v8965, 16
        %v9212 = vrot.slane %v9210, 7
        %v9213 = vshll.u32 %v8965, 16
        %v9215 = vor.u32 %v9212, %v9213
        %v9216 = vsel %vm670, %v9196, %v9215
        %v9218 = vshrl.u32 %v8869, 16
        %v9220 = vrot.slane %v9218, 7
        %v9221 = vshll.u32 %v8869, 16
        %v9223 = vor.u32 %v9220, %v9221
        %v9224 = vsel %vm670, %v9204, %v9223
        %v9226 = vshrl.u32 %v8973, 16
        %v9228 = vrot.slane %v9226, 7
        %v9229 = vshll.u32 %v8973, 16
        %v9231 = vor.u32 %v9228, %v9229
        %v9232 = vsel %vm670, %v9212, %v9231
        %v9234 = vshrl.u32 %v8870, 16
        %v9236 = vrot.slane %v9234, 7
        %v9237 = vshll.u32 %v8870, 16
        %v9239 = vor.u32 %v9236, %v9237
        %v9240 = vsel %vm670, %v9220, %v9239
        %v9242 = vshrl.u32 %v8981, 16
        %v9244 = vrot.slane %v9242, 7
        %v9245 = vshll.u32 %v8981, 16
        %v9247 = vor.u32 %v9244, %v9245
        %v9248 = vsel %vm670, %v9228, %v9247
        %v9250 = vshrl.u32 %v8871, 16
        %v9252 = vrot.slane %v9250, 7
        %v9253 = vshll.u32 %v8871, 16
        %v9255 = vor.u32 %v9252, %v9253
        %v9256 = vsel %vm670, %v9236, %v9255
        %v9258 = vshrl.u32 %v8989, 16
        %v9260 = vrot.slane %v9258, 7
        %v9261 = vshll.u32 %v8989, 16
        %v9263 = vor.u32 %v9260, %v9261
        %v9264 = vsel %vm670, %v9244, %v9263
        %v9266 = vshrl.u32 %v8872, 16
        %v9268 = vrot.slane %v9266, 7
        %v9269 = vshll.u32 %v8872, 16
        %v9271 = vor.u32 %v9268, %v9269
        %v9272 = vsel %vm670, %v9252, %v9271
        %v9274 = vshrl.u32 %v8997, 16
        %v9276 = vrot.slane %v9274, 7
        %v9277 = vshll.u32 %v8997, 16
        %v9279 = vor.u32 %v9276, %v9277
        %v9280 = vsel %vm670, %v9260, %v9279
        %v9282 = vshrl.u32 %v8873, 16
        %v9284 = vrot.slane %v9282, 7
        %v9285 = vshll.u32 %v8873, 16
        %v9287 = vor.u32 %v9284, %v9285
        %v9288 = vsel %vm670, %v9268, %v9287
        %v9290 = vshrl.u32 %v9000, 16
        %v9292 = vrot.slane %v9290, 7
        %v9293 = vshll.u32 %v9000, 16
        %v9295 = vor.u32 %v9292, %v9293
        %v9296 = vsel %vm670, %v9276, %v9295
        %v9361 = vunpack.c.l.b16 %v9001
        %v9362 = vunpack.c.l.b16 %v9002
        %v9363 = vunpack.c.l.b16 %v9003
        %v9364 = vunpack.c.l.b16 %v9004
        %v9365 = vunpack.c.l.b16 %v9005
        %v9366 = vunpack.c.l.b16 %v9006
        %v9367 = vunpack.c.l.b16 %v9007
        %v9368 = vunpack.c.l.b16 %v9008
        %v9369 = vunpack.c.l.b16 %v9009
        %v9370 = vunpack.c.l.b16 %v9010
        %v9371 = vunpack.c.l.b16 %v9011
        %v9372 = vunpack.c.l.b16 %v9012
        %v9373 = vunpack.c.l.b16 %v9013
        %v9374 = vunpack.c.l.b16 %v9014
        %v9375 = vunpack.c.l.b16 %v9015
        %v9376 = vunpack.c.l.b16 %v9016
        %v9377 = vunpack.c.l.b16 %v9017
        %v9378 = vunpack.c.l.b16 %v9018
        %v9379 = vunpack.c.l.b16 %v9019
        %v9380 = vunpack.c.l.b16 %v9020
        %v9381 = vunpack.c.l.b16 %v9021
        %v9382 = vunpack.c.l.b16 %v9022
        %v9383 = vunpack.c.l.b16 %v9023
        %v9384 = vunpack.c.l.b16 %v9024
        %v9385 = vunpack.c.l.b16 %v9025
        %v9386 = vunpack.c.l.b16 %v9026
        %v9387 = vunpack.c.l.b16 %v9027
        %v9388 = vunpack.c.l.b16 %v9028
        %v9389 = vunpack.c.l.b16 %v9029
        %v9390 = vunpack.c.l.b16 %v9030
        %v9391 = vunpack.c.l.b16 %v9031
        %v9392 = vunpack.c.l.b16 %v9032
        %v9393 = vpack.c.b16 %v9362, %v9361
        %v9394 = vpack.c.b16 %v9364, %v9363
        %v9395 = vpack.c.b16 %v9366, %v9365
        %v9396 = vpack.c.b16 %v9368, %v9367
        %v9397 = vpack.c.b16 %v9370, %v9369
        %v9398 = vpack.c.b16 %v9372, %v9371
        %v9399 = vpack.c.b16 %v9374, %v9373
        %v9400 = vpack.c.b16 %v9376, %v9375
        %v9401 = vpack.c.b16 %v9378, %v9377
        %v9402 = vpack.c.b16 %v9380, %v9379
        %v9403 = vpack.c.b16 %v9382, %v9381
        %v9404 = vpack.c.b16 %v9384, %v9383
        %v9405 = vpack.c.b16 %v9386, %v9385
        %v9406 = vpack.c.b16 %v9388, %v9387
        %v9407 = vpack.c.b16 %v9390, %v9389
        %v9408 = vpack.c.b16 %v9392, %v9391
        %9425 = vmatprep.subr.bf16.mxu0 0
        %9426 = vmatpush1.bf16.msra.mxu0 %v9393
        %9427 = vmatprep.subr.bf16.mxu0 0
        %9428 = vmatpush1.bf16.msra.mxu0 %v9394
        %9429 = vmatprep.subr.bf16.mxu0 0
        %9430 = vmatpush1.bf16.msra.mxu0 %v9395
        %9431 = vmatprep.subr.bf16.mxu0 0
        %9432 = vmatpush1.bf16.msra.mxu0 %v9396
        %9433 = vmatprep.subr.bf16.mxu0 0
        %9434 = vmatpush1.bf16.msra.mxu0 %v9397
        %9435 = vmatprep.subr.bf16.mxu0 0
        %9436 = vmatpush1.bf16.msra.mxu0 %v9398
        %9437 = vmatprep.subr.bf16.mxu0 0
        %9438 = vmatpush1.bf16.msra.mxu0 %v9399
        %9439 = vmatprep.subr.bf16.mxu0 0
        %9440 = vmatpush1.bf16.msra.mxu0 %v9400
        %9441 = vmatprep.subr.bf16.mxu0 0
        %9442 = vmatpush1.bf16.msra.mxu0 %v9401
        %9443 = vmatprep.subr.bf16.mxu0 0
        %9444 = vmatpush1.bf16.msra.mxu0 %v9402
        %9445 = vmatprep.subr.bf16.mxu0 0
        %9446 = vmatpush1.bf16.msra.mxu0 %v9403
        %9447 = vmatprep.subr.bf16.mxu0 0
        %9448 = vmatpush1.bf16.msra.mxu0 %v9404
        %9449 = vmatprep.subr.bf16.mxu0 0
        %9450 = vmatpush1.bf16.msra.mxu0 %v9405
        %9451 = vmatprep.subr.bf16.mxu0 0
        %9452 = vmatpush1.bf16.msra.mxu0 %v9406
        %9453 = vmatprep.subr.bf16.mxu0 0
        %9454 = vmatpush1.bf16.msra.mxu0 %v9407
        %9455 = vmatprep.subr.bf16.mxu0 0
        %9456 = vmatpush1.bf16.msra.mxu0 %v9408
        %9457 = vmatprep.mubr.bf16.mxu0 %v9056
        %9458 = vmatmul.mubr.bf16.gmra.mrb[0].mxu0 %v9044
        %v9459 = vpop.f32.mrb[0].mxu0
        %v9460 = vadd.f32 0.0, %v9459
        %v9461 = vpop.f32.mrb[0].mxu0
        %v9462 = vpop.f32.mrb[0].mxu0
        %v9463 = vadd.f32 0.0, %v9462
        %v9464 = vpop.f32.mrb[0].mxu0
        %9465 = vmatprep.mubr.bf16.mxu0 %v9072
        %9466 = vmatmul.mubr.bf16.gmra.mrb[0].mxu0 %v9064
        %v9467 = vpop.f32.mrb[0].mxu0
        %v9468 = vadd.f32 0.0, %v9467
        %v9469 = vpop.f32.mrb[0].mxu0
        %v9470 = vpop.f32.mrb[0].mxu0
        %v9471 = vadd.f32 0.0, %v9470
        %v9472 = vpop.f32.mrb[0].mxu0
        %9473 = vmatprep.mubr.bf16.mxu0 %v9088
        %9474 = vmatmul.mubr.bf16.gmra.mrb[0].mxu0 %v9080
        %v9475 = vpop.f32.mrb[0].mxu0
        %v9476 = vadd.f32 0.0, %v9475
        %v9477 = vpop.f32.mrb[0].mxu0
        %v9478 = vpop.f32.mrb[0].mxu0
        %v9479 = vadd.f32 0.0, %v9478
        %v9480 = vpop.f32.mrb[0].mxu0
        %9481 = vmatprep.mubr.bf16.mxu0 %v9104
        %9482 = vmatmul.mubr.bf16.gmra.mrb[0].mxu0 %v9096
        %v9483 = vpop.f32.mrb[0].mxu0
        %v9484 = vadd.f32 0.0, %v9483
        %v9485 = vpop.f32.mrb[0].mxu0
        %v9486 = vpop.f32.mrb[0].mxu0
        %v9487 = vadd.f32 0.0, %v9486
        %v9488 = vpop.f32.mrb[0].mxu0
        %9489 = vmatprep.mubr.bf16.mxu0 %v9120
        %9490 = vmatmul.mubr.bf16.gmra.mrb[0].mxu0 %v9112
        %v9491 = vpop.f32.mrb[0].mxu0
        %v9492 = vadd.f32 0.0, %v9491
        %v9493 = vpop.f32.mrb[0].mxu0
        %v9494 = vpop.f32.mrb[0].mxu0
        %v9495 = vadd.f32 0.0, %v9494
        %v9496 = vpop.f32.mrb[0].mxu0
        %9497 = vmatprep.mubr.bf16.mxu0 %v9136
        %9498 = vmatmul.mubr.bf16.gmra.mrb[0].mxu0 %v9128
        %v9499 = vpop.f32.mrb[0].mxu0
        %v9500 = vadd.f32 0.0, %v9499
        %v9501 = vpop.f32.mrb[0].mxu0
        %v9502 = vpop.f32.mrb[0].mxu0
        %v9503 = vadd.f32 0.0, %v9502
        %v9504 = vpop.f32.mrb[0].mxu0
        %9505 = vmatprep.mubr.bf16.mxu0 %v9152
        %9506 = vmatmul.mubr.bf16.gmra.mrb[0].mxu0 %v9144
        %v9507 = vpop.f32.mrb[0].mxu0
        %v9508 = vadd.f32 0.0, %v9507
        %v9509 = vpop.f32.mrb[0].mxu0
        %v9510 = vpop.f32.mrb[0].mxu0
        %v9511 = vadd.f32 0.0, %v9510
        %v9512 = vpop.f32.mrb[0].mxu0
        %9513 = vmatprep.mubr.bf16.mxu0 %v9168
        %9514 = vmatmul.mubr.bf16.gmra.mrb[0].mxu0 %v9160
        %v9515 = vpop.f32.mrb[0].mxu0
        %v9516 = vadd.f32 0.0, %v9515
        %v9517 = vpop.f32.mrb[0].mxu0
        %v9518 = vpop.f32.mrb[0].mxu0
        %v9519 = vadd.f32 0.0, %v9518
        %v9520 = vpop.f32.mrb[0].mxu0
        %9521 = vmatprep.mubr.bf16.mxu0 %v9184
        %9522 = vmatmul.mubr.bf16.gmra.mrb[0].mxu0 %v9176
        %v9523 = vpop.f32.mrb[0].mxu0
        %v9524 = vadd.f32 0.0, %v9523
        %v9525 = vpop.f32.mrb[0].mxu0
        %v9526 = vpop.f32.mrb[0].mxu0
        %v9527 = vadd.f32 0.0, %v9526
        %v9528 = vpop.f32.mrb[0].mxu0
        %9529 = vmatprep.mubr.bf16.mxu0 %v9200
        %9530 = vmatmul.mubr.bf16.gmra.mrb[0].mxu0 %v9192
        %v9531 = vpop.f32.mrb[0].mxu0
        %v9532 = vadd.f32 0.0, %v9531
        %v9533 = vpop.f32.mrb[0].mxu0
        %v9534 = vpop.f32.mrb[0].mxu0
        %v9535 = vadd.f32 0.0, %v9534
        %v9536 = vpop.f32.mrb[0].mxu0
        %9537 = vmatprep.mubr.bf16.mxu0 %v9216
        %9538 = vmatmul.mubr.bf16.gmra.mrb[0].mxu0 %v9208
        %v9539 = vpop.f32.mrb[0].mxu0
        %v9540 = vadd.f32 0.0, %v9539
        %v9541 = vpop.f32.mrb[0].mxu0
        %v9542 = vpop.f32.mrb[0].mxu0
        %v9543 = vadd.f32 0.0, %v9542
        %v9544 = vpop.f32.mrb[0].mxu0
        %9545 = vmatprep.mubr.bf16.mxu0 %v9232
        %9546 = vmatmul.mubr.bf16.gmra.mrb[0].mxu0 %v9224
        %v9547 = vpop.f32.mrb[0].mxu0
        %v9548 = vadd.f32 0.0, %v9547
        %v9549 = vpop.f32.mrb[0].mxu0
        %v9550 = vpop.f32.mrb[0].mxu0
        %v9551 = vadd.f32 0.0, %v9550
        %v9552 = vpop.f32.mrb[0].mxu0
        %9553 = vmatprep.mubr.bf16.mxu0 %v9248
        %9554 = vmatmul.mubr.bf16.gmra.mrb[0].mxu0 %v9240
        %v9555 = vpop.f32.mrb[0].mxu0
        %v9556 = vadd.f32 0.0, %v9555
        %v9557 = vpop.f32.mrb[0].mxu0
        %v9558 = vpop.f32.mrb[0].mxu0
        %v9559 = vadd.f32 0.0, %v9558
        %v9560 = vpop.f32.mrb[0].mxu0
        %9561 = vmatprep.mubr.bf16.mxu0 %v9264
        %9562 = vmatmul.mubr.bf16.gmra.mrb[0].mxu0 %v9256
        %v9563 = vpop.f32.mrb[0].mxu0
        %v9564 = vadd.f32 0.0, %v9563
        %v9565 = vpop.f32.mrb[0].mxu0
        %v9566 = vpop.f32.mrb[0].mxu0
        %v9567 = vadd.f32 0.0, %v9566
        %v9568 = vpop.f32.mrb[0].mxu0
        %9569 = vmatprep.mubr.bf16.mxu0 %v9280
        %9570 = vmatmul.mubr.bf16.gmra.mrb[0].mxu0 %v9272
        %v9571 = vpop.f32.mrb[0].mxu0
        %v9572 = vadd.f32 0.0, %v9571
        %v9573 = vpop.f32.mrb[0].mxu0
        %v9574 = vpop.f32.mrb[0].mxu0
        %v9575 = vadd.f32 0.0, %v9574
        %v9576 = vpop.f32.mrb[0].mxu0
        %9577 = vmatprep.mubr.bf16.mxu0 %v9296
        %9578 = vmatmul.mubr.bf16.gmra.mrb[0].mxu0 %v9288
        %v9579 = vpop.f32.mrb[0].mxu0
        %v9580 = vadd.f32 0.0, %v9579
        %v9581 = vpop.f32.mrb[0].mxu0
        %v9582 = vpop.f32.mrb[0].mxu0
        %v9583 = vadd.f32 0.0, %v9582
        %v9584 = vpop.f32.mrb[0].mxu0
        %9585 = vdwg.mxu0
        %v9586 = vadd.f32 %v8823, %v9460
        %v9587 = vadd.f32 %v8824, %v9463
        %v9588 = vadd.f32 %v8825, %v9468
        %v9589 = vadd.f32 %v8826, %v9471
        %v9590 = vadd.f32 %v8827, %v9476
        %v9591 = vadd.f32 %v8828, %v9479
        %v9592 = vadd.f32 %v8829, %v9484
        %v9593 = vadd.f32 %v8830, %v9487
        %v9594 = vadd.f32 %v8831, %v9492
        %v9595 = vadd.f32 %v8832, %v9495
        %v9596 = vadd.f32 %v8833, %v9500
        %v9597 = vadd.f32 %v8834, %v9503
        %v9598 = vadd.f32 %v8835, %v9508
        %v9599 = vadd.f32 %v8836, %v9511
        %v9600 = vadd.f32 %v8837, %v9516
        %v9601 = vadd.f32 %v8838, %v9519
        %v9602 = vadd.f32 %v8839, %v9524
        %v9603 = vadd.f32 %v8840, %v9527
        %v9604 = vadd.f32 %v8841, %v9532
        %v9605 = vadd.f32 %v8842, %v9535
        %v9606 = vadd.f32 %v8843, %v9540
        %v9607 = vadd.f32 %v8844, %v9543
        %v9608 = vadd.f32 %v8845, %v9548
        %v9609 = vadd.f32 %v8846, %v9551
        %v9610 = vadd.f32 %v8847, %v9556
        %v9611 = vadd.f32 %v8848, %v9559
        %v9612 = vadd.f32 %v8849, %v9564
        %v9613 = vadd.f32 %v8850, %v9567
        %v9614 = vadd.f32 %v8851, %v9572
        %v9615 = vadd.f32 %v8852, %v9575
        %v9616 = vadd.f32 %v8853, %v9580
        %v9617 = vadd.f32 %v8854, %v9583
        %v9618 = vld [vmem:[#allocation2 + $0x18] sm:$0xff]
        %v9619 = vld [vmem:[#allocation2 + $0x20] sm:$0xff]
        %v9620 = vld [vmem:[#allocation2 + $0x28] sm:$0xff]
        %v9621 = vld [vmem:[#allocation2 + $0x30] sm:$0xff]
        %v9622 = vld [vmem:[#allocation2 + $0x38] sm:$0xff]
        %v9623 = vld [vmem:[#allocation2 + $0x40] sm:$0xff]
        %v9624 = vld [vmem:[#allocation2 + $0x48] sm:$0xff]
        %v9625 = vld [vmem:[#allocation2 + $0x50] sm:$0xff]
        %v9626 = vld [vmem:[#allocation2 + $0x58] sm:$0xff]
        %v9627 = vld [vmem:[#allocation2 + $0x60] sm:$0xff]
        %v9628 = vld [vmem:[#allocation2 + $0x68] sm:$0xff]
        %v9629 = vld [vmem:[#allocation2 + $0x70] sm:$0xff]
        %v9630 = vld [vmem:[#allocation2 + $0x78] sm:$0xff]
        %v9631 = vld [vmem:[#allocation2 + $0x80] sm:$0xff]
        %v9632 = vld [vmem:[#allocation2 + $0x88] sm:$0xff]
        %v9633 = vld [vmem:[#allocation2 + $0x90] sm:$0xff]
        %v9634 = vld [vmem:[#allocation2 + $0x98] sm:$0x1]
        %v9635 = vsel %vm679, %v9618, 0
        %v9636 = vsel %vm680, %v9619, 0
        %v9637 = vsel %vm680, %v9620, 0
        %v9638 = vsel %vm680, %v9621, 0
        %v9639 = vsel %vm680, %v9622, 0
        %v9640 = vsel %vm680, %v9623, 0
        %v9641 = vsel %vm680, %v9624, 0
        %v9642 = vsel %vm680, %v9625, 0
        %v9643 = vsel %vm680, %v9626, 0
        %v9644 = vsel %vm680, %v9627, 0
        %v9645 = vsel %vm680, %v9628, 0
        %v9646 = vsel %vm680, %v9629, 0
        %v9647 = vsel %vm680, %v9630, 0
        %v9648 = vsel %vm680, %v9631, 0
        %v9649 = vsel %vm680, %v9632, 0
        %v9650 = vsel %vm680, %v9633, 0
        %v9651 = vsel %vm681, %v9634, 0
        %v9652 = vld [vmem:[%s7108 + $0x200] sm:$0xf]
        %v9653 = vld [vmem:[%s7108 + $0x204] sm:$0xf]
        %v9654 = vld [vmem:[%s7108 + $0x208] sm:$0xf]
        %v9655 = vld [vmem:[%s7108 + $0x20c] sm:$0xf]
        %v9656 = vld [vmem:[%s7108 + $0x210] sm:$0xf]
        %v9657 = vld [vmem:[%s7108 + $0x214] sm:$0xf]
        %v9658 = vld [vmem:[%s7108 + $0x218] sm:$0xf]
        %v9659 = vld [vmem:[%s7108 + $0x21c] sm:$0xf]
        %v9660 = vld [vmem:[%s7108 + $0x220] sm:$0xf]
        %v9661 = vld [vmem:[%s7108 + $0x224] sm:$0xf]
        %v9662 = vld [vmem:[%s7108 + $0x228] sm:$0xf]
        %v9663 = vld [vmem:[%s7108 + $0x22c] sm:$0xf]
        %v9664 = vld [vmem:[%s7108 + $0x230] sm:$0xf]
        %v9665 = vld [vmem:[%s7108 + $0x234] sm:$0xf]
        %v9666 = vld [vmem:[%s7108 + $0x238] sm:$0xf]
        %v9667 = vld [vmem:[%s7108 + $0x23c] sm:$0xf]
        %v9669 = vshrl.u32 %v9635, 16
        %v9671 = vshll.u32 %v9635, 16
        %v9673 = vrot.slane %v9671, 1
        %v9674 = vor.u32 %v9669, %v9673
        %v9676 = vshll.u32 %v9636, 16
        %v9678 = vrot.slane %v9676, 1
        %v9679 = vsel %vm474, %v9674, %v9678
        %v9680 = vshrl.u32 %v9636, 16
        %v9682 = vor.u32 %v9680, %v9678
        %v9684 = vshll.u32 %v9637, 16
        %v9686 = vrot.slane %v9684, 1
        %v9687 = vsel %vm474, %v9682, %v9686
        %v9688 = vshrl.u32 %v9637, 16
        %v9690 = vor.u32 %v9688, %v9686
        %v9692 = vshll.u32 %v9638, 16
        %v9694 = vrot.slane %v9692, 1
        %v9695 = vsel %vm474, %v9690, %v9694
        %v9696 = vshrl.u32 %v9638, 16
        %v9698 = vor.u32 %v9696, %v9694
        %v9700 = vshll.u32 %v9639, 16
        %v9702 = vrot.slane %v9700, 1
        %v9703 = vsel %vm474, %v9698, %v9702
        %v9704 = vshrl.u32 %v9639, 16
        %v9706 = vor.u32 %v9704, %v9702
        %v9708 = vshll.u32 %v9640, 16
        %v9710 = vrot.slane %v9708, 1
        %v9711 = vsel %vm474, %v9706, %v9710
        %v9712 = vshrl.u32 %v9640, 16
        %v9714 = vor.u32 %v9712, %v9710
        %v9716 = vshll.u32 %v9641, 16
        %v9718 = vrot.slane %v9716, 1
        %v9719 = vsel %vm474, %v9714, %v9718
        %v9720 = vshrl.u32 %v9641, 16
        %v9722 = vor.u32 %v9720, %v9718
        %v9724 = vshll.u32 %v9642, 16
        %v9726 = vrot.slane %v9724, 1
        %v9727 = vsel %vm474, %v9722, %v9726
        %v9728 = vshrl.u32 %v9642, 16
        %v9730 = vor.u32 %v9728, %v9726
        %v9732 = vshll.u32 %v9643, 16
        %v9734 = vrot.slane %v9732, 1
        %v9735 = vsel %vm474, %v9730, %v9734
        %v9736 = vshrl.u32 %v9643, 16
        %v9738 = vor.u32 %v9736, %v9734
        %v9740 = vshll.u32 %v9644, 16
        %v9742 = vrot.slane %v9740, 1
        %v9743 = vsel %vm474, %v9738, %v9742
        %v9744 = vshrl.u32 %v9644, 16
        %v9746 = vor.u32 %v9744, %v9742
        %v9748 = vshll.u32 %v9645, 16
        %v9750 = vrot.slane %v9748, 1
        %v9751 = vsel %vm474, %v9746, %v9750
        %v9752 = vshrl.u32 %v9645, 16
        %v9754 = vor.u32 %v9752, %v9750
        %v9756 = vshll.u32 %v9646, 16
        %v9758 = vrot.slane %v9756, 1
        %v9759 = vsel %vm474, %v9754, %v9758
        %v9760 = vshrl.u32 %v9646, 16
        %v9762 = vor.u32 %v9760, %v9758
        %v9764 = vshll.u32 %v9647, 16
        %v9766 = vrot.slane %v9764, 1
        %v9767 = vsel %vm474, %v9762, %v9766
        %v9768 = vshrl.u32 %v9647, 16
        %v9770 = vor.u32 %v9768, %v9766
        %v9772 = vshll.u32 %v9648, 16
        %v9774 = vrot.slane %v9772, 1
        %v9775 = vsel %vm474, %v9770, %v9774
        %v9776 = vshrl.u32 %v9648, 16
        %v9778 = vor.u32 %v9776, %v9774
        %v9780 = vshll.u32 %v9649, 16
        %v9782 = vrot.slane %v9780, 1
        %v9783 = vsel %vm474, %v9778, %v9782
        %v9784 = vshrl.u32 %v9649, 16
        %v9786 = vor.u32 %v9784, %v9782
        %v9788 = vshll.u32 %v9650, 16
        %v9790 = vrot.slane %v9788, 1
        %v9791 = vsel %vm474, %v9786, %v9790
        %v9792 = vshrl.u32 %v9650, 16
        %v9794 = vor.u32 %v9792, %v9790
        %v9796 = vshll.u32 %v9651, 16
        %v9798 = vrot.slane %v9796, 1
        %v9799 = vsel %vm474, %v9794, %v9798
        %v9832 = vunpack.c.l.b16 %v9652
        %v9833 = vunpack.c.l.b16 %v9653
        %v9834 = vunpack.c.l.b16 %v9654
        %v9835 = vunpack.c.l.b16 %v9655
        %v9836 = vunpack.c.l.b16 %v9656
        %v9837 = vunpack.c.l.b16 %v9657
        %v9838 = vunpack.c.l.b16 %v9658
        %v9839 = vunpack.c.l.b16 %v9659
        %v9840 = vunpack.c.l.b16 %v9660
        %v9841 = vunpack.c.l.b16 %v9661
        %v9842 = vunpack.c.l.b16 %v9662
        %v9843 = vunpack.c.l.b16 %v9663
        %v9844 = vunpack.c.l.b16 %v9664
        %v9845 = vunpack.c.l.b16 %v9665
        %v9846 = vunpack.c.l.b16 %v9666
        %v9847 = vunpack.c.l.b16 %v9667
        %v9848 = vpack.c.b16 %v9833, %v9832
        %v9849 = vpack.c.b16 %v9835, %v9834
        %v9850 = vpack.c.b16 %v9837, %v9836
        %v9851 = vpack.c.b16 %v9839, %v9838
        %v9852 = vpack.c.b16 %v9841, %v9840
        %v9853 = vpack.c.b16 %v9843, %v9842
        %v9854 = vpack.c.b16 %v9845, %v9844
        %v9855 = vpack.c.b16 %v9847, %v9846
        %9864 = vmatprep.subr.bf16.mxu0 0
        %9865 = vmatpush1.bf16.msra.mxu0 %v9848
        %9866 = vmatprep.subr.bf16.mxu0 0
        %9867 = vmatpush1.bf16.msra.mxu0 %v9849
        %9868 = vmatprep.subr.bf16.mxu0 0
        %9869 = vmatpush1.bf16.msra.mxu0 %v9850
        %9870 = vmatprep.subr.bf16.mxu0 0
        %9871 = vmatpush1.bf16.msra.mxu0 %v9851
        %9872 = vmatprep.subr.bf16.mxu0 0
        %9873 = vmatpush1.bf16.msra.mxu0 %v9852
        %9874 = vmatprep.subr.bf16.mxu0 0
        %9875 = vmatpush1.bf16.msra.mxu0 %v9853
        %9876 = vmatprep.subr.bf16.mxu0 0
        %9877 = vmatpush1.bf16.msra.mxu0 %v9854
        %9878 = vmatprep.subr.bf16.mxu0 0
        %9879 = vmatpush1.bf16.msra.mxu0 %v9855
        %9880 = vmatprep.subr.bf16.mxu0 0
        %9881 = vmatpush1.bf16.msra.mxu0 0
        %9882 = vmatprep.subr.bf16.mxu0 0
        %9883 = vmatpush1.bf16.msra.mxu0 0
        %9884 = vmatprep.subr.bf16.mxu0 0
        %9885 = vmatpush1.bf16.msra.mxu0 0
        %9886 = vmatprep.subr.bf16.mxu0 0
        %9887 = vmatpush1.bf16.msra.mxu0 0
        %9888 = vmatprep.subr.bf16.mxu0 0
        %9889 = vmatpush1.bf16.msra.mxu0 0
        %9890 = vmatprep.subr.bf16.mxu0 0
        %9891 = vmatpush1.bf16.msra.mxu0 0
        %9892 = vmatprep.subr.bf16.mxu0 0
        %9893 = vmatpush1.bf16.msra.mxu0 0
        %9894 = vmatprep.subr.bf16.mxu0 0
        %9895 = vmatpush1.bf16.msra.mxu0 0
        %9896 = vmatprep.mubr.bf16.mxu0 0
        %9897 = vmatmul.mubr.bf16.gmra.mrb[0].mxu0 %v9679
        %v9898 = vpop.f32.mrb[0].mxu0
        %v9899 = vadd.f32 0.0, %v9898
        %v9900 = vpop.f32.mrb[0].mxu0
        %v9901 = vpop.f32.mrb[0].mxu0
        %v9902 = vadd.f32 0.0, %v9901
        %v9903 = vpop.f32.mrb[0].mxu0
        %9904 = vmatprep.mubr.bf16.mxu0 0
        %9905 = vmatmul.mubr.bf16.gmra.mrb[0].mxu0 %v9687
        %v9906 = vpop.f32.mrb[0].mxu0
        %v9907 = vadd.f32 0.0, %v9906
        %v9908 = vpop.f32.mrb[0].mxu0
        %v9909 = vpop.f32.mrb[0].mxu0
        %v9910 = vadd.f32 0.0, %v9909
        %v9911 = vpop.f32.mrb[0].mxu0
        %9912 = vmatprep.mubr.bf16.mxu0 0
        %9913 = vmatmul.mubr.bf16.gmra.mrb[0].mxu0 %v9695
        %v9914 = vpop.f32.mrb[0].mxu0
        %v9915 = vadd.f32 0.0, %v9914
        %v9916 = vpop.f32.mrb[0].mxu0
        %v9917 = vpop.f32.mrb[0].mxu0
        %v9918 = vadd.f32 0.0, %v9917
        %v9919 = vpop.f32.mrb[0].mxu0
        %9920 = vmatprep.mubr.bf16.mxu0 0
        %9921 = vmatmul.mubr.bf16.gmra.mrb[0].mxu0 %v9703
        %v9922 = vpop.f32.mrb[0].mxu0
        %v9923 = vadd.f32 0.0, %v9922
        %v9924 = vpop.f32.mrb[0].mxu0
        %v9925 = vpop.f32.mrb[0].mxu0
        %v9926 = vadd.f32 0.0, %v9925
        %v9927 = vpop.f32.mrb[0].mxu0
        %9928 = vmatprep.mubr.bf16.mxu0 0
        %9929 = vmatmul.mubr.bf16.gmra.mrb[0].mxu0 %v9711
        %v9930 = vpop.f32.mrb[0].mxu0
        %v9931 = vadd.f32 0.0, %v9930
        %v9932 = vpop.f32.mrb[0].mxu0
        %v9933 = vpop.f32.mrb[0].mxu0
        %v9934 = vadd.f32 0.0, %v9933
        %v9935 = vpop.f32.mrb[0].mxu0
        %9936 = vmatprep.mubr.bf16.mxu0 0
        %9937 = vmatmul.mubr.bf16.gmra.mrb[0].mxu0 %v9719
        %v9938 = vpop.f32.mrb[0].mxu0
        %v9939 = vadd.f32 0.0, %v9938
        %v9940 = vpop.f32.mrb[0].mxu0
        %v9941 = vpop.f32.mrb[0].mxu0
        %v9942 = vadd.f32 0.0, %v9941
        %v9943 = vpop.f32.mrb[0].mxu0
        %9944 = vmatprep.mubr.bf16.mxu0 0
        %9945 = vmatmul.mubr.bf16.gmra.mrb[0].mxu0 %v9727
        %v9946 = vpop.f32.mrb[0].mxu0
        %v9947 = vadd.f32 0.0, %v9946
        %v9948 = vpop.f32.mrb[0].mxu0
        %v9949 = vpop.f32.mrb[0].mxu0
        %v9950 = vadd.f32 0.0, %v9949
        %v9951 = vpop.f32.mrb[0].mxu0
        %9952 = vmatprep.mubr.bf16.mxu0 0
        %9953 = vmatmul.mubr.bf16.gmra.mrb[0].mxu0 %v9735
        %v9954 = vpop.f32.mrb[0].mxu0
        %v9955 = vadd.f32 0.0, %v9954
        %v9956 = vpop.f32.mrb[0].mxu0
        %v9957 = vpop.f32.mrb[0].mxu0
        %v9958 = vadd.f32 0.0, %v9957
        %v9959 = vpop.f32.mrb[0].mxu0
        %9960 = vmatprep.mubr.bf16.mxu0 0
        %9961 = vmatmul.mubr.bf16.gmra.mrb[0].mxu0 %v9743
        %v9962 = vpop.f32.mrb[0].mxu0
        %v9963 = vadd.f32 0.0, %v9962
        %v9964 = vpop.f32.mrb[0].mxu0
        %v9965 = vpop.f32.mrb[0].mxu0
        %v9966 = vadd.f32 0.0, %v9965
        %v9967 = vpop.f32.mrb[0].mxu0
        %9968 = vmatprep.mubr.bf16.mxu0 0
        %9969 = vmatmul.mubr.bf16.gmra.mrb[0].mxu0 %v9751
        %v9970 = vpop.f32.mrb[0].mxu0
        %v9971 = vadd.f32 0.0, %v9970
        %v9972 = vpop.f32.mrb[0].mxu0
        %v9973 = vpop.f32.mrb[0].mxu0
        %v9974 = vadd.f32 0.0, %v9973
        %v9975 = vpop.f32.mrb[0].mxu0
        %9976 = vmatprep.mubr.bf16.mxu0 0
        %9977 = vmatmul.mubr.bf16.gmra.mrb[0].mxu0 %v9759
        %v9978 = vpop.f32.mrb[0].mxu0
        %v9979 = vadd.f32 0.0, %v9978
        %v9980 = vpop.f32.mrb[0].mxu0
        %v9981 = vpop.f32.mrb[0].mxu0
        %v9982 = vadd.f32 0.0, %v9981
        %v9983 = vpop.f32.mrb[0].mxu0
        %9984 = vmatprep.mubr.bf16.mxu0 0
        %9985 = vmatmul.mubr.bf16.gmra.mrb[0].mxu0 %v9767
        %v9986 = vpop.f32.mrb[0].mxu0
        %v9987 = vadd.f32 0.0, %v9986
        %v9988 = vpop.f32.mrb[0].mxu0
        %v9989 = vpop.f32.mrb[0].mxu0
        %v9990 = vadd.f32 0.0, %v9989
        %v9991 = vpop.f32.mrb[0].mxu0
        %9992 = vmatprep.mubr.bf16.mxu0 0
        %9993 = vmatmul.mubr.bf16.gmra.mrb[0].mxu0 %v9775
        %v9994 = vpop.f32.mrb[0].mxu0
        %v9995 = vadd.f32 0.0, %v9994
        %v9996 = vpop.f32.mrb[0].mxu0
        %v9997 = vpop.f32.mrb[0].mxu0
        %v9998 = vadd.f32 0.0, %v9997
        %v9999 = vpop.f32.mrb[0].mxu0
        %10000 = vmatprep.mubr.bf16.mxu0 0
        %10001 = vmatmul.mubr.bf16.gmra.mrb[0].mxu0 %v9783
        %v10002 = vpop.f32.mrb[0].mxu0
        %v10003 = vadd.f32 0.0, %v10002
        %v10004 = vpop.f32.mrb[0].mxu0
        %v10005 = vpop.f32.mrb[0].mxu0
        %v10006 = vadd.f32 0.0, %v10005
        %v10007 = vpop.f32.mrb[0].mxu0
        %10008 = vmatprep.mubr.bf16.mxu0 0
        %10009 = vmatmul.mubr.bf16.gmra.mrb[0].mxu0 %v9791
        %v10010 = vpop.f32.mrb[0].mxu0
        %v10011 = vadd.f32 0.0, %v10010
        %v10012 = vpop.f32.mrb[0].mxu0
        %v10013 = vpop.f32.mrb[0].mxu0
        %v10014 = vadd.f32 0.0, %v10013
        %v10015 = vpop.f32.mrb[0].mxu0
        %10016 = vmatprep.mubr.bf16.mxu0 0
        %10017 = vmatmul.mubr.bf16.gmra.mrb[0].mxu0 %v9799
        %v10018 = vpop.f32.mrb[0].mxu0
        %v10019 = vadd.f32 0.0, %v10018
        %v10020 = vpop.f32.mrb[0].mxu0
        %v10021 = vpop.f32.mrb[0].mxu0
        %v10022 = vadd.f32 0.0, %v10021
        %v10023 = vpop.f32.mrb[0].mxu0
        %10024 = vdwg.mxu0
        %v10025 = vadd.f32 %v9586, %v9899
        %v10026 = vadd.f32 %v9587, %v9902
        %v10027 = vadd.f32 %v9588, %v9907
        %v10028 = vadd.f32 %v9589, %v9910
        %v10029 = vadd.f32 %v9590, %v9915
        %v10030 = vadd.f32 %v9591, %v9918
        %v10031 = vadd.f32 %v9592, %v9923
        %v10032 = vadd.f32 %v9593, %v9926
        %v10033 = vadd.f32 %v9594, %v9931
        %v10034 = vadd.f32 %v9595, %v9934
        %v10035 = vadd.f32 %v9596, %v9939
        %v10036 = vadd.f32 %v9597, %v9942
        %v10037 = vadd.f32 %v9598, %v9947
        %v10038 = vadd.f32 %v9599, %v9950
        %v10039 = vadd.f32 %v9600, %v9955
        %v10040 = vadd.f32 %v9601, %v9958
        %v10041 = vadd.f32 %v9602, %v9963
        %v10042 = vadd.f32 %v9603, %v9966
        %v10043 = vadd.f32 %v9604, %v9971
        %v10044 = vadd.f32 %v9605, %v9974
        %v10045 = vadd.f32 %v9606, %v9979
        %v10046 = vadd.f32 %v9607, %v9982
        %v10047 = vadd.f32 %v9608, %v9987
        %v10048 = vadd.f32 %v9609, %v9990
        %v10049 = vadd.f32 %v9610, %v9995
        %v10050 = vadd.f32 %v9611, %v9998
        %v10051 = vadd.f32 %v9612, %v10003
        %v10052 = vadd.f32 %v9613, %v10006
        %v10053 = vadd.f32 %v9614, %v10011
        %v10054 = vadd.f32 %v9615, %v10014
        %v10055 = vadd.f32 %v9616, %v10019
        %v10056 = vadd.f32 %v9617, %v10022
        %s10057 = scalar_lea.vmem %s2, 2
        %v10058 = vld [vmem:[%s10057] sm:$0x1]
        %v10060 = vlaneseq
        %v10061 = vshrl.u32 %v10060, 7
        %v10062 = vsub.s32 0, %v10061
        %v10063 = vrot.slane %v10058, %v10062
        %v10065 = vadd.f32 %v10025, %v10063
        %v10066 = vadd.f32 %v10026, %v10063
        %v10067 = vadd.f32 %v10027, %v10063
        %v10068 = vadd.f32 %v10028, %v10063
        %v10069 = vadd.f32 %v10029, %v10063
        %v10070 = vadd.f32 %v10030, %v10063
        %v10071 = vadd.f32 %v10031, %v10063
        %v10072 = vadd.f32 %v10032, %v10063
        %v10073 = vadd.f32 %v10033, %v10063
        %v10074 = vadd.f32 %v10034, %v10063
        %v10075 = vadd.f32 %v10035, %v10063
        %v10076 = vadd.f32 %v10036, %v10063
        %v10077 = vadd.f32 %v10037, %v10063
        %v10078 = vadd.f32 %v10038, %v10063
        %v10079 = vadd.f32 %v10039, %v10063
        %v10080 = vadd.f32 %v10040, %v10063
        %v10081 = vadd.f32 %v10041, %v10063
        %v10082 = vadd.f32 %v10042, %v10063
        %v10083 = vadd.f32 %v10043, %v10063
        %v10084 = vadd.f32 %v10044, %v10063
        %v10085 = vadd.f32 %v10045, %v10063
        %v10086 = vadd.f32 %v10046, %v10063
        %v10087 = vadd.f32 %v10047, %v10063
        %v10088 = vadd.f32 %v10048, %v10063
        %v10089 = vadd.f32 %v10049, %v10063
        %v10090 = vadd.f32 %v10050, %v10063
        %v10091 = vadd.f32 %v10051, %v10063
        %v10092 = vadd.f32 %v10052, %v10063
        %v10093 = vadd.f32 %v10053, %v10063
        %v10094 = vadd.f32 %v10054, %v10063
        %v10095 = vadd.f32 %v10055, %v10063
        %v10096 = vadd.f32 %v10056, %v10063
        %v10097 = vmax.f32 %v10065, 0.0
        %v10098 = vmax.f32 %v10066, 0.0
        %v10099 = vmax.f32 %v10067, 0.0
        %v10100 = vmax.f32 %v10068, 0.0
        %v10101 = vmax.f32 %v10069, 0.0
        %v10102 = vmax.f32 %v10070, 0.0
        %v10103 = vmax.f32 %v10071, 0.0
        %v10104 = vmax.f32 %v10072, 0.0
        %v10105 = vmax.f32 %v10073, 0.0
        %v10106 = vmax.f32 %v10074, 0.0
        %v10107 = vmax.f32 %v10075, 0.0
        %v10108 = vmax.f32 %v10076, 0.0
        %v10109 = vmax.f32 %v10077, 0.0
        %v10110 = vmax.f32 %v10078, 0.0
        %v10111 = vmax.f32 %v10079, 0.0
        %v10112 = vmax.f32 %v10080, 0.0
        %v10113 = vmax.f32 %v10081, 0.0
        %v10114 = vmax.f32 %v10082, 0.0
        %v10115 = vmax.f32 %v10083, 0.0
        %v10116 = vmax.f32 %v10084, 0.0
        %v10117 = vmax.f32 %v10085, 0.0
        %v10118 = vmax.f32 %v10086, 0.0
        %v10119 = vmax.f32 %v10087, 0.0
        %v10120 = vmax.f32 %v10088, 0.0
        %v10121 = vmax.f32 %v10089, 0.0
        %v10122 = vmax.f32 %v10090, 0.0
        %v10123 = vmax.f32 %v10091, 0.0
        %v10124 = vmax.f32 %v10092, 0.0
        %v10125 = vmax.f32 %v10093, 0.0
        %v10126 = vmax.f32 %v10094, 0.0
        %v10127 = vmax.f32 %v10095, 0.0
        %v10128 = vmax.f32 %v10096, 0.0
        %v10129 = vpack.c.bf16 %v10098, %v10097
        %v10130 = vpack.c.bf16 %v10100, %v10099
        %v10131 = vpack.c.bf16 %v10102, %v10101
        %v10132 = vpack.c.bf16 %v10104, %v10103
        %v10133 = vpack.c.bf16 %v10106, %v10105
        %v10134 = vpack.c.bf16 %v10108, %v10107
        %v10135 = vpack.c.bf16 %v10110, %v10109
        %v10136 = vpack.c.bf16 %v10112, %v10111
        %v10137 = vpack.c.bf16 %v10114, %v10113
        %v10138 = vpack.c.bf16 %v10116, %v10115
        %v10139 = vpack.c.bf16 %v10118, %v10117
        %v10140 = vpack.c.bf16 %v10120, %v10119
        %v10141 = vpack.c.bf16 %v10122, %v10121
        %v10142 = vpack.c.bf16 %v10124, %v10123
        %v10143 = vpack.c.bf16 %v10126, %v10125
        %v10144 = vpack.c.bf16 %v10128, %v10127
        %v10145 = vadd.bf16 %v6949, %v10129
        %v10146 = vadd.bf16 %v6950, %v10130
        %v10147 = vadd.bf16 %v6951, %v10131
        %v10148 = vadd.bf16 %v6952, %v10132
        %v10149 = vadd.bf16 %v6953, %v10133
        %v10150 = vadd.bf16 %v6954, %v10134
        %v10151 = vadd.bf16 %v6955, %v10135
        %v10152 = vadd.bf16 %v6956, %v10136
        %v10153 = vadd.bf16 %v6957, %v10137
        %v10154 = vadd.bf16 %v6958, %v10138
        %v10155 = vadd.bf16 %v6959, %v10139
        %v10156 = vadd.bf16 %v6960, %v10140
        %v10157 = vadd.bf16 %v6961, %v10141
        %v10158 = vadd.bf16 %v6962, %v10142
        %v10159 = vadd.bf16 %v6963, %v10143
        %v10160 = vadd.bf16 %v7160, %v10144
        %10161 = vst [vmem:[#allocation2 + $0x10] sm:$0xff] %v10145
        %10162 = vst [vmem:[#allocation2 + $0x18] sm:$0xff] %v10146
        %10163 = vst [vmem:[#allocation2 + $0x20] sm:$0xff] %v10147
        %10164 = vst [vmem:[#allocation2 + $0x28] sm:$0xff] %v10148
        %10165 = vst [vmem:[#allocation2 + $0x30] sm:$0xff] %v10149
        %10166 = vst [vmem:[#allocation2 + $0x38] sm:$0xff] %v10150
        %10167 = vst [vmem:[#allocation2 + $0x40] sm:$0xff] %v10151
        %10168 = vst [vmem:[#allocation2 + $0x48] sm:$0xff] %v10152
        %10169 = vst [vmem:[#allocation2 + $0x50] sm:$0xff] %v10153
        %10170 = vst [vmem:[#allocation2 + $0x58] sm:$0xff] %v10154
        %10171 = vst [vmem:[#allocation2 + $0x60] sm:$0xff] %v10155
        %10172 = vst [vmem:[#allocation2 + $0x68] sm:$0xff] %v10156
        %10173 = vst [vmem:[#allocation2 + $0x70] sm:$0xff] %v10157
        %10174 = vst [vmem:[#allocation2 + $0x78] sm:$0xff] %v10158
        %10175 = vst [vmem:[#allocation2 + $0x80] sm:$0xff] %v10159
        %10176 = vst [vmem:[#allocation2 + $0x88] sm:$0xff] %v10160
        %v10177 = vld [vmem:[#allocation2 + $0x10] sm:$0xff]
        %v10178 = vld [vmem:[#allocation2 + $0x18] sm:$0xff]
        %v10179 = vld [vmem:[#allocation2 + $0x20] sm:$0xff]
        %v10180 = vld [vmem:[#allocation2 + $0x28] sm:$0xff]
        %v10181 = vld [vmem:[#allocation2 + $0x30] sm:$0xff]
        %v10182 = vld [vmem:[#allocation2 + $0x38] sm:$0xff]
        %v10183 = vld [vmem:[#allocation2 + $0x40] sm:$0xff]
        %v10184 = vld [vmem:[#allocation2 + $0x48] sm:$0xff]
        %v10185 = vld [vmem:[#allocation2 + $0x50] sm:$0xff]
        %v10186 = vld [vmem:[#allocation2 + $0x58] sm:$0xff]
        %v10187 = vld [vmem:[#allocation2 + $0x60] sm:$0xff]
        %v10188 = vld [vmem:[#allocation2 + $0x68] sm:$0xff]
        %v10189 = vld [vmem:[#allocation2 + $0x70] sm:$0xff]
        %v10190 = vld [vmem:[#allocation2 + $0x78] sm:$0xff]
        %v10191 = vld [vmem:[#allocation2 + $0x80] sm:$0xff]
        %v10192 = vld [vmem:[#allocation2 + $0x88] sm:$0xff]
        %v10193 = vld [vmem:[#allocation8] sm:$0xf]
        %v10194 = vld [vmem:[#allocation8 + $0x4] sm:$0xf]
        %v10195 = vld [vmem:[#allocation8 + $0x8] sm:$0xf]
        %v10196 = vld [vmem:[#allocation8 + $0xc] sm:$0xf]
        %v10197 = vld [vmem:[#allocation8 + $0x10] sm:$0xf]
        %v10198 = vld [vmem:[#allocation8 + $0x14] sm:$0xf]
        %v10199 = vld [vmem:[#allocation8 + $0x18] sm:$0xf]
        %v10200 = vld [vmem:[#allocation8 + $0x1c] sm:$0xf]
        %v10201 = vld [vmem:[#allocation8 + $0x20] sm:$0xf]
        %v10202 = vld [vmem:[#allocation8 + $0x24] sm:$0xf]
        %v10203 = vld [vmem:[#allocation8 + $0x28] sm:$0xf]
        %v10204 = vld [vmem:[#allocation8 + $0x2c] sm:$0xf]
        %v10205 = vld [vmem:[#allocation8 + $0x30] sm:$0xf]
        %v10206 = vld [vmem:[#allocation8 + $0x34] sm:$0xf]
        %v10207 = vld [vmem:[#allocation8 + $0x38] sm:$0xf]
        %v10208 = vld [vmem:[#allocation8 + $0x3c] sm:$0xf]
        %v10209 = vld [vmem:[%s4] sm:$0x1]
        %v10211 = vlaneseq
        %v10212 = vshrl.u32 %v10211, 7
        %v10213 = vsub.s32 0, %v10212
        %v10214 = vrot.slane %v10209, %v10213
        %v10232 = vunpack.c.l.b16 %v10193
        %v10233 = vunpack.c.l.b16 %v10194
        %v10234 = vunpack.c.l.b16 %v10195
        %v10235 = vunpack.c.l.b16 %v10196
        %v10236 = vunpack.c.l.b16 %v10197
        %v10237 = vunpack.c.l.b16 %v10198
        %v10238 = vunpack.c.l.b16 %v10199
        %v10239 = vunpack.c.l.b16 %v10200
        %v10240 = vunpack.c.l.b16 %v10201
        %v10241 = vunpack.c.l.b16 %v10202
        %v10242 = vunpack.c.l.b16 %v10203
        %v10243 = vunpack.c.l.b16 %v10204
        %v10244 = vunpack.c.l.b16 %v10205
        %v10245 = vunpack.c.l.b16 %v10206
        %v10246 = vunpack.c.l.b16 %v10207
        %v10247 = vunpack.c.l.b16 %v10208
        %v10248 = vpack.c.b16 %v10233, %v10232
        %v10249 = vpack.c.b16 %v10235, %v10234
        %v10250 = vpack.c.b16 %v10237, %v10236
        %v10251 = vpack.c.b16 %v10239, %v10238
        %v10252 = vpack.c.b16 %v10241, %v10240
        %v10253 = vpack.c.b16 %v10243, %v10242
        %v10254 = vpack.c.b16 %v10245, %v10244
        %v10255 = vpack.c.b16 %v10247, %v10246
        %10264 = vmatprep.subr.bf16.mxu0 0
        %10265 = vmatpush1.bf16.msra.mxu0 %v10248
        %10266 = vmatprep.subr.bf16.mxu0 0
        %10267 = vmatpush1.bf16.msra.mxu0 %v10249
        %10268 = vmatprep.subr.bf16.mxu0 0
        %10269 = vmatpush1.bf16.msra.mxu0 %v10250
        %10270 = vmatprep.subr.bf16.mxu0 0
        %10271 = vmatpush1.bf16.msra.mxu0 %v10251
        %10272 = vmatprep.subr.bf16.mxu0 0
        %10273 = vmatpush1.bf16.msra.mxu0 %v10252
        %10274 = vmatprep.subr.bf16.mxu0 0
        %10275 = vmatpush1.bf16.msra.mxu0 %v10253
        %10276 = vmatprep.subr.bf16.mxu0 0
        %10277 = vmatpush1.bf16.msra.mxu0 %v10254
        %10278 = vmatprep.subr.bf16.mxu0 0
        %10279 = vmatpush1.bf16.msra.mxu0 %v10255
        %10280 = vmatprep.subr.bf16.mxu0 0
        %10281 = vmatpush1.bf16.msra.mxu0 0
        %10282 = vmatprep.subr.bf16.mxu0 0
        %10283 = vmatpush1.bf16.msra.mxu0 0
        %10284 = vmatprep.subr.bf16.mxu0 0
        %10285 = vmatpush1.bf16.msra.mxu0 0
        %10286 = vmatprep.subr.bf16.mxu0 0
        %10287 = vmatpush1.bf16.msra.mxu0 0
        %10288 = vmatprep.subr.bf16.mxu0 0
        %10289 = vmatpush1.bf16.msra.mxu0 0
        %10290 = vmatprep.subr.bf16.mxu0 0
        %10291 = vmatpush1.bf16.msra.mxu0 0
        %10292 = vmatprep.subr.bf16.mxu0 0
        %10293 = vmatpush1.bf16.msra.mxu0 0
        %10294 = vmatprep.subr.bf16.mxu0 0
        %10295 = vmatpush1.bf16.msra.mxu0 0
        %10296 = vmatprep.mubr.bf16.mxu0 0
        %10297 = vmatmul.mubr.bf16.gmra.mrb[0].mxu0 %v10177
        %v10298 = vpop.f32.mrb[0].mxu0
        %v10299 = vadd.f32 %v10214, %v10298
        %v10300 = vpop.f32.mrb[0].mxu0
        %v10301 = vpop.f32.mrb[0].mxu0
        %v10302 = vadd.f32 %v10214, %v10301
        %v10303 = vpop.f32.mrb[0].mxu0
        %10304 = vmatprep.mubr.bf16.mxu0 0
        %10305 = vmatmul.mubr.bf16.gmra.mrb[0].mxu0 %v10178
        %v10306 = vpop.f32.mrb[0].mxu0
        %v10307 = vadd.f32 %v10214, %v10306
        %v10308 = vpop.f32.mrb[0].mxu0
        %v10309 = vpop.f32.mrb[0].mxu0
        %v10310 = vadd.f32 %v10214, %v10309
        %v10311 = vpop.f32.mrb[0].mxu0
        %10312 = vmatprep.mubr.bf16.mxu0 0
        %10313 = vmatmul.mubr.bf16.gmra.mrb[0].mxu0 %v10179
        %v10314 = vpop.f32.mrb[0].mxu0
        %v10315 = vadd.f32 %v10214, %v10314
        %v10316 = vpop.f32.mrb[0].mxu0
        %v10317 = vpop.f32.mrb[0].mxu0
        %v10318 = vadd.f32 %v10214, %v10317
        %v10319 = vpop.f32.mrb[0].mxu0
        %10320 = vmatprep.mubr.bf16.mxu0 0
        %10321 = vmatmul.mubr.bf16.gmra.mrb[0].mxu0 %v10180
        %v10322 = vpop.f32.mrb[0].mxu0
        %v10323 = vadd.f32 %v10214, %v10322
        %v10324 = vpop.f32.mrb[0].mxu0
        %v10325 = vpop.f32.mrb[0].mxu0
        %v10326 = vadd.f32 %v10214, %v10325
        %v10327 = vpop.f32.mrb[0].mxu0
        %10328 = vmatprep.mubr.bf16.mxu0 0
        %10329 = vmatmul.mubr.bf16.gmra.mrb[0].mxu0 %v10181
        %v10330 = vpop.f32.mrb[0].mxu0
        %v10331 = vadd.f32 %v10214, %v10330
        %v10332 = vpop.f32.mrb[0].mxu0
        %v10333 = vpop.f32.mrb[0].mxu0
        %v10334 = vadd.f32 %v10214, %v10333
        %v10335 = vpop.f32.mrb[0].mxu0
        %10336 = vmatprep.mubr.bf16.mxu0 0
        %10337 = vmatmul.mubr.bf16.gmra.mrb[0].mxu0 %v10182
        %v10338 = vpop.f32.mrb[0].mxu0
        %v10339 = vadd.f32 %v10214, %v10338
        %v10340 = vpop.f32.mrb[0].mxu0
        %v10341 = vpop.f32.mrb[0].mxu0
        %v10342 = vadd.f32 %v10214, %v10341
        %v10343 = vpop.f32.mrb[0].mxu0
        %10344 = vmatprep.mubr.bf16.mxu0 0
        %10345 = vmatmul.mubr.bf16.gmra.mrb[0].mxu0 %v10183
        %v10346 = vpop.f32.mrb[0].mxu0
        %v10347 = vadd.f32 %v10214, %v10346
        %v10348 = vpop.f32.mrb[0].mxu0
        %v10349 = vpop.f32.mrb[0].mxu0
        %v10350 = vadd.f32 %v10214, %v10349
        %v10351 = vpop.f32.mrb[0].mxu0
        %10352 = vmatprep.mubr.bf16.mxu0 0
        %10353 = vmatmul.mubr.bf16.gmra.mrb[0].mxu0 %v10184
        %v10354 = vpop.f32.mrb[0].mxu0
        %v10355 = vadd.f32 %v10214, %v10354
        %v10356 = vpop.f32.mrb[0].mxu0
        %v10357 = vpop.f32.mrb[0].mxu0
        %v10358 = vadd.f32 %v10214, %v10357
        %v10359 = vpop.f32.mrb[0].mxu0
        %10360 = vmatprep.mubr.bf16.mxu0 0
        %10361 = vmatmul.mubr.bf16.gmra.mrb[0].mxu0 %v10185
        %v10362 = vpop.f32.mrb[0].mxu0
        %v10363 = vadd.f32 %v10214, %v10362
        %v10364 = vpop.f32.mrb[0].mxu0
        %v10365 = vpop.f32.mrb[0].mxu0
        %v10366 = vadd.f32 %v10214, %v10365
        %v10367 = vpop.f32.mrb[0].mxu0
        %10368 = vmatprep.mubr.bf16.mxu0 0
        %10369 = vmatmul.mubr.bf16.gmra.mrb[0].mxu0 %v10186
        %v10370 = vpop.f32.mrb[0].mxu0
        %v10371 = vadd.f32 %v10214, %v10370
        %v10372 = vpop.f32.mrb[0].mxu0
        %v10373 = vpop.f32.mrb[0].mxu0
        %v10374 = vadd.f32 %v10214, %v10373
        %v10375 = vpop.f32.mrb[0].mxu0
        %10376 = vmatprep.mubr.bf16.mxu0 0
        %10377 = vmatmul.mubr.bf16.gmra.mrb[0].mxu0 %v10187
        %v10378 = vpop.f32.mrb[0].mxu0
        %v10379 = vadd.f32 %v10214, %v10378
        %v10380 = vpop.f32.mrb[0].mxu0
        %v10381 = vpop.f32.mrb[0].mxu0
        %v10382 = vadd.f32 %v10214, %v10381
        %v10383 = vpop.f32.mrb[0].mxu0
        %10384 = vmatprep.mubr.bf16.mxu0 0
        %10385 = vmatmul.mubr.bf16.gmra.mrb[0].mxu0 %v10188
        %v10386 = vpop.f32.mrb[0].mxu0
        %v10387 = vadd.f32 %v10214, %v10386
        %v10388 = vpop.f32.mrb[0].mxu0
        %v10389 = vpop.f32.mrb[0].mxu0
        %v10390 = vadd.f32 %v10214, %v10389
        %v10391 = vpop.f32.mrb[0].mxu0
        %10392 = vmatprep.mubr.bf16.mxu0 0
        %10393 = vmatmul.mubr.bf16.gmra.mrb[0].mxu0 %v10189
        %v10394 = vpop.f32.mrb[0].mxu0
        %v10395 = vadd.f32 %v10214, %v10394
        %v10396 = vpop.f32.mrb[0].mxu0
        %v10397 = vpop.f32.mrb[0].mxu0
        %v10398 = vadd.f32 %v10214, %v10397
        %v10399 = vpop.f32.mrb[0].mxu0
        %10400 = vmatprep.mubr.bf16.mxu0 0
        %10401 = vmatmul.mubr.bf16.gmra.mrb[0].mxu0 %v10190
        %v10402 = vpop.f32.mrb[0].mxu0
        %v10403 = vadd.f32 %v10214, %v10402
        %v10404 = vpop.f32.mrb[0].mxu0
        %v10405 = vpop.f32.mrb[0].mxu0
        %v10406 = vadd.f32 %v10214, %v10405
        %v10407 = vpop.f32.mrb[0].mxu0
        %10408 = vmatprep.mubr.bf16.mxu0 0
        %10409 = vmatmul.mubr.bf16.gmra.mrb[0].mxu0 %v10191
        %v10410 = vpop.f32.mrb[0].mxu0
        %v10411 = vadd.f32 %v10214, %v10410
        %v10412 = vpop.f32.mrb[0].mxu0
        %v10413 = vpop.f32.mrb[0].mxu0
        %v10414 = vadd.f32 %v10214, %v10413
        %v10415 = vpop.f32.mrb[0].mxu0
        %10416 = vmatprep.mubr.bf16.mxu0 0
        %10417 = vmatmul.mubr.bf16.gmra.mrb[0].mxu0 %v10192
        %v10418 = vpop.f32.mrb[0].mxu0
        %v10419 = vadd.f32 %v10214, %v10418
        %v10420 = vpop.f32.mrb[0].mxu0
        %v10421 = vpop.f32.mrb[0].mxu0
        %v10422 = vadd.f32 %v10214, %v10421
        %v10423 = vpop.f32.mrb[0].mxu0
        %10424 = vdwg.mxu0
        %v10425 = vadd.f32 %v10299, %v10302
        %v10426 = vadd.f32 %v10425, %v10307
        %v10427 = vadd.f32 %v10426, %v10310
        %v10428 = vadd.f32 %v10427, %v10315
        %v10429 = vadd.f32 %v10428, %v10318
        %v10430 = vadd.f32 %v10429, %v10323
        %v10431 = vadd.f32 %v10430, %v10326
        %v10432 = vadd.f32 %v10431, %v10331
        %v10433 = vadd.f32 %v10432, %v10334
        %v10434 = vadd.f32 %v10433, %v10339
        %v10435 = vadd.f32 %v10434, %v10342
        %v10436 = vadd.f32 %v10435, %v10347
        %v10437 = vadd.f32 %v10436, %v10350
        %v10438 = vadd.f32 %v10437, %v10355
        %v10439 = vadd.f32 %v10438, %v10358
        %v10440 = vadd.f32 %v10439, %v10363
        %v10441 = vadd.f32 %v10440, %v10366
        %v10442 = vadd.f32 %v10441, %v10371
        %v10443 = vadd.f32 %v10442, %v10374
        %v10444 = vadd.f32 %v10443, %v10379
        %v10445 = vadd.f32 %v10444, %v10382
        %v10446 = vadd.f32 %v10445, %v10387
        %v10447 = vadd.f32 %v10446, %v10390
        %v10448 = vadd.f32 %v10447, %v10395
        %v10449 = vadd.f32 %v10448, %v10398
        %v10450 = vadd.f32 %v10449, %v10403
        %v10451 = vadd.f32 %v10450, %v10406
        %v10452 = vadd.f32 %v10451, %v10411
        %v10453 = vadd.f32 %v10452, %v10414
        %v10454 = vadd.f32 %v10453, %v10419
        %v10455 = vadd.f32 %v10454, %v10422
        %v10456 = vrot.slane %v10455, 4
        %v10457 = vadd.f32 %v10455, %v10456
        %v10458 = vrot.slane %v10457, 2
        %v10459 = vadd.f32 %v10457, %v10458
        %v10460 = vrot.slane %v10459, 1
        %v10461 = vadd.f32 %v10459, %v10460
        %v10462 = vmul.f32 %v10461, 0.00390625
        %v10463 = vld [vmem:[#allocation9] sm:$0xff]
        %v10464 = vld [vmem:[#allocation9 + $0x8] sm:$0xff]
        %v10465 = vld [vmem:[#allocation9 + $0x10] sm:$0xff]
        %v10466 = vld [vmem:[#allocation9 + $0x18] sm:$0xff]
        %v10467 = vld [vmem:[#allocation9 + $0x20] sm:$0xff]
        %v10468 = vld [vmem:[#allocation9 + $0x28] sm:$0xff]
        %v10469 = vld [vmem:[#allocation9 + $0x30] sm:$0xff]
        %v10470 = vld [vmem:[#allocation9 + $0x38] sm:$0xff]
        %v10471 = vld [vmem:[#allocation9 + $0x40] sm:$0xff]
        %v10472 = vld [vmem:[#allocation9 + $0x48] sm:$0xff]
        %v10473 = vld [vmem:[#allocation9 + $0x50] sm:$0xff]
        %v10474 = vld [vmem:[#allocation9 + $0x58] sm:$0xff]
        %v10475 = vld [vmem:[#allocation9 + $0x60] sm:$0xff]
        %v10476 = vld [vmem:[#allocation9 + $0x68] sm:$0xff]
        %v10477 = vld [vmem:[#allocation9 + $0x70] sm:$0xff]
        %v10478 = vld [vmem:[#allocation9 + $0x78] sm:$0xff]
        %10479 = vmatprep.subr.mxu0 0.0
        %10480 = vmatpush1.msra.mxu0 %v10463
        %10481 = vmatprep.subr.mxu0 0.0
        %10482 = vmatpush1.msra.mxu0 %v10464
        %10483 = vmatprep.subr.mxu0 0.0
        %10484 = vmatpush1.msra.mxu0 %v10465
        %10485 = vmatprep.subr.mxu0 0.0
        %10486 = vmatpush1.msra.mxu0 %v10466
        %10487 = vmatprep.subr.mxu0 0.0
        %10488 = vmatpush1.msra.mxu0 %v10467
        %10489 = vmatprep.subr.mxu0 0.0
        %10490 = vmatpush1.msra.mxu0 %v10468
        %10491 = vmatprep.subr.mxu0 0.0
        %10492 = vmatpush1.msra.mxu0 %v10469
        %10493 = vmatprep.subr.mxu0 0.0
        %10494 = vmatpush1.msra.mxu0 %v10470
        %10495 = vmatprep.subr.mxu0 0.0
        %10496 = vmatpush1.msra.mxu0 %v10471
        %10497 = vmatprep.subr.mxu0 0.0
        %10498 = vmatpush1.msra.mxu0 %v10472
        %10499 = vmatprep.subr.mxu0 0.0
        %10500 = vmatpush1.msra.mxu0 %v10473
        %10501 = vmatprep.subr.mxu0 0.0
        %10502 = vmatpush1.msra.mxu0 %v10474
        %10503 = vmatprep.subr.mxu0 0.0
        %10504 = vmatpush1.msra.mxu0 %v10475
        %10505 = vmatprep.subr.mxu0 0.0
        %10506 = vmatpush1.msra.mxu0 %v10476
        %10507 = vmatprep.subr.mxu0 0.0
        %10508 = vmatpush1.msra.mxu0 %v10477
        %10509 = vmatprep.subr.mxu0 0.0
        %10510 = vmatpush1.msra.mxu0 %v10478
        %10511 = vmatprep.subr.mxu0 0.0
        %10512 = vmatpush1.msra.mxu0 0.0
        %10513 = vmatprep.subr.mxu0 0.0
        %10514 = vmatpush1.msra.mxu0 0.0
        %10515 = vmatprep.subr.mxu0 0.0
        %10516 = vmatpush1.msra.mxu0 0.0
        %10517 = vmatprep.subr.mxu0 0.0
        %10518 = vmatpush1.msra.mxu0 0.0
        %10519 = vmatprep.subr.mxu0 0.0
        %10520 = vmatpush1.msra.mxu0 0.0
        %10521 = vmatprep.subr.mxu0 0.0
        %10522 = vmatpush1.msra.mxu0 0.0
        %10523 = vmatprep.subr.mxu0 0.0
        %10524 = vmatpush1.msra.mxu0 0.0
        %10525 = vmatprep.subr.mxu0 0.0
        %10526 = vmatpush1.msra.mxu0 0.0
        %10527 = vmatprep.subr.mxu0 0.0
        %10528 = vmatpush1.msra.mxu0 0.0
        %10529 = vmatprep.subr.mxu0 0.0
        %10530 = vmatpush1.msra.mxu0 0.0
        %10531 = vmatprep.subr.mxu0 0.0
        %10532 = vmatpush1.msra.mxu0 0.0
        %10533 = vmatprep.subr.mxu0 0.0
        %10534 = vmatpush1.msra.mxu0 0.0
        %10535 = vmatprep.subr.mxu0 0.0
        %10536 = vmatpush1.msra.mxu0 0.0
        %10537 = vmatprep.subr.mxu0 0.0
        %10538 = vmatpush1.msra.mxu0 0.0
        %10539 = vmatprep.subr.mxu0 0.0
        %10540 = vmatpush1.msra.mxu0 0.0
        %10541 = vmatprep.subr.mxu0 0.0
        %10542 = vmatpush1.msra.mxu0 0.0
        %10543 = vmatprep.mubr.f32.mxu0 0.0
        %10544 = vmatmul.mubr.f32.gmra.mrb[0].mxu0 %v10462
        %v10545 = vpop.f32.mrb[0].mxu0
        %v10546 = vadd.f32 0.0, %v10545
        %v10547 = vpop.f32.mrb[0].mxu0
        %10548 = vdwg.mxu0
        %v10549 = vmax.f32 %v10546, 0.0
        %v10550 = vld [vmem:[#allocation11] sm:$0xff]
        %v10551 = vld [vmem:[#allocation11 + $0x8] sm:$0xff]
        %v10552 = vld [vmem:[#allocation11 + $0x10] sm:$0xff]
        %v10553 = vld [vmem:[#allocation11 + $0x18] sm:$0xff]
        %v10554 = vld [vmem:[#allocation11 + $0x20] sm:$0xff]
        %v10555 = vld [vmem:[#allocation11 + $0x28] sm:$0xff]
        %v10556 = vld [vmem:[#allocation11 + $0x30] sm:$0xff]
        %v10557 = vld [vmem:[#allocation11 + $0x38] sm:$0xff]
        %v10558 = vld [vmem:[#allocation11 + $0x40] sm:$0xff]
        %v10559 = vld [vmem:[#allocation11 + $0x48] sm:$0xff]
        %v10560 = vld [vmem:[#allocation11 + $0x50] sm:$0xff]
        %v10561 = vld [vmem:[#allocation11 + $0x58] sm:$0xff]
        %v10562 = vld [vmem:[#allocation11 + $0x60] sm:$0xff]
        %v10563 = vld [vmem:[#allocation11 + $0x68] sm:$0xff]
        %v10564 = vld [vmem:[#allocation11 + $0x70] sm:$0xff]
        %v10565 = vld [vmem:[#allocation11 + $0x78] sm:$0xff]
        %10566 = vmatprep.subr.mxu0 0.0
        %10567 = vmatpush1.msra.mxu0 %v10550
        %10568 = vmatprep.subr.mxu0 0.0
        %10569 = vmatpush1.msra.mxu0 %v10551
        %10570 = vmatprep.subr.mxu0 0.0
        %10571 = vmatpush1.msra.mxu0 %v10552
        %10572 = vmatprep.subr.mxu0 0.0
        %10573 = vmatpush1.msra.mxu0 %v10553
        %10574 = vmatprep.subr.mxu0 0.0
        %10575 = vmatpush1.msra.mxu0 %v10554
        %10576 = vmatprep.subr.mxu0 0.0
        %10577 = vmatpush1.msra.mxu0 %v10555
        %10578 = vmatprep.subr.mxu0 0.0
        %10579 = vmatpush1.msra.mxu0 %v10556
        %10580 = vmatprep.subr.mxu0 0.0
        %10581 = vmatpush1.msra.mxu0 %v10557
        %10582 = vmatprep.subr.mxu0 0.0
        %10583 = vmatpush1.msra.mxu0 %v10558
        %10584 = vmatprep.subr.mxu0 0.0
        %10585 = vmatpush1.msra.mxu0 %v10559
        %10586 = vmatprep.subr.mxu0 0.0
        %10587 = vmatpush1.msra.mxu0 %v10560
        %10588 = vmatprep.subr.mxu0 0.0
        %10589 = vmatpush1.msra.mxu0 %v10561
        %10590 = vmatprep.subr.mxu0 0.0
        %10591 = vmatpush1.msra.mxu0 %v10562
        %10592 = vmatprep.subr.mxu0 0.0
        %10593 = vmatpush1.msra.mxu0 %v10563
        %10594 = vmatprep.subr.mxu0 0.0
        %10595 = vmatpush1.msra.mxu0 %v10564
        %10596 = vmatprep.subr.mxu0 0.0
        %10597 = vmatpush1.msra.mxu0 %v10565
        %10598 = vmatprep.subr.mxu0 0.0
        %10599 = vmatpush1.msra.mxu0 0.0
        %10600 = vmatprep.subr.mxu0 0.0
        %10601 = vmatpush1.msra.mxu0 0.0
        %10602 = vmatprep.subr.mxu0 0.0
        %10603 = vmatpush1.msra.mxu0 0.0
        %10604 = vmatprep.subr.mxu0 0.0
        %10605 = vmatpush1.msra.mxu0 0.0
        %10606 = vmatprep.subr.mxu0 0.0
        %10607 = vmatpush1.msra.mxu0 0.0
        %10608 = vmatprep.subr.mxu0 0.0
        %10609 = vmatpush1.msra.mxu0 0.0
        %10610 = vmatprep.subr.mxu0 0.0
        %10611 = vmatpush1.msra.mxu0 0.0
        %10612 = vmatprep.subr.mxu0 0.0
        %10613 = vmatpush1.msra.mxu0 0.0
        %10614 = vmatprep.subr.mxu0 0.0
        %10615 = vmatpush1.msra.mxu0 0.0
        %10616 = vmatprep.subr.mxu0 0.0
        %10617 = vmatpush1.msra.mxu0 0.0
        %10618 = vmatprep.subr.mxu0 0.0
        %10619 = vmatpush1.msra.mxu0 0.0
        %10620 = vmatprep.subr.mxu0 0.0
        %10621 = vmatpush1.msra.mxu0 0.0
        %10622 = vmatprep.subr.mxu0 0.0
        %10623 = vmatpush1.msra.mxu0 0.0
        %10624 = vmatprep.subr.mxu0 0.0
        %10625 = vmatpush1.msra.mxu0 0.0
        %10626 = vmatprep.subr.mxu0 0.0
        %10627 = vmatpush1.msra.mxu0 0.0
        %10628 = vmatprep.subr.mxu0 0.0
        %10629 = vmatpush1.msra.mxu0 0.0
        %10630 = vmatprep.mubr.f32.mxu0 0.0
        %10631 = vmatmul.mubr.f32.gmra.mrb[0].mxu0 %v10549
        %v10632 = vpop.f32.mrb[0].mxu0
        %v10633 = vadd.f32 0.0, %v10632
        %v10634 = vpop.f32.mrb[0].mxu0
        %10635 = vdwg.mxu0
        %v10636 = vxor.u32 %v10633, 2147483648
        %v10637 = vmul.f32 %v10636, 1.442695
        %v10638 = vpow.pop %v10637
        %v10639 = vadd.f32 %v10638, 1.0
        %v10640 = vrcp.pop %v10639
        %v10641 = vmul.f32 1.0, %v10640
        %v10642 = vlaneseq
        %v10643 = vshrl.u32 %v10642, 7
        %v10644 = vsub.s32 0, %v10643
        %v10645 = vrot.slane %v10641, %v10644
        %v10646 = vmul.f32 %v10299, %v10645
        %v10647 = vmul.f32 %v10302, %v10645
        %v10648 = vmul.f32 %v10307, %v10645
        %v10649 = vmul.f32 %v10310, %v10645
        %v10650 = vmul.f32 %v10315, %v10645
        %v10651 = vmul.f32 %v10318, %v10645
        %v10652 = vmul.f32 %v10323, %v10645
        %v10653 = vmul.f32 %v10326, %v10645
        %v10654 = vmul.f32 %v10331, %v10645
        %v10655 = vmul.f32 %v10334, %v10645
        %v10656 = vmul.f32 %v10339, %v10645
        %v10657 = vmul.f32 %v10342, %v10645
        %v10658 = vmul.f32 %v10347, %v10645
        %v10659 = vmul.f32 %v10350, %v10645
        %v10660 = vmul.f32 %v10355, %v10645
        %v10661 = vmul.f32 %v10358, %v10645
        %v10662 = vmul.f32 %v10363, %v10645
        %v10663 = vmul.f32 %v10366, %v10645
        %v10664 = vmul.f32 %v10371, %v10645
        %v10665 = vmul.f32 %v10374, %v10645
        %v10666 = vmul.f32 %v10379, %v10645
        %v10667 = vmul.f32 %v10382, %v10645
        %v10668 = vmul.f32 %v10387, %v10645
        %v10669 = vmul.f32 %v10390, %v10645
        %v10670 = vmul.f32 %v10395, %v10645
        %v10671 = vmul.f32 %v10398, %v10645
        %v10672 = vmul.f32 %v10403, %v10645
        %v10673 = vmul.f32 %v10406, %v10645
        %v10674 = vmul.f32 %v10411, %v10645
        %v10675 = vmul.f32 %v10414, %v10645
        %v10676 = vmul.f32 %v10419, %v10645
        %v10677 = vmul.f32 %v10422, %v10645
        %v10678 = vld [vmem:[%s308] sm:$0xff]
        %v10679 = vld [vmem:[%s308 + $0x8] sm:$0xff]
        %v10680 = vld [vmem:[%s308 + $0x10] sm:$0xff]
        %v10681 = vld [vmem:[%s308 + $0x18] sm:$0xff]
        %v10682 = vld [vmem:[%s308 + $0x20] sm:$0xff]
        %v10683 = vld [vmem:[%s308 + $0x28] sm:$0xff]
        %v10684 = vld [vmem:[%s308 + $0x30] sm:$0xff]
        %v10685 = vld [vmem:[%s308 + $0x38] sm:$0xff]
        %v10686 = vld [vmem:[%s308 + $0x40] sm:$0xff]
        %v10687 = vld [vmem:[%s308 + $0x48] sm:$0xff]
        %v10688 = vld [vmem:[%s308 + $0x50] sm:$0xff]
        %v10689 = vld [vmem:[%s308 + $0x58] sm:$0xff]
        %v10690 = vld [vmem:[%s308 + $0x60] sm:$0xff]
        %v10691 = vld [vmem:[%s308 + $0x68] sm:$0xff]
        %v10692 = vld [vmem:[%s308 + $0x70] sm:$0xff]
        %v10693 = vld [vmem:[%s308 + $0x78] sm:$0xff]
        %v10694 = vld [vmem:[%s308 + $0x80] sm:$0xff]
        %v10695 = vld [vmem:[%s308 + $0x88] sm:$0xff]
        %v10696 = vld [vmem:[%s308 + $0x90] sm:$0xff]
        %v10697 = vld [vmem:[%s308 + $0x98] sm:$0xff]
        %v10698 = vld [vmem:[%s308 + $0xa0] sm:$0xff]
        %v10699 = vld [vmem:[%s308 + $0xa8] sm:$0xff]
        %v10700 = vld [vmem:[%s308 + $0xb0] sm:$0xff]
        %v10701 = vld [vmem:[%s308 + $0xb8] sm:$0xff]
        %v10702 = vld [vmem:[%s308 + $0xc0] sm:$0xff]
        %v10703 = vld [vmem:[%s308 + $0xc8] sm:$0xff]
        %v10704 = vld [vmem:[%s308 + $0xd0] sm:$0xff]
        %v10705 = vld [vmem:[%s308 + $0xd8] sm:$0xff]
        %v10706 = vld [vmem:[%s308 + $0xe0] sm:$0xff]
        %v10707 = vld [vmem:[%s308 + $0xe8] sm:$0xff]
        %v10708 = vld [vmem:[%s308 + $0xf0] sm:$0xff]
        %v10709 = vld [vmem:[%s308 + $0xf8] sm:$0xff]
        %v10710 = vadd.f32 %v10646, %v10678
        %v10711 = vadd.f32 %v10647, %v10679
        %v10712 = vadd.f32 %v10648, %v10680
        %v10713 = vadd.f32 %v10649, %v10681
        %v10714 = vadd.f32 %v10650, %v10682
        %v10715 = vadd.f32 %v10651, %v10683
        %v10716 = vadd.f32 %v10652, %v10684
        %v10717 = vadd.f32 %v10653, %v10685
        %v10718 = vadd.f32 %v10654, %v10686
        %v10719 = vadd.f32 %v10655, %v10687
        %v10720 = vadd.f32 %v10656, %v10688
        %v10721 = vadd.f32 %v10657, %v10689
        %v10722 = vadd.f32 %v10658, %v10690
        %v10723 = vadd.f32 %v10659, %v10691
        %v10724 = vadd.f32 %v10660, %v10692
        %v10725 = vadd.f32 %v10661, %v10693
        %v10726 = vadd.f32 %v10662, %v10694
        %v10727 = vadd.f32 %v10663, %v10695
        %v10728 = vadd.f32 %v10664, %v10696
        %v10729 = vadd.f32 %v10665, %v10697
        %v10730 = vadd.f32 %v10666, %v10698
        %v10731 = vadd.f32 %v10667, %v10699
        %v10732 = vadd.f32 %v10668, %v10700
        %v10733 = vadd.f32 %v10669, %v10701
        %v10734 = vadd.f32 %v10670, %v10702
        %v10735 = vadd.f32 %v10671, %v10703
        %v10736 = vadd.f32 %v10672, %v10704
        %v10737 = vadd.f32 %v10673, %v10705
        %v10738 = vadd.f32 %v10674, %v10706
        %v10739 = vadd.f32 %v10675, %v10707
        %v10740 = vadd.f32 %v10676, %v10708
        %v10741 = vadd.f32 %v10677, %v10709
        %10742 = vst.msk [vmem:[%s354] sm:$0xff] %vm426, %v10710
        %10743 = vst.msk [vmem:[%s354 + $0x8] sm:$0xff] %vm426, %v10711
        %10744 = vst.msk [vmem:[%s354 + $0x10] sm:$0xff] %vm426, %v10712
        %10745 = vst.msk [vmem:[%s354 + $0x18] sm:$0xff] %vm426, %v10713
        %10746 = vst.msk [vmem:[%s354 + $0x20] sm:$0xff] %vm426, %v10714
        %10747 = vst.msk [vmem:[%s354 + $0x28] sm:$0xff] %vm426, %v10715
        %10748 = vst.msk [vmem:[%s354 + $0x30] sm:$0xff] %vm426, %v10716
        %10749 = vst.msk [vmem:[%s354 + $0x38] sm:$0xff] %vm426, %v10717
        %10750 = vst.msk [vmem:[%s354 + $0x40] sm:$0xff] %vm426, %v10718
        %10751 = vst.msk [vmem:[%s354 + $0x48] sm:$0xff] %vm426, %v10719
        %10752 = vst.msk [vmem:[%s354 + $0x50] sm:$0xff] %vm426, %v10720
        %10753 = vst.msk [vmem:[%s354 + $0x58] sm:$0xff] %vm426, %v10721
        %10754 = vst.msk [vmem:[%s354 + $0x60] sm:$0xff] %vm426, %v10722
        %10755 = vst.msk [vmem:[%s354 + $0x68] sm:$0xff] %vm426, %v10723
        %10756 = vst.msk [vmem:[%s354 + $0x70] sm:$0xff] %vm426, %v10724
        %10757 = vst.msk [vmem:[%s354 + $0x78] sm:$0xff] %vm426, %v10725
        %10758 = vst.msk [vmem:[%s354 + $0x80] sm:$0xff] %vm426, %v10726
        %10759 = vst.msk [vmem:[%s354 + $0x88] sm:$0xff] %vm426, %v10727
        %10760 = vst.msk [vmem:[%s354 + $0x90] sm:$0xff] %vm426, %v10728
        %10761 = vst.msk [vmem:[%s354 + $0x98] sm:$0xff] %vm426, %v10729
        %10762 = vst.msk [vmem:[%s354 + $0xa0] sm:$0xff] %vm426, %v10730
        %10763 = vst.msk [vmem:[%s354 + $0xa8] sm:$0xff] %vm426, %v10731
        %10764 = vst.msk [vmem:[%s354 + $0xb0] sm:$0xff] %vm426, %v10732
        %10765 = vst.msk [vmem:[%s354 + $0xb8] sm:$0xff] %vm426, %v10733
        %10766 = vst.msk [vmem:[%s354 + $0xc0] sm:$0xff] %vm426, %v10734
        %10767 = vst.msk [vmem:[%s354 + $0xc8] sm:$0xff] %vm426, %v10735
        %10768 = vst.msk [vmem:[%s354 + $0xd0] sm:$0xff] %vm426, %v10736
        %10769 = vst.msk [vmem:[%s354 + $0xd8] sm:$0xff] %vm426, %v10737
        %10770 = vst.msk [vmem:[%s354 + $0xe0] sm:$0xff] %vm426, %v10738
        %10771 = vst.msk [vmem:[%s354 + $0xe8] sm:$0xff] %vm426, %v10739
        %10772 = vst.msk [vmem:[%s354 + $0xf0] sm:$0xff] %vm426, %v10740
        %10773 = vst.msk [vmem:[%s354 + $0xf8] sm:$0xff] %vm426, %v10741
        %s10774 = sand.u32 %s186, 1
        %s10775 = scalar_lea.sflag [#allocation5], %s10774
        %s10776 = sand.u32 %s186, 1
        %s10777 = smul.addr %s10776, 256
        %s10778 = scalar_lea.vmem [#allocation12], %s10777
        // Predicated region
        $region69: #{rdb_forward.1} parent=47 // pred_check
          %p10779 = pneg %p196
        $region70: #{rdb_forward.1} parent=47 // pred_check_branch
          %10781 = sbr.rel (%p10779) target = $region72
        $region71: #{rdb_forward.1} parent=47 // pred_region
          %s10783 = ssub.s32 4096, 4096
          %10784 = vsyncadd %s10775, %s10783
          %s10785 = smul.addr %s26, 32
          %s10786 = smul.addr %s10785, 128
          %s10787 = scalar_lea.hbm %s7, %s10786
          %s10788 = sshll.u32 %s10778, 4
          %s10789 = int_to_ptr.vmem [resolvable:$true] %s10788
          %10794 = dma.vmem_to_hbm [thread:$0]  %s10789, 4096, %s10787, %s10775, 128, 128, 8
        $region72: #{rdb_forward.1} parent=47 // pred_fallthru
          _
      $region48: #{rdb_forward.1} parent=5 // pred_fallthru
        _
      %p10795 = scmp.le.s32.totalorder 2, %s21
      // Predicated region
      $region73: #{rdb_forward.1} parent=5 // pred_check
        %p10796 = pneg %p10795
      $region74: #{rdb_forward.1} parent=5 // pred_check_branch
        %10798 = sbr.rel (%p10796) target = $region76
      $region75: #{rdb_forward.1} parent=5 // pred_region
        %s10799 = ssub.s32 %s21, 2
        // Predicated region
        $region77: #{rdb_forward.1} parent=75 // pred_check
          %p10800 = pneg %p202
        $region78: #{rdb_forward.1} parent=75 // pred_check_branch
          %10802 = sbr.rel (%p10800) target = $region80
        $region79: #{rdb_forward.1} parent=75 // pred_region
          %s10803 = sand.u32 %s187, 1
          %s10804 = scalar_lea.sflag [#allocation5], %s10803
          %s10805 = sand.u32 %s187, 1
          %s10806 = smul.addr %s10805, 256
          %s10807 = scalar_lea.vmem [#allocation12], %s10806
          %10808 = dma.done %s10804, 4096
        $region80: #{rdb_forward.1} parent=75 // pred_fallthru
          _
      $region76: #{rdb_forward.1} parent=5 // pred_fallthru
        _
    $region6: #{rdb_forward.1} parent=1 // loop_footer
      %s25 = sadd.s32 1, %s21
    $region7: #{rdb_forward.1} parent=1 // loop_footer_branch
      %20 = sbr.rel target = $region3
    $region8: #{rdb_forward.1} parent=1 // loop_exit
      _
    %10809 = vsyncpa [#allocation4], 1
    %s10810 = scalar_lea.sflag [#allocation4], 1
    %10811 = vsyncpa %s10810, 1
    %10812 = vsyncpa [#allocation7], 1
    %10813 = vsyncpa [#allocation10], 1
    %10814 = vsyncpa [#allocation5], 1
    %s10815 = scalar_lea.sflag [#allocation5], 1
    %10816 = vsyncpa %s10815, 1

</llo_original>
